<compile_context>
chip_gen: v7x
topology: tpu7x:2x2x1
jax: 0.10.0
libtpu: 0.0.40
codegen_flags: <defaults>
</compile_context>

<pallas_src>
import functools

import jax
import jax.numpy as jnp
from jax.experimental import pallas as pl
from jax.experimental.pallas import tpu as pltpu


_TM = 1024                        # rows per grid step (multiple of 8/16)
_VMEM_LIMIT = 32 * 1024 * 1024    # stay inside v7x's smaller scoped VMEM


# ----------------------------- Pallas kernel --------------------------------

def _fused_matmul_kernel(x_ref, w_ref, scale_ref, shift_ref, o_ref, *, relu_in, out_act):
    # x_ref: (tm, K) bf16, w_ref: (K, N) bf16, scale/shift: (1, N) f32, o_ref: (tm, N)
    x = x_ref[...]
    if relu_in:
        x = jnp.maximum(x, 0)
    y = jnp.dot(x, w_ref[...], preferred_element_type=jnp.float32)
    y = y * scale_ref[...] + shift_ref[...]
    if out_act == "tanh":
        y = jnp.tanh(y)
    o_ref[...] = y.astype(o_ref.dtype)


def fused_matmul(X, W, scale, shift, *, relu_in, out_act, out_dtype):
    """act((relu?(X) @ W) * scale + shift).  X:(M,K) bf16, W:(K,N) bf16 -> (M,N)."""
    M, K = X.shape
    N = W.shape[1]
    if M <= _TM:
        tm, Mp = M, M                         # single full-extent block
    else:
        tm = _TM
        Mp = ((M + tm - 1) // tm) * tm
        if Mp != M:                           # pad so every block is a full tile
            X = jnp.pad(X, ((0, Mp - M), (0, 0)))
    kern = functools.partial(_fused_matmul_kernel, relu_in=relu_in, out_act=out_act)
    out = pl.pallas_call(
        kern,
        out_shape=jax.ShapeDtypeStruct((Mp, N), out_dtype),
        grid=(Mp // tm,),
        in_specs=[
            pl.BlockSpec((tm, K), lambda i: (i, 0)),
            pl.BlockSpec((K, N), lambda i: (0, 0)),
            pl.BlockSpec((1, N), lambda i: (0, 0)),
            pl.BlockSpec((1, N), lambda i: (0, 0)),
        ],
        out_specs=pl.BlockSpec((tm, N), lambda i: (i, 0)),
        compiler_params=pltpu.CompilerParams(
            dimension_semantics=("parallel",),
            vmem_limit_bytes=_VMEM_LIMIT,
        ),
    )(X, W, scale, shift)
    return out[:M] if Mp != M else out


# ------------------------------ layer wrappers -------------------------------

def pointwise_conv_bn(x, w, scale, shift):
    """1x1 conv (no bias) + folded BatchNorm.  x: (B,H,W,Cin), w: (Cin,Cout) bf16."""
    B, H, W_, Cin = x.shape
    y = fused_matmul(x.reshape(B * H * W_, Cin).astype(jnp.bfloat16), w, scale, shift,
                     relu_in=False, out_act=None, out_dtype=jnp.bfloat16)
    return y.reshape(B, H, W_, -1)


def conv_transpose_layer(inputs, w_packed, scale4, shift4, *, relu_in, out_act, out_dtype):
    """[ReLU ->] ConvTranspose2d(k=4,s=2,p=1) over channel-concat(inputs) -> scale/shift [-> act].

    inputs: list of NHWC tensors sharing (B, H, W).  Returns (B, 2H, 2W, Cout).
    Derivation: out[2m-1+q, 2n-1+r] = sum_{a,b in {0,1}} x[m-1+a, n-1+b] @ w[:,:,q+2(1-a),r+2(1-b)]
    so the 2x2 neighbourhood packs into K and the 2x2 sub-pixel offsets pack into N.
    """
    B, H, W_, _ = inputs[0].shape
    cout = w_packed.shape[1] // 4
    pads = [jnp.pad(x.astype(jnp.bfloat16), ((0, 0), (1, 1), (1, 1), (0, 0)))
            for x in inputs]
    taps = []                                 # K order: (a, b, [input0 | input1 ...])
    for a in (0, 1):
        for b in (0, 1):
            for xp in pads:
                taps.append(xp[:, a:a + H + 1, b:b + W_ + 1, :])
    X = jnp.concatenate(taps, axis=-1).reshape(B * (H + 1) * (W_ + 1), -1)
    Y = fused_matmul(X, w_packed, scale4, shift4,
                     relu_in=relu_in, out_act=out_act, out_dtype=out_dtype)
    # (M, 4*Cout) -> interleave the 2x2 sub-pixel positions, then crop the 1-px halo.
    Y = Y.reshape(B, H + 1, W_ + 1, 2, 2, cout)
    Y = jnp.transpose(Y, (0, 1, 3, 2, 4, 5)).reshape(B, 2 * H + 2, 2 * W_ + 2, cout)
    return Y[:, 1:2 * H + 1, 1:2 * W_ + 1, :]


# ------------------------------ DecoderNetwork --------------------------------

def decoder_forward(params, encoder_inputs_nchw, cat_embedding, num_ups):
    e = [jnp.transpose(t, (0, 2, 3, 1)) for t in encoder_inputs_nchw]  # -> NHWC
    B, H, W_, _ = e[-1].shape
    cat = jnp.broadcast_to(cat_embedding[:, None, None, :],
                           (B, H, W_, cat_embedding.shape[-1]))
    x = jnp.concatenate([e[-1], cat], axis=-1)

    p = params["cat_aware"]
    d = pointwise_conv_bn(x, p["w"], p["scale"], p["shift"])

    p = params["first"]
    d = conv_transpose_layer([d], p["w"], p["scale"], p["shift"],
                             relu_in=True, out_act=None, out_dtype=jnp.bfloat16)

    for i in range(num_ups - 5):
        p = params[f"inter_{i}"]
        d = conv_transpose_layer([d, e[-(2 + i)]], p["w"], p["scale"], p["shift"],
                                 relu_in=True, out_act=None, out_dtype=jnp.bfloat16)

    for j, idx in zip((1, 2, 3), (3, 2, 1)):
        p = params[f"up_{j}"]
        d = conv_transpose_layer([d, e[idx]], p["w"], p["scale"], p["shift"],
                                 relu_in=True, out_act=None, out_dtype=jnp.bfloat16)

    p = params["last"]
    out = conv_transpose_layer([d, e[0]], p["w"], p["scale"], p["shift"],
                               relu_in=True, out_act="tanh", out_dtype=jnp.float32)
    return jnp.transpose(out, (0, 3, 1, 2))  # back to NCHW


# ------------------------------ parameter init --------------------------------

def pack_convt_weight(w):
    """(Cin, Cout, 4, 4) PyTorch ConvTranspose2d weight -> (4*Cin, 4*Cout) bf16.

    K order: (a, b, ci) over the 2x2 input neighbourhood; N order: (q, r, co) over the
    2x2 output sub-pixel offsets.  Tap mapping: ky = q + 2*(1-a), kx = r + 2*(1-b).
    """
    rows = []
    for a in (0, 1):
        for b in (0, 1):
            cols = [w[:, :, q + 2 * (1 - a), r + 2 * (1 - b)]
                    for q in (0, 1) for r in (0, 1)]
            rows.append(jnp.concatenate(cols, axis=1))
    return jnp.concatenate(rows, axis=0).astype(jnp.bfloat16)


def _bn_fold(key, c, eps=1e-5):
    k1, k2, k3, k4 = jax.random.split(key, 4)
    gamma = jax.random.uniform(k1, (c,), minval=0.5, maxval=1.5)
    beta = 0.1 * jax.random.normal(k2, (c,))
    mean = 0.1 * jax.random.normal(k3, (c,))
    var = jax.random.uniform(k4, (c,), minval=0.5, maxval=1.5)
    scale = gamma / jnp.sqrt(var + eps)
    shift = beta - mean * scale
    return (scale.reshape(1, c).astype(jnp.float32),
            shift.reshape(1, c).astype(jnp.float32))


def init_params(key, *, out_channels, num_ups, cat_nc, ngf):
    params = {}

    def nk():
        nonlocal key
        key, sub = jax.random.split(key)
        return sub

    def convt(cin, cout, *, with_norm=True):
        w = 0.05 * jax.random.normal(nk(), (cin, cout, 4, 4), jnp.float32)
        if with_norm:
            scale, shift = _bn_fold(nk(), cout)
        else:  # plain conv bias, no norm (last layer)
            scale = jnp.ones((1, cout), jnp.float32)
            shift = (0.1 * jax.random.normal(nk(), (cout,))).reshape(1, cout).astype(jnp.float32)
        return {"w": pack_convt_weight(w),
                "scale": jnp.tile(scale, (1, 4)),
                "shift": jnp.tile(shift, (1, 4))}

    # cat_aware: 1x1 conv (ngf*8 + cat_nc -> ngf*8, bias=False) + BatchNorm
    cin, cout = ngf * 8 + cat_nc, ngf * 8
    scale, shift = _bn_fold(nk(), cout)
    params["cat_aware"] = {
        "w": (0.05 * jax.random.normal(nk(), (cin, cout), jnp.float32)).astype(jnp.bfloat16),
        "scale": scale, "shift": shift}
    params["first"] = convt(ngf * 8, ngf * 8)
    for i in range(num_ups - 5):
        params[f"inter_{i}"] = convt(ngf * 16, ngf * 8)
    params["up_1"] = convt(ngf * 16, ngf * 4)
    params["up_2"] = convt(ngf * 8, ngf * 2)
    params["up_3"] = convt(ngf * 4, ngf)
    # last: ConvTranspose2d(ngf*2 -> out_channels, bias=True), no norm, tanh
    params["last"] = convt(ngf * 2, out_channels, with_norm=False)
    return params


# ------------------------------------ main ------------------------------------

if __name__ == "__main__":
    B, ngf, cat_nc, out_channels, num_ups = 2, 8, 32, 3, 6
    H0 = 2  # deepest encoder spatial size

    key = jax.random.PRNGKey(0)
    kp, ke, kc = jax.random.split(key, 3)
    params = init_params(kp, out_channels=out_channels, num_ups=num_ups,
                         cat_nc=cat_nc, ngf=ngf)

    # Encoder feature pyramid (NCHW, PyTorch convention), shallowest first.
    enc_channels = [ngf, ngf * 2, ngf * 4] + [ngf * 8] * (num_ups - 3)
    enc_spatial = [H0 * 2 ** (num_ups - 1 - i) for i in range(num_ups)]
    encoder_inputs = []
    for c, s in zip(enc_channels, enc_spatial):
        ke, sub = jax.random.split(ke)
        encoder_inputs.append(jax.random.normal(sub, (B, c, s, s), jnp.float32))
    cat_embedding = jax.random.normal(kc, (B, cat_nc), jnp.float32)

    fwd = jax.jit(functools.partial(decoder_forward, num_ups=num_ups))
    out = jax.block_until_ready(fwd(params, encoder_inputs, cat_embedding))

    assert out.shape == (B, out_channels, 2 * enc_spatial[0], 2 * enc_spatial[0]), out.shape
    assert bool(jnp.all(jnp.isfinite(out)))
    assert bool(jnp.all(jnp.abs(out) <= 1.0))  # tanh range
    assert float(jnp.std(out)) > 1e-4
    print("KERNEL_OK")
</pallas_src>

<mosaic_0001>
module attributes {stable_mosaic.version = 11 : i64} {
  func.func @_fused_matmul_kernel(%arg0: i32, %arg1: memref<18x256xbf16, #tpu.memory_space<vmem>>, %arg2: memref<256x256xbf16, #tpu.memory_space<vmem>>, %arg3: memref<1x256xf32, #tpu.memory_space<vmem>>, %arg4: memref<1x256xf32, #tpu.memory_space<vmem>>, %arg5: memref<18x256xbf16, #tpu.memory_space<vmem>>) attributes {dimension_semantics = [#tpu.dimension_semantics<parallel>], iteration_bounds = array<i64: 1>, scalar_prefetch = 0 : i64, scratch_operands = 0 : i64, tpu.core_type = #tpu.core_type<tc>, window_params = [{transform_indices = @transform_0, window_bounds = array<i64: 18, 256>}, {pipeline_mode = #tpu.pipeline_mode<synchronous>, transform_indices = @transform_1, window_bounds = array<i64: 256, 256>}, {pipeline_mode = #tpu.pipeline_mode<synchronous>, transform_indices = @transform_2, window_bounds = array<i64: 1, 256>}, {pipeline_mode = #tpu.pipeline_mode<synchronous>, transform_indices = @transform_3, window_bounds = array<i64: 1, 256>}, {transform_indices = @transform_4, window_bounds = array<i64: 18, 256>}]} {
    %c0 = arith.constant 0 : index
    %c0_0 = arith.constant 0 : index
    %0 = vector.load %arg1[%c0, %c0_0] : memref<18x256xbf16, #tpu.memory_space<vmem>>, vector<18x256xbf16>
    %cst = arith.constant 0.000000e+00 : bf16
    %1 = vector.broadcast %cst : bf16 to vector<18x256xbf16>
    %2 = arith.maximumf %0, %1 : vector<18x256xbf16>
    %c0_1 = arith.constant 0 : index
    %c0_2 = arith.constant 0 : index
    %3 = vector.load %arg2[%c0_1, %c0_2] : memref<256x256xbf16, #tpu.memory_space<vmem>>, vector<256x256xbf16>
    %cst_3 = arith.constant dense<0.000000e+00> : vector<18x256xf32>
    %4 = tpu.matmul %2, %3, %cst_3 {dimension_numbers = #tpu.dot_dimension_numbers<[1], [0], [0], [1], [0, 0, 1, 1], [], []>} : vector<18x256xbf16>, vector<256x256xbf16>, vector<18x256xf32> -> vector<18x256xf32>
    %c0_4 = arith.constant 0 : index
    %c0_5 = arith.constant 0 : index
    %5 = vector.load %arg3[%c0_4, %c0_5] : memref<1x256xf32, #tpu.memory_space<vmem>>, vector<1x256xf32>
    %6 = vector.broadcast %5 : vector<1x256xf32> to vector<18x256xf32>
    %7 = arith.mulf %4, %6 : vector<18x256xf32>
    %c0_6 = arith.constant 0 : index
    %c0_7 = arith.constant 0 : index
    %8 = vector.load %arg4[%c0_6, %c0_7] : memref<1x256xf32, #tpu.memory_space<vmem>>, vector<1x256xf32>
    %9 = vector.broadcast %8 : vector<1x256xf32> to vector<18x256xf32>
    %10 = arith.addf %7, %9 : vector<18x256xf32>
    %11 = arith.truncf %10 : vector<18x256xf32> to vector<18x256xbf16>
    %c0_8 = arith.constant 0 : index
    %c0_9 = arith.constant 0 : index
    %12 = vector.load %arg5[%c0_8, %c0_9] : memref<18x256xbf16, #tpu.memory_space<vmem>>, vector<18x256xbf16>
    tpu.vector_store %arg5[%c0_8, %c0_9], %11 {strides = array<i32>} : memref<18x256xbf16, #tpu.memory_space<vmem>>, vector<18x256xbf16>,
    return
  }
  func.func @transform_0(%arg0: i32) -> (i32, i32) {
    %c0_i32 = arith.constant 0 : i32
    %c0_i32_0 = arith.constant 0 : i32
    return %arg0, %c0_i32 : i32, i32
  }
  func.func @transform_1(%arg0: i32) -> (i32, i32) {
    %c0_i32 = arith.constant 0 : i32
    %c0_i32_0 = arith.constant 0 : i32
    %c0_i32_1 = arith.constant 0 : i32
    return %c0_i32, %c0_i32_0 : i32, i32
  }
  func.func @transform_2(%arg0: i32) -> (i32, i32) {
    %c0_i32 = arith.constant 0 : i32
    %c0_i32_0 = arith.constant 0 : i32
    %c0_i32_1 = arith.constant 0 : i32
    return %c0_i32, %c0_i32_0 : i32, i32
  }
  func.func @transform_3(%arg0: i32) -> (i32, i32) {
    %c0_i32 = arith.constant 0 : i32
    %c0_i32_0 = arith.constant 0 : i32
    %c0_i32_1 = arith.constant 0 : i32
    return %c0_i32, %c0_i32_0 : i32, i32
  }
  func.func @transform_4(%arg0: i32) -> (i32, i32) {
    %c0_i32 = arith.constant 0 : i32
    %c0_i32_0 = arith.constant 0 : i32
    return %arg0, %c0_i32 : i32, i32
  }
}

module attributes {stable_mosaic.version = 11 : i64} {
  func.func @_fused_matmul_kernel(%arg0: i32, %arg1: memref<8x96xbf16, #tpu.memory_space<vmem>>, %arg2: memref<96x64xbf16, #tpu.memory_space<vmem>>, %arg3: memref<1x64xf32, #tpu.memory_space<vmem>>, %arg4: memref<1x64xf32, #tpu.memory_space<vmem>>, %arg5: memref<8x64xbf16, #tpu.memory_space<vmem>>) attributes {dimension_semantics = [#tpu.dimension_semantics<parallel>], iteration_bounds = array<i64: 1>, scalar_prefetch = 0 : i64, scratch_operands = 0 : i64, tpu.core_type = #tpu.core_type<tc>, window_params = [{transform_indices = @transform_0, window_bounds = array<i64: 8, 96>}, {pipeline_mode = #tpu.pipeline_mode<synchronous>, transform_indices = @transform_1, window_bounds = array<i64: 96, 64>}, {pipeline_mode = #tpu.pipeline_mode<synchronous>, transform_indices = @transform_2, window_bounds = array<i64: 1, 64>}, {pipeline_mode = #tpu.pipeline_mode<synchronous>, transform_indices = @transform_3, window_bounds = array<i64: 1, 64>}, {transform_indices = @transform_4, window_bounds = array<i64: 8, 64>}]} {
    %c0 = arith.constant 0 : index
    %c0_0 = arith.constant 0 : index
    %0 = vector.load %arg1[%c0, %c0_0] : memref<8x96xbf16, #tpu.memory_space<vmem>>, vector<8x96xbf16>
    %c0_1 = arith.constant 0 : index
    %c0_2 = arith.constant 0 : index
    %1 = vector.load %arg2[%c0_1, %c0_2] : memref<96x64xbf16, #tpu.memory_space<vmem>>, vector<96x64xbf16>
    %cst = arith.constant dense<0.000000e+00> : vector<8x64xf32>
    %2 = tpu.matmul %0, %1, %cst {dimension_numbers = #tpu.dot_dimension_numbers<[1], [0], [0], [1], [0, 0, 1, 1], [], []>} : vector<8x96xbf16>, vector<96x64xbf16>, vector<8x64xf32> -> vector<8x64xf32>
    %c0_3 = arith.constant 0 : index
    %c0_4 = arith.constant 0 : index
    %3 = vector.load %arg3[%c0_3, %c0_4] : memref<1x64xf32, #tpu.memory_space<vmem>>, vector<1x64xf32>
    %4 = vector.broadcast %3 : vector<1x64xf32> to vector<8x64xf32>
    %5 = arith.mulf %2, %4 : vector<8x64xf32>
    %c0_5 = arith.constant 0 : index
    %c0_6 = arith.constant 0 : index
    %6 = vector.load %arg4[%c0_5, %c0_6] : memref<1x64xf32, #tpu.memory_space<vmem>>, vector<1x64xf32>
    %7 = vector.broadcast %6 : vector<1x64xf32> to vector<8x64xf32>
    %8 = arith.addf %5, %7 : vector<8x64xf32>
    %9 = arith.truncf %8 : vector<8x64xf32> to vector<8x64xbf16>
    %c0_7 = arith.constant 0 : index
    %c0_8 = arith.constant 0 : index
    %10 = vector.load %arg5[%c0_7, %c0_8] : memref<8x64xbf16, #tpu.memory_space<vmem>>, vector<8x64xbf16>
    tpu.vector_store %arg5[%c0_7, %c0_8], %9 {strides = array<i32>} : memref<8x64xbf16, #tpu.memory_space<vmem>>, vector<8x64xbf16>,
    return
  }
  func.func @transform_0(%arg0: i32) -> (i32, i32) {
    %c0_i32 = arith.constant 0 : i32
    %c0_i32_0 = arith.constant 0 : i32
    return %arg0, %c0_i32 : i32, i32
  }
  func.func @transform_1(%arg0: i32) -> (i32, i32) {
    %c0_i32 = arith.constant 0 : i32
    %c0_i32_0 = arith.constant 0 : i32
    %c0_i32_1 = arith.constant 0 : i32
    return %c0_i32, %c0_i32_0 : i32, i32
  }
  func.func @transform_2(%arg0: i32) -> (i32, i32) {
    %c0_i32 = arith.constant 0 : i32
    %c0_i32_0 = arith.constant 0 : i32
    %c0_i32_1 = arith.constant 0 : i32
    return %c0_i32, %c0_i32_0 : i32, i32
  }
  func.func @transform_3(%arg0: i32) -> (i32, i32) {
    %c0_i32 = arith.constant 0 : i32
    %c0_i32_0 = arith.constant 0 : i32
    %c0_i32_1 = arith.constant 0 : i32
    return %c0_i32, %c0_i32_0 : i32, i32
  }
  func.func @transform_4(%arg0: i32) -> (i32, i32) {
    %c0_i32 = arith.constant 0 : i32
    %c0_i32_0 = arith.constant 0 : i32
    return %arg0, %c0_i32 : i32, i32
  }
}

module attributes {stable_mosaic.version = 11 : i64} {
  func.func @_fused_matmul_kernel(%arg0: i32, %arg1: memref<50x512xbf16, #tpu.memory_space<vmem>>, %arg2: memref<512x256xbf16, #tpu.memory_space<vmem>>, %arg3: memref<1x256xf32, #tpu.memory_space<vmem>>, %arg4: memref<1x256xf32, #tpu.memory_space<vmem>>, %arg5: memref<50x256xbf16, #tpu.memory_space<vmem>>) attributes {dimension_semantics = [#tpu.dimension_semantics<parallel>], iteration_bounds = array<i64: 1>, scalar_prefetch = 0 : i64, scratch_operands = 0 : i64, tpu.core_type = #tpu.core_type<tc>, window_params = [{transform_indices = @transform_0, window_bounds = array<i64: 50, 512>}, {pipeline_mode = #tpu.pipeline_mode<synchronous>, transform_indices = @transform_1, window_bounds = array<i64: 512, 256>}, {pipeline_mode = #tpu.pipeline_mode<synchronous>, transform_indices = @transform_2, window_bounds = array<i64: 1, 256>}, {pipeline_mode = #tpu.pipeline_mode<synchronous>, transform_indices = @transform_3, window_bounds = array<i64: 1, 256>}, {transform_indices = @transform_4, window_bounds = array<i64: 50, 256>}]} {
    %c0 = arith.constant 0 : index
    %c0_0 = arith.constant 0 : index
    %0 = vector.load %arg1[%c0, %c0_0] : memref<50x512xbf16, #tpu.memory_space<vmem>>, vector<50x512xbf16>
    %cst = arith.constant 0.000000e+00 : bf16
    %1 = vector.broadcast %cst : bf16 to vector<50x512xbf16>
    %2 = arith.maximumf %0, %1 : vector<50x512xbf16>
    %c0_1 = arith.constant 0 : index
    %c0_2 = arith.constant 0 : index
    %3 = vector.load %arg2[%c0_1, %c0_2] : memref<512x256xbf16, #tpu.memory_space<vmem>>, vector<512x256xbf16>
    %cst_3 = arith.constant dense<0.000000e+00> : vector<50x256xf32>
    %4 = tpu.matmul %2, %3, %cst_3 {dimension_numbers = #tpu.dot_dimension_numbers<[1], [0], [0], [1], [0, 0, 1, 1], [], []>} : vector<50x512xbf16>, vector<512x256xbf16>, vector<50x256xf32> -> vector<50x256xf32>
    %c0_4 = arith.constant 0 : index
    %c0_5 = arith.constant 0 : index
    %5 = vector.load %arg3[%c0_4, %c0_5] : memref<1x256xf32, #tpu.memory_space<vmem>>, vector<1x256xf32>
    %6 = vector.broadcast %5 : vector<1x256xf32> to vector<50x256xf32>
    %7 = arith.mulf %4, %6 : vector<50x256xf32>
    %c0_6 = arith.constant 0 : index
    %c0_7 = arith.constant 0 : index
    %8 = vector.load %arg4[%c0_6, %c0_7] : memref<1x256xf32, #tpu.memory_space<vmem>>, vector<1x256xf32>
    %9 = vector.broadcast %8 : vector<1x256xf32> to vector<50x256xf32>
    %10 = arith.addf %7, %9 : vector<50x256xf32>
    %11 = arith.truncf %10 : vector<50x256xf32> to vector<50x256xbf16>
    %c0_8 = arith.constant 0 : index
    %c0_9 = arith.constant 0 : index
    %12 = vector.load %arg5[%c0_8, %c0_9] : memref<50x256xbf16, #tpu.memory_space<vmem>>, vector<50x256xbf16>
    tpu.vector_store %arg5[%c0_8, %c0_9], %11 {strides = array<i32>} : memref<50x256xbf16, #tpu.memory_space<vmem>>, vector<50x256xbf16>,
    return
  }
  func.func @transform_0(%arg0: i32) -> (i32, i32) {
    %c0_i32 = arith.constant 0 : i32
    %c0_i32_0 = arith.constant 0 : i32
    return %arg0, %c0_i32 : i32, i32
  }
  func.func @transform_1(%arg0: i32) -> (i32, i32) {
    %c0_i32 = arith.constant 0 : i32
    %c0_i32_0 = arith.constant 0 : i32
    %c0_i32_1 = arith.constant 0 : i32
    return %c0_i32, %c0_i32_0 : i32, i32
  }
  func.func @transform_2(%arg0: i32) -> (i32, i32) {
    %c0_i32 = arith.constant 0 : i32
    %c0_i32_0 = arith.constant 0 : i32
    %c0_i32_1 = arith.constant 0 : i32
    return %c0_i32, %c0_i32_0 : i32, i32
  }
  func.func @transform_3(%arg0: i32) -> (i32, i32) {
    %c0_i32 = arith.constant 0 : i32
    %c0_i32_0 = arith.constant 0 : i32
    %c0_i32_1 = arith.constant 0 : i32
    return %c0_i32, %c0_i32_0 : i32, i32
  }
  func.func @transform_4(%arg0: i32) -> (i32, i32) {
    %c0_i32 = arith.constant 0 : i32
    %c0_i32_0 = arith.constant 0 : i32
    return %arg0, %c0_i32 : i32, i32
  }
}

module attributes {stable_mosaic.version = 11 : i64} {
  func.func @_fused_matmul_kernel(%arg0: i32, %arg1: memref<162x512xbf16, #tpu.memory_space<vmem>>, %arg2: memref<512x128xbf16, #tpu.memory_space<vmem>>, %arg3: memref<1x128xf32, #tpu.memory_space<vmem>>, %arg4: memref<1x128xf32, #tpu.memory_space<vmem>>, %arg5: memref<162x128xbf16, #tpu.memory_space<vmem>>) attributes {dimension_semantics = [#tpu.dimension_semantics<parallel>], iteration_bounds = array<i64: 1>, scalar_prefetch = 0 : i64, scratch_operands = 0 : i64, tpu.core_type = #tpu.core_type<tc>, window_params = [{transform_indices = @transform_0, window_bounds = array<i64: 162, 512>}, {pipeline_mode = #tpu.pipeline_mode<synchronous>, transform_indices = @transform_1, window_bounds = array<i64: 512, 128>}, {pipeline_mode = #tpu.pipeline_mode<synchronous>, transform_indices = @transform_2, window_bounds = array<i64: 1, 128>}, {pipeline_mode = #tpu.pipeline_mode<synchronous>, transform_indices = @transform_3, window_bounds = array<i64: 1, 128>}, {transform_indices = @transform_4, window_bounds = array<i64: 162, 128>}]} {
    %c0 = arith.constant 0 : index
    %c0_0 = arith.constant 0 : index
    %0 = vector.load %arg1[%c0, %c0_0] : memref<162x512xbf16, #tpu.memory_space<vmem>>, vector<162x512xbf16>
    %cst = arith.constant 0.000000e+00 : bf16
    %1 = vector.broadcast %cst : bf16 to vector<162x512xbf16>
    %2 = arith.maximumf %0, %1 : vector<162x512xbf16>
    %c0_1 = arith.constant 0 : index
    %c0_2 = arith.constant 0 : index
    %3 = vector.load %arg2[%c0_1, %c0_2] : memref<512x128xbf16, #tpu.memory_space<vmem>>, vector<512x128xbf16>
    %cst_3 = arith.constant dense<0.000000e+00> : vector<162x128xf32>
    %4 = tpu.matmul %2, %3, %cst_3 {dimension_numbers = #tpu.dot_dimension_numbers<[1], [0], [0], [1], [0, 0, 1, 1], [], []>} : vector<162x512xbf16>, vector<512x128xbf16>, vector<162x128xf32> -> vector<162x128xf32>
    %c0_4 = arith.constant 0 : index
    %c0_5 = arith.constant 0 : index
    %5 = vector.load %arg3[%c0_4, %c0_5] : memref<1x128xf32, #tpu.memory_space<vmem>>, vector<1x128xf32>
    %6 = vector.broadcast %5 : vector<1x128xf32> to vector<162x128xf32>
    %7 = arith.mulf %4, %6 : vector<162x128xf32>
    %c0_6 = arith.constant 0 : index
    %c0_7 = arith.constant 0 : index
    %8 = vector.load %arg4[%c0_6, %c0_7] : memref<1x128xf32, #tpu.memory_space<vmem>>, vector<1x128xf32>
    %9 = vector.broadcast %8 : vector<1x128xf32> to vector<162x128xf32>
    %10 = arith.addf %7, %9 : vector<162x128xf32>
    %11 = arith.truncf %10 : vector<162x128xf32> to vector<162x128xbf16>
    %c0_8 = arith.constant 0 : index
    %c0_9 = arith.constant 0 : index
    %12 = vector.load %arg5[%c0_8, %c0_9] : memref<162x128xbf16, #tpu.memory_space<vmem>>, vector<162x128xbf16>
    tpu.vector_store %arg5[%c0_8, %c0_9], %11 {strides = array<i32>} : memref<162x128xbf16, #tpu.memory_space<vmem>>, vector<162x128xbf16>,
    return
  }
  func.func @transform_0(%arg0: i32) -> (i32, i32) {
    %c0_i32 = arith.constant 0 : i32
    %c0_i32_0 = arith.constant 0 : i32
    return %arg0, %c0_i32 : i32, i32
  }
  func.func @transform_1(%arg0: i32) -> (i32, i32) {
    %c0_i32 = arith.constant 0 : i32
    %c0_i32_0 = arith.constant 0 : i32
    %c0_i32_1 = arith.constant 0 : i32
    return %c0_i32, %c0_i32_0 : i32, i32
  }
  func.func @transform_2(%arg0: i32) -> (i32, i32) {
    %c0_i32 = arith.constant 0 : i32
    %c0_i32_0 = arith.constant 0 : i32
    %c0_i32_1 = arith.constant 0 : i32
    return %c0_i32, %c0_i32_0 : i32, i32
  }
  func.func @transform_3(%arg0: i32) -> (i32, i32) {
    %c0_i32 = arith.constant 0 : i32
    %c0_i32_0 = arith.constant 0 : i32
    %c0_i32_1 = arith.constant 0 : i32
    return %c0_i32, %c0_i32_0 : i32, i32
  }
  func.func @transform_4(%arg0: i32) -> (i32, i32) {
    %c0_i32 = arith.constant 0 : i32
    %c0_i32_0 = arith.constant 0 : i32
    return %arg0, %c0_i32 : i32, i32
  }
}

module attributes {stable_mosaic.version = 11 : i64} {
  func.func @_fused_matmul_kernel(%arg0: i32, %arg1: memref<578x256xbf16, #tpu.memory_space<vmem>>, %arg2: memref<256x64xbf16, #tpu.memory_space<vmem>>, %arg3: memref<1x64xf32, #tpu.memory_space<vmem>>, %arg4: memref<1x64xf32, #tpu.memory_space<vmem>>, %arg5: memref<578x64xbf16, #tpu.memory_space<vmem>>) attributes {dimension_semantics = [#tpu.dimension_semantics<parallel>], iteration_bounds = array<i64: 1>, scalar_prefetch = 0 : i64, scratch_operands = 0 : i64, tpu.core_type = #tpu.core_type<tc>, window_params = [{transform_indices = @transform_0, window_bounds = array<i64: 578, 256>}, {pipeline_mode = #tpu.pipeline_mode<synchronous>, transform_indices = @transform_1, window_bounds = array<i64: 256, 64>}, {pipeline_mode = #tpu.pipeline_mode<synchronous>, transform_indices = @transform_2, window_bounds = array<i64: 1, 64>}, {pipeline_mode = #tpu.pipeline_mode<synchronous>, transform_indices = @transform_3, window_bounds = array<i64: 1, 64>}, {transform_indices = @transform_4, window_bounds = array<i64: 578, 64>}]} {
    %c0 = arith.constant 0 : index
    %c0_0 = arith.constant 0 : index
    %0 = vector.load %arg1[%c0, %c0_0] : memref<578x256xbf16, #tpu.memory_space<vmem>>, vector<578x256xbf16>
    %cst = arith.constant 0.000000e+00 : bf16
    %1 = vector.broadcast %cst : bf16 to vector<578x256xbf16>
    %2 = arith.maximumf %0, %1 : vector<578x256xbf16>
    %c0_1 = arith.constant 0 : index
    %c0_2 = arith.constant 0 : index
    %3 = vector.load %arg2[%c0_1, %c0_2] : memref<256x64xbf16, #tpu.memory_space<vmem>>, vector<256x64xbf16>
    %cst_3 = arith.constant dense<0.000000e+00> : vector<578x64xf32>
    %4 = tpu.matmul %2, %3, %cst_3 {dimension_numbers = #tpu.dot_dimension_numbers<[1], [0], [0], [1], [0, 0, 1, 1], [], []>} : vector<578x256xbf16>, vector<256x64xbf16>, vector<578x64xf32> -> vector<578x64xf32>
    %c0_4 = arith.constant 0 : index
    %c0_5 = arith.constant 0 : index
    %5 = vector.load %arg3[%c0_4, %c0_5] : memref<1x64xf32, #tpu.memory_space<vmem>>, vector<1x64xf32>
    %6 = vector.broadcast %5 : vector<1x64xf32> to vector<578x64xf32>
    %7 = arith.mulf %4, %6 : vector<578x64xf32>
    %c0_6 = arith.constant 0 : index
    %c0_7 = arith.constant 0 : index
    %8 = vector.load %arg4[%c0_6, %c0_7] : memref<1x64xf32, #tpu.memory_space<vmem>>, vector<1x64xf32>
    %9 = vector.broadcast %8 : vector<1x64xf32> to vector<578x64xf32>
    %10 = arith.addf %7, %9 : vector<578x64xf32>
    %11 = arith.truncf %10 : vector<578x64xf32> to vector<578x64xbf16>
    %c0_8 = arith.constant 0 : index
    %c0_9 = arith.constant 0 : index
    %12 = vector.load %arg5[%c0_8, %c0_9] : memref<578x64xbf16, #tpu.memory_space<vmem>>, vector<578x64xbf16>
    tpu.vector_store %arg5[%c0_8, %c0_9], %11 {strides = array<i32>} : memref<578x64xbf16, #tpu.memory_space<vmem>>, vector<578x64xbf16>,
    return
  }
  func.func @transform_0(%arg0: i32) -> (i32, i32) {
    %c0_i32 = arith.constant 0 : i32
    %c0_i32_0 = arith.constant 0 : i32
    return %arg0, %c0_i32 : i32, i32
  }
  func.func @transform_1(%arg0: i32) -> (i32, i32) {
    %c0_i32 = arith.constant 0 : i32
    %c0_i32_0 = arith.constant 0 : i32
    %c0_i32_1 = arith.constant 0 : i32
    return %c0_i32, %c0_i32_0 : i32, i32
  }
  func.func @transform_2(%arg0: i32) -> (i32, i32) {
    %c0_i32 = arith.constant 0 : i32
    %c0_i32_0 = arith.constant 0 : i32
    %c0_i32_1 = arith.constant 0 : i32
    return %c0_i32, %c0_i32_0 : i32, i32
  }
  func.func @transform_3(%arg0: i32) -> (i32, i32) {
    %c0_i32 = arith.constant 0 : i32
    %c0_i32_0 = arith.constant 0 : i32
    %c0_i32_1 = arith.constant 0 : i32
    return %c0_i32, %c0_i32_0 : i32, i32
  }
  func.func @transform_4(%arg0: i32) -> (i32, i32) {
    %c0_i32 = arith.constant 0 : i32
    %c0_i32_0 = arith.constant 0 : i32
    return %arg0, %c0_i32 : i32, i32
  }
}

module attributes {stable_mosaic.version = 11 : i64} {
  func.func @_fused_matmul_kernel(%arg0: i32, %arg1: memref<1024x128xbf16, #tpu.memory_space<vmem>>, %arg2: memref<128x32xbf16, #tpu.memory_space<vmem>>, %arg3: memref<1x32xf32, #tpu.memory_space<vmem>>, %arg4: memref<1x32xf32, #tpu.memory_space<vmem>>, %arg5: memref<1024x32xbf16, #tpu.memory_space<vmem>>) attributes {dimension_semantics = [#tpu.dimension_semantics<parallel>], iteration_bounds = array<i64: 3>, scalar_prefetch = 0 : i64, scratch_operands = 0 : i64, tpu.core_type = #tpu.core_type<tc>, window_params = [{transform_indices = @transform_0, window_bounds = array<i64: 1024, 128>}, {pipeline_mode = #tpu.pipeline_mode<synchronous>, transform_indices = @transform_1, window_bounds = array<i64: 128, 32>}, {pipeline_mode = #tpu.pipeline_mode<synchronous>, transform_indices = @transform_2, window_bounds = array<i64: 1, 32>}, {pipeline_mode = #tpu.pipeline_mode<synchronous>, transform_indices = @transform_3, window_bounds = array<i64: 1, 32>}, {transform_indices = @transform_4, window_bounds = array<i64: 1024, 32>}]} {
    %c0 = arith.constant 0 : index
    %c0_0 = arith.constant 0 : index
    %0 = vector.load %arg1[%c0, %c0_0] : memref<1024x128xbf16, #tpu.memory_space<vmem>>, vector<1024x128xbf16>
    %cst = arith.constant 0.000000e+00 : bf16
    %1 = vector.broadcast %cst : bf16 to vector<1024x128xbf16>
    %2 = arith.maximumf %0, %1 : vector<1024x128xbf16>
    %c0_1 = arith.constant 0 : index
    %c0_2 = arith.constant 0 : index
    %3 = vector.load %arg2[%c0_1, %c0_2] : memref<128x32xbf16, #tpu.memory_space<vmem>>, vector<128x32xbf16>
    %cst_3 = arith.constant dense<0.000000e+00> : vector<1024x32xf32>
    %4 = tpu.matmul %2, %3, %cst_3 {dimension_numbers = #tpu.dot_dimension_numbers<[1], [0], [0], [1], [0, 0, 1, 1], [], []>} : vector<1024x128xbf16>, vector<128x32xbf16>, vector<1024x32xf32> -> vector<1024x32xf32>
    %c0_4 = arith.constant 0 : index
    %c0_5 = arith.constant 0 : index
    %5 = vector.load %arg3[%c0_4, %c0_5] : memref<1x32xf32, #tpu.memory_space<vmem>>, vector<1x32xf32>
    %6 = vector.broadcast %5 : vector<1x32xf32> to vector<1024x32xf32>
    %7 = arith.mulf %4, %6 : vector<1024x32xf32>
    %c0_6 = arith.constant 0 : index
    %c0_7 = arith.constant 0 : index
    %8 = vector.load %arg4[%c0_6, %c0_7] : memref<1x32xf32, #tpu.memory_space<vmem>>, vector<1x32xf32>
    %9 = vector.broadcast %8 : vector<1x32xf32> to vector<1024x32xf32>
    %10 = arith.addf %7, %9 : vector<1024x32xf32>
    %11 = arith.truncf %10 : vector<1024x32xf32> to vector<1024x32xbf16>
    %c0_8 = arith.constant 0 : index
    %c0_9 = arith.constant 0 : index
    %12 = vector.load %arg5[%c0_8, %c0_9] : memref<1024x32xbf16, #tpu.memory_space<vmem>>, vector<1024x32xbf16>
    tpu.vector_store %arg5[%c0_8, %c0_9], %11 {strides = array<i32>} : memref<1024x32xbf16, #tpu.memory_space<vmem>>, vector<1024x32xbf16>,
    return
  }
  func.func @transform_0(%arg0: i32) -> (i32, i32) {
    %c0_i32 = arith.constant 0 : i32
    %c0_i32_0 = arith.constant 0 : i32
    return %arg0, %c0_i32 : i32, i32
  }
  func.func @transform_1(%arg0: i32) -> (i32, i32) {
    %c0_i32 = arith.constant 0 : i32
    %c0_i32_0 = arith.constant 0 : i32
    %c0_i32_1 = arith.constant 0 : i32
    return %c0_i32, %c0_i32_0 : i32, i32
  }
  func.func @transform_2(%arg0: i32) -> (i32, i32) {
    %c0_i32 = arith.constant 0 : i32
    %c0_i32_0 = arith.constant 0 : i32
    %c0_i32_1 = arith.constant 0 : i32
    return %c0_i32, %c0_i32_0 : i32, i32
  }
  func.func @transform_3(%arg0: i32) -> (i32, i32) {
    %c0_i32 = arith.constant 0 : i32
    %c0_i32_0 = arith.constant 0 : i32
    %c0_i32_1 = arith.constant 0 : i32
    return %c0_i32, %c0_i32_0 : i32, i32
  }
  func.func @transform_4(%arg0: i32) -> (i32, i32) {
    %c0_i32 = arith.constant 0 : i32
    %c0_i32_0 = arith.constant 0 : i32
    return %arg0, %c0_i32 : i32, i32
  }
}

module attributes {stable_mosaic.version = 11 : i64} {
  func.func @_fused_matmul_kernel(%arg0: i32, %arg1: memref<1024x64xbf16, #tpu.memory_space<vmem>>, %arg2: memref<64x12xbf16, #tpu.memory_space<vmem>>, %arg3: memref<1x12xf32, #tpu.memory_space<vmem>>, %arg4: memref<1x12xf32, #tpu.memory_space<vmem>>, %arg5: memref<1024x12xf32, #tpu.memory_space<vmem>>) attributes {dimension_semantics = [#tpu.dimension_semantics<parallel>], iteration_bounds = array<i64: 9>, scalar_prefetch = 0 : i64, scratch_operands = 0 : i64, tpu.core_type = #tpu.core_type<tc>, window_params = [{transform_indices = @transform_0, window_bounds = array<i64: 1024, 64>}, {pipeline_mode = #tpu.pipeline_mode<synchronous>, transform_indices = @transform_1, window_bounds = array<i64: 64, 12>}, {pipeline_mode = #tpu.pipeline_mode<synchronous>, transform_indices = @transform_2, window_bounds = array<i64: 1, 12>}, {pipeline_mode = #tpu.pipeline_mode<synchronous>, transform_indices = @transform_3, window_bounds = array<i64: 1, 12>}, {transform_indices = @transform_4, window_bounds = array<i64: 1024, 12>}]} {
    %c0 = arith.constant 0 : index
    %c0_0 = arith.constant 0 : index
    %0 = vector.load %arg1[%c0, %c0_0] : memref<1024x64xbf16, #tpu.memory_space<vmem>>, vector<1024x64xbf16>
    %cst = arith.constant 0.000000e+00 : bf16
    %1 = vector.broadcast %cst : bf16 to vector<1024x64xbf16>
    %2 = arith.maximumf %0, %1 : vector<1024x64xbf16>
    %c0_1 = arith.constant 0 : index
    %c0_2 = arith.constant 0 : index
    %3 = vector.load %arg2[%c0_1, %c0_2] : memref<64x12xbf16, #tpu.memory_space<vmem>>, vector<64x12xbf16>
    %cst_3 = arith.constant dense<0.000000e+00> : vector<1024x12xf32>
    %4 = tpu.matmul %2, %3, %cst_3 {dimension_numbers = #tpu.dot_dimension_numbers<[1], [0], [0], [1], [0, 0, 1, 1], [], []>} : vector<1024x64xbf16>, vector<64x12xbf16>, vector<1024x12xf32> -> vector<1024x12xf32>
    %c0_4 = arith.constant 0 : index
    %c0_5 = arith.constant 0 : index
    %5 = vector.load %arg3[%c0_4, %c0_5] : memref<1x12xf32, #tpu.memory_space<vmem>>, vector<1x12xf32>
    %6 = vector.broadcast %5 : vector<1x12xf32> to vector<1024x12xf32>
    %7 = arith.mulf %4, %6 : vector<1024x12xf32>
    %c0_6 = arith.constant 0 : index
    %c0_7 = arith.constant 0 : index
    %8 = vector.load %arg4[%c0_6, %c0_7] : memref<1x12xf32, #tpu.memory_space<vmem>>, vector<1x12xf32>
    %9 = vector.broadcast %8 : vector<1x12xf32> to vector<1024x12xf32>
    %10 = arith.addf %7, %9 : vector<1024x12xf32>
    %11 = math.tanh %10 : vector<1024x12xf32>
    %c0_8 = arith.constant 0 : index
    %c0_9 = arith.constant 0 : index
    %12 = vector.load %arg5[%c0_8, %c0_9] : memref<1024x12xf32, #tpu.memory_space<vmem>>, vector<1024x12xf32>
    tpu.vector_store %arg5[%c0_8, %c0_9], %11 {strides = array<i32>} : memref<1024x12xf32, #tpu.memory_space<vmem>>, vector<1024x12xf32>,
    return
  }
  func.func @transform_0(%arg0: i32) -> (i32, i32) {
    %c0_i32 = arith.constant 0 : i32
    %c0_i32_0 = arith.constant 0 : i32
    return %arg0, %c0_i32 : i32, i32
  }
  func.func @transform_1(%arg0: i32) -> (i32, i32) {
    %c0_i32 = arith.constant 0 : i32
    %c0_i32_0 = arith.constant 0 : i32
    %c0_i32_1 = arith.constant 0 : i32
    return %c0_i32, %c0_i32_0 : i32, i32
  }
  func.func @transform_2(%arg0: i32) -> (i32, i32) {
    %c0_i32 = arith.constant 0 : i32
    %c0_i32_0 = arith.constant 0 : i32
    %c0_i32_1 = arith.constant 0 : i32
    return %c0_i32, %c0_i32_0 : i32, i32
  }
  func.func @transform_3(%arg0: i32) -> (i32, i32) {
    %c0_i32 = arith.constant 0 : i32
    %c0_i32_0 = arith.constant 0 : i32
    %c0_i32_1 = arith.constant 0 : i32
    return %c0_i32, %c0_i32_0 : i32, i32
  }
  func.func @transform_4(%arg0: i32) -> (i32, i32) {
    %c0_i32 = arith.constant 0 : i32
    %c0_i32_0 = arith.constant 0 : i32
    return %arg0, %c0_i32 : i32, i32
  }
}

</mosaic_0001>

<llo_original>
// kernel: decoder_forward.7
$region0: #{decoder_forward.7}
  #allocation0 [shape = 'u32[]', space=smem, size = 0x4, offset = 0x4, fixed_abs, tag = 'smem constant byte address 0x4 - core index']
  #allocation1 [shape = 'u32[144,128]{1,0:T(1,128)}', space=vmem, size = 0x12000, scoped, tag = 'internal scratch']
  %s0 = inlined_call_operand.vmem [shape: bf16[8,96], index: 0, kind: input, shape index: {}]
  %s1 = inlined_call_operand.vmem [shape: bf16[96,64], index: 1, kind: input, shape index: {}]
  %s2 = inlined_call_operand.hbm [shape: f32[1,64], index: 2, kind: input, shape index: {}]
  %s3 = inlined_call_operand.hbm [shape: f32[1,64], index: 3, kind: input, shape index: {}]
  %s4 = inlined_call_operand.vmem [shape: bf16[8,64], index: 4, kind: output, shape index: {}]
  %s5 = sld [smem:[#allocation0]]
  $region34: #{decoder_forward.7} parent=0
    _
  %s7 = ssub.s32 1, %s5
  %s8 = scalar_select 0, %s7, %s5
  $region1: #{decoder_forward.7} parent=0
    #allocation2 [shape = 'u8[512]{0}', space=vmem, size = 0x400, scoped, tag = 'input window, operand 2, single buffered']
    #allocation3 [shape = 's32[1]{0}', space=sflag, size = 0x4, scoped, tag = 'scoped memory for decoder_forward.7']
    #allocation4 [shape = 'u8[512]{0}', space=vmem, size = 0x400, scoped, tag = 'input window, operand 3, single buffered']
    #allocation5 [shape = 's32[1]{0}', space=sflag, size = 0x4, scoped, tag = 'scoped memory for decoder_forward.7']
    %9 = vsyncpa [#allocation3], 0
    %10 = vsyncpa [#allocation5], 0
    // Predicated region
    $region2: #{decoder_forward.7} parent=1 // pred_check
      _
    $region3: #{decoder_forward.7} parent=1 // pred_check_branch
      %12 = sbr.rel (0) target = $region5
    $region4: #{decoder_forward.7} parent=1 // pred_region
      _
    $region5: #{decoder_forward.7} parent=1 // pred_fallthru
      _
    // Predicated region
    $region6: #{decoder_forward.7} parent=1 // pred_check
      _
    $region7: #{decoder_forward.7} parent=1 // pred_check_branch
      %14 = sbr.rel (0) target = $region9
    $region8: #{decoder_forward.7} parent=1 // pred_region
      _
    $region9: #{decoder_forward.7} parent=1 // pred_fallthru
      _
    // Predicated region
    $region10: #{decoder_forward.7} parent=1 // pred_check
      _
    $region11: #{decoder_forward.7} parent=1 // pred_check_branch
      %16 = sbr.rel (0) target = $region13
    $region12: #{decoder_forward.7} parent=1 // pred_region
      %s18 = ssub.s32 16, 16
      %19 = vsyncadd [#allocation3], %s18
      %s21 = sshll.u32 [#allocation2], 4
      %s22 = int_to_ptr.vmem [resolvable:$true] %s21
      %24 = dma.hbm_to_vmem [thread:$0]  %s2, 16, %s22, [#allocation3]
    $region13: #{decoder_forward.7} parent=1 // pred_fallthru
      _
    // Predicated region
    $region14: #{decoder_forward.7} parent=1 // pred_check
      _
    $region15: #{decoder_forward.7} parent=1 // pred_check_branch
      %26 = sbr.rel (0) target = $region17
    $region16: #{decoder_forward.7} parent=1 // pred_region
      %s28 = ssub.s32 16, 16
      %29 = vsyncadd [#allocation5], %s28
      %s31 = sshll.u32 [#allocation4], 4
      %s32 = int_to_ptr.vmem [resolvable:$true] %s31
      %34 = dma.hbm_to_vmem [thread:$0]  %s3, 16, %s32, [#allocation5]
    $region17: #{decoder_forward.7} parent=1 // pred_fallthru
      _
    // Predicated region
    $region18: #{decoder_forward.7} parent=1 // pred_check
      _
    $region19: #{decoder_forward.7} parent=1 // pred_check_branch
      %36 = sbr.rel (0) target = $region21
    $region20: #{decoder_forward.7} parent=1 // pred_region
      %37 = dma.done [#allocation3], 16
    $region21: #{decoder_forward.7} parent=1 // pred_fallthru
      _
    // Predicated region
    $region22: #{decoder_forward.7} parent=1 // pred_check
      _
    $region23: #{decoder_forward.7} parent=1 // pred_check_branch
      %39 = sbr.rel (0) target = $region25
    $region24: #{decoder_forward.7} parent=1 // pred_region
      %40 = dma.done [#allocation5], 16
    $region25: #{decoder_forward.7} parent=1 // pred_fallthru
      _
    %v42 = vld [vmem:[%s0] sm:$0xf]
    %v43 = vld [vmem:[%s1] sm:$0xf]
    %v44 = vld [vmem:[%s1 + $0x4] sm:$0xf]
    %v45 = vld [vmem:[%s1 + $0x8] sm:$0xf]
    %v46 = vld [vmem:[%s1 + $0xc] sm:$0xf]
    %v47 = vld [vmem:[%s1 + $0x10] sm:$0xf]
    %v48 = vld [vmem:[%s1 + $0x14] sm:$0xf]
    %v49 = vld [vmem:[%s1 + $0x18] sm:$0xf]
    %v50 = vld [vmem:[%s1 + $0x1c] sm:$0xf]
    %v51 = vld [vmem:[%s1 + $0x20] sm:$0xf]
    %v52 = vld [vmem:[%s1 + $0x24] sm:$0xf]
    %v53 = vld [vmem:[%s1 + $0x28] sm:$0xf]
    %v54 = vld [vmem:[%s1 + $0x2c] sm:$0xf]
    %v67 = vunpack.c.l.b16 %v43
    %v68 = vunpack.c.l.b16 %v44
    %v69 = vunpack.c.l.b16 %v45
    %v70 = vunpack.c.l.b16 %v46
    %v71 = vunpack.c.l.b16 %v47
    %v72 = vunpack.c.l.b16 %v48
    %v73 = vunpack.c.l.b16 %v49
    %v74 = vunpack.c.l.b16 %v50
    %v75 = vunpack.c.l.b16 %v51
    %v76 = vunpack.c.l.b16 %v52
    %v77 = vunpack.c.l.b16 %v53
    %v78 = vunpack.c.l.b16 %v54
    %v79 = vpack.c.b16 %v68, %v67
    %v80 = vpack.c.b16 %v70, %v69
    %v81 = vpack.c.b16 %v72, %v71
    %v82 = vpack.c.b16 %v74, %v73
    %v83 = vpack.c.b16 %v76, %v75
    %v84 = vpack.c.b16 %v78, %v77
    %vm91 = vcmask 785408
    %v93 = vsel %vm91, %v42, 0
    %95 = vmatprep.subr.bf16.mxu0 0
    %96 = vmatpush1.bf16.msra.mxu0 %v79
    %97 = vmatprep.subr.bf16.mxu0 0
    %98 = vmatpush1.bf16.msra.mxu0 %v80
    %99 = vmatprep.subr.bf16.mxu0 0
    %100 = vmatpush1.bf16.msra.mxu0 %v81
    %101 = vmatprep.subr.bf16.mxu0 0
    %102 = vmatpush1.bf16.msra.mxu0 %v82
    %103 = vmatprep.subr.bf16.mxu0 0
    %104 = vmatpush1.bf16.msra.mxu0 %v83
    %105 = vmatprep.subr.bf16.mxu0 0
    %106 = vmatpush1.bf16.msra.mxu0 %v84
    %107 = vmatprep.subr.bf16.mxu0 0
    %108 = vmatpush1.bf16.msra.mxu0 0
    %109 = vmatprep.subr.bf16.mxu0 0
    %110 = vmatpush1.bf16.msra.mxu0 0
    %111 = vmatprep.subr.bf16.mxu0 0
    %112 = vmatpush1.bf16.msra.mxu0 0
    %113 = vmatprep.subr.bf16.mxu0 0
    %114 = vmatpush1.bf16.msra.mxu0 0
    %115 = vmatprep.subr.bf16.mxu0 0
    %116 = vmatpush1.bf16.msra.mxu0 0
    %117 = vmatprep.subr.bf16.mxu0 0
    %118 = vmatpush1.bf16.msra.mxu0 0
    %119 = vmatprep.subr.bf16.mxu0 0
    %120 = vmatpush1.bf16.msra.mxu0 0
    %121 = vmatprep.subr.bf16.mxu0 0
    %122 = vmatpush1.bf16.msra.mxu0 0
    %123 = vmatprep.subr.bf16.mxu0 0
    %124 = vmatpush1.bf16.msra.mxu0 0
    %125 = vmatprep.subr.bf16.mxu0 0
    %126 = vmatpush1.bf16.msra.mxu0 0
    %127 = vmatprep.mubr.bf16.mxu0 0
    %128 = vmatmul.mubr.bf16.gmra.mrb[0].mxu0 %v93
    %v129 = vpop.f32.mrb[0].mxu0
    %v130 = vadd.f32 0.0, %v129
    %v131 = vpop.f32.mrb[0].mxu0
    %v132 = vpop.f32.mrb[0].mxu0
    %v133 = vpop.f32.mrb[0].mxu0
    %134 = vdwg.mxu0
    %v135 = vld [vmem:[#allocation2] sm:$0x1]
    %v137 = vlaneseq
    %v138 = vshrl.u32 %v137, 7
    %v139 = vsub.s32 0, %v138
    %v140 = vrot.slane %v135, %v139
    %v142 = vmul.f32 %v130, %v140
    %v143 = vld [vmem:[#allocation4] sm:$0x1]
    %v145 = vlaneseq
    %v146 = vshrl.u32 %v145, 7
    %v147 = vsub.s32 0, %v146
    %v148 = vrot.slane %v143, %v147
    %v150 = vadd.f32 %v142, %v148
    %v151 = vpack.c.bf16 %v150, %v150
    %vm152 = vcmask 519168
    %153 = vst.msk [vmem:[%s4] sm:$0xf] %vm152, %v151
    // Predicated region
    $region26: #{decoder_forward.7} parent=1 // pred_check
      _
    $region27: #{decoder_forward.7} parent=1 // pred_check_branch
      %155 = sbr.rel (0) target = $region29
    $region28: #{decoder_forward.7} parent=1 // pred_region
      _
    $region29: #{decoder_forward.7} parent=1 // pred_fallthru
      _
    // Predicated region
    $region30: #{decoder_forward.7} parent=1 // pred_check
      _
    $region31: #{decoder_forward.7} parent=1 // pred_check_branch
      %157 = sbr.rel (0) target = $region33
    $region32: #{decoder_forward.7} parent=1 // pred_region
      _
    $region33: #{decoder_forward.7} parent=1 // pred_fallthru
      _
    %158 = vsyncpa [#allocation3], 1
    %159 = vsyncpa [#allocation5], 1

// kernel: decoder_forward.8
$region0: #{decoder_forward.8}
  #allocation0 [shape = 'u32[]', space=smem, size = 0x4, offset = 0x4, fixed_abs, tag = 'smem constant byte address 0x4 - core index']
  #allocation1 [shape = 'u32[144,128]{1,0:T(1,128)}', space=vmem, size = 0x12000, scoped, tag = 'internal scratch']
  %s0 = inlined_call_operand.vmem [shape: bf16[18,256], index: 0, kind: input, shape index: {}]
  %s1 = inlined_call_operand.hbm [shape: bf16[256,256], index: 1, kind: input, shape index: {}]
  %s2 = inlined_call_operand.hbm [shape: f32[1,256], index: 2, kind: input, shape index: {}]
  %s3 = inlined_call_operand.hbm [shape: f32[1,256], index: 3, kind: input, shape index: {}]
  %s4 = inlined_call_operand.vmem [shape: bf16[18,256], index: 4, kind: output, shape index: {}]
  %s5 = sld [smem:[#allocation0]]
  $region38: #{decoder_forward.8} parent=0
    _
  %s7 = ssub.s32 1, %s5
  %s8 = scalar_select 0, %s7, %s5
  $region1: #{decoder_forward.8} parent=0
    #allocation2 [shape = 'u8[131072]{0}', space=vmem, size = 0x20000, scoped, tag = 'input window, operand 1, single buffered']
    #allocation3 [shape = 's32[1]{0}', space=sflag, size = 0x4, scoped, tag = 'scoped memory for decoder_forward.8']
    #allocation4 [shape = 'u8[1024]{0}', space=vmem, size = 0x400, scoped, tag = 'input window, operand 2, single buffered']
    #allocation5 [shape = 's32[1]{0}', space=sflag, size = 0x4, scoped, tag = 'scoped memory for decoder_forward.8']
    #allocation6 [shape = 'u8[1024]{0}', space=vmem, size = 0x400, scoped, tag = 'input window, operand 3, single buffered']
    %9 = vsyncpa [#allocation3], 0
    %10 = vsyncpa [#allocation5], 0
    // Predicated region
    $region2: #{decoder_forward.8} parent=1 // pred_check
      _
    $region3: #{decoder_forward.8} parent=1 // pred_check_branch
      %12 = sbr.rel (0) target = $region5
    $region4: #{decoder_forward.8} parent=1 // pred_region
      _
    $region5: #{decoder_forward.8} parent=1 // pred_fallthru
      _
    // Predicated region
    $region6: #{decoder_forward.8} parent=1 // pred_check
      _
    $region7: #{decoder_forward.8} parent=1 // pred_check_branch
      %14 = sbr.rel (0) target = $region9
    $region8: #{decoder_forward.8} parent=1 // pred_region
      %s16 = ssub.s32 4096, 4096
      %17 = vsyncadd [#allocation3], %s16
      %s18 = sshll.u32 [#allocation2], 4
      %s19 = int_to_ptr.vmem [resolvable:$true] %s18
      %24 = dma.hbm_to_vmem [thread:$0]  %s1, 4096, %s19, [#allocation3], 128, 128, 8
    $region9: #{decoder_forward.8} parent=1 // pred_fallthru
      _
    // Predicated region
    $region10: #{decoder_forward.8} parent=1 // pred_check
      _
    $region11: #{decoder_forward.8} parent=1 // pred_check_branch
      %26 = sbr.rel (0) target = $region13
    $region12: #{decoder_forward.8} parent=1 // pred_region
      %s28 = ssub.s32 32, 32
      %29 = vsyncadd [#allocation5], %s28
      %s31 = sshll.u32 [#allocation4], 4
      %s32 = int_to_ptr.vmem [resolvable:$true] %s31
      %34 = dma.hbm_to_vmem [thread:$0]  %s2, 32, %s32, [#allocation5]
    $region13: #{decoder_forward.8} parent=1 // pred_fallthru
      _
    // Predicated region
    $region14: #{decoder_forward.8} parent=1 // pred_check
      _
    $region15: #{decoder_forward.8} parent=1 // pred_check_branch
      %36 = sbr.rel (0) target = $region17
    $region16: #{decoder_forward.8} parent=1 // pred_region
      %s38 = ssub.s32 32, 32
      %39 = vsyncadd [#allocation5], %s38
      %s41 = sshll.u32 [#allocation6], 4
      %s42 = int_to_ptr.vmem [resolvable:$true] %s41
      %44 = dma.hbm_to_vmem [thread:$0]  %s3, 32, %s42, [#allocation5]
    $region17: #{decoder_forward.8} parent=1 // pred_fallthru
      _
    // Predicated region
    $region18: #{decoder_forward.8} parent=1 // pred_check
      _
    $region19: #{decoder_forward.8} parent=1 // pred_check_branch
      %46 = sbr.rel (0) target = $region21
    $region20: #{decoder_forward.8} parent=1 // pred_region
      %47 = dma.done [#allocation3], 4096
    $region21: #{decoder_forward.8} parent=1 // pred_fallthru
      _
    // Predicated region
    $region22: #{decoder_forward.8} parent=1 // pred_check
      _
    $region23: #{decoder_forward.8} parent=1 // pred_check_branch
      %49 = sbr.rel (0) target = $region25
    $region24: #{decoder_forward.8} parent=1 // pred_region
      %50 = dma.done [#allocation5], 32
    $region25: #{decoder_forward.8} parent=1 // pred_fallthru
      _
    // Predicated region
    $region26: #{decoder_forward.8} parent=1 // pred_check
      _
    $region27: #{decoder_forward.8} parent=1 // pred_check_branch
      %52 = sbr.rel (0) target = $region29
    $region28: #{decoder_forward.8} parent=1 // pred_region
      %53 = dma.done [#allocation5], 32
    $region29: #{decoder_forward.8} parent=1 // pred_fallthru
      _
    %v55 = vld [vmem:[%s0] sm:$0xff]
    %v56 = vld [vmem:[%s0 + $0x8] sm:$0xff]
    %v57 = vld [vmem:[%s0 + $0x10] sm:$0x11]
    %v58 = vmax.bf16 %v55, 0
    %v59 = vmax.bf16 %v56, 0
    %v60 = vmax.bf16 %v57, 0
    %v61 = vld [vmem:[#allocation2] sm:$0xff]
    %v62 = vld [vmem:[#allocation2 + $0x8] sm:$0xff]
    %v63 = vld [vmem:[#allocation2 + $0x10] sm:$0xff]
    %v64 = vld [vmem:[#allocation2 + $0x18] sm:$0xff]
    %v65 = vld [vmem:[#allocation2 + $0x20] sm:$0xff]
    %v66 = vld [vmem:[#allocation2 + $0x28] sm:$0xff]
    %v67 = vld [vmem:[#allocation2 + $0x30] sm:$0xff]
    %v68 = vld [vmem:[#allocation2 + $0x38] sm:$0xff]
    %v69 = vld [vmem:[#allocation2 + $0x40] sm:$0xff]
    %v70 = vld [vmem:[#allocation2 + $0x48] sm:$0xff]
    %v71 = vld [vmem:[#allocation2 + $0x50] sm:$0xff]
    %v72 = vld [vmem:[#allocation2 + $0x58] sm:$0xff]
    %v73 = vld [vmem:[#allocation2 + $0x60] sm:$0xff]
    %v74 = vld [vmem:[#allocation2 + $0x68] sm:$0xff]
    %v75 = vld [vmem:[#allocation2 + $0x70] sm:$0xff]
    %v76 = vld [vmem:[#allocation2 + $0x78] sm:$0xff]
    %v77 = vld [vmem:[#allocation2 + $0x80] sm:$0xff]
    %v78 = vld [vmem:[#allocation2 + $0x88] sm:$0xff]
    %v79 = vld [vmem:[#allocation2 + $0x90] sm:$0xff]
    %v80 = vld [vmem:[#allocation2 + $0x98] sm:$0xff]
    %v81 = vld [vmem:[#allocation2 + $0xa0] sm:$0xff]
    %v82 = vld [vmem:[#allocation2 + $0xa8] sm:$0xff]
    %v83 = vld [vmem:[#allocation2 + $0xb0] sm:$0xff]
    %v84 = vld [vmem:[#allocation2 + $0xb8] sm:$0xff]
    %v85 = vld [vmem:[#allocation2 + $0xc0] sm:$0xff]
    %v86 = vld [vmem:[#allocation2 + $0xc8] sm:$0xff]
    %v87 = vld [vmem:[#allocation2 + $0xd0] sm:$0xff]
    %v88 = vld [vmem:[#allocation2 + $0xd8] sm:$0xff]
    %v89 = vld [vmem:[#allocation2 + $0xe0] sm:$0xff]
    %v90 = vld [vmem:[#allocation2 + $0xe8] sm:$0xff]
    %v91 = vld [vmem:[#allocation2 + $0xf0] sm:$0xff]
    %v92 = vld [vmem:[#allocation2 + $0xf8] sm:$0xff]
    %v96 = vunpack.c.l.b16 %v58
    %v97 = vunpack.c.h.b16 %v58
    %v98 = vunpack.c.l.b16 %v59
    %v99 = vunpack.c.h.b16 %v59
    %v100 = vunpack.c.l.b16 %v60
    %v101 = vunpack.c.h.b16 %v60
    %v102 = vpack.c.b16 %v98, %v96
    %v103 = vpack.c.b16 %v99, %v97
    %v104 = vpack.c.b16 %v100, %v100
    %v105 = vpack.c.b16 %v101, %v101
    %v142 = vunpack.c.l.b16 %v61
    %v143 = vunpack.c.h.b16 %v61
    %v144 = vunpack.c.l.b16 %v62
    %v145 = vunpack.c.h.b16 %v62
    %v146 = vunpack.c.l.b16 %v63
    %v147 = vunpack.c.h.b16 %v63
    %v148 = vunpack.c.l.b16 %v64
    %v149 = vunpack.c.h.b16 %v64
    %v150 = vunpack.c.l.b16 %v65
    %v151 = vunpack.c.h.b16 %v65
    %v152 = vunpack.c.l.b16 %v66
    %v153 = vunpack.c.h.b16 %v66
    %v154 = vunpack.c.l.b16 %v67
    %v155 = vunpack.c.h.b16 %v67
    %v156 = vunpack.c.l.b16 %v68
    %v157 = vunpack.c.h.b16 %v68
    %v158 = vunpack.c.l.b16 %v69
    %v159 = vunpack.c.h.b16 %v69
    %v160 = vunpack.c.l.b16 %v70
    %v161 = vunpack.c.h.b16 %v70
    %v162 = vunpack.c.l.b16 %v71
    %v163 = vunpack.c.h.b16 %v71
    %v164 = vunpack.c.l.b16 %v72
    %v165 = vunpack.c.h.b16 %v72
    %v166 = vunpack.c.l.b16 %v73
    %v167 = vunpack.c.h.b16 %v73
    %v168 = vunpack.c.l.b16 %v74
    %v169 = vunpack.c.h.b16 %v74
    %v170 = vunpack.c.l.b16 %v75
    %v171 = vunpack.c.h.b16 %v75
    %v172 = vunpack.c.l.b16 %v76
    %v173 = vunpack.c.h.b16 %v76
    %v174 = vunpack.c.l.b16 %v77
    %v175 = vunpack.c.h.b16 %v77
    %v176 = vunpack.c.l.b16 %v78
    %v177 = vunpack.c.h.b16 %v78
    %v178 = vunpack.c.l.b16 %v79
    %v179 = vunpack.c.h.b16 %v79
    %v180 = vunpack.c.l.b16 %v80
    %v181 = vunpack.c.h.b16 %v80
    %v182 = vunpack.c.l.b16 %v81
    %v183 = vunpack.c.h.b16 %v81
    %v184 = vunpack.c.l.b16 %v82
    %v185 = vunpack.c.h.b16 %v82
    %v186 = vunpack.c.l.b16 %v83
    %v187 = vunpack.c.h.b16 %v83
    %v188 = vunpack.c.l.b16 %v84
    %v189 = vunpack.c.h.b16 %v84
    %v190 = vunpack.c.l.b16 %v85
    %v191 = vunpack.c.h.b16 %v85
    %v192 = vunpack.c.l.b16 %v86
    %v193 = vunpack.c.h.b16 %v86
    %v194 = vunpack.c.l.b16 %v87
    %v195 = vunpack.c.h.b16 %v87
    %v196 = vunpack.c.l.b16 %v88
    %v197 = vunpack.c.h.b16 %v88
    %v198 = vunpack.c.l.b16 %v89
    %v199 = vunpack.c.h.b16 %v89
    %v200 = vunpack.c.l.b16 %v90
    %v201 = vunpack.c.h.b16 %v90
    %v202 = vunpack.c.l.b16 %v91
    %v203 = vunpack.c.h.b16 %v91
    %v204 = vunpack.c.l.b16 %v92
    %v205 = vunpack.c.h.b16 %v92
    %v206 = vpack.c.b16 %v144, %v142
    %v207 = vpack.c.b16 %v145, %v143
    %v208 = vpack.c.b16 %v148, %v146
    %v209 = vpack.c.b16 %v149, %v147
    %v210 = vpack.c.b16 %v152, %v150
    %v211 = vpack.c.b16 %v153, %v151
    %v212 = vpack.c.b16 %v156, %v154
    %v213 = vpack.c.b16 %v157, %v155
    %v214 = vpack.c.b16 %v160, %v158
    %v215 = vpack.c.b16 %v161, %v159
    %v216 = vpack.c.b16 %v164, %v162
    %v217 = vpack.c.b16 %v165, %v163
    %v218 = vpack.c.b16 %v168, %v166
    %v219 = vpack.c.b16 %v169, %v167
    %v220 = vpack.c.b16 %v172, %v170
    %v221 = vpack.c.b16 %v173, %v171
    %v222 = vpack.c.b16 %v176, %v174
    %v223 = vpack.c.b16 %v177, %v175
    %v224 = vpack.c.b16 %v180, %v178
    %v225 = vpack.c.b16 %v181, %v179
    %v226 = vpack.c.b16 %v184, %v182
    %v227 = vpack.c.b16 %v185, %v183
    %v228 = vpack.c.b16 %v188, %v186
    %v229 = vpack.c.b16 %v189, %v187
    %v230 = vpack.c.b16 %v192, %v190
    %v231 = vpack.c.b16 %v193, %v191
    %v232 = vpack.c.b16 %v196, %v194
    %v233 = vpack.c.b16 %v197, %v195
    %v234 = vpack.c.b16 %v200, %v198
    %v235 = vpack.c.b16 %v201, %v199
    %v236 = vpack.c.b16 %v204, %v202
    %v237 = vpack.c.b16 %v205, %v203
    %270 = vmatprep.subr.bf16.mxu0 %v207
    %271 = vmatpush1.bf16.msra.mxu0 %v206
    %272 = vmatprep.subr.bf16.mxu0 %v209
    %273 = vmatpush1.bf16.msra.mxu0 %v208
    %274 = vmatprep.subr.bf16.mxu0 %v211
    %275 = vmatpush1.bf16.msra.mxu0 %v210
    %276 = vmatprep.subr.bf16.mxu0 %v213
    %277 = vmatpush1.bf16.msra.mxu0 %v212
    %278 = vmatprep.subr.bf16.mxu0 %v215
    %279 = vmatpush1.bf16.msra.mxu0 %v214
    %280 = vmatprep.subr.bf16.mxu0 %v217
    %281 = vmatpush1.bf16.msra.mxu0 %v216
    %282 = vmatprep.subr.bf16.mxu0 %v219
    %283 = vmatpush1.bf16.msra.mxu0 %v218
    %284 = vmatprep.subr.bf16.mxu0 %v221
    %285 = vmatpush1.bf16.msra.mxu0 %v220
    %286 = vmatprep.subr.bf16.mxu0 %v223
    %287 = vmatpush1.bf16.msra.mxu0 %v222
    %288 = vmatprep.subr.bf16.mxu0 %v225
    %289 = vmatpush1.bf16.msra.mxu0 %v224
    %290 = vmatprep.subr.bf16.mxu0 %v227
    %291 = vmatpush1.bf16.msra.mxu0 %v226
    %292 = vmatprep.subr.bf16.mxu0 %v229
    %293 = vmatpush1.bf16.msra.mxu0 %v228
    %294 = vmatprep.subr.bf16.mxu0 %v231
    %295 = vmatpush1.bf16.msra.mxu0 %v230
    %296 = vmatprep.subr.bf16.mxu0 %v233
    %297 = vmatpush1.bf16.msra.mxu0 %v232
    %298 = vmatprep.subr.bf16.mxu0 %v235
    %299 = vmatpush1.bf16.msra.mxu0 %v234
    %300 = vmatprep.subr.bf16.mxu0 %v237
    %301 = vmatpush1.bf16.msra.mxu0 %v236
    %302 = vmatprep.mubr.bf16.mxu0 %v103
    %303 = vmatmul.mubr.bf16.gmra.mrb[0].mxu0 %v102
    %v304 = vpop.f32.mrb[0].mxu0
    %v305 = vadd.f32 0.0, %v304
    %v306 = vpop.f32.mrb[0].mxu0
    %v307 = vadd.f32 0.0, %v306
    %v308 = vpop.f32.mrb[0].mxu0
    %v309 = vadd.f32 0.0, %v308
    %v310 = vpop.f32.mrb[0].mxu0
    %v311 = vadd.f32 0.0, %v310
    %312 = vmatprep.mubr.bf16.mxu0 %v105
    %313 = vmatmul.mubr.bf16.gmra.mrb[0].mxu0 %v104
    %v314 = vpop.f32.mrb[0].mxu0
    %v315 = vadd.f32 0.0, %v314
    %v316 = vpop.f32.mrb[0].mxu0
    %v317 = vadd.f32 0.0, %v316
    %v318 = vpop.f32.mrb[0].mxu0
    %v319 = vpop.f32.mrb[0].mxu0
    %320 = vdwg.mxu0
    %v321 = vld [vmem:[#allocation4] sm:$0x3]
    %v323 = vlaneseq
    %v324 = vshrl.u32 %v323, 7
    %v325 = vsub.s32 0, %v324
    %v326 = vrot.slane %v321, %v325
    %v327 = vlaneseq
    %v328 = vshrl.u32 %v327, 7
    %v329 = vsub.s32 1, %v328
    %v330 = vrot.slane %v321, %v329
    %v333 = vmul.f32 %v305, %v326
    %v334 = vmul.f32 %v307, %v330
    %v335 = vmul.f32 %v309, %v326
    %v336 = vmul.f32 %v311, %v330
    %v337 = vmul.f32 %v315, %v326
    %v338 = vmul.f32 %v317, %v330
    %v339 = vld [vmem:[#allocation6] sm:$0x3]
    %v341 = vlaneseq
    %v342 = vshrl.u32 %v341, 7
    %v343 = vsub.s32 0, %v342
    %v344 = vrot.slane %v339, %v343
    %v345 = vlaneseq
    %v346 = vshrl.u32 %v345, 7
    %v347 = vsub.s32 1, %v346
    %v348 = vrot.slane %v339, %v347
    %v351 = vadd.f32 %v333, %v344
    %v352 = vadd.f32 %v334, %v348
    %v353 = vadd.f32 %v335, %v344
    %v354 = vadd.f32 %v336, %v348
    %v355 = vadd.f32 %v337, %v344
    %v356 = vadd.f32 %v338, %v348
    %v357 = vpack.c.bf16 %v353, %v351
    %v358 = vpack.c.bf16 %v354, %v352
    %v359 = vpack.c.bf16 %v355, %v355
    %v360 = vpack.c.bf16 %v356, %v356
    %v365 = vunpack.c.l.b16 %v357
    %v366 = vunpack.c.l.b16 %v358
    %v367 = vunpack.c.h.b16 %v357
    %v368 = vunpack.c.h.b16 %v358
    %v369 = vunpack.c.l.b16 %v359
    %v370 = vunpack.c.l.b16 %v360
    %v371 = vpack.c.b16 %v366, %v365
    %v372 = vpack.c.b16 %v368, %v367
    %v373 = vpack.c.b16 %v370, %v369
    %377 = vst [vmem:[%s4] sm:$0xff] %v371
    %378 = vst [vmem:[%s4 + $0x8] sm:$0xff] %v372
    %379 = vst [vmem:[%s4 + $0x10] sm:$0x11] %v373
    // Predicated region
    $region30: #{decoder_forward.8} parent=1 // pred_check
      _
    $region31: #{decoder_forward.8} parent=1 // pred_check_branch
      %381 = sbr.rel (0) target = $region33
    $region32: #{decoder_forward.8} parent=1 // pred_region
      _
    $region33: #{decoder_forward.8} parent=1 // pred_fallthru
      _
    // Predicated region
    $region34: #{decoder_forward.8} parent=1 // pred_check
      _
    $region35: #{decoder_forward.8} parent=1 // pred_check_branch
      %383 = sbr.rel (0) target = $region37
    $region36: #{decoder_forward.8} parent=1 // pred_region
      _
    $region37: #{decoder_forward.8} parent=1 // pred_fallthru
      _
    %384 = vsyncpa [#allocation3], 1
    %385 = vsyncpa [#allocation5], 1

// kernel: decoder_forward.9
$region0: #{decoder_forward.9}
  #allocation0 [shape = 'u32[]', space=smem, size = 0x4, offset = 0x4, fixed_abs, tag = 'smem constant byte address 0x4 - core index']
  #allocation1 [shape = 'u32[144,128]{1,0:T(1,128)}', space=vmem, size = 0x12000, scoped, tag = 'internal scratch']
  %s0 = inlined_call_operand.vmem [shape: bf16[50,512], index: 0, kind: input, shape index: {}]
  %s1 = inlined_call_operand.hbm [shape: bf16[512,256], index: 1, kind: input, shape index: {}]
  %s2 = inlined_call_operand.hbm [shape: f32[1,256], index: 2, kind: input, shape index: {}]
  %s3 = inlined_call_operand.hbm [shape: f32[1,256], index: 3, kind: input, shape index: {}]
  %s4 = inlined_call_operand.vmem [shape: bf16[50,256], index: 4, kind: output, shape index: {}]
  %s5 = sld [smem:[#allocation0]]
  $region38: #{decoder_forward.9} parent=0
    _
  %s7 = ssub.s32 1, %s5
  %s8 = scalar_select 0, %s7, %s5
  $region1: #{decoder_forward.9} parent=0
    #allocation2 [shape = 'u8[262144]{0}', space=vmem, size = 0x40000, scoped, tag = 'input window, operand 1, single buffered']
    #allocation3 [shape = 's32[1]{0}', space=sflag, size = 0x4, scoped, tag = 'scoped memory for decoder_forward.9']
    #allocation4 [shape = 'u8[1024]{0}', space=vmem, size = 0x400, scoped, tag = 'input window, operand 2, single buffered']
    #allocation5 [shape = 's32[1]{0}', space=sflag, size = 0x4, scoped, tag = 'scoped memory for decoder_forward.9']
    #allocation6 [shape = 'u8[1024]{0}', space=vmem, size = 0x400, scoped, tag = 'input window, operand 3, single buffered']
    %9 = vsyncpa [#allocation3], 0
    %10 = vsyncpa [#allocation5], 0
    // Predicated region
    $region2: #{decoder_forward.9} parent=1 // pred_check
      _
    $region3: #{decoder_forward.9} parent=1 // pred_check_branch
      %12 = sbr.rel (0) target = $region5
    $region4: #{decoder_forward.9} parent=1 // pred_region
      _
    $region5: #{decoder_forward.9} parent=1 // pred_fallthru
      _
    // Predicated region
    $region6: #{decoder_forward.9} parent=1 // pred_check
      _
    $region7: #{decoder_forward.9} parent=1 // pred_check_branch
      %14 = sbr.rel (0) target = $region9
    $region8: #{decoder_forward.9} parent=1 // pred_region
      %s16 = ssub.s32 8192, 8192
      %17 = vsyncadd [#allocation3], %s16
      %s18 = sshll.u32 [#allocation2], 4
      %s19 = int_to_ptr.vmem [resolvable:$true] %s18
      %24 = dma.hbm_to_vmem [thread:$0]  %s1, 8192, %s19, [#allocation3], 128, 128, 8
    $region9: #{decoder_forward.9} parent=1 // pred_fallthru
      _
    // Predicated region
    $region10: #{decoder_forward.9} parent=1 // pred_check
      _
    $region11: #{decoder_forward.9} parent=1 // pred_check_branch
      %26 = sbr.rel (0) target = $region13
    $region12: #{decoder_forward.9} parent=1 // pred_region
      %s28 = ssub.s32 32, 32
      %29 = vsyncadd [#allocation5], %s28
      %s31 = sshll.u32 [#allocation4], 4
      %s32 = int_to_ptr.vmem [resolvable:$true] %s31
      %34 = dma.hbm_to_vmem [thread:$0]  %s2, 32, %s32, [#allocation5]
    $region13: #{decoder_forward.9} parent=1 // pred_fallthru
      _
    // Predicated region
    $region14: #{decoder_forward.9} parent=1 // pred_check
      _
    $region15: #{decoder_forward.9} parent=1 // pred_check_branch
      %36 = sbr.rel (0) target = $region17
    $region16: #{decoder_forward.9} parent=1 // pred_region
      %s38 = ssub.s32 32, 32
      %39 = vsyncadd [#allocation5], %s38
      %s41 = sshll.u32 [#allocation6], 4
      %s42 = int_to_ptr.vmem [resolvable:$true] %s41
      %44 = dma.hbm_to_vmem [thread:$0]  %s3, 32, %s42, [#allocation5]
    $region17: #{decoder_forward.9} parent=1 // pred_fallthru
      _
    // Predicated region
    $region18: #{decoder_forward.9} parent=1 // pred_check
      _
    $region19: #{decoder_forward.9} parent=1 // pred_check_branch
      %46 = sbr.rel (0) target = $region21
    $region20: #{decoder_forward.9} parent=1 // pred_region
      %47 = dma.done [#allocation3], 8192
    $region21: #{decoder_forward.9} parent=1 // pred_fallthru
      _
    // Predicated region
    $region22: #{decoder_forward.9} parent=1 // pred_check
      _
    $region23: #{decoder_forward.9} parent=1 // pred_check_branch
      %49 = sbr.rel (0) target = $region25
    $region24: #{decoder_forward.9} parent=1 // pred_region
      %50 = dma.done [#allocation5], 32
    $region25: #{decoder_forward.9} parent=1 // pred_fallthru
      _
    // Predicated region
    $region26: #{decoder_forward.9} parent=1 // pred_check
      _
    $region27: #{decoder_forward.9} parent=1 // pred_check_branch
      %52 = sbr.rel (0) target = $region29
    $region28: #{decoder_forward.9} parent=1 // pred_region
      %53 = dma.done [#allocation5], 32
    $region29: #{decoder_forward.9} parent=1 // pred_fallthru
      _
    %v55 = vld [vmem:[%s0] sm:$0xff]
    %v56 = vld [vmem:[%s0 + $0x8] sm:$0xff]
    %v57 = vld [vmem:[%s0 + $0x10] sm:$0xff]
    %v58 = vld [vmem:[%s0 + $0x18] sm:$0xff]
    %v59 = vld [vmem:[%s0 + $0x20] sm:$0xff]
    %v60 = vld [vmem:[%s0 + $0x28] sm:$0xff]
    %v61 = vld [vmem:[%s0 + $0x30] sm:$0xff]
    %v62 = vld [vmem:[%s0 + $0x38] sm:$0xff]
    %v63 = vld [vmem:[%s0 + $0x40] sm:$0xff]
    %v64 = vld [vmem:[%s0 + $0x48] sm:$0xff]
    %v65 = vld [vmem:[%s0 + $0x50] sm:$0xff]
    %v66 = vld [vmem:[%s0 + $0x58] sm:$0xff]
    %v67 = vld [vmem:[%s0 + $0x60] sm:$0x11]
    %v68 = vld [vmem:[%s0 + $0x68] sm:$0x11]
    %v69 = vmax.bf16 %v55, 0
    %v70 = vmax.bf16 %v56, 0
    %v71 = vmax.bf16 %v57, 0
    %v72 = vmax.bf16 %v58, 0
    %v73 = vmax.bf16 %v59, 0
    %v74 = vmax.bf16 %v60, 0
    %v75 = vmax.bf16 %v61, 0
    %v76 = vmax.bf16 %v62, 0
    %v77 = vmax.bf16 %v63, 0
    %v78 = vmax.bf16 %v64, 0
    %v79 = vmax.bf16 %v65, 0
    %v80 = vmax.bf16 %v66, 0
    %v81 = vmax.bf16 %v67, 0
    %v82 = vmax.bf16 %v68, 0
    %v83 = vld [vmem:[#allocation2] sm:$0xff]
    %v84 = vld [vmem:[#allocation2 + $0x8] sm:$0xff]
    %v85 = vld [vmem:[#allocation2 + $0x10] sm:$0xff]
    %v86 = vld [vmem:[#allocation2 + $0x18] sm:$0xff]
    %v87 = vld [vmem:[#allocation2 + $0x20] sm:$0xff]
    %v88 = vld [vmem:[#allocation2 + $0x28] sm:$0xff]
    %v89 = vld [vmem:[#allocation2 + $0x30] sm:$0xff]
    %v90 = vld [vmem:[#allocation2 + $0x38] sm:$0xff]
    %v91 = vld [vmem:[#allocation2 + $0x40] sm:$0xff]
    %v92 = vld [vmem:[#allocation2 + $0x48] sm:$0xff]
    %v93 = vld [vmem:[#allocation2 + $0x50] sm:$0xff]
    %v94 = vld [vmem:[#allocation2 + $0x58] sm:$0xff]
    %v95 = vld [vmem:[#allocation2 + $0x60] sm:$0xff]
    %v96 = vld [vmem:[#allocation2 + $0x68] sm:$0xff]
    %v97 = vld [vmem:[#allocation2 + $0x70] sm:$0xff]
    %v98 = vld [vmem:[#allocation2 + $0x78] sm:$0xff]
    %v99 = vld [vmem:[#allocation2 + $0x80] sm:$0xff]
    %v100 = vld [vmem:[#allocation2 + $0x88] sm:$0xff]
    %v101 = vld [vmem:[#allocation2 + $0x90] sm:$0xff]
    %v102 = vld [vmem:[#allocation2 + $0x98] sm:$0xff]
    %v103 = vld [vmem:[#allocation2 + $0xa0] sm:$0xff]
    %v104 = vld [vmem:[#allocation2 + $0xa8] sm:$0xff]
    %v105 = vld [vmem:[#allocation2 + $0xb0] sm:$0xff]
    %v106 = vld [vmem:[#allocation2 + $0xb8] sm:$0xff]
    %v107 = vld [vmem:[#allocation2 + $0xc0] sm:$0xff]
    %v108 = vld [vmem:[#allocation2 + $0xc8] sm:$0xff]
    %v109 = vld [vmem:[#allocation2 + $0xd0] sm:$0xff]
    %v110 = vld [vmem:[#allocation2 + $0xd8] sm:$0xff]
    %v111 = vld [vmem:[#allocation2 + $0xe0] sm:$0xff]
    %v112 = vld [vmem:[#allocation2 + $0xe8] sm:$0xff]
    %v113 = vld [vmem:[#allocation2 + $0xf0] sm:$0xff]
    %v114 = vld [vmem:[#allocation2 + $0xf8] sm:$0xff]
    %v115 = vld [vmem:[#allocation2 + $0x100] sm:$0xff]
    %v116 = vld [vmem:[#allocation2 + $0x108] sm:$0xff]
    %v117 = vld [vmem:[#allocation2 + $0x110] sm:$0xff]
    %v118 = vld [vmem:[#allocation2 + $0x118] sm:$0xff]
    %v119 = vld [vmem:[#allocation2 + $0x120] sm:$0xff]
    %v120 = vld [vmem:[#allocation2 + $0x128] sm:$0xff]
    %v121 = vld [vmem:[#allocation2 + $0x130] sm:$0xff]
    %v122 = vld [vmem:[#allocation2 + $0x138] sm:$0xff]
    %v123 = vld [vmem:[#allocation2 + $0x140] sm:$0xff]
    %v124 = vld [vmem:[#allocation2 + $0x148] sm:$0xff]
    %v125 = vld [vmem:[#allocation2 + $0x150] sm:$0xff]
    %v126 = vld [vmem:[#allocation2 + $0x158] sm:$0xff]
    %v127 = vld [vmem:[#allocation2 + $0x160] sm:$0xff]
    %v128 = vld [vmem:[#allocation2 + $0x168] sm:$0xff]
    %v129 = vld [vmem:[#allocation2 + $0x170] sm:$0xff]
    %v130 = vld [vmem:[#allocation2 + $0x178] sm:$0xff]
    %v131 = vld [vmem:[#allocation2 + $0x180] sm:$0xff]
    %v132 = vld [vmem:[#allocation2 + $0x188] sm:$0xff]
    %v133 = vld [vmem:[#allocation2 + $0x190] sm:$0xff]
    %v134 = vld [vmem:[#allocation2 + $0x198] sm:$0xff]
    %v135 = vld [vmem:[#allocation2 + $0x1a0] sm:$0xff]
    %v136 = vld [vmem:[#allocation2 + $0x1a8] sm:$0xff]
    %v137 = vld [vmem:[#allocation2 + $0x1b0] sm:$0xff]
    %v138 = vld [vmem:[#allocation2 + $0x1b8] sm:$0xff]
    %v139 = vld [vmem:[#allocation2 + $0x1c0] sm:$0xff]
    %v140 = vld [vmem:[#allocation2 + $0x1c8] sm:$0xff]
    %v141 = vld [vmem:[#allocation2 + $0x1d0] sm:$0xff]
    %v142 = vld [vmem:[#allocation2 + $0x1d8] sm:$0xff]
    %v143 = vld [vmem:[#allocation2 + $0x1e0] sm:$0xff]
    %v144 = vld [vmem:[#allocation2 + $0x1e8] sm:$0xff]
    %v145 = vld [vmem:[#allocation2 + $0x1f0] sm:$0xff]
    %v146 = vld [vmem:[#allocation2 + $0x1f8] sm:$0xff]
    %v161 = vunpack.c.l.b16 %v69
    %v162 = vunpack.c.h.b16 %v69
    %v163 = vunpack.c.l.b16 %v70
    %v164 = vunpack.c.h.b16 %v70
    %v165 = vunpack.c.l.b16 %v71
    %v166 = vunpack.c.h.b16 %v71
    %v167 = vunpack.c.l.b16 %v72
    %v168 = vunpack.c.h.b16 %v72
    %v169 = vunpack.c.l.b16 %v73
    %v170 = vunpack.c.h.b16 %v73
    %v171 = vunpack.c.l.b16 %v74
    %v172 = vunpack.c.h.b16 %v74
    %v173 = vunpack.c.l.b16 %v75
    %v174 = vunpack.c.h.b16 %v75
    %v175 = vunpack.c.l.b16 %v76
    %v176 = vunpack.c.h.b16 %v76
    %v177 = vunpack.c.l.b16 %v77
    %v178 = vunpack.c.h.b16 %v77
    %v179 = vunpack.c.l.b16 %v78
    %v180 = vunpack.c.h.b16 %v78
    %v181 = vunpack.c.l.b16 %v79
    %v182 = vunpack.c.h.b16 %v79
    %v183 = vunpack.c.l.b16 %v80
    %v184 = vunpack.c.h.b16 %v80
    %v185 = vunpack.c.l.b16 %v81
    %v186 = vunpack.c.h.b16 %v81
    %v187 = vunpack.c.l.b16 %v82
    %v188 = vunpack.c.h.b16 %v82
    %v189 = vpack.c.b16 %v165, %v161
    %v190 = vpack.c.b16 %v166, %v162
    %v191 = vpack.c.b16 %v167, %v163
    %v192 = vpack.c.b16 %v168, %v164
    %v193 = vpack.c.b16 %v173, %v169
    %v194 = vpack.c.b16 %v174, %v170
    %v195 = vpack.c.b16 %v175, %v171
    %v196 = vpack.c.b16 %v176, %v172
    %v197 = vpack.c.b16 %v181, %v177
    %v198 = vpack.c.b16 %v182, %v178
    %v199 = vpack.c.b16 %v183, %v179
    %v200 = vpack.c.b16 %v184, %v180
    %v201 = vpack.c.b16 %v185, %v185
    %v202 = vpack.c.b16 %v186, %v186
    %v203 = vpack.c.b16 %v187, %v187
    %v204 = vpack.c.b16 %v188, %v188
    %v285 = vunpack.c.l.b16 %v83
    %v286 = vunpack.c.h.b16 %v83
    %v287 = vunpack.c.l.b16 %v84
    %v288 = vunpack.c.h.b16 %v84
    %v289 = vunpack.c.l.b16 %v85
    %v290 = vunpack.c.h.b16 %v85
    %v291 = vunpack.c.l.b16 %v86
    %v292 = vunpack.c.h.b16 %v86
    %v293 = vunpack.c.l.b16 %v87
    %v294 = vunpack.c.h.b16 %v87
    %v295 = vunpack.c.l.b16 %v88
    %v296 = vunpack.c.h.b16 %v88
    %v297 = vunpack.c.l.b16 %v89
    %v298 = vunpack.c.h.b16 %v89
    %v299 = vunpack.c.l.b16 %v90
    %v300 = vunpack.c.h.b16 %v90
    %v301 = vunpack.c.l.b16 %v91
    %v302 = vunpack.c.h.b16 %v91
    %v303 = vunpack.c.l.b16 %v92
    %v304 = vunpack.c.h.b16 %v92
    %v305 = vunpack.c.l.b16 %v93
    %v306 = vunpack.c.h.b16 %v93
    %v307 = vunpack.c.l.b16 %v94
    %v308 = vunpack.c.h.b16 %v94
    %v309 = vunpack.c.l.b16 %v95
    %v310 = vunpack.c.h.b16 %v95
    %v311 = vunpack.c.l.b16 %v96
    %v312 = vunpack.c.h.b16 %v96
    %v313 = vunpack.c.l.b16 %v97
    %v314 = vunpack.c.h.b16 %v97
    %v315 = vunpack.c.l.b16 %v98
    %v316 = vunpack.c.h.b16 %v98
    %v317 = vunpack.c.l.b16 %v99
    %v318 = vunpack.c.h.b16 %v99
    %v319 = vunpack.c.l.b16 %v100
    %v320 = vunpack.c.h.b16 %v100
    %v321 = vunpack.c.l.b16 %v101
    %v322 = vunpack.c.h.b16 %v101
    %v323 = vunpack.c.l.b16 %v102
    %v324 = vunpack.c.h.b16 %v102
    %v325 = vunpack.c.l.b16 %v103
    %v326 = vunpack.c.h.b16 %v103
    %v327 = vunpack.c.l.b16 %v104
    %v328 = vunpack.c.h.b16 %v104
    %v329 = vunpack.c.l.b16 %v105
    %v330 = vunpack.c.h.b16 %v105
    %v331 = vunpack.c.l.b16 %v106
    %v332 = vunpack.c.h.b16 %v106
    %v333 = vunpack.c.l.b16 %v107
    %v334 = vunpack.c.h.b16 %v107
    %v335 = vunpack.c.l.b16 %v108
    %v336 = vunpack.c.h.b16 %v108
    %v337 = vunpack.c.l.b16 %v109
    %v338 = vunpack.c.h.b16 %v109
    %v339 = vunpack.c.l.b16 %v110
    %v340 = vunpack.c.h.b16 %v110
    %v341 = vunpack.c.l.b16 %v111
    %v342 = vunpack.c.h.b16 %v111
    %v343 = vunpack.c.l.b16 %v112
    %v344 = vunpack.c.h.b16 %v112
    %v345 = vunpack.c.l.b16 %v113
    %v346 = vunpack.c.h.b16 %v113
    %v347 = vunpack.c.l.b16 %v114
    %v348 = vunpack.c.h.b16 %v114
    %v349 = vunpack.c.l.b16 %v115
    %v350 = vunpack.c.h.b16 %v115
    %v351 = vunpack.c.l.b16 %v116
    %v352 = vunpack.c.h.b16 %v116
    %v353 = vunpack.c.l.b16 %v117
    %v354 = vunpack.c.h.b16 %v117
    %v355 = vunpack.c.l.b16 %v118
    %v356 = vunpack.c.h.b16 %v118
    %v357 = vunpack.c.l.b16 %v119
    %v358 = vunpack.c.h.b16 %v119
    %v359 = vunpack.c.l.b16 %v120
    %v360 = vunpack.c.h.b16 %v120
    %v361 = vunpack.c.l.b16 %v121
    %v362 = vunpack.c.h.b16 %v121
    %v363 = vunpack.c.l.b16 %v122
    %v364 = vunpack.c.h.b16 %v122
    %v365 = vunpack.c.l.b16 %v123
    %v366 = vunpack.c.h.b16 %v123
    %v367 = vunpack.c.l.b16 %v124
    %v368 = vunpack.c.h.b16 %v124
    %v369 = vunpack.c.l.b16 %v125
    %v370 = vunpack.c.h.b16 %v125
    %v371 = vunpack.c.l.b16 %v126
    %v372 = vunpack.c.h.b16 %v126
    %v373 = vunpack.c.l.b16 %v127
    %v374 = vunpack.c.h.b16 %v127
    %v375 = vunpack.c.l.b16 %v128
    %v376 = vunpack.c.h.b16 %v128
    %v377 = vunpack.c.l.b16 %v129
    %v378 = vunpack.c.h.b16 %v129
    %v379 = vunpack.c.l.b16 %v130
    %v380 = vunpack.c.h.b16 %v130
    %v381 = vunpack.c.l.b16 %v131
    %v382 = vunpack.c.h.b16 %v131
    %v383 = vunpack.c.l.b16 %v132
    %v384 = vunpack.c.h.b16 %v132
    %v385 = vunpack.c.l.b16 %v133
    %v386 = vunpack.c.h.b16 %v133
    %v387 = vunpack.c.l.b16 %v134
    %v388 = vunpack.c.h.b16 %v134
    %v389 = vunpack.c.l.b16 %v135
    %v390 = vunpack.c.h.b16 %v135
    %v391 = vunpack.c.l.b16 %v136
    %v392 = vunpack.c.h.b16 %v136
    %v393 = vunpack.c.l.b16 %v137
    %v394 = vunpack.c.h.b16 %v137
    %v395 = vunpack.c.l.b16 %v138
    %v396 = vunpack.c.h.b16 %v138
    %v397 = vunpack.c.l.b16 %v139
    %v398 = vunpack.c.h.b16 %v139
    %v399 = vunpack.c.l.b16 %v140
    %v400 = vunpack.c.h.b16 %v140
    %v401 = vunpack.c.l.b16 %v141
    %v402 = vunpack.c.h.b16 %v141
    %v403 = vunpack.c.l.b16 %v142
    %v404 = vunpack.c.h.b16 %v142
    %v405 = vunpack.c.l.b16 %v143
    %v406 = vunpack.c.h.b16 %v143
    %v407 = vunpack.c.l.b16 %v144
    %v408 = vunpack.c.h.b16 %v144
    %v409 = vunpack.c.l.b16 %v145
    %v410 = vunpack.c.h.b16 %v145
    %v411 = vunpack.c.l.b16 %v146
    %v412 = vunpack.c.h.b16 %v146
    %v413 = vpack.c.b16 %v287, %v285
    %v414 = vpack.c.b16 %v288, %v286
    %v415 = vpack.c.b16 %v291, %v289
    %v416 = vpack.c.b16 %v292, %v290
    %v417 = vpack.c.b16 %v295, %v293
    %v418 = vpack.c.b16 %v296, %v294
    %v419 = vpack.c.b16 %v299, %v297
    %v420 = vpack.c.b16 %v300, %v298
    %v421 = vpack.c.b16 %v303, %v301
    %v422 = vpack.c.b16 %v304, %v302
    %v423 = vpack.c.b16 %v307, %v305
    %v424 = vpack.c.b16 %v308, %v306
    %v425 = vpack.c.b16 %v311, %v309
    %v426 = vpack.c.b16 %v312, %v310
    %v427 = vpack.c.b16 %v315, %v313
    %v428 = vpack.c.b16 %v316, %v314
    %v429 = vpack.c.b16 %v319, %v317
    %v430 = vpack.c.b16 %v320, %v318
    %v431 = vpack.c.b16 %v323, %v321
    %v432 = vpack.c.b16 %v324, %v322
    %v433 = vpack.c.b16 %v327, %v325
    %v434 = vpack.c.b16 %v328, %v326
    %v435 = vpack.c.b16 %v331, %v329
    %v436 = vpack.c.b16 %v332, %v330
    %v437 = vpack.c.b16 %v335, %v333
    %v438 = vpack.c.b16 %v336, %v334
    %v439 = vpack.c.b16 %v339, %v337
    %v440 = vpack.c.b16 %v340, %v338
    %v441 = vpack.c.b16 %v343, %v341
    %v442 = vpack.c.b16 %v344, %v342
    %v443 = vpack.c.b16 %v347, %v345
    %v444 = vpack.c.b16 %v348, %v346
    %v445 = vpack.c.b16 %v351, %v349
    %v446 = vpack.c.b16 %v352, %v350
    %v447 = vpack.c.b16 %v355, %v353
    %v448 = vpack.c.b16 %v356, %v354
    %v449 = vpack.c.b16 %v359, %v357
    %v450 = vpack.c.b16 %v360, %v358
    %v451 = vpack.c.b16 %v363, %v361
    %v452 = vpack.c.b16 %v364, %v362
    %v453 = vpack.c.b16 %v367, %v365
    %v454 = vpack.c.b16 %v368, %v366
    %v455 = vpack.c.b16 %v371, %v369
    %v456 = vpack.c.b16 %v372, %v370
    %v457 = vpack.c.b16 %v375, %v373
    %v458 = vpack.c.b16 %v376, %v374
    %v459 = vpack.c.b16 %v379, %v377
    %v460 = vpack.c.b16 %v380, %v378
    %v461 = vpack.c.b16 %v383, %v381
    %v462 = vpack.c.b16 %v384, %v382
    %v463 = vpack.c.b16 %v387, %v385
    %v464 = vpack.c.b16 %v388, %v386
    %v465 = vpack.c.b16 %v391, %v389
    %v466 = vpack.c.b16 %v392, %v390
    %v467 = vpack.c.b16 %v395, %v393
    %v468 = vpack.c.b16 %v396, %v394
    %v469 = vpack.c.b16 %v399, %v397
    %v470 = vpack.c.b16 %v400, %v398
    %v471 = vpack.c.b16 %v403, %v401
    %v472 = vpack.c.b16 %v404, %v402
    %v473 = vpack.c.b16 %v407, %v405
    %v474 = vpack.c.b16 %v408, %v406
    %v475 = vpack.c.b16 %v411, %v409
    %v476 = vpack.c.b16 %v412, %v410
    %541 = vmatprep.subr.bf16.mxu0 %v414
    %542 = vmatpush1.bf16.msra.mxu0 %v413
    %543 = vmatprep.subr.bf16.mxu0 %v416
    %544 = vmatpush1.bf16.msra.mxu0 %v415
    %545 = vmatprep.subr.bf16.mxu0 %v418
    %546 = vmatpush1.bf16.msra.mxu0 %v417
    %547 = vmatprep.subr.bf16.mxu0 %v420
    %548 = vmatpush1.bf16.msra.mxu0 %v419
    %549 = vmatprep.subr.bf16.mxu0 %v422
    %550 = vmatpush1.bf16.msra.mxu0 %v421
    %551 = vmatprep.subr.bf16.mxu0 %v424
    %552 = vmatpush1.bf16.msra.mxu0 %v423
    %553 = vmatprep.subr.bf16.mxu0 %v426
    %554 = vmatpush1.bf16.msra.mxu0 %v425
    %555 = vmatprep.subr.bf16.mxu0 %v428
    %556 = vmatpush1.bf16.msra.mxu0 %v427
    %557 = vmatprep.subr.bf16.mxu0 %v430
    %558 = vmatpush1.bf16.msra.mxu0 %v429
    %559 = vmatprep.subr.bf16.mxu0 %v432
    %560 = vmatpush1.bf16.msra.mxu0 %v431
    %561 = vmatprep.subr.bf16.mxu0 %v434
    %562 = vmatpush1.bf16.msra.mxu0 %v433
    %563 = vmatprep.subr.bf16.mxu0 %v436
    %564 = vmatpush1.bf16.msra.mxu0 %v435
    %565 = vmatprep.subr.bf16.mxu0 %v438
    %566 = vmatpush1.bf16.msra.mxu0 %v437
    %567 = vmatprep.subr.bf16.mxu0 %v440
    %568 = vmatpush1.bf16.msra.mxu0 %v439
    %569 = vmatprep.subr.bf16.mxu0 %v442
    %570 = vmatpush1.bf16.msra.mxu0 %v441
    %571 = vmatprep.subr.bf16.mxu0 %v444
    %572 = vmatpush1.bf16.msra.mxu0 %v443
    %573 = vmatprep.mubr.bf16.mxu0 %v190
    %574 = vmatmul.mubr.bf16.gmra.mrb[0].mxu0 %v189
    %v575 = vpop.f32.mrb[0].mxu0
    %v576 = vadd.f32 0.0, %v575
    %v577 = vpop.f32.mrb[0].mxu0
    %v578 = vadd.f32 0.0, %v577
    %v579 = vpop.f32.mrb[0].mxu0
    %v580 = vadd.f32 0.0, %v579
    %v581 = vpop.f32.mrb[0].mxu0
    %v582 = vadd.f32 0.0, %v581
    %583 = vmatprep.mubr.bf16.mxu0 %v194
    %584 = vmatmul.mubr.bf16.gmra.mrb[0].mxu0 %v193
    %v585 = vpop.f32.mrb[0].mxu0
    %v586 = vadd.f32 0.0, %v585
    %v587 = vpop.f32.mrb[0].mxu0
    %v588 = vadd.f32 0.0, %v587
    %v589 = vpop.f32.mrb[0].mxu0
    %v590 = vadd.f32 0.0, %v589
    %v591 = vpop.f32.mrb[0].mxu0
    %v592 = vadd.f32 0.0, %v591
    %593 = vmatprep.mubr.bf16.mxu0 %v198
    %594 = vmatmul.mubr.bf16.gmra.mrb[0].mxu0 %v197
    %v595 = vpop.f32.mrb[0].mxu0
    %v596 = vadd.f32 0.0, %v595
    %v597 = vpop.f32.mrb[0].mxu0
    %v598 = vadd.f32 0.0, %v597
    %v599 = vpop.f32.mrb[0].mxu0
    %v600 = vadd.f32 0.0, %v599
    %v601 = vpop.f32.mrb[0].mxu0
    %v602 = vadd.f32 0.0, %v601
    %603 = vmatprep.mubr.bf16.mxu0 %v202
    %604 = vmatmul.mubr.bf16.gmra.mrb[0].mxu0 %v201
    %v605 = vpop.f32.mrb[0].mxu0
    %v606 = vadd.f32 0.0, %v605
    %v607 = vpop.f32.mrb[0].mxu0
    %v608 = vadd.f32 0.0, %v607
    %v609 = vpop.f32.mrb[0].mxu0
    %v610 = vpop.f32.mrb[0].mxu0
    %611 = vdwg.mxu0
    %612 = vmatprep.subr.bf16.mxu0 %v446
    %613 = vmatpush1.bf16.msra.mxu0 %v445
    %614 = vmatprep.subr.bf16.mxu0 %v448
    %615 = vmatpush1.bf16.msra.mxu0 %v447
    %616 = vmatprep.subr.bf16.mxu0 %v450
    %617 = vmatpush1.bf16.msra.mxu0 %v449
    %618 = vmatprep.subr.bf16.mxu0 %v452
    %619 = vmatpush1.bf16.msra.mxu0 %v451
    %620 = vmatprep.subr.bf16.mxu0 %v454
    %621 = vmatpush1.bf16.msra.mxu0 %v453
    %622 = vmatprep.subr.bf16.mxu0 %v456
    %623 = vmatpush1.bf16.msra.mxu0 %v455
    %624 = vmatprep.subr.bf16.mxu0 %v458
    %625 = vmatpush1.bf16.msra.mxu0 %v457
    %626 = vmatprep.subr.bf16.mxu0 %v460
    %627 = vmatpush1.bf16.msra.mxu0 %v459
    %628 = vmatprep.subr.bf16.mxu0 %v462
    %629 = vmatpush1.bf16.msra.mxu0 %v461
    %630 = vmatprep.subr.bf16.mxu0 %v464
    %631 = vmatpush1.bf16.msra.mxu0 %v463
    %632 = vmatprep.subr.bf16.mxu0 %v466
    %633 = vmatpush1.bf16.msra.mxu0 %v465
    %634 = vmatprep.subr.bf16.mxu0 %v468
    %635 = vmatpush1.bf16.msra.mxu0 %v467
    %636 = vmatprep.subr.bf16.mxu0 %v470
    %637 = vmatpush1.bf16.msra.mxu0 %v469
    %638 = vmatprep.subr.bf16.mxu0 %v472
    %639 = vmatpush1.bf16.msra.mxu0 %v471
    %640 = vmatprep.subr.bf16.mxu0 %v474
    %641 = vmatpush1.bf16.msra.mxu0 %v473
    %642 = vmatprep.subr.bf16.mxu0 %v476
    %643 = vmatpush1.bf16.msra.mxu0 %v475
    %644 = vmatprep.mubr.bf16.mxu0 %v192
    %645 = vmatmul.mubr.bf16.gmra.mrb[0].mxu0 %v191
    %v646 = vpop.f32.mrb[0].mxu0
    %v647 = vadd.f32 %v576, %v646
    %v648 = vpop.f32.mrb[0].mxu0
    %v649 = vadd.f32 %v578, %v648
    %v650 = vpop.f32.mrb[0].mxu0
    %v651 = vadd.f32 %v580, %v650
    %v652 = vpop.f32.mrb[0].mxu0
    %v653 = vadd.f32 %v582, %v652
    %654 = vmatprep.mubr.bf16.mxu0 %v196
    %655 = vmatmul.mubr.bf16.gmra.mrb[0].mxu0 %v195
    %v656 = vpop.f32.mrb[0].mxu0
    %v657 = vadd.f32 %v586, %v656
    %v658 = vpop.f32.mrb[0].mxu0
    %v659 = vadd.f32 %v588, %v658
    %v660 = vpop.f32.mrb[0].mxu0
    %v661 = vadd.f32 %v590, %v660
    %v662 = vpop.f32.mrb[0].mxu0
    %v663 = vadd.f32 %v592, %v662
    %664 = vmatprep.mubr.bf16.mxu0 %v200
    %665 = vmatmul.mubr.bf16.gmra.mrb[0].mxu0 %v199
    %v666 = vpop.f32.mrb[0].mxu0
    %v667 = vadd.f32 %v596, %v666
    %v668 = vpop.f32.mrb[0].mxu0
    %v669 = vadd.f32 %v598, %v668
    %v670 = vpop.f32.mrb[0].mxu0
    %v671 = vadd.f32 %v600, %v670
    %v672 = vpop.f32.mrb[0].mxu0
    %v673 = vadd.f32 %v602, %v672
    %674 = vmatprep.mubr.bf16.mxu0 %v204
    %675 = vmatmul.mubr.bf16.gmra.mrb[0].mxu0 %v203
    %v676 = vpop.f32.mrb[0].mxu0
    %v677 = vadd.f32 %v606, %v676
    %v678 = vpop.f32.mrb[0].mxu0
    %v679 = vadd.f32 %v608, %v678
    %v680 = vpop.f32.mrb[0].mxu0
    %v681 = vpop.f32.mrb[0].mxu0
    %682 = vdwg.mxu0
    %v683 = vld [vmem:[#allocation4] sm:$0x3]
    %v685 = vlaneseq
    %v686 = vshrl.u32 %v685, 7
    %v687 = vsub.s32 0, %v686
    %v688 = vrot.slane %v683, %v687
    %v689 = vlaneseq
    %v690 = vshrl.u32 %v689, 7
    %v691 = vsub.s32 1, %v690
    %v692 = vrot.slane %v683, %v691
    %v695 = vmul.f32 %v647, %v688
    %v696 = vmul.f32 %v649, %v692
    %v697 = vmul.f32 %v651, %v688
    %v698 = vmul.f32 %v653, %v692
    %v699 = vmul.f32 %v657, %v688
    %v700 = vmul.f32 %v659, %v692
    %v701 = vmul.f32 %v661, %v688
    %v702 = vmul.f32 %v663, %v692
    %v703 = vmul.f32 %v667, %v688
    %v704 = vmul.f32 %v669, %v692
    %v705 = vmul.f32 %v671, %v688
    %v706 = vmul.f32 %v673, %v692
    %v707 = vmul.f32 %v677, %v688
    %v708 = vmul.f32 %v679, %v692
    %v709 = vld [vmem:[#allocation6] sm:$0x3]
    %v711 = vlaneseq
    %v712 = vshrl.u32 %v711, 7
    %v713 = vsub.s32 0, %v712
    %v714 = vrot.slane %v709, %v713
    %v715 = vlaneseq
    %v716 = vshrl.u32 %v715, 7
    %v717 = vsub.s32 1, %v716
    %v718 = vrot.slane %v709, %v717
    %v721 = vadd.f32 %v695, %v714
    %v722 = vadd.f32 %v696, %v718
    %v723 = vadd.f32 %v697, %v714
    %v724 = vadd.f32 %v698, %v718
    %v725 = vadd.f32 %v699, %v714
    %v726 = vadd.f32 %v700, %v718
    %v727 = vadd.f32 %v701, %v714
    %v728 = vadd.f32 %v702, %v718
    %v729 = vadd.f32 %v703, %v714
    %v730 = vadd.f32 %v704, %v718
    %v731 = vadd.f32 %v705, %v714
    %v732 = vadd.f32 %v706, %v718
    %v733 = vadd.f32 %v707, %v714
    %v734 = vadd.f32 %v708, %v718
    %v735 = vpack.c.bf16 %v723, %v721
    %v736 = vpack.c.bf16 %v724, %v722
    %v737 = vpack.c.bf16 %v727, %v725
    %v738 = vpack.c.bf16 %v728, %v726
    %v739 = vpack.c.bf16 %v731, %v729
    %v740 = vpack.c.bf16 %v732, %v730
    %v741 = vpack.c.bf16 %v733, %v733
    %v742 = vpack.c.bf16 %v734, %v734
    %v751 = vunpack.c.l.b16 %v735
    %v752 = vunpack.c.l.b16 %v736
    %v753 = vunpack.c.h.b16 %v735
    %v754 = vunpack.c.h.b16 %v736
    %v755 = vunpack.c.l.b16 %v737
    %v756 = vunpack.c.l.b16 %v738
    %v757 = vunpack.c.h.b16 %v737
    %v758 = vunpack.c.h.b16 %v738
    %v759 = vunpack.c.l.b16 %v739
    %v760 = vunpack.c.l.b16 %v740
    %v761 = vunpack.c.h.b16 %v739
    %v762 = vunpack.c.h.b16 %v740
    %v763 = vunpack.c.l.b16 %v741
    %v764 = vunpack.c.l.b16 %v742
    %v765 = vpack.c.b16 %v752, %v751
    %v766 = vpack.c.b16 %v754, %v753
    %v767 = vpack.c.b16 %v756, %v755
    %v768 = vpack.c.b16 %v758, %v757
    %v769 = vpack.c.b16 %v760, %v759
    %v770 = vpack.c.b16 %v762, %v761
    %v771 = vpack.c.b16 %v764, %v763
    %779 = vst [vmem:[%s4] sm:$0xff] %v765
    %780 = vst [vmem:[%s4 + $0x8] sm:$0xff] %v766
    %781 = vst [vmem:[%s4 + $0x10] sm:$0xff] %v767
    %782 = vst [vmem:[%s4 + $0x18] sm:$0xff] %v768
    %783 = vst [vmem:[%s4 + $0x20] sm:$0xff] %v769
    %784 = vst [vmem:[%s4 + $0x28] sm:$0xff] %v770
    %785 = vst [vmem:[%s4 + $0x30] sm:$0x11] %v771
    // Predicated region
    $region30: #{decoder_forward.9} parent=1 // pred_check
      _
    $region31: #{decoder_forward.9} parent=1 // pred_check_branch
      %787 = sbr.rel (0) target = $region33
    $region32: #{decoder_forward.9} parent=1 // pred_region
      _
    $region33: #{decoder_forward.9} parent=1 // pred_fallthru
      _
    // Predicated region
    $region34: #{decoder_forward.9} parent=1 // pred_check
      _
    $region35: #{decoder_forward.9} parent=1 // pred_check_branch
      %789 = sbr.rel (0) target = $region37
    $region36: #{decoder_forward.9} parent=1 // pred_region
      _
    $region37: #{decoder_forward.9} parent=1 // pred_fallthru
      _
    %790 = vsyncpa [#allocation3], 1
    %791 = vsyncpa [#allocation5], 1

// kernel: decoder_forward.10
$region0: #{decoder_forward.10}
  #allocation0 [shape = 'u32[]', space=smem, size = 0x4, offset = 0x4, fixed_abs, tag = 'smem constant byte address 0x4 - core index']
  #allocation1 [shape = 'u32[144,128]{1,0:T(1,128)}', space=vmem, size = 0x12000, scoped, tag = 'internal scratch']
  %s0 = inlined_call_operand.vmem [shape: bf16[162,512], index: 0, kind: input, shape index: {}]
  %s1 = inlined_call_operand.vmem [shape: bf16[512,128], index: 1, kind: input, shape index: {}]
  %s2 = inlined_call_operand.vmem [shape: f32[1,128], index: 2, kind: input, shape index: {}]
  %s3 = inlined_call_operand.vmem [shape: f32[1,128], index: 3, kind: input, shape index: {}]
  %s4 = inlined_call_operand.vmem [shape: bf16[162,128], index: 4, kind: output, shape index: {}]
  %s5 = sld [smem:[#allocation0]]
  $region26: #{decoder_forward.10} parent=0
    _
  %s7 = ssub.s32 1, %s5
  %s8 = scalar_select 0, %s7, %s5
  // Predicated region
  $region2: #{decoder_forward.10} parent=0 // pred_check
    _
  $region3: #{decoder_forward.10} parent=0 // pred_check_branch
    %10 = sbr.rel (0) target = $region5
  $region4: #{decoder_forward.10} parent=0 // pred_region
    _
  $region5: #{decoder_forward.10} parent=0 // pred_fallthru
    _
  // Predicated region
  $region6: #{decoder_forward.10} parent=0 // pred_check
    _
  $region7: #{decoder_forward.10} parent=0 // pred_check_branch
    %12 = sbr.rel (0) target = $region9
  $region8: #{decoder_forward.10} parent=0 // pred_region
    _
  $region9: #{decoder_forward.10} parent=0 // pred_fallthru
    _
  // Predicated region
  $region10: #{decoder_forward.10} parent=0 // pred_check
    _
  $region11: #{decoder_forward.10} parent=0 // pred_check_branch
    %14 = sbr.rel (0) target = $region13
  $region12: #{decoder_forward.10} parent=0 // pred_region
    _
  $region13: #{decoder_forward.10} parent=0 // pred_fallthru
    _
  // Predicated region
  $region14: #{decoder_forward.10} parent=0 // pred_check
    _
  $region15: #{decoder_forward.10} parent=0 // pred_check_branch
    %16 = sbr.rel (0) target = $region17
  $region16: #{decoder_forward.10} parent=0 // pred_region
    _
  $region17: #{decoder_forward.10} parent=0 // pred_fallthru
    _
  %v18 = vld [vmem:[%s0] sm:$0xff]
  %v19 = vld [vmem:[%s0 + $0x8] sm:$0xff]
  %v20 = vld [vmem:[%s0 + $0x10] sm:$0xff]
  %v21 = vld [vmem:[%s0 + $0x18] sm:$0xff]
  %v22 = vld [vmem:[%s0 + $0x20] sm:$0xff]
  %v23 = vld [vmem:[%s0 + $0x28] sm:$0xff]
  %v24 = vld [vmem:[%s0 + $0x30] sm:$0xff]
  %v25 = vld [vmem:[%s0 + $0x38] sm:$0xff]
  %v26 = vld [vmem:[%s0 + $0x40] sm:$0xff]
  %v27 = vld [vmem:[%s0 + $0x48] sm:$0xff]
  %v28 = vld [vmem:[%s0 + $0x50] sm:$0xff]
  %v29 = vld [vmem:[%s0 + $0x58] sm:$0xff]
  %v30 = vld [vmem:[%s0 + $0x60] sm:$0xff]
  %v31 = vld [vmem:[%s0 + $0x68] sm:$0xff]
  %v32 = vld [vmem:[%s0 + $0x70] sm:$0xff]
  %v33 = vld [vmem:[%s0 + $0x78] sm:$0xff]
  %v34 = vld [vmem:[%s0 + $0x80] sm:$0xff]
  %v35 = vld [vmem:[%s0 + $0x88] sm:$0xff]
  %v36 = vld [vmem:[%s0 + $0x90] sm:$0xff]
  %v37 = vld [vmem:[%s0 + $0x98] sm:$0xff]
  %v38 = vld [vmem:[%s0 + $0xa0] sm:$0xff]
  %v39 = vld [vmem:[%s0 + $0xa8] sm:$0xff]
  %v40 = vld [vmem:[%s0 + $0xb0] sm:$0xff]
  %v41 = vld [vmem:[%s0 + $0xb8] sm:$0xff]
  %v42 = vld [vmem:[%s0 + $0xc0] sm:$0xff]
  %v43 = vld [vmem:[%s0 + $0xc8] sm:$0xff]
  %v44 = vld [vmem:[%s0 + $0xd0] sm:$0xff]
  %v45 = vld [vmem:[%s0 + $0xd8] sm:$0xff]
  %v46 = vld [vmem:[%s0 + $0xe0] sm:$0xff]
  %v47 = vld [vmem:[%s0 + $0xe8] sm:$0xff]
  %v48 = vld [vmem:[%s0 + $0xf0] sm:$0xff]
  %v49 = vld [vmem:[%s0 + $0xf8] sm:$0xff]
  %v50 = vld [vmem:[%s0 + $0x100] sm:$0xff]
  %v51 = vld [vmem:[%s0 + $0x108] sm:$0xff]
  %v52 = vld [vmem:[%s0 + $0x110] sm:$0xff]
  %v53 = vld [vmem:[%s0 + $0x118] sm:$0xff]
  %v54 = vld [vmem:[%s0 + $0x120] sm:$0xff]
  %v55 = vld [vmem:[%s0 + $0x128] sm:$0xff]
  %v56 = vld [vmem:[%s0 + $0x130] sm:$0xff]
  %v57 = vld [vmem:[%s0 + $0x138] sm:$0xff]
  %v58 = vld [vmem:[%s0 + $0x140] sm:$0x11]
  %v59 = vld [vmem:[%s0 + $0x148] sm:$0x11]
  %v60 = vmax.bf16 %v18, 0
  %v61 = vmax.bf16 %v19, 0
  %v62 = vmax.bf16 %v20, 0
  %v63 = vmax.bf16 %v21, 0
  %v64 = vmax.bf16 %v22, 0
  %v65 = vmax.bf16 %v23, 0
  %v66 = vmax.bf16 %v24, 0
  %v67 = vmax.bf16 %v25, 0
  %v68 = vmax.bf16 %v26, 0
  %v69 = vmax.bf16 %v27, 0
  %v70 = vmax.bf16 %v28, 0
  %v71 = vmax.bf16 %v29, 0
  %v72 = vmax.bf16 %v30, 0
  %v73 = vmax.bf16 %v31, 0
  %v74 = vmax.bf16 %v32, 0
  %v75 = vmax.bf16 %v33, 0
  %v76 = vmax.bf16 %v34, 0
  %v77 = vmax.bf16 %v35, 0
  %v78 = vmax.bf16 %v36, 0
  %v79 = vmax.bf16 %v37, 0
  %v80 = vmax.bf16 %v38, 0
  %v81 = vmax.bf16 %v39, 0
  %v82 = vmax.bf16 %v40, 0
  %v83 = vmax.bf16 %v41, 0
  %v84 = vmax.bf16 %v42, 0
  %v85 = vmax.bf16 %v43, 0
  %v86 = vmax.bf16 %v44, 0
  %v87 = vmax.bf16 %v45, 0
  %v88 = vmax.bf16 %v46, 0
  %v89 = vmax.bf16 %v47, 0
  %v90 = vmax.bf16 %v48, 0
  %v91 = vmax.bf16 %v49, 0
  %v92 = vmax.bf16 %v50, 0
  %v93 = vmax.bf16 %v51, 0
  %v94 = vmax.bf16 %v52, 0
  %v95 = vmax.bf16 %v53, 0
  %v96 = vmax.bf16 %v54, 0
  %v97 = vmax.bf16 %v55, 0
  %v98 = vmax.bf16 %v56, 0
  %v99 = vmax.bf16 %v57, 0
  %v100 = vmax.bf16 %v58, 0
  %v101 = vmax.bf16 %v59, 0
  %v102 = vld [vmem:[%s1] sm:$0xf]
  %v103 = vld [vmem:[%s1 + $0x4] sm:$0xf]
  %v104 = vld [vmem:[%s1 + $0x8] sm:$0xf]
  %v105 = vld [vmem:[%s1 + $0xc] sm:$0xf]
  %v106 = vld [vmem:[%s1 + $0x10] sm:$0xf]
  %v107 = vld [vmem:[%s1 + $0x14] sm:$0xf]
  %v108 = vld [vmem:[%s1 + $0x18] sm:$0xf]
  %v109 = vld [vmem:[%s1 + $0x1c] sm:$0xf]
  %v110 = vld [vmem:[%s1 + $0x20] sm:$0xf]
  %v111 = vld [vmem:[%s1 + $0x24] sm:$0xf]
  %v112 = vld [vmem:[%s1 + $0x28] sm:$0xf]
  %v113 = vld [vmem:[%s1 + $0x2c] sm:$0xf]
  %v114 = vld [vmem:[%s1 + $0x30] sm:$0xf]
  %v115 = vld [vmem:[%s1 + $0x34] sm:$0xf]
  %v116 = vld [vmem:[%s1 + $0x38] sm:$0xf]
  %v117 = vld [vmem:[%s1 + $0x3c] sm:$0xf]
  %v118 = vld [vmem:[%s1 + $0x40] sm:$0xf]
  %v119 = vld [vmem:[%s1 + $0x44] sm:$0xf]
  %v120 = vld [vmem:[%s1 + $0x48] sm:$0xf]
  %v121 = vld [vmem:[%s1 + $0x4c] sm:$0xf]
  %v122 = vld [vmem:[%s1 + $0x50] sm:$0xf]
  %v123 = vld [vmem:[%s1 + $0x54] sm:$0xf]
  %v124 = vld [vmem:[%s1 + $0x58] sm:$0xf]
  %v125 = vld [vmem:[%s1 + $0x5c] sm:$0xf]
  %v126 = vld [vmem:[%s1 + $0x60] sm:$0xf]
  %v127 = vld [vmem:[%s1 + $0x64] sm:$0xf]
  %v128 = vld [vmem:[%s1 + $0x68] sm:$0xf]
  %v129 = vld [vmem:[%s1 + $0x6c] sm:$0xf]
  %v130 = vld [vmem:[%s1 + $0x70] sm:$0xf]
  %v131 = vld [vmem:[%s1 + $0x74] sm:$0xf]
  %v132 = vld [vmem:[%s1 + $0x78] sm:$0xf]
  %v133 = vld [vmem:[%s1 + $0x7c] sm:$0xf]
  %v134 = vld [vmem:[%s1 + $0x80] sm:$0xf]
  %v135 = vld [vmem:[%s1 + $0x84] sm:$0xf]
  %v136 = vld [vmem:[%s1 + $0x88] sm:$0xf]
  %v137 = vld [vmem:[%s1 + $0x8c] sm:$0xf]
  %v138 = vld [vmem:[%s1 + $0x90] sm:$0xf]
  %v139 = vld [vmem:[%s1 + $0x94] sm:$0xf]
  %v140 = vld [vmem:[%s1 + $0x98] sm:$0xf]
  %v141 = vld [vmem:[%s1 + $0x9c] sm:$0xf]
  %v142 = vld [vmem:[%s1 + $0xa0] sm:$0xf]
  %v143 = vld [vmem:[%s1 + $0xa4] sm:$0xf]
  %v144 = vld [vmem:[%s1 + $0xa8] sm:$0xf]
  %v145 = vld [vmem:[%s1 + $0xac] sm:$0xf]
  %v146 = vld [vmem:[%s1 + $0xb0] sm:$0xf]
  %v147 = vld [vmem:[%s1 + $0xb4] sm:$0xf]
  %v148 = vld [vmem:[%s1 + $0xb8] sm:$0xf]
  %v149 = vld [vmem:[%s1 + $0xbc] sm:$0xf]
  %v150 = vld [vmem:[%s1 + $0xc0] sm:$0xf]
  %v151 = vld [vmem:[%s1 + $0xc4] sm:$0xf]
  %v152 = vld [vmem:[%s1 + $0xc8] sm:$0xf]
  %v153 = vld [vmem:[%s1 + $0xcc] sm:$0xf]
  %v154 = vld [vmem:[%s1 + $0xd0] sm:$0xf]
  %v155 = vld [vmem:[%s1 + $0xd4] sm:$0xf]
  %v156 = vld [vmem:[%s1 + $0xd8] sm:$0xf]
  %v157 = vld [vmem:[%s1 + $0xdc] sm:$0xf]
  %v158 = vld [vmem:[%s1 + $0xe0] sm:$0xf]
  %v159 = vld [vmem:[%s1 + $0xe4] sm:$0xf]
  %v160 = vld [vmem:[%s1 + $0xe8] sm:$0xf]
  %v161 = vld [vmem:[%s1 + $0xec] sm:$0xf]
  %v162 = vld [vmem:[%s1 + $0xf0] sm:$0xf]
  %v163 = vld [vmem:[%s1 + $0xf4] sm:$0xf]
  %v164 = vld [vmem:[%s1 + $0xf8] sm:$0xf]
  %v165 = vld [vmem:[%s1 + $0xfc] sm:$0xf]
  %v208 = vunpack.c.l.b16 %v60
  %v209 = vunpack.c.h.b16 %v60
  %v210 = vunpack.c.l.b16 %v61
  %v211 = vunpack.c.h.b16 %v61
  %v212 = vunpack.c.l.b16 %v62
  %v213 = vunpack.c.h.b16 %v62
  %v214 = vunpack.c.l.b16 %v63
  %v215 = vunpack.c.h.b16 %v63
  %v216 = vunpack.c.l.b16 %v64
  %v217 = vunpack.c.h.b16 %v64
  %v218 = vunpack.c.l.b16 %v65
  %v219 = vunpack.c.h.b16 %v65
  %v220 = vunpack.c.l.b16 %v66
  %v221 = vunpack.c.h.b16 %v66
  %v222 = vunpack.c.l.b16 %v67
  %v223 = vunpack.c.h.b16 %v67
  %v224 = vunpack.c.l.b16 %v68
  %v225 = vunpack.c.h.b16 %v68
  %v226 = vunpack.c.l.b16 %v69
  %v227 = vunpack.c.h.b16 %v69
  %v228 = vunpack.c.l.b16 %v70
  %v229 = vunpack.c.h.b16 %v70
  %v230 = vunpack.c.l.b16 %v71
  %v231 = vunpack.c.h.b16 %v71
  %v232 = vunpack.c.l.b16 %v72
  %v233 = vunpack.c.h.b16 %v72
  %v234 = vunpack.c.l.b16 %v73
  %v235 = vunpack.c.h.b16 %v73
  %v236 = vunpack.c.l.b16 %v74
  %v237 = vunpack.c.h.b16 %v74
  %v238 = vunpack.c.l.b16 %v75
  %v239 = vunpack.c.h.b16 %v75
  %v240 = vunpack.c.l.b16 %v76
  %v241 = vunpack.c.h.b16 %v76
  %v242 = vunpack.c.l.b16 %v77
  %v243 = vunpack.c.h.b16 %v77
  %v244 = vunpack.c.l.b16 %v78
  %v245 = vunpack.c.h.b16 %v78
  %v246 = vunpack.c.l.b16 %v79
  %v247 = vunpack.c.h.b16 %v79
  %v248 = vunpack.c.l.b16 %v80
  %v249 = vunpack.c.h.b16 %v80
  %v250 = vunpack.c.l.b16 %v81
  %v251 = vunpack.c.h.b16 %v81
  %v252 = vunpack.c.l.b16 %v82
  %v253 = vunpack.c.h.b16 %v82
  %v254 = vunpack.c.l.b16 %v83
  %v255 = vunpack.c.h.b16 %v83
  %v256 = vunpack.c.l.b16 %v84
  %v257 = vunpack.c.h.b16 %v84
  %v258 = vunpack.c.l.b16 %v85
  %v259 = vunpack.c.h.b16 %v85
  %v260 = vunpack.c.l.b16 %v86
  %v261 = vunpack.c.h.b16 %v86
  %v262 = vunpack.c.l.b16 %v87
  %v263 = vunpack.c.h.b16 %v87
  %v264 = vunpack.c.l.b16 %v88
  %v265 = vunpack.c.h.b16 %v88
  %v266 = vunpack.c.l.b16 %v89
  %v267 = vunpack.c.h.b16 %v89
  %v268 = vunpack.c.l.b16 %v90
  %v269 = vunpack.c.h.b16 %v90
  %v270 = vunpack.c.l.b16 %v91
  %v271 = vunpack.c.h.b16 %v91
  %v272 = vunpack.c.l.b16 %v92
  %v273 = vunpack.c.h.b16 %v92
  %v274 = vunpack.c.l.b16 %v93
  %v275 = vunpack.c.h.b16 %v93
  %v276 = vunpack.c.l.b16 %v94
  %v277 = vunpack.c.h.b16 %v94
  %v278 = vunpack.c.l.b16 %v95
  %v279 = vunpack.c.h.b16 %v95
  %v280 = vunpack.c.l.b16 %v96
  %v281 = vunpack.c.h.b16 %v96
  %v282 = vunpack.c.l.b16 %v97
  %v283 = vunpack.c.h.b16 %v97
  %v284 = vunpack.c.l.b16 %v98
  %v285 = vunpack.c.h.b16 %v98
  %v286 = vunpack.c.l.b16 %v99
  %v287 = vunpack.c.h.b16 %v99
  %v288 = vunpack.c.l.b16 %v100
  %v289 = vunpack.c.h.b16 %v100
  %v290 = vunpack.c.l.b16 %v101
  %v291 = vunpack.c.h.b16 %v101
  %v292 = vpack.c.b16 %v212, %v208
  %v293 = vpack.c.b16 %v213, %v209
  %v294 = vpack.c.b16 %v214, %v210
  %v295 = vpack.c.b16 %v215, %v211
  %v296 = vpack.c.b16 %v220, %v216
  %v297 = vpack.c.b16 %v221, %v217
  %v298 = vpack.c.b16 %v222, %v218
  %v299 = vpack.c.b16 %v223, %v219
  %v300 = vpack.c.b16 %v228, %v224
  %v301 = vpack.c.b16 %v229, %v225
  %v302 = vpack.c.b16 %v230, %v226
  %v303 = vpack.c.b16 %v231, %v227
  %v304 = vpack.c.b16 %v236, %v232
  %v305 = vpack.c.b16 %v237, %v233
  %v306 = vpack.c.b16 %v238, %v234
  %v307 = vpack.c.b16 %v239, %v235
  %v308 = vpack.c.b16 %v244, %v240
  %v309 = vpack.c.b16 %v245, %v241
  %v310 = vpack.c.b16 %v246, %v242
  %v311 = vpack.c.b16 %v247, %v243
  %v312 = vpack.c.b16 %v252, %v248
  %v313 = vpack.c.b16 %v253, %v249
  %v314 = vpack.c.b16 %v254, %v250
  %v315 = vpack.c.b16 %v255, %v251
  %v316 = vpack.c.b16 %v260, %v256
  %v317 = vpack.c.b16 %v261, %v257
  %v318 = vpack.c.b16 %v262, %v258
  %v319 = vpack.c.b16 %v263, %v259
  %v320 = vpack.c.b16 %v268, %v264
  %v321 = vpack.c.b16 %v269, %v265
  %v322 = vpack.c.b16 %v270, %v266
  %v323 = vpack.c.b16 %v271, %v267
  %v324 = vpack.c.b16 %v276, %v272
  %v325 = vpack.c.b16 %v277, %v273
  %v326 = vpack.c.b16 %v278, %v274
  %v327 = vpack.c.b16 %v279, %v275
  %v328 = vpack.c.b16 %v284, %v280
  %v329 = vpack.c.b16 %v285, %v281
  %v330 = vpack.c.b16 %v286, %v282
  %v331 = vpack.c.b16 %v287, %v283
  %v332 = vpack.c.b16 %v288, %v288
  %v333 = vpack.c.b16 %v289, %v289
  %v334 = vpack.c.b16 %v290, %v290
  %v335 = vpack.c.b16 %v291, %v291
  %v444 = vunpack.c.l.b16 %v102
  %v445 = vunpack.c.l.b16 %v103
  %v446 = vunpack.c.l.b16 %v104
  %v447 = vunpack.c.l.b16 %v105
  %v448 = vunpack.c.l.b16 %v106
  %v449 = vunpack.c.l.b16 %v107
  %v450 = vunpack.c.l.b16 %v108
  %v451 = vunpack.c.l.b16 %v109
  %v452 = vunpack.c.l.b16 %v110
  %v453 = vunpack.c.l.b16 %v111
  %v454 = vunpack.c.l.b16 %v112
  %v455 = vunpack.c.l.b16 %v113
  %v456 = vunpack.c.l.b16 %v114
  %v457 = vunpack.c.l.b16 %v115
  %v458 = vunpack.c.l.b16 %v116
  %v459 = vunpack.c.l.b16 %v117
  %v460 = vunpack.c.l.b16 %v118
  %v461 = vunpack.c.l.b16 %v119
  %v462 = vunpack.c.l.b16 %v120
  %v463 = vunpack.c.l.b16 %v121
  %v464 = vunpack.c.l.b16 %v122
  %v465 = vunpack.c.l.b16 %v123
  %v466 = vunpack.c.l.b16 %v124
  %v467 = vunpack.c.l.b16 %v125
  %v468 = vunpack.c.l.b16 %v126
  %v469 = vunpack.c.l.b16 %v127
  %v470 = vunpack.c.l.b16 %v128
  %v471 = vunpack.c.l.b16 %v129
  %v472 = vunpack.c.l.b16 %v130
  %v473 = vunpack.c.l.b16 %v131
  %v474 = vunpack.c.l.b16 %v132
  %v475 = vunpack.c.l.b16 %v133
  %v476 = vunpack.c.l.b16 %v134
  %v477 = vunpack.c.l.b16 %v135
  %v478 = vunpack.c.l.b16 %v136
  %v479 = vunpack.c.l.b16 %v137
  %v480 = vunpack.c.l.b16 %v138
  %v481 = vunpack.c.l.b16 %v139
  %v482 = vunpack.c.l.b16 %v140
  %v483 = vunpack.c.l.b16 %v141
  %v484 = vunpack.c.l.b16 %v142
  %v485 = vunpack.c.l.b16 %v143
  %v486 = vunpack.c.l.b16 %v144
  %v487 = vunpack.c.l.b16 %v145
  %v488 = vunpack.c.l.b16 %v146
  %v489 = vunpack.c.l.b16 %v147
  %v490 = vunpack.c.l.b16 %v148
  %v491 = vunpack.c.l.b16 %v149
  %v492 = vunpack.c.l.b16 %v150
  %v493 = vunpack.c.l.b16 %v151
  %v494 = vunpack.c.l.b16 %v152
  %v495 = vunpack.c.l.b16 %v153
  %v496 = vunpack.c.l.b16 %v154
  %v497 = vunpack.c.l.b16 %v155
  %v498 = vunpack.c.l.b16 %v156
  %v499 = vunpack.c.l.b16 %v157
  %v500 = vunpack.c.l.b16 %v158
  %v501 = vunpack.c.l.b16 %v159
  %v502 = vunpack.c.l.b16 %v160
  %v503 = vunpack.c.l.b16 %v161
  %v504 = vunpack.c.l.b16 %v162
  %v505 = vunpack.c.l.b16 %v163
  %v506 = vunpack.c.l.b16 %v164
  %v507 = vunpack.c.l.b16 %v165
  %v508 = vpack.c.b16 %v445, %v444
  %v509 = vpack.c.b16 %v447, %v446
  %v510 = vpack.c.b16 %v449, %v448
  %v511 = vpack.c.b16 %v451, %v450
  %v512 = vpack.c.b16 %v453, %v452
  %v513 = vpack.c.b16 %v455, %v454
  %v514 = vpack.c.b16 %v457, %v456
  %v515 = vpack.c.b16 %v459, %v458
  %v516 = vpack.c.b16 %v461, %v460
  %v517 = vpack.c.b16 %v463, %v462
  %v518 = vpack.c.b16 %v465, %v464
  %v519 = vpack.c.b16 %v467, %v466
  %v520 = vpack.c.b16 %v469, %v468
  %v521 = vpack.c.b16 %v471, %v470
  %v522 = vpack.c.b16 %v473, %v472
  %v523 = vpack.c.b16 %v475, %v474
  %v524 = vpack.c.b16 %v477, %v476
  %v525 = vpack.c.b16 %v479, %v478
  %v526 = vpack.c.b16 %v481, %v480
  %v527 = vpack.c.b16 %v483, %v482
  %v528 = vpack.c.b16 %v485, %v484
  %v529 = vpack.c.b16 %v487, %v486
  %v530 = vpack.c.b16 %v489, %v488
  %v531 = vpack.c.b16 %v491, %v490
  %v532 = vpack.c.b16 %v493, %v492
  %v533 = vpack.c.b16 %v495, %v494
  %v534 = vpack.c.b16 %v497, %v496
  %v535 = vpack.c.b16 %v499, %v498
  %v536 = vpack.c.b16 %v501, %v500
  %v537 = vpack.c.b16 %v503, %v502
  %v538 = vpack.c.b16 %v505, %v504
  %v539 = vpack.c.b16 %v507, %v506
  %572 = vmatprep.subr.bf16.mxu0 0
  %573 = vmatpush1.bf16.msra.mxu0 %v508
  %574 = vmatprep.subr.bf16.mxu0 0
  %575 = vmatpush1.bf16.msra.mxu0 %v509
  %576 = vmatprep.subr.bf16.mxu0 0
  %577 = vmatpush1.bf16.msra.mxu0 %v510
  %578 = vmatprep.subr.bf16.mxu0 0
  %579 = vmatpush1.bf16.msra.mxu0 %v511
  %580 = vmatprep.subr.bf16.mxu0 0
  %581 = vmatpush1.bf16.msra.mxu0 %v512
  %582 = vmatprep.subr.bf16.mxu0 0
  %583 = vmatpush1.bf16.msra.mxu0 %v513
  %584 = vmatprep.subr.bf16.mxu0 0
  %585 = vmatpush1.bf16.msra.mxu0 %v514
  %586 = vmatprep.subr.bf16.mxu0 0
  %587 = vmatpush1.bf16.msra.mxu0 %v515
  %588 = vmatprep.subr.bf16.mxu0 0
  %589 = vmatpush1.bf16.msra.mxu0 %v516
  %590 = vmatprep.subr.bf16.mxu0 0
  %591 = vmatpush1.bf16.msra.mxu0 %v517
  %592 = vmatprep.subr.bf16.mxu0 0
  %593 = vmatpush1.bf16.msra.mxu0 %v518
  %594 = vmatprep.subr.bf16.mxu0 0
  %595 = vmatpush1.bf16.msra.mxu0 %v519
  %596 = vmatprep.subr.bf16.mxu0 0
  %597 = vmatpush1.bf16.msra.mxu0 %v520
  %598 = vmatprep.subr.bf16.mxu0 0
  %599 = vmatpush1.bf16.msra.mxu0 %v521
  %600 = vmatprep.subr.bf16.mxu0 0
  %601 = vmatpush1.bf16.msra.mxu0 %v522
  %602 = vmatprep.subr.bf16.mxu0 0
  %603 = vmatpush1.bf16.msra.mxu0 %v523
  %604 = vmatprep.mubr.bf16.mxu0 %v293
  %605 = vmatmul.mubr.bf16.gmra.mrb[0].mxu0 %v292
  %v606 = vpop.f32.mrb[0].mxu0
  %v607 = vadd.f32 0.0, %v606
  %v608 = vpop.f32.mrb[0].mxu0
  %v609 = vpop.f32.mrb[0].mxu0
  %v610 = vadd.f32 0.0, %v609
  %v611 = vpop.f32.mrb[0].mxu0
  %612 = vmatprep.mubr.bf16.mxu0 %v297
  %613 = vmatmul.mubr.bf16.gmra.mrb[0].mxu0 %v296
  %v614 = vpop.f32.mrb[0].mxu0
  %v615 = vadd.f32 0.0, %v614
  %v616 = vpop.f32.mrb[0].mxu0
  %v617 = vpop.f32.mrb[0].mxu0
  %v618 = vadd.f32 0.0, %v617
  %v619 = vpop.f32.mrb[0].mxu0
  %620 = vmatprep.mubr.bf16.mxu0 %v301
  %621 = vmatmul.mubr.bf16.gmra.mrb[0].mxu0 %v300
  %v622 = vpop.f32.mrb[0].mxu0
  %v623 = vadd.f32 0.0, %v622
  %v624 = vpop.f32.mrb[0].mxu0
  %v625 = vpop.f32.mrb[0].mxu0
  %v626 = vadd.f32 0.0, %v625
  %v627 = vpop.f32.mrb[0].mxu0
  %628 = vmatprep.mubr.bf16.mxu0 %v305
  %629 = vmatmul.mubr.bf16.gmra.mrb[0].mxu0 %v304
  %v630 = vpop.f32.mrb[0].mxu0
  %v631 = vadd.f32 0.0, %v630
  %v632 = vpop.f32.mrb[0].mxu0
  %v633 = vpop.f32.mrb[0].mxu0
  %v634 = vadd.f32 0.0, %v633
  %v635 = vpop.f32.mrb[0].mxu0
  %636 = vmatprep.mubr.bf16.mxu0 %v309
  %637 = vmatmul.mubr.bf16.gmra.mrb[0].mxu0 %v308
  %v638 = vpop.f32.mrb[0].mxu0
  %v639 = vadd.f32 0.0, %v638
  %v640 = vpop.f32.mrb[0].mxu0
  %v641 = vpop.f32.mrb[0].mxu0
  %v642 = vadd.f32 0.0, %v641
  %v643 = vpop.f32.mrb[0].mxu0
  %644 = vmatprep.mubr.bf16.mxu0 %v313
  %645 = vmatmul.mubr.bf16.gmra.mrb[0].mxu0 %v312
  %v646 = vpop.f32.mrb[0].mxu0
  %v647 = vadd.f32 0.0, %v646
  %v648 = vpop.f32.mrb[0].mxu0
  %v649 = vpop.f32.mrb[0].mxu0
  %v650 = vadd.f32 0.0, %v649
  %v651 = vpop.f32.mrb[0].mxu0
  %652 = vmatprep.mubr.bf16.mxu0 %v317
  %653 = vmatmul.mubr.bf16.gmra.mrb[0].mxu0 %v316
  %v654 = vpop.f32.mrb[0].mxu0
  %v655 = vadd.f32 0.0, %v654
  %v656 = vpop.f32.mrb[0].mxu0
  %v657 = vpop.f32.mrb[0].mxu0
  %v658 = vadd.f32 0.0, %v657
  %v659 = vpop.f32.mrb[0].mxu0
  %660 = vmatprep.mubr.bf16.mxu0 %v321
  %661 = vmatmul.mubr.bf16.gmra.mrb[0].mxu0 %v320
  %v662 = vpop.f32.mrb[0].mxu0
  %v663 = vadd.f32 0.0, %v662
  %v664 = vpop.f32.mrb[0].mxu0
  %v665 = vpop.f32.mrb[0].mxu0
  %v666 = vadd.f32 0.0, %v665
  %v667 = vpop.f32.mrb[0].mxu0
  %668 = vmatprep.mubr.bf16.mxu0 %v325
  %669 = vmatmul.mubr.bf16.gmra.mrb[0].mxu0 %v324
  %v670 = vpop.f32.mrb[0].mxu0
  %v671 = vadd.f32 0.0, %v670
  %v672 = vpop.f32.mrb[0].mxu0
  %v673 = vpop.f32.mrb[0].mxu0
  %v674 = vadd.f32 0.0, %v673
  %v675 = vpop.f32.mrb[0].mxu0
  %676 = vmatprep.mubr.bf16.mxu0 %v329
  %677 = vmatmul.mubr.bf16.gmra.mrb[0].mxu0 %v328
  %v678 = vpop.f32.mrb[0].mxu0
  %v679 = vadd.f32 0.0, %v678
  %v680 = vpop.f32.mrb[0].mxu0
  %v681 = vpop.f32.mrb[0].mxu0
  %v682 = vadd.f32 0.0, %v681
  %v683 = vpop.f32.mrb[0].mxu0
  %684 = vmatprep.mubr.bf16.mxu0 %v333
  %685 = vmatmul.mubr.bf16.gmra.mrb[0].mxu0 %v332
  %v686 = vpop.f32.mrb[0].mxu0
  %v687 = vadd.f32 0.0, %v686
  %v688 = vpop.f32.mrb[0].mxu0
  %v689 = vpop.f32.mrb[0].mxu0
  %v690 = vpop.f32.mrb[0].mxu0
  %691 = vdwg.mxu0
  %692 = vmatprep.subr.bf16.mxu0 0
  %693 = vmatpush1.bf16.msra.mxu0 %v524
  %694 = vmatprep.subr.bf16.mxu0 0
  %695 = vmatpush1.bf16.msra.mxu0 %v525
  %696 = vmatprep.subr.bf16.mxu0 0
  %697 = vmatpush1.bf16.msra.mxu0 %v526
  %698 = vmatprep.subr.bf16.mxu0 0
  %699 = vmatpush1.bf16.msra.mxu0 %v527
  %700 = vmatprep.subr.bf16.mxu0 0
  %701 = vmatpush1.bf16.msra.mxu0 %v528
  %702 = vmatprep.subr.bf16.mxu0 0
  %703 = vmatpush1.bf16.msra.mxu0 %v529
  %704 = vmatprep.subr.bf16.mxu0 0
  %705 = vmatpush1.bf16.msra.mxu0 %v530
  %706 = vmatprep.subr.bf16.mxu0 0
  %707 = vmatpush1.bf16.msra.mxu0 %v531
  %708 = vmatprep.subr.bf16.mxu0 0
  %709 = vmatpush1.bf16.msra.mxu0 %v532
  %710 = vmatprep.subr.bf16.mxu0 0
  %711 = vmatpush1.bf16.msra.mxu0 %v533
  %712 = vmatprep.subr.bf16.mxu0 0
  %713 = vmatpush1.bf16.msra.mxu0 %v534
  %714 = vmatprep.subr.bf16.mxu0 0
  %715 = vmatpush1.bf16.msra.mxu0 %v535
  %716 = vmatprep.subr.bf16.mxu0 0
  %717 = vmatpush1.bf16.msra.mxu0 %v536
  %718 = vmatprep.subr.bf16.mxu0 0
  %719 = vmatpush1.bf16.msra.mxu0 %v537
  %720 = vmatprep.subr.bf16.mxu0 0
  %721 = vmatpush1.bf16.msra.mxu0 %v538
  %722 = vmatprep.subr.bf16.mxu0 0
  %723 = vmatpush1.bf16.msra.mxu0 %v539
  %724 = vmatprep.mubr.bf16.mxu0 %v295
  %725 = vmatmul.mubr.bf16.gmra.mrb[0].mxu0 %v294
  %v726 = vpop.f32.mrb[0].mxu0
  %v727 = vadd.f32 %v607, %v726
  %v728 = vpop.f32.mrb[0].mxu0
  %v729 = vpop.f32.mrb[0].mxu0
  %v730 = vadd.f32 %v610, %v729
  %v731 = vpop.f32.mrb[0].mxu0
  %732 = vmatprep.mubr.bf16.mxu0 %v299
  %733 = vmatmul.mubr.bf16.gmra.mrb[0].mxu0 %v298
  %v734 = vpop.f32.mrb[0].mxu0
  %v735 = vadd.f32 %v615, %v734
  %v736 = vpop.f32.mrb[0].mxu0
  %v737 = vpop.f32.mrb[0].mxu0
  %v738 = vadd.f32 %v618, %v737
  %v739 = vpop.f32.mrb[0].mxu0
  %740 = vmatprep.mubr.bf16.mxu0 %v303
  %741 = vmatmul.mubr.bf16.gmra.mrb[0].mxu0 %v302
  %v742 = vpop.f32.mrb[0].mxu0
  %v743 = vadd.f32 %v623, %v742
  %v744 = vpop.f32.mrb[0].mxu0
  %v745 = vpop.f32.mrb[0].mxu0
  %v746 = vadd.f32 %v626, %v745
  %v747 = vpop.f32.mrb[0].mxu0
  %748 = vmatprep.mubr.bf16.mxu0 %v307
  %749 = vmatmul.mubr.bf16.gmra.mrb[0].mxu0 %v306
  %v750 = vpop.f32.mrb[0].mxu0
  %v751 = vadd.f32 %v631, %v750
  %v752 = vpop.f32.mrb[0].mxu0
  %v753 = vpop.f32.mrb[0].mxu0
  %v754 = vadd.f32 %v634, %v753
  %v755 = vpop.f32.mrb[0].mxu0
  %756 = vmatprep.mubr.bf16.mxu0 %v311
  %757 = vmatmul.mubr.bf16.gmra.mrb[0].mxu0 %v310
  %v758 = vpop.f32.mrb[0].mxu0
  %v759 = vadd.f32 %v639, %v758
  %v760 = vpop.f32.mrb[0].mxu0
  %v761 = vpop.f32.mrb[0].mxu0
  %v762 = vadd.f32 %v642, %v761
  %v763 = vpop.f32.mrb[0].mxu0
  %764 = vmatprep.mubr.bf16.mxu0 %v315
  %765 = vmatmul.mubr.bf16.gmra.mrb[0].mxu0 %v314
  %v766 = vpop.f32.mrb[0].mxu0
  %v767 = vadd.f32 %v647, %v766
  %v768 = vpop.f32.mrb[0].mxu0
  %v769 = vpop.f32.mrb[0].mxu0
  %v770 = vadd.f32 %v650, %v769
  %v771 = vpop.f32.mrb[0].mxu0
  %772 = vmatprep.mubr.bf16.mxu0 %v319
  %773 = vmatmul.mubr.bf16.gmra.mrb[0].mxu0 %v318
  %v774 = vpop.f32.mrb[0].mxu0
  %v775 = vadd.f32 %v655, %v774
  %v776 = vpop.f32.mrb[0].mxu0
  %v777 = vpop.f32.mrb[0].mxu0
  %v778 = vadd.f32 %v658, %v777
  %v779 = vpop.f32.mrb[0].mxu0
  %780 = vmatprep.mubr.bf16.mxu0 %v323
  %781 = vmatmul.mubr.bf16.gmra.mrb[0].mxu0 %v322
  %v782 = vpop.f32.mrb[0].mxu0
  %v783 = vadd.f32 %v663, %v782
  %v784 = vpop.f32.mrb[0].mxu0
  %v785 = vpop.f32.mrb[0].mxu0
  %v786 = vadd.f32 %v666, %v785
  %v787 = vpop.f32.mrb[0].mxu0
  %788 = vmatprep.mubr.bf16.mxu0 %v327
  %789 = vmatmul.mubr.bf16.gmra.mrb[0].mxu0 %v326
  %v790 = vpop.f32.mrb[0].mxu0
  %v791 = vadd.f32 %v671, %v790
  %v792 = vpop.f32.mrb[0].mxu0
  %v793 = vpop.f32.mrb[0].mxu0
  %v794 = vadd.f32 %v674, %v793
  %v795 = vpop.f32.mrb[0].mxu0
  %796 = vmatprep.mubr.bf16.mxu0 %v331
  %797 = vmatmul.mubr.bf16.gmra.mrb[0].mxu0 %v330
  %v798 = vpop.f32.mrb[0].mxu0
  %v799 = vadd.f32 %v679, %v798
  %v800 = vpop.f32.mrb[0].mxu0
  %v801 = vpop.f32.mrb[0].mxu0
  %v802 = vadd.f32 %v682, %v801
  %v803 = vpop.f32.mrb[0].mxu0
  %804 = vmatprep.mubr.bf16.mxu0 %v335
  %805 = vmatmul.mubr.bf16.gmra.mrb[0].mxu0 %v334
  %v806 = vpop.f32.mrb[0].mxu0
  %v807 = vadd.f32 %v687, %v806
  %v808 = vpop.f32.mrb[0].mxu0
  %v809 = vpop.f32.mrb[0].mxu0
  %v810 = vpop.f32.mrb[0].mxu0
  %811 = vdwg.mxu0
  %v812 = vld [vmem:[%s2] sm:$0x1]
  %v814 = vlaneseq
  %v815 = vshrl.u32 %v814, 7
  %v816 = vsub.s32 0, %v815
  %v817 = vrot.slane %v812, %v816
  %v819 = vmul.f32 %v727, %v817
  %v820 = vmul.f32 %v730, %v817
  %v821 = vmul.f32 %v735, %v817
  %v822 = vmul.f32 %v738, %v817
  %v823 = vmul.f32 %v743, %v817
  %v824 = vmul.f32 %v746, %v817
  %v825 = vmul.f32 %v751, %v817
  %v826 = vmul.f32 %v754, %v817
  %v827 = vmul.f32 %v759, %v817
  %v828 = vmul.f32 %v762, %v817
  %v829 = vmul.f32 %v767, %v817
  %v830 = vmul.f32 %v770, %v817
  %v831 = vmul.f32 %v775, %v817
  %v832 = vmul.f32 %v778, %v817
  %v833 = vmul.f32 %v783, %v817
  %v834 = vmul.f32 %v786, %v817
  %v835 = vmul.f32 %v791, %v817
  %v836 = vmul.f32 %v794, %v817
  %v837 = vmul.f32 %v799, %v817
  %v838 = vmul.f32 %v802, %v817
  %v839 = vmul.f32 %v807, %v817
  %v840 = vld [vmem:[%s3] sm:$0x1]
  %v842 = vlaneseq
  %v843 = vshrl.u32 %v842, 7
  %v844 = vsub.s32 0, %v843
  %v845 = vrot.slane %v840, %v844
  %v847 = vadd.f32 %v819, %v845
  %v848 = vadd.f32 %v820, %v845
  %v849 = vadd.f32 %v821, %v845
  %v850 = vadd.f32 %v822, %v845
  %v851 = vadd.f32 %v823, %v845
  %v852 = vadd.f32 %v824, %v845
  %v853 = vadd.f32 %v825, %v845
  %v854 = vadd.f32 %v826, %v845
  %v855 = vadd.f32 %v827, %v845
  %v856 = vadd.f32 %v828, %v845
  %v857 = vadd.f32 %v829, %v845
  %v858 = vadd.f32 %v830, %v845
  %v859 = vadd.f32 %v831, %v845
  %v860 = vadd.f32 %v832, %v845
  %v861 = vadd.f32 %v833, %v845
  %v862 = vadd.f32 %v834, %v845
  %v863 = vadd.f32 %v835, %v845
  %v864 = vadd.f32 %v836, %v845
  %v865 = vadd.f32 %v837, %v845
  %v866 = vadd.f32 %v838, %v845
  %v867 = vadd.f32 %v839, %v845
  %v868 = vpack.c.bf16 %v848, %v847
  %v869 = vpack.c.bf16 %v850, %v849
  %v870 = vpack.c.bf16 %v852, %v851
  %v871 = vpack.c.bf16 %v854, %v853
  %v872 = vpack.c.bf16 %v856, %v855
  %v873 = vpack.c.bf16 %v858, %v857
  %v874 = vpack.c.bf16 %v860, %v859
  %v875 = vpack.c.bf16 %v862, %v861
  %v876 = vpack.c.bf16 %v864, %v863
  %v877 = vpack.c.bf16 %v866, %v865
  %v878 = vpack.c.bf16 %v867, %v867
  %v890 = vunpack.c.l.b16 %v868
  %v891 = vunpack.c.h.b16 %v868
  %v892 = vunpack.c.l.b16 %v869
  %v893 = vunpack.c.h.b16 %v869
  %v894 = vunpack.c.l.b16 %v870
  %v895 = vunpack.c.h.b16 %v870
  %v896 = vunpack.c.l.b16 %v871
  %v897 = vunpack.c.h.b16 %v871
  %v898 = vunpack.c.l.b16 %v872
  %v899 = vunpack.c.h.b16 %v872
  %v900 = vunpack.c.l.b16 %v873
  %v901 = vunpack.c.h.b16 %v873
  %v902 = vunpack.c.l.b16 %v874
  %v903 = vunpack.c.h.b16 %v874
  %v904 = vunpack.c.l.b16 %v875
  %v905 = vunpack.c.h.b16 %v875
  %v906 = vunpack.c.l.b16 %v876
  %v907 = vunpack.c.h.b16 %v876
  %v908 = vunpack.c.l.b16 %v877
  %v909 = vunpack.c.h.b16 %v877
  %v910 = vunpack.c.l.b16 %v878
  %v911 = vpack.c.b16 %v890, %v890
  %v912 = vpack.c.b16 %v891, %v891
  %v913 = vpack.c.b16 %v892, %v892
  %v914 = vpack.c.b16 %v893, %v893
  %v915 = vpack.c.b16 %v894, %v894
  %v916 = vpack.c.b16 %v895, %v895
  %v917 = vpack.c.b16 %v896, %v896
  %v918 = vpack.c.b16 %v897, %v897
  %v919 = vpack.c.b16 %v898, %v898
  %v920 = vpack.c.b16 %v899, %v899
  %v921 = vpack.c.b16 %v900, %v900
  %v922 = vpack.c.b16 %v901, %v901
  %v923 = vpack.c.b16 %v902, %v902
  %v924 = vpack.c.b16 %v903, %v903
  %v925 = vpack.c.b16 %v904, %v904
  %v926 = vpack.c.b16 %v905, %v905
  %v927 = vpack.c.b16 %v906, %v906
  %v928 = vpack.c.b16 %v907, %v907
  %v929 = vpack.c.b16 %v908, %v908
  %v930 = vpack.c.b16 %v909, %v909
  %v931 = vpack.c.b16 %v910, %v910
  %953 = vst [vmem:[%s4] sm:$0xf] %v911
  %954 = vst [vmem:[%s4 + $0x4] sm:$0xf] %v912
  %955 = vst [vmem:[%s4 + $0x8] sm:$0xf] %v913
  %956 = vst [vmem:[%s4 + $0xc] sm:$0xf] %v914
  %957 = vst [vmem:[%s4 + $0x10] sm:$0xf] %v915
  %958 = vst [vmem:[%s4 + $0x14] sm:$0xf] %v916
  %959 = vst [vmem:[%s4 + $0x18] sm:$0xf] %v917
  %960 = vst [vmem:[%s4 + $0x1c] sm:$0xf] %v918
  %961 = vst [vmem:[%s4 + $0x20] sm:$0xf] %v919
  %962 = vst [vmem:[%s4 + $0x24] sm:$0xf] %v920
  %963 = vst [vmem:[%s4 + $0x28] sm:$0xf] %v921
  %964 = vst [vmem:[%s4 + $0x2c] sm:$0xf] %v922
  %965 = vst [vmem:[%s4 + $0x30] sm:$0xf] %v923
  %966 = vst [vmem:[%s4 + $0x34] sm:$0xf] %v924
  %967 = vst [vmem:[%s4 + $0x38] sm:$0xf] %v925
  %968 = vst [vmem:[%s4 + $0x3c] sm:$0xf] %v926
  %969 = vst [vmem:[%s4 + $0x40] sm:$0xf] %v927
  %970 = vst [vmem:[%s4 + $0x44] sm:$0xf] %v928
  %971 = vst [vmem:[%s4 + $0x48] sm:$0xf] %v929
  %972 = vst [vmem:[%s4 + $0x4c] sm:$0xf] %v930
  %973 = vst [vmem:[%s4 + $0x50] sm:$0x1] %v931
  // Predicated region
  $region18: #{decoder_forward.10} parent=0 // pred_check
    _
  $region19: #{decoder_forward.10} parent=0 // pred_check_branch
    %975 = sbr.rel (0) target = $region21
  $region20: #{decoder_forward.10} parent=0 // pred_region
    _
  $region21: #{decoder_forward.10} parent=0 // pred_fallthru
    _
  // Predicated region
  $region22: #{decoder_forward.10} parent=0 // pred_check
    _
  $region23: #{decoder_forward.10} parent=0 // pred_check_branch
    %977 = sbr.rel (0) target = $region25
  $region24: #{decoder_forward.10} parent=0 // pred_region
    _
  $region25: #{decoder_forward.10} parent=0 // pred_fallthru
    _

// kernel: decoder_forward.11
$region0: #{decoder_forward.11}
  #allocation0 [shape = 'u32[]', space=smem, size = 0x4, offset = 0x4, fixed_abs, tag = 'smem constant byte address 0x4 - core index']
  #allocation1 [shape = 'u32[144,128]{1,0:T(1,128)}', space=vmem, size = 0x12000, scoped, tag = 'internal scratch']
  %s0 = inlined_call_operand.vmem [shape: bf16[578,256], index: 0, kind: input, shape index: {}]
  %s1 = inlined_call_operand.vmem [shape: bf16[256,64], index: 1, kind: input, shape index: {}]
  %s2 = inlined_call_operand.vmem [shape: f32[1,64], index: 2, kind: input, shape index: {}]
  %s3 = inlined_call_operand.vmem [shape: f32[1,64], index: 3, kind: input, shape index: {}]
  %s4 = inlined_call_operand.vmem [shape: bf16[578,64], index: 4, kind: output, shape index: {}]
  %s5 = sld [smem:[#allocation0]]
  $region26: #{decoder_forward.11} parent=0
    _
  %s7 = ssub.s32 1, %s5
  %s8 = scalar_select 0, %s7, %s5
  // Predicated region
  $region2: #{decoder_forward.11} parent=0 // pred_check
    _
  $region3: #{decoder_forward.11} parent=0 // pred_check_branch
    %10 = sbr.rel (0) target = $region5
  $region4: #{decoder_forward.11} parent=0 // pred_region
    _
  $region5: #{decoder_forward.11} parent=0 // pred_fallthru
    _
  // Predicated region
  $region6: #{decoder_forward.11} parent=0 // pred_check
    _
  $region7: #{decoder_forward.11} parent=0 // pred_check_branch
    %12 = sbr.rel (0) target = $region9
  $region8: #{decoder_forward.11} parent=0 // pred_region
    _
  $region9: #{decoder_forward.11} parent=0 // pred_fallthru
    _
  // Predicated region
  $region10: #{decoder_forward.11} parent=0 // pred_check
    _
  $region11: #{decoder_forward.11} parent=0 // pred_check_branch
    %14 = sbr.rel (0) target = $region13
  $region12: #{decoder_forward.11} parent=0 // pred_region
    _
  $region13: #{decoder_forward.11} parent=0 // pred_fallthru
    _
  // Predicated region
  $region14: #{decoder_forward.11} parent=0 // pred_check
    _
  $region15: #{decoder_forward.11} parent=0 // pred_check_branch
    %16 = sbr.rel (0) target = $region17
  $region16: #{decoder_forward.11} parent=0 // pred_region
    _
  $region17: #{decoder_forward.11} parent=0 // pred_fallthru
    _
  %v18 = vld [vmem:[%s0] sm:$0xff]
  %v19 = vld [vmem:[%s0 + $0x8] sm:$0xff]
  %v20 = vld [vmem:[%s0 + $0x10] sm:$0xff]
  %v21 = vld [vmem:[%s0 + $0x18] sm:$0xff]
  %v22 = vld [vmem:[%s0 + $0x20] sm:$0xff]
  %v23 = vld [vmem:[%s0 + $0x28] sm:$0xff]
  %v24 = vld [vmem:[%s0 + $0x30] sm:$0xff]
  %v25 = vld [vmem:[%s0 + $0x38] sm:$0xff]
  %v26 = vld [vmem:[%s0 + $0x40] sm:$0xff]
  %v27 = vld [vmem:[%s0 + $0x48] sm:$0xff]
  %v28 = vld [vmem:[%s0 + $0x50] sm:$0xff]
  %v29 = vld [vmem:[%s0 + $0x58] sm:$0xff]
  %v30 = vld [vmem:[%s0 + $0x60] sm:$0xff]
  %v31 = vld [vmem:[%s0 + $0x68] sm:$0xff]
  %v32 = vld [vmem:[%s0 + $0x70] sm:$0xff]
  %v33 = vld [vmem:[%s0 + $0x78] sm:$0xff]
  %v34 = vld [vmem:[%s0 + $0x80] sm:$0xff]
  %v35 = vld [vmem:[%s0 + $0x88] sm:$0xff]
  %v36 = vld [vmem:[%s0 + $0x90] sm:$0xff]
  %v37 = vld [vmem:[%s0 + $0x98] sm:$0xff]
  %v38 = vld [vmem:[%s0 + $0xa0] sm:$0xff]
  %v39 = vld [vmem:[%s0 + $0xa8] sm:$0xff]
  %v40 = vld [vmem:[%s0 + $0xb0] sm:$0xff]
  %v41 = vld [vmem:[%s0 + $0xb8] sm:$0xff]
  %v42 = vld [vmem:[%s0 + $0xc0] sm:$0xff]
  %v43 = vld [vmem:[%s0 + $0xc8] sm:$0xff]
  %v44 = vld [vmem:[%s0 + $0xd0] sm:$0xff]
  %v45 = vld [vmem:[%s0 + $0xd8] sm:$0xff]
  %v46 = vld [vmem:[%s0 + $0xe0] sm:$0xff]
  %v47 = vld [vmem:[%s0 + $0xe8] sm:$0xff]
  %v48 = vld [vmem:[%s0 + $0xf0] sm:$0xff]
  %v49 = vld [vmem:[%s0 + $0xf8] sm:$0xff]
  %v50 = vld [vmem:[%s0 + $0x100] sm:$0xff]
  %v51 = vld [vmem:[%s0 + $0x108] sm:$0xff]
  %v52 = vld [vmem:[%s0 + $0x110] sm:$0xff]
  %v53 = vld [vmem:[%s0 + $0x118] sm:$0xff]
  %v54 = vld [vmem:[%s0 + $0x120] sm:$0xff]
  %v55 = vld [vmem:[%s0 + $0x128] sm:$0xff]
  %v56 = vld [vmem:[%s0 + $0x130] sm:$0xff]
  %v57 = vld [vmem:[%s0 + $0x138] sm:$0xff]
  %v58 = vld [vmem:[%s0 + $0x140] sm:$0xff]
  %v59 = vld [vmem:[%s0 + $0x148] sm:$0xff]
  %v60 = vld [vmem:[%s0 + $0x150] sm:$0xff]
  %v61 = vld [vmem:[%s0 + $0x158] sm:$0xff]
  %v62 = vld [vmem:[%s0 + $0x160] sm:$0xff]
  %v63 = vld [vmem:[%s0 + $0x168] sm:$0xff]
  %v64 = vld [vmem:[%s0 + $0x170] sm:$0xff]
  %v65 = vld [vmem:[%s0 + $0x178] sm:$0xff]
  %v66 = vld [vmem:[%s0 + $0x180] sm:$0xff]
  %v67 = vld [vmem:[%s0 + $0x188] sm:$0xff]
  %v68 = vld [vmem:[%s0 + $0x190] sm:$0xff]
  %v69 = vld [vmem:[%s0 + $0x198] sm:$0xff]
  %v70 = vld [vmem:[%s0 + $0x1a0] sm:$0xff]
  %v71 = vld [vmem:[%s0 + $0x1a8] sm:$0xff]
  %v72 = vld [vmem:[%s0 + $0x1b0] sm:$0xff]
  %v73 = vld [vmem:[%s0 + $0x1b8] sm:$0xff]
  %v74 = vld [vmem:[%s0 + $0x1c0] sm:$0xff]
  %v75 = vld [vmem:[%s0 + $0x1c8] sm:$0xff]
  %v76 = vld [vmem:[%s0 + $0x1d0] sm:$0xff]
  %v77 = vld [vmem:[%s0 + $0x1d8] sm:$0xff]
  %v78 = vld [vmem:[%s0 + $0x1e0] sm:$0xff]
  %v79 = vld [vmem:[%s0 + $0x1e8] sm:$0xff]
  %v80 = vld [vmem:[%s0 + $0x1f0] sm:$0xff]
  %v81 = vld [vmem:[%s0 + $0x1f8] sm:$0xff]
  %v82 = vld [vmem:[%s0 + $0x200] sm:$0xff]
  %v83 = vld [vmem:[%s0 + $0x208] sm:$0xff]
  %v84 = vld [vmem:[%s0 + $0x210] sm:$0xff]
  %v85 = vld [vmem:[%s0 + $0x218] sm:$0xff]
  %v86 = vld [vmem:[%s0 + $0x220] sm:$0xff]
  %v87 = vld [vmem:[%s0 + $0x228] sm:$0xff]
  %v88 = vld [vmem:[%s0 + $0x230] sm:$0xff]
  %v89 = vld [vmem:[%s0 + $0x238] sm:$0xff]
  %v90 = vld [vmem:[%s0 + $0x240] sm:$0x11]
  %v91 = vmax.bf16 %v18, 0
  %v92 = vmax.bf16 %v19, 0
  %v93 = vmax.bf16 %v20, 0
  %v94 = vmax.bf16 %v21, 0
  %v95 = vmax.bf16 %v22, 0
  %v96 = vmax.bf16 %v23, 0
  %v97 = vmax.bf16 %v24, 0
  %v98 = vmax.bf16 %v25, 0
  %v99 = vmax.bf16 %v26, 0
  %v100 = vmax.bf16 %v27, 0
  %v101 = vmax.bf16 %v28, 0
  %v102 = vmax.bf16 %v29, 0
  %v103 = vmax.bf16 %v30, 0
  %v104 = vmax.bf16 %v31, 0
  %v105 = vmax.bf16 %v32, 0
  %v106 = vmax.bf16 %v33, 0
  %v107 = vmax.bf16 %v34, 0
  %v108 = vmax.bf16 %v35, 0
  %v109 = vmax.bf16 %v36, 0
  %v110 = vmax.bf16 %v37, 0
  %v111 = vmax.bf16 %v38, 0
  %v112 = vmax.bf16 %v39, 0
  %v113 = vmax.bf16 %v40, 0
  %v114 = vmax.bf16 %v41, 0
  %v115 = vmax.bf16 %v42, 0
  %v116 = vmax.bf16 %v43, 0
  %v117 = vmax.bf16 %v44, 0
  %v118 = vmax.bf16 %v45, 0
  %v119 = vmax.bf16 %v46, 0
  %v120 = vmax.bf16 %v47, 0
  %v121 = vmax.bf16 %v48, 0
  %v122 = vmax.bf16 %v49, 0
  %v123 = vmax.bf16 %v50, 0
  %v124 = vmax.bf16 %v51, 0
  %v125 = vmax.bf16 %v52, 0
  %v126 = vmax.bf16 %v53, 0
  %v127 = vmax.bf16 %v54, 0
  %v128 = vmax.bf16 %v55, 0
  %v129 = vmax.bf16 %v56, 0
  %v130 = vmax.bf16 %v57, 0
  %v131 = vmax.bf16 %v58, 0
  %v132 = vmax.bf16 %v59, 0
  %v133 = vmax.bf16 %v60, 0
  %v134 = vmax.bf16 %v61, 0
  %v135 = vmax.bf16 %v62, 0
  %v136 = vmax.bf16 %v63, 0
  %v137 = vmax.bf16 %v64, 0
  %v138 = vmax.bf16 %v65, 0
  %v139 = vmax.bf16 %v66, 0
  %v140 = vmax.bf16 %v67, 0
  %v141 = vmax.bf16 %v68, 0
  %v142 = vmax.bf16 %v69, 0
  %v143 = vmax.bf16 %v70, 0
  %v144 = vmax.bf16 %v71, 0
  %v145 = vmax.bf16 %v72, 0
  %v146 = vmax.bf16 %v73, 0
  %v147 = vmax.bf16 %v74, 0
  %v148 = vmax.bf16 %v75, 0
  %v149 = vmax.bf16 %v76, 0
  %v150 = vmax.bf16 %v77, 0
  %v151 = vmax.bf16 %v78, 0
  %v152 = vmax.bf16 %v79, 0
  %v153 = vmax.bf16 %v80, 0
  %v154 = vmax.bf16 %v81, 0
  %v155 = vmax.bf16 %v82, 0
  %v156 = vmax.bf16 %v83, 0
  %v157 = vmax.bf16 %v84, 0
  %v158 = vmax.bf16 %v85, 0
  %v159 = vmax.bf16 %v86, 0
  %v160 = vmax.bf16 %v87, 0
  %v161 = vmax.bf16 %v88, 0
  %v162 = vmax.bf16 %v89, 0
  %v163 = vmax.bf16 %v90, 0
  %v164 = vld [vmem:[%s1] sm:$0xf]
  %v165 = vld [vmem:[%s1 + $0x4] sm:$0xf]
  %v166 = vld [vmem:[%s1 + $0x8] sm:$0xf]
  %v167 = vld [vmem:[%s1 + $0xc] sm:$0xf]
  %v168 = vld [vmem:[%s1 + $0x10] sm:$0xf]
  %v169 = vld [vmem:[%s1 + $0x14] sm:$0xf]
  %v170 = vld [vmem:[%s1 + $0x18] sm:$0xf]
  %v171 = vld [vmem:[%s1 + $0x1c] sm:$0xf]
  %v172 = vld [vmem:[%s1 + $0x20] sm:$0xf]
  %v173 = vld [vmem:[%s1 + $0x24] sm:$0xf]
  %v174 = vld [vmem:[%s1 + $0x28] sm:$0xf]
  %v175 = vld [vmem:[%s1 + $0x2c] sm:$0xf]
  %v176 = vld [vmem:[%s1 + $0x30] sm:$0xf]
  %v177 = vld [vmem:[%s1 + $0x34] sm:$0xf]
  %v178 = vld [vmem:[%s1 + $0x38] sm:$0xf]
  %v179 = vld [vmem:[%s1 + $0x3c] sm:$0xf]
  %v180 = vld [vmem:[%s1 + $0x40] sm:$0xf]
  %v181 = vld [vmem:[%s1 + $0x44] sm:$0xf]
  %v182 = vld [vmem:[%s1 + $0x48] sm:$0xf]
  %v183 = vld [vmem:[%s1 + $0x4c] sm:$0xf]
  %v184 = vld [vmem:[%s1 + $0x50] sm:$0xf]
  %v185 = vld [vmem:[%s1 + $0x54] sm:$0xf]
  %v186 = vld [vmem:[%s1 + $0x58] sm:$0xf]
  %v187 = vld [vmem:[%s1 + $0x5c] sm:$0xf]
  %v188 = vld [vmem:[%s1 + $0x60] sm:$0xf]
  %v189 = vld [vmem:[%s1 + $0x64] sm:$0xf]
  %v190 = vld [vmem:[%s1 + $0x68] sm:$0xf]
  %v191 = vld [vmem:[%s1 + $0x6c] sm:$0xf]
  %v192 = vld [vmem:[%s1 + $0x70] sm:$0xf]
  %v193 = vld [vmem:[%s1 + $0x74] sm:$0xf]
  %v194 = vld [vmem:[%s1 + $0x78] sm:$0xf]
  %v195 = vld [vmem:[%s1 + $0x7c] sm:$0xf]
  %v269 = vunpack.c.l.b16 %v91
  %v270 = vunpack.c.h.b16 %v91
  %v271 = vunpack.c.l.b16 %v92
  %v272 = vunpack.c.h.b16 %v92
  %v273 = vunpack.c.l.b16 %v93
  %v274 = vunpack.c.h.b16 %v93
  %v275 = vunpack.c.l.b16 %v94
  %v276 = vunpack.c.h.b16 %v94
  %v277 = vunpack.c.l.b16 %v95
  %v278 = vunpack.c.h.b16 %v95
  %v279 = vunpack.c.l.b16 %v96
  %v280 = vunpack.c.h.b16 %v96
  %v281 = vunpack.c.l.b16 %v97
  %v282 = vunpack.c.h.b16 %v97
  %v283 = vunpack.c.l.b16 %v98
  %v284 = vunpack.c.h.b16 %v98
  %v285 = vunpack.c.l.b16 %v99
  %v286 = vunpack.c.h.b16 %v99
  %v287 = vunpack.c.l.b16 %v100
  %v288 = vunpack.c.h.b16 %v100
  %v289 = vunpack.c.l.b16 %v101
  %v290 = vunpack.c.h.b16 %v101
  %v291 = vunpack.c.l.b16 %v102
  %v292 = vunpack.c.h.b16 %v102
  %v293 = vunpack.c.l.b16 %v103
  %v294 = vunpack.c.h.b16 %v103
  %v295 = vunpack.c.l.b16 %v104
  %v296 = vunpack.c.h.b16 %v104
  %v297 = vunpack.c.l.b16 %v105
  %v298 = vunpack.c.h.b16 %v105
  %v299 = vunpack.c.l.b16 %v106
  %v300 = vunpack.c.h.b16 %v106
  %v301 = vunpack.c.l.b16 %v107
  %v302 = vunpack.c.h.b16 %v107
  %v303 = vunpack.c.l.b16 %v108
  %v304 = vunpack.c.h.b16 %v108
  %v305 = vunpack.c.l.b16 %v109
  %v306 = vunpack.c.h.b16 %v109
  %v307 = vunpack.c.l.b16 %v110
  %v308 = vunpack.c.h.b16 %v110
  %v309 = vunpack.c.l.b16 %v111
  %v310 = vunpack.c.h.b16 %v111
  %v311 = vunpack.c.l.b16 %v112
  %v312 = vunpack.c.h.b16 %v112
  %v313 = vunpack.c.l.b16 %v113
  %v314 = vunpack.c.h.b16 %v113
  %v315 = vunpack.c.l.b16 %v114
  %v316 = vunpack.c.h.b16 %v114
  %v317 = vunpack.c.l.b16 %v115
  %v318 = vunpack.c.h.b16 %v115
  %v319 = vunpack.c.l.b16 %v116
  %v320 = vunpack.c.h.b16 %v116
  %v321 = vunpack.c.l.b16 %v117
  %v322 = vunpack.c.h.b16 %v117
  %v323 = vunpack.c.l.b16 %v118
  %v324 = vunpack.c.h.b16 %v118
  %v325 = vunpack.c.l.b16 %v119
  %v326 = vunpack.c.h.b16 %v119
  %v327 = vunpack.c.l.b16 %v120
  %v328 = vunpack.c.h.b16 %v120
  %v329 = vunpack.c.l.b16 %v121
  %v330 = vunpack.c.h.b16 %v121
  %v331 = vunpack.c.l.b16 %v122
  %v332 = vunpack.c.h.b16 %v122
  %v333 = vunpack.c.l.b16 %v123
  %v334 = vunpack.c.h.b16 %v123
  %v335 = vunpack.c.l.b16 %v124
  %v336 = vunpack.c.h.b16 %v124
  %v337 = vunpack.c.l.b16 %v125
  %v338 = vunpack.c.h.b16 %v125
  %v339 = vunpack.c.l.b16 %v126
  %v340 = vunpack.c.h.b16 %v126
  %v341 = vunpack.c.l.b16 %v127
  %v342 = vunpack.c.h.b16 %v127
  %v343 = vunpack.c.l.b16 %v128
  %v344 = vunpack.c.h.b16 %v128
  %v345 = vunpack.c.l.b16 %v129
  %v346 = vunpack.c.h.b16 %v129
  %v347 = vunpack.c.l.b16 %v130
  %v348 = vunpack.c.h.b16 %v130
  %v349 = vunpack.c.l.b16 %v131
  %v350 = vunpack.c.h.b16 %v131
  %v351 = vunpack.c.l.b16 %v132
  %v352 = vunpack.c.h.b16 %v132
  %v353 = vunpack.c.l.b16 %v133
  %v354 = vunpack.c.h.b16 %v133
  %v355 = vunpack.c.l.b16 %v134
  %v356 = vunpack.c.h.b16 %v134
  %v357 = vunpack.c.l.b16 %v135
  %v358 = vunpack.c.h.b16 %v135
  %v359 = vunpack.c.l.b16 %v136
  %v360 = vunpack.c.h.b16 %v136
  %v361 = vunpack.c.l.b16 %v137
  %v362 = vunpack.c.h.b16 %v137
  %v363 = vunpack.c.l.b16 %v138
  %v364 = vunpack.c.h.b16 %v138
  %v365 = vunpack.c.l.b16 %v139
  %v366 = vunpack.c.h.b16 %v139
  %v367 = vunpack.c.l.b16 %v140
  %v368 = vunpack.c.h.b16 %v140
  %v369 = vunpack.c.l.b16 %v141
  %v370 = vunpack.c.h.b16 %v141
  %v371 = vunpack.c.l.b16 %v142
  %v372 = vunpack.c.h.b16 %v142
  %v373 = vunpack.c.l.b16 %v143
  %v374 = vunpack.c.h.b16 %v143
  %v375 = vunpack.c.l.b16 %v144
  %v376 = vunpack.c.h.b16 %v144
  %v377 = vunpack.c.l.b16 %v145
  %v378 = vunpack.c.h.b16 %v145
  %v379 = vunpack.c.l.b16 %v146
  %v380 = vunpack.c.h.b16 %v146
  %v381 = vunpack.c.l.b16 %v147
  %v382 = vunpack.c.h.b16 %v147
  %v383 = vunpack.c.l.b16 %v148
  %v384 = vunpack.c.h.b16 %v148
  %v385 = vunpack.c.l.b16 %v149
  %v386 = vunpack.c.h.b16 %v149
  %v387 = vunpack.c.l.b16 %v150
  %v388 = vunpack.c.h.b16 %v150
  %v389 = vunpack.c.l.b16 %v151
  %v390 = vunpack.c.h.b16 %v151
  %v391 = vunpack.c.l.b16 %v152
  %v392 = vunpack.c.h.b16 %v152
  %v393 = vunpack.c.l.b16 %v153
  %v394 = vunpack.c.h.b16 %v153
  %v395 = vunpack.c.l.b16 %v154
  %v396 = vunpack.c.h.b16 %v154
  %v397 = vunpack.c.l.b16 %v155
  %v398 = vunpack.c.h.b16 %v155
  %v399 = vunpack.c.l.b16 %v156
  %v400 = vunpack.c.h.b16 %v156
  %v401 = vunpack.c.l.b16 %v157
  %v402 = vunpack.c.h.b16 %v157
  %v403 = vunpack.c.l.b16 %v158
  %v404 = vunpack.c.h.b16 %v158
  %v405 = vunpack.c.l.b16 %v159
  %v406 = vunpack.c.h.b16 %v159
  %v407 = vunpack.c.l.b16 %v160
  %v408 = vunpack.c.h.b16 %v160
  %v409 = vunpack.c.l.b16 %v161
  %v410 = vunpack.c.h.b16 %v161
  %v411 = vunpack.c.l.b16 %v162
  %v412 = vunpack.c.h.b16 %v162
  %v413 = vunpack.c.l.b16 %v163
  %v414 = vunpack.c.h.b16 %v163
  %v415 = vpack.c.b16 %v271, %v269
  %v416 = vpack.c.b16 %v272, %v270
  %v417 = vpack.c.b16 %v275, %v273
  %v418 = vpack.c.b16 %v276, %v274
  %v419 = vpack.c.b16 %v279, %v277
  %v420 = vpack.c.b16 %v280, %v278
  %v421 = vpack.c.b16 %v283, %v281
  %v422 = vpack.c.b16 %v284, %v282
  %v423 = vpack.c.b16 %v287, %v285
  %v424 = vpack.c.b16 %v288, %v286
  %v425 = vpack.c.b16 %v291, %v289
  %v426 = vpack.c.b16 %v292, %v290
  %v427 = vpack.c.b16 %v295, %v293
  %v428 = vpack.c.b16 %v296, %v294
  %v429 = vpack.c.b16 %v299, %v297
  %v430 = vpack.c.b16 %v300, %v298
  %v431 = vpack.c.b16 %v303, %v301
  %v432 = vpack.c.b16 %v304, %v302
  %v433 = vpack.c.b16 %v307, %v305
  %v434 = vpack.c.b16 %v308, %v306
  %v435 = vpack.c.b16 %v311, %v309
  %v436 = vpack.c.b16 %v312, %v310
  %v437 = vpack.c.b16 %v315, %v313
  %v438 = vpack.c.b16 %v316, %v314
  %v439 = vpack.c.b16 %v319, %v317
  %v440 = vpack.c.b16 %v320, %v318
  %v441 = vpack.c.b16 %v323, %v321
  %v442 = vpack.c.b16 %v324, %v322
  %v443 = vpack.c.b16 %v327, %v325
  %v444 = vpack.c.b16 %v328, %v326
  %v445 = vpack.c.b16 %v331, %v329
  %v446 = vpack.c.b16 %v332, %v330
  %v447 = vpack.c.b16 %v335, %v333
  %v448 = vpack.c.b16 %v336, %v334
  %v449 = vpack.c.b16 %v339, %v337
  %v450 = vpack.c.b16 %v340, %v338
  %v451 = vpack.c.b16 %v343, %v341
  %v452 = vpack.c.b16 %v344, %v342
  %v453 = vpack.c.b16 %v347, %v345
  %v454 = vpack.c.b16 %v348, %v346
  %v455 = vpack.c.b16 %v351, %v349
  %v456 = vpack.c.b16 %v352, %v350
  %v457 = vpack.c.b16 %v355, %v353
  %v458 = vpack.c.b16 %v356, %v354
  %v459 = vpack.c.b16 %v359, %v357
  %v460 = vpack.c.b16 %v360, %v358
  %v461 = vpack.c.b16 %v363, %v361
  %v462 = vpack.c.b16 %v364, %v362
  %v463 = vpack.c.b16 %v367, %v365
  %v464 = vpack.c.b16 %v368, %v366
  %v465 = vpack.c.b16 %v371, %v369
  %v466 = vpack.c.b16 %v372, %v370
  %v467 = vpack.c.b16 %v375, %v373
  %v468 = vpack.c.b16 %v376, %v374
  %v469 = vpack.c.b16 %v379, %v377
  %v470 = vpack.c.b16 %v380, %v378
  %v471 = vpack.c.b16 %v383, %v381
  %v472 = vpack.c.b16 %v384, %v382
  %v473 = vpack.c.b16 %v387, %v385
  %v474 = vpack.c.b16 %v388, %v386
  %v475 = vpack.c.b16 %v391, %v389
  %v476 = vpack.c.b16 %v392, %v390
  %v477 = vpack.c.b16 %v395, %v393
  %v478 = vpack.c.b16 %v396, %v394
  %v479 = vpack.c.b16 %v399, %v397
  %v480 = vpack.c.b16 %v400, %v398
  %v481 = vpack.c.b16 %v403, %v401
  %v482 = vpack.c.b16 %v404, %v402
  %v483 = vpack.c.b16 %v407, %v405
  %v484 = vpack.c.b16 %v408, %v406
  %v485 = vpack.c.b16 %v411, %v409
  %v486 = vpack.c.b16 %v412, %v410
  %v487 = vpack.c.b16 %v413, %v413
  %v488 = vpack.c.b16 %v414, %v414
  %v595 = vunpack.c.l.b16 %v164
  %v596 = vunpack.c.l.b16 %v165
  %v597 = vunpack.c.l.b16 %v166
  %v598 = vunpack.c.l.b16 %v167
  %v599 = vunpack.c.l.b16 %v168
  %v600 = vunpack.c.l.b16 %v169
  %v601 = vunpack.c.l.b16 %v170
  %v602 = vunpack.c.l.b16 %v171
  %v603 = vunpack.c.l.b16 %v172
  %v604 = vunpack.c.l.b16 %v173
  %v605 = vunpack.c.l.b16 %v174
  %v606 = vunpack.c.l.b16 %v175
  %v607 = vunpack.c.l.b16 %v176
  %v608 = vunpack.c.l.b16 %v177
  %v609 = vunpack.c.l.b16 %v178
  %v610 = vunpack.c.l.b16 %v179
  %v611 = vunpack.c.l.b16 %v180
  %v612 = vunpack.c.l.b16 %v181
  %v613 = vunpack.c.l.b16 %v182
  %v614 = vunpack.c.l.b16 %v183
  %v615 = vunpack.c.l.b16 %v184
  %v616 = vunpack.c.l.b16 %v185
  %v617 = vunpack.c.l.b16 %v186
  %v618 = vunpack.c.l.b16 %v187
  %v619 = vunpack.c.l.b16 %v188
  %v620 = vunpack.c.l.b16 %v189
  %v621 = vunpack.c.l.b16 %v190
  %v622 = vunpack.c.l.b16 %v191
  %v623 = vunpack.c.l.b16 %v192
  %v624 = vunpack.c.l.b16 %v193
  %v625 = vunpack.c.l.b16 %v194
  %v626 = vunpack.c.l.b16 %v195
  %v627 = vpack.c.b16 %v596, %v595
  %v628 = vpack.c.b16 %v598, %v597
  %v629 = vpack.c.b16 %v600, %v599
  %v630 = vpack.c.b16 %v602, %v601
  %v631 = vpack.c.b16 %v604, %v603
  %v632 = vpack.c.b16 %v606, %v605
  %v633 = vpack.c.b16 %v608, %v607
  %v634 = vpack.c.b16 %v610, %v609
  %v635 = vpack.c.b16 %v612, %v611
  %v636 = vpack.c.b16 %v614, %v613
  %v637 = vpack.c.b16 %v616, %v615
  %v638 = vpack.c.b16 %v618, %v617
  %v639 = vpack.c.b16 %v620, %v619
  %v640 = vpack.c.b16 %v622, %v621
  %v641 = vpack.c.b16 %v624, %v623
  %v642 = vpack.c.b16 %v626, %v625
  %659 = vmatprep.subr.bf16.mxu0 0
  %660 = vmatpush1.bf16.msra.mxu0 %v627
  %661 = vmatprep.subr.bf16.mxu0 0
  %662 = vmatpush1.bf16.msra.mxu0 %v628
  %663 = vmatprep.subr.bf16.mxu0 0
  %664 = vmatpush1.bf16.msra.mxu0 %v629
  %665 = vmatprep.subr.bf16.mxu0 0
  %666 = vmatpush1.bf16.msra.mxu0 %v630
  %667 = vmatprep.subr.bf16.mxu0 0
  %668 = vmatpush1.bf16.msra.mxu0 %v631
  %669 = vmatprep.subr.bf16.mxu0 0
  %670 = vmatpush1.bf16.msra.mxu0 %v632
  %671 = vmatprep.subr.bf16.mxu0 0
  %672 = vmatpush1.bf16.msra.mxu0 %v633
  %673 = vmatprep.subr.bf16.mxu0 0
  %674 = vmatpush1.bf16.msra.mxu0 %v634
  %675 = vmatprep.subr.bf16.mxu0 0
  %676 = vmatpush1.bf16.msra.mxu0 %v635
  %677 = vmatprep.subr.bf16.mxu0 0
  %678 = vmatpush1.bf16.msra.mxu0 %v636
  %679 = vmatprep.subr.bf16.mxu0 0
  %680 = vmatpush1.bf16.msra.mxu0 %v637
  %681 = vmatprep.subr.bf16.mxu0 0
  %682 = vmatpush1.bf16.msra.mxu0 %v638
  %683 = vmatprep.subr.bf16.mxu0 0
  %684 = vmatpush1.bf16.msra.mxu0 %v639
  %685 = vmatprep.subr.bf16.mxu0 0
  %686 = vmatpush1.bf16.msra.mxu0 %v640
  %687 = vmatprep.subr.bf16.mxu0 0
  %688 = vmatpush1.bf16.msra.mxu0 %v641
  %689 = vmatprep.subr.bf16.mxu0 0
  %690 = vmatpush1.bf16.msra.mxu0 %v642
  %691 = vmatprep.mubr.bf16.mxu0 %v416
  %692 = vmatmul.mubr.bf16.gmra.mrb[0].mxu0 %v415
  %v693 = vpop.f32.mrb[0].mxu0
  %v694 = vadd.f32 0.0, %v693
  %v695 = vpop.f32.mrb[0].mxu0
  %v696 = vpop.f32.mrb[0].mxu0
  %v697 = vadd.f32 0.0, %v696
  %v698 = vpop.f32.mrb[0].mxu0
  %699 = vmatprep.mubr.bf16.mxu0 %v418
  %700 = vmatmul.mubr.bf16.gmra.mrb[0].mxu0 %v417
  %v701 = vpop.f32.mrb[0].mxu0
  %v702 = vadd.f32 0.0, %v701
  %v703 = vpop.f32.mrb[0].mxu0
  %v704 = vpop.f32.mrb[0].mxu0
  %v705 = vadd.f32 0.0, %v704
  %v706 = vpop.f32.mrb[0].mxu0
  %707 = vmatprep.mubr.bf16.mxu0 %v420
  %708 = vmatmul.mubr.bf16.gmra.mrb[0].mxu0 %v419
  %v709 = vpop.f32.mrb[0].mxu0
  %v710 = vadd.f32 0.0, %v709
  %v711 = vpop.f32.mrb[0].mxu0
  %v712 = vpop.f32.mrb[0].mxu0
  %v713 = vadd.f32 0.0, %v712
  %v714 = vpop.f32.mrb[0].mxu0
  %715 = vmatprep.mubr.bf16.mxu0 %v422
  %716 = vmatmul.mubr.bf16.gmra.mrb[0].mxu0 %v421
  %v717 = vpop.f32.mrb[0].mxu0
  %v718 = vadd.f32 0.0, %v717
  %v719 = vpop.f32.mrb[0].mxu0
  %v720 = vpop.f32.mrb[0].mxu0
  %v721 = vadd.f32 0.0, %v720
  %v722 = vpop.f32.mrb[0].mxu0
  %723 = vmatprep.mubr.bf16.mxu0 %v424
  %724 = vmatmul.mubr.bf16.gmra.mrb[0].mxu0 %v423
  %v725 = vpop.f32.mrb[0].mxu0
  %v726 = vadd.f32 0.0, %v725
  %v727 = vpop.f32.mrb[0].mxu0
  %v728 = vpop.f32.mrb[0].mxu0
  %v729 = vadd.f32 0.0, %v728
  %v730 = vpop.f32.mrb[0].mxu0
  %731 = vmatprep.mubr.bf16.mxu0 %v426
  %732 = vmatmul.mubr.bf16.gmra.mrb[0].mxu0 %v425
  %v733 = vpop.f32.mrb[0].mxu0
  %v734 = vadd.f32 0.0, %v733
  %v735 = vpop.f32.mrb[0].mxu0
  %v736 = vpop.f32.mrb[0].mxu0
  %v737 = vadd.f32 0.0, %v736
  %v738 = vpop.f32.mrb[0].mxu0
  %739 = vmatprep.mubr.bf16.mxu0 %v428
  %740 = vmatmul.mubr.bf16.gmra.mrb[0].mxu0 %v427
  %v741 = vpop.f32.mrb[0].mxu0
  %v742 = vadd.f32 0.0, %v741
  %v743 = vpop.f32.mrb[0].mxu0
  %v744 = vpop.f32.mrb[0].mxu0
  %v745 = vadd.f32 0.0, %v744
  %v746 = vpop.f32.mrb[0].mxu0
  %747 = vmatprep.mubr.bf16.mxu0 %v430
  %748 = vmatmul.mubr.bf16.gmra.mrb[0].mxu0 %v429
  %v749 = vpop.f32.mrb[0].mxu0
  %v750 = vadd.f32 0.0, %v749
  %v751 = vpop.f32.mrb[0].mxu0
  %v752 = vpop.f32.mrb[0].mxu0
  %v753 = vadd.f32 0.0, %v752
  %v754 = vpop.f32.mrb[0].mxu0
  %755 = vmatprep.mubr.bf16.mxu0 %v432
  %756 = vmatmul.mubr.bf16.gmra.mrb[0].mxu0 %v431
  %v757 = vpop.f32.mrb[0].mxu0
  %v758 = vadd.f32 0.0, %v757
  %v759 = vpop.f32.mrb[0].mxu0
  %v760 = vpop.f32.mrb[0].mxu0
  %v761 = vadd.f32 0.0, %v760
  %v762 = vpop.f32.mrb[0].mxu0
  %763 = vmatprep.mubr.bf16.mxu0 %v434
  %764 = vmatmul.mubr.bf16.gmra.mrb[0].mxu0 %v433
  %v765 = vpop.f32.mrb[0].mxu0
  %v766 = vadd.f32 0.0, %v765
  %v767 = vpop.f32.mrb[0].mxu0
  %v768 = vpop.f32.mrb[0].mxu0
  %v769 = vadd.f32 0.0, %v768
  %v770 = vpop.f32.mrb[0].mxu0
  %771 = vmatprep.mubr.bf16.mxu0 %v436
  %772 = vmatmul.mubr.bf16.gmra.mrb[0].mxu0 %v435
  %v773 = vpop.f32.mrb[0].mxu0
  %v774 = vadd.f32 0.0, %v773
  %v775 = vpop.f32.mrb[0].mxu0
  %v776 = vpop.f32.mrb[0].mxu0
  %v777 = vadd.f32 0.0, %v776
  %v778 = vpop.f32.mrb[0].mxu0
  %779 = vmatprep.mubr.bf16.mxu0 %v438
  %780 = vmatmul.mubr.bf16.gmra.mrb[0].mxu0 %v437
  %v781 = vpop.f32.mrb[0].mxu0
  %v782 = vadd.f32 0.0, %v781
  %v783 = vpop.f32.mrb[0].mxu0
  %v784 = vpop.f32.mrb[0].mxu0
  %v785 = vadd.f32 0.0, %v784
  %v786 = vpop.f32.mrb[0].mxu0
  %787 = vmatprep.mubr.bf16.mxu0 %v440
  %788 = vmatmul.mubr.bf16.gmra.mrb[0].mxu0 %v439
  %v789 = vpop.f32.mrb[0].mxu0
  %v790 = vadd.f32 0.0, %v789
  %v791 = vpop.f32.mrb[0].mxu0
  %v792 = vpop.f32.mrb[0].mxu0
  %v793 = vadd.f32 0.0, %v792
  %v794 = vpop.f32.mrb[0].mxu0
  %795 = vmatprep.mubr.bf16.mxu0 %v442
  %796 = vmatmul.mubr.bf16.gmra.mrb[0].mxu0 %v441
  %v797 = vpop.f32.mrb[0].mxu0
  %v798 = vadd.f32 0.0, %v797
  %v799 = vpop.f32.mrb[0].mxu0
  %v800 = vpop.f32.mrb[0].mxu0
  %v801 = vadd.f32 0.0, %v800
  %v802 = vpop.f32.mrb[0].mxu0
  %803 = vmatprep.mubr.bf16.mxu0 %v444
  %804 = vmatmul.mubr.bf16.gmra.mrb[0].mxu0 %v443
  %v805 = vpop.f32.mrb[0].mxu0
  %v806 = vadd.f32 0.0, %v805
  %v807 = vpop.f32.mrb[0].mxu0
  %v808 = vpop.f32.mrb[0].mxu0
  %v809 = vadd.f32 0.0, %v808
  %v810 = vpop.f32.mrb[0].mxu0
  %811 = vmatprep.mubr.bf16.mxu0 %v446
  %812 = vmatmul.mubr.bf16.gmra.mrb[0].mxu0 %v445
  %v813 = vpop.f32.mrb[0].mxu0
  %v814 = vadd.f32 0.0, %v813
  %v815 = vpop.f32.mrb[0].mxu0
  %v816 = vpop.f32.mrb[0].mxu0
  %v817 = vadd.f32 0.0, %v816
  %v818 = vpop.f32.mrb[0].mxu0
  %819 = vmatprep.mubr.bf16.mxu0 %v448
  %820 = vmatmul.mubr.bf16.gmra.mrb[0].mxu0 %v447
  %v821 = vpop.f32.mrb[0].mxu0
  %v822 = vadd.f32 0.0, %v821
  %v823 = vpop.f32.mrb[0].mxu0
  %v824 = vpop.f32.mrb[0].mxu0
  %v825 = vadd.f32 0.0, %v824
  %v826 = vpop.f32.mrb[0].mxu0
  %827 = vmatprep.mubr.bf16.mxu0 %v450
  %828 = vmatmul.mubr.bf16.gmra.mrb[0].mxu0 %v449
  %v829 = vpop.f32.mrb[0].mxu0
  %v830 = vadd.f32 0.0, %v829
  %v831 = vpop.f32.mrb[0].mxu0
  %v832 = vpop.f32.mrb[0].mxu0
  %v833 = vadd.f32 0.0, %v832
  %v834 = vpop.f32.mrb[0].mxu0
  %835 = vmatprep.mubr.bf16.mxu0 %v452
  %836 = vmatmul.mubr.bf16.gmra.mrb[0].mxu0 %v451
  %v837 = vpop.f32.mrb[0].mxu0
  %v838 = vadd.f32 0.0, %v837
  %v839 = vpop.f32.mrb[0].mxu0
  %v840 = vpop.f32.mrb[0].mxu0
  %v841 = vadd.f32 0.0, %v840
  %v842 = vpop.f32.mrb[0].mxu0
  %843 = vmatprep.mubr.bf16.mxu0 %v454
  %844 = vmatmul.mubr.bf16.gmra.mrb[0].mxu0 %v453
  %v845 = vpop.f32.mrb[0].mxu0
  %v846 = vadd.f32 0.0, %v845
  %v847 = vpop.f32.mrb[0].mxu0
  %v848 = vpop.f32.mrb[0].mxu0
  %v849 = vadd.f32 0.0, %v848
  %v850 = vpop.f32.mrb[0].mxu0
  %851 = vmatprep.mubr.bf16.mxu0 %v456
  %852 = vmatmul.mubr.bf16.gmra.mrb[0].mxu0 %v455
  %v853 = vpop.f32.mrb[0].mxu0
  %v854 = vadd.f32 0.0, %v853
  %v855 = vpop.f32.mrb[0].mxu0
  %v856 = vpop.f32.mrb[0].mxu0
  %v857 = vadd.f32 0.0, %v856
  %v858 = vpop.f32.mrb[0].mxu0
  %859 = vmatprep.mubr.bf16.mxu0 %v458
  %860 = vmatmul.mubr.bf16.gmra.mrb[0].mxu0 %v457
  %v861 = vpop.f32.mrb[0].mxu0
  %v862 = vadd.f32 0.0, %v861
  %v863 = vpop.f32.mrb[0].mxu0
  %v864 = vpop.f32.mrb[0].mxu0
  %v865 = vadd.f32 0.0, %v864
  %v866 = vpop.f32.mrb[0].mxu0
  %867 = vmatprep.mubr.bf16.mxu0 %v460
  %868 = vmatmul.mubr.bf16.gmra.mrb[0].mxu0 %v459
  %v869 = vpop.f32.mrb[0].mxu0
  %v870 = vadd.f32 0.0, %v869
  %v871 = vpop.f32.mrb[0].mxu0
  %v872 = vpop.f32.mrb[0].mxu0
  %v873 = vadd.f32 0.0, %v872
  %v874 = vpop.f32.mrb[0].mxu0
  %875 = vmatprep.mubr.bf16.mxu0 %v462
  %876 = vmatmul.mubr.bf16.gmra.mrb[0].mxu0 %v461
  %v877 = vpop.f32.mrb[0].mxu0
  %v878 = vadd.f32 0.0, %v877
  %v879 = vpop.f32.mrb[0].mxu0
  %v880 = vpop.f32.mrb[0].mxu0
  %v881 = vadd.f32 0.0, %v880
  %v882 = vpop.f32.mrb[0].mxu0
  %883 = vmatprep.mubr.bf16.mxu0 %v464
  %884 = vmatmul.mubr.bf16.gmra.mrb[0].mxu0 %v463
  %v885 = vpop.f32.mrb[0].mxu0
  %v886 = vadd.f32 0.0, %v885
  %v887 = vpop.f32.mrb[0].mxu0
  %v888 = vpop.f32.mrb[0].mxu0
  %v889 = vadd.f32 0.0, %v888
  %v890 = vpop.f32.mrb[0].mxu0
  %891 = vmatprep.mubr.bf16.mxu0 %v466
  %892 = vmatmul.mubr.bf16.gmra.mrb[0].mxu0 %v465
  %v893 = vpop.f32.mrb[0].mxu0
  %v894 = vadd.f32 0.0, %v893
  %v895 = vpop.f32.mrb[0].mxu0
  %v896 = vpop.f32.mrb[0].mxu0
  %v897 = vadd.f32 0.0, %v896
  %v898 = vpop.f32.mrb[0].mxu0
  %899 = vmatprep.mubr.bf16.mxu0 %v468
  %900 = vmatmul.mubr.bf16.gmra.mrb[0].mxu0 %v467
  %v901 = vpop.f32.mrb[0].mxu0
  %v902 = vadd.f32 0.0, %v901
  %v903 = vpop.f32.mrb[0].mxu0
  %v904 = vpop.f32.mrb[0].mxu0
  %v905 = vadd.f32 0.0, %v904
  %v906 = vpop.f32.mrb[0].mxu0
  %907 = vmatprep.mubr.bf16.mxu0 %v470
  %908 = vmatmul.mubr.bf16.gmra.mrb[0].mxu0 %v469
  %v909 = vpop.f32.mrb[0].mxu0
  %v910 = vadd.f32 0.0, %v909
  %v911 = vpop.f32.mrb[0].mxu0
  %v912 = vpop.f32.mrb[0].mxu0
  %v913 = vadd.f32 0.0, %v912
  %v914 = vpop.f32.mrb[0].mxu0
  %915 = vmatprep.mubr.bf16.mxu0 %v472
  %916 = vmatmul.mubr.bf16.gmra.mrb[0].mxu0 %v471
  %v917 = vpop.f32.mrb[0].mxu0
  %v918 = vadd.f32 0.0, %v917
  %v919 = vpop.f32.mrb[0].mxu0
  %v920 = vpop.f32.mrb[0].mxu0
  %v921 = vadd.f32 0.0, %v920
  %v922 = vpop.f32.mrb[0].mxu0
  %923 = vmatprep.mubr.bf16.mxu0 %v474
  %924 = vmatmul.mubr.bf16.gmra.mrb[0].mxu0 %v473
  %v925 = vpop.f32.mrb[0].mxu0
  %v926 = vadd.f32 0.0, %v925
  %v927 = vpop.f32.mrb[0].mxu0
  %v928 = vpop.f32.mrb[0].mxu0
  %v929 = vadd.f32 0.0, %v928
  %v930 = vpop.f32.mrb[0].mxu0
  %931 = vmatprep.mubr.bf16.mxu0 %v476
  %932 = vmatmul.mubr.bf16.gmra.mrb[0].mxu0 %v475
  %v933 = vpop.f32.mrb[0].mxu0
  %v934 = vadd.f32 0.0, %v933
  %v935 = vpop.f32.mrb[0].mxu0
  %v936 = vpop.f32.mrb[0].mxu0
  %v937 = vadd.f32 0.0, %v936
  %v938 = vpop.f32.mrb[0].mxu0
  %939 = vmatprep.mubr.bf16.mxu0 %v478
  %940 = vmatmul.mubr.bf16.gmra.mrb[0].mxu0 %v477
  %v941 = vpop.f32.mrb[0].mxu0
  %v942 = vadd.f32 0.0, %v941
  %v943 = vpop.f32.mrb[0].mxu0
  %v944 = vpop.f32.mrb[0].mxu0
  %v945 = vadd.f32 0.0, %v944
  %v946 = vpop.f32.mrb[0].mxu0
  %947 = vmatprep.mubr.bf16.mxu0 %v480
  %948 = vmatmul.mubr.bf16.gmra.mrb[0].mxu0 %v479
  %v949 = vpop.f32.mrb[0].mxu0
  %v950 = vadd.f32 0.0, %v949
  %v951 = vpop.f32.mrb[0].mxu0
  %v952 = vpop.f32.mrb[0].mxu0
  %v953 = vadd.f32 0.0, %v952
  %v954 = vpop.f32.mrb[0].mxu0
  %955 = vmatprep.mubr.bf16.mxu0 %v482
  %956 = vmatmul.mubr.bf16.gmra.mrb[0].mxu0 %v481
  %v957 = vpop.f32.mrb[0].mxu0
  %v958 = vadd.f32 0.0, %v957
  %v959 = vpop.f32.mrb[0].mxu0
  %v960 = vpop.f32.mrb[0].mxu0
  %v961 = vadd.f32 0.0, %v960
  %v962 = vpop.f32.mrb[0].mxu0
  %963 = vmatprep.mubr.bf16.mxu0 %v484
  %964 = vmatmul.mubr.bf16.gmra.mrb[0].mxu0 %v483
  %v965 = vpop.f32.mrb[0].mxu0
  %v966 = vadd.f32 0.0, %v965
  %v967 = vpop.f32.mrb[0].mxu0
  %v968 = vpop.f32.mrb[0].mxu0
  %v969 = vadd.f32 0.0, %v968
  %v970 = vpop.f32.mrb[0].mxu0
  %971 = vmatprep.mubr.bf16.mxu0 %v486
  %972 = vmatmul.mubr.bf16.gmra.mrb[0].mxu0 %v485
  %v973 = vpop.f32.mrb[0].mxu0
  %v974 = vadd.f32 0.0, %v973
  %v975 = vpop.f32.mrb[0].mxu0
  %v976 = vpop.f32.mrb[0].mxu0
  %v977 = vadd.f32 0.0, %v976
  %v978 = vpop.f32.mrb[0].mxu0
  %979 = vmatprep.mubr.bf16.mxu0 %v488
  %980 = vmatmul.mubr.bf16.gmra.mrb[0].mxu0 %v487
  %v981 = vpop.f32.mrb[0].mxu0
  %v982 = vadd.f32 0.0, %v981
  %v983 = vpop.f32.mrb[0].mxu0
  %v984 = vpop.f32.mrb[0].mxu0
  %v985 = vpop.f32.mrb[0].mxu0
  %986 = vdwg.mxu0
  %v987 = vld [vmem:[%s2] sm:$0x1]
  %v989 = vlaneseq
  %v990 = vshrl.u32 %v989, 7
  %v991 = vsub.s32 0, %v990
  %v992 = vrot.slane %v987, %v991
  %v994 = vmul.f32 %v694, %v992
  %v995 = vmul.f32 %v697, %v992
  %v996 = vmul.f32 %v702, %v992
  %v997 = vmul.f32 %v705, %v992
  %v998 = vmul.f32 %v710, %v992
  %v999 = vmul.f32 %v713, %v992
  %v1000 = vmul.f32 %v718, %v992
  %v1001 = vmul.f32 %v721, %v992
  %v1002 = vmul.f32 %v726, %v992
  %v1003 = vmul.f32 %v729, %v992
  %v1004 = vmul.f32 %v734, %v992
  %v1005 = vmul.f32 %v737, %v992
  %v1006 = vmul.f32 %v742, %v992
  %v1007 = vmul.f32 %v745, %v992
  %v1008 = vmul.f32 %v750, %v992
  %v1009 = vmul.f32 %v753, %v992
  %v1010 = vmul.f32 %v758, %v992
  %v1011 = vmul.f32 %v761, %v992
  %v1012 = vmul.f32 %v766, %v992
  %v1013 = vmul.f32 %v769, %v992
  %v1014 = vmul.f32 %v774, %v992
  %v1015 = vmul.f32 %v777, %v992
  %v1016 = vmul.f32 %v782, %v992
  %v1017 = vmul.f32 %v785, %v992
  %v1018 = vmul.f32 %v790, %v992
  %v1019 = vmul.f32 %v793, %v992
  %v1020 = vmul.f32 %v798, %v992
  %v1021 = vmul.f32 %v801, %v992
  %v1022 = vmul.f32 %v806, %v992
  %v1023 = vmul.f32 %v809, %v992
  %v1024 = vmul.f32 %v814, %v992
  %v1025 = vmul.f32 %v817, %v992
  %v1026 = vmul.f32 %v822, %v992
  %v1027 = vmul.f32 %v825, %v992
  %v1028 = vmul.f32 %v830, %v992
  %v1029 = vmul.f32 %v833, %v992
  %v1030 = vmul.f32 %v838, %v992
  %v1031 = vmul.f32 %v841, %v992
  %v1032 = vmul.f32 %v846, %v992
  %v1033 = vmul.f32 %v849, %v992
  %v1034 = vmul.f32 %v854, %v992
  %v1035 = vmul.f32 %v857, %v992
  %v1036 = vmul.f32 %v862, %v992
  %v1037 = vmul.f32 %v865, %v992
  %v1038 = vmul.f32 %v870, %v992
  %v1039 = vmul.f32 %v873, %v992
  %v1040 = vmul.f32 %v878, %v992
  %v1041 = vmul.f32 %v881, %v992
  %v1042 = vmul.f32 %v886, %v992
  %v1043 = vmul.f32 %v889, %v992
  %v1044 = vmul.f32 %v894, %v992
  %v1045 = vmul.f32 %v897, %v992
  %v1046 = vmul.f32 %v902, %v992
  %v1047 = vmul.f32 %v905, %v992
  %v1048 = vmul.f32 %v910, %v992
  %v1049 = vmul.f32 %v913, %v992
  %v1050 = vmul.f32 %v918, %v992
  %v1051 = vmul.f32 %v921, %v992
  %v1052 = vmul.f32 %v926, %v992
  %v1053 = vmul.f32 %v929, %v992
  %v1054 = vmul.f32 %v934, %v992
  %v1055 = vmul.f32 %v937, %v992
  %v1056 = vmul.f32 %v942, %v992
  %v1057 = vmul.f32 %v945, %v992
  %v1058 = vmul.f32 %v950, %v992
  %v1059 = vmul.f32 %v953, %v992
  %v1060 = vmul.f32 %v958, %v992
  %v1061 = vmul.f32 %v961, %v992
  %v1062 = vmul.f32 %v966, %v992
  %v1063 = vmul.f32 %v969, %v992
  %v1064 = vmul.f32 %v974, %v992
  %v1065 = vmul.f32 %v977, %v992
  %v1066 = vmul.f32 %v982, %v992
  %v1067 = vld [vmem:[%s3] sm:$0x1]
  %v1069 = vlaneseq
  %v1070 = vshrl.u32 %v1069, 7
  %v1071 = vsub.s32 0, %v1070
  %v1072 = vrot.slane %v1067, %v1071
  %v1074 = vadd.f32 %v994, %v1072
  %v1075 = vadd.f32 %v995, %v1072
  %v1076 = vadd.f32 %v996, %v1072
  %v1077 = vadd.f32 %v997, %v1072
  %v1078 = vadd.f32 %v998, %v1072
  %v1079 = vadd.f32 %v999, %v1072
  %v1080 = vadd.f32 %v1000, %v1072
  %v1081 = vadd.f32 %v1001, %v1072
  %v1082 = vadd.f32 %v1002, %v1072
  %v1083 = vadd.f32 %v1003, %v1072
  %v1084 = vadd.f32 %v1004, %v1072
  %v1085 = vadd.f32 %v1005, %v1072
  %v1086 = vadd.f32 %v1006, %v1072
  %v1087 = vadd.f32 %v1007, %v1072
  %v1088 = vadd.f32 %v1008, %v1072
  %v1089 = vadd.f32 %v1009, %v1072
  %v1090 = vadd.f32 %v1010, %v1072
  %v1091 = vadd.f32 %v1011, %v1072
  %v1092 = vadd.f32 %v1012, %v1072
  %v1093 = vadd.f32 %v1013, %v1072
  %v1094 = vadd.f32 %v1014, %v1072
  %v1095 = vadd.f32 %v1015, %v1072
  %v1096 = vadd.f32 %v1016, %v1072
  %v1097 = vadd.f32 %v1017, %v1072
  %v1098 = vadd.f32 %v1018, %v1072
  %v1099 = vadd.f32 %v1019, %v1072
  %v1100 = vadd.f32 %v1020, %v1072
  %v1101 = vadd.f32 %v1021, %v1072
  %v1102 = vadd.f32 %v1022, %v1072
  %v1103 = vadd.f32 %v1023, %v1072
  %v1104 = vadd.f32 %v1024, %v1072
  %v1105 = vadd.f32 %v1025, %v1072
  %v1106 = vadd.f32 %v1026, %v1072
  %v1107 = vadd.f32 %v1027, %v1072
  %v1108 = vadd.f32 %v1028, %v1072
  %v1109 = vadd.f32 %v1029, %v1072
  %v1110 = vadd.f32 %v1030, %v1072
  %v1111 = vadd.f32 %v1031, %v1072
  %v1112 = vadd.f32 %v1032, %v1072
  %v1113 = vadd.f32 %v1033, %v1072
  %v1114 = vadd.f32 %v1034, %v1072
  %v1115 = vadd.f32 %v1035, %v1072
  %v1116 = vadd.f32 %v1036, %v1072
  %v1117 = vadd.f32 %v1037, %v1072
  %v1118 = vadd.f32 %v1038, %v1072
  %v1119 = vadd.f32 %v1039, %v1072
  %v1120 = vadd.f32 %v1040, %v1072
  %v1121 = vadd.f32 %v1041, %v1072
  %v1122 = vadd.f32 %v1042, %v1072
  %v1123 = vadd.f32 %v1043, %v1072
  %v1124 = vadd.f32 %v1044, %v1072
  %v1125 = vadd.f32 %v1045, %v1072
  %v1126 = vadd.f32 %v1046, %v1072
  %v1127 = vadd.f32 %v1047, %v1072
  %v1128 = vadd.f32 %v1048, %v1072
  %v1129 = vadd.f32 %v1049, %v1072
  %v1130 = vadd.f32 %v1050, %v1072
  %v1131 = vadd.f32 %v1051, %v1072
  %v1132 = vadd.f32 %v1052, %v1072
  %v1133 = vadd.f32 %v1053, %v1072
  %v1134 = vadd.f32 %v1054, %v1072
  %v1135 = vadd.f32 %v1055, %v1072
  %v1136 = vadd.f32 %v1056, %v1072
  %v1137 = vadd.f32 %v1057, %v1072
  %v1138 = vadd.f32 %v1058, %v1072
  %v1139 = vadd.f32 %v1059, %v1072
  %v1140 = vadd.f32 %v1060, %v1072
  %v1141 = vadd.f32 %v1061, %v1072
  %v1142 = vadd.f32 %v1062, %v1072
  %v1143 = vadd.f32 %v1063, %v1072
  %v1144 = vadd.f32 %v1064, %v1072
  %v1145 = vadd.f32 %v1065, %v1072
  %v1146 = vadd.f32 %v1066, %v1072
  %v1147 = vpack.c.bf16 %v1075, %v1074
  %v1148 = vpack.c.bf16 %v1077, %v1076
  %v1149 = vpack.c.bf16 %v1079, %v1078
  %v1150 = vpack.c.bf16 %v1081, %v1080
  %v1151 = vpack.c.bf16 %v1083, %v1082
  %v1152 = vpack.c.bf16 %v1085, %v1084
  %v1153 = vpack.c.bf16 %v1087, %v1086
  %v1154 = vpack.c.bf16 %v1089, %v1088
  %v1155 = vpack.c.bf16 %v1091, %v1090
  %v1156 = vpack.c.bf16 %v1093, %v1092
  %v1157 = vpack.c.bf16 %v1095, %v1094
  %v1158 = vpack.c.bf16 %v1097, %v1096
  %v1159 = vpack.c.bf16 %v1099, %v1098
  %v1160 = vpack.c.bf16 %v1101, %v1100
  %v1161 = vpack.c.bf16 %v1103, %v1102
  %v1162 = vpack.c.bf16 %v1105, %v1104
  %v1163 = vpack.c.bf16 %v1107, %v1106
  %v1164 = vpack.c.bf16 %v1109, %v1108
  %v1165 = vpack.c.bf16 %v1111, %v1110
  %v1166 = vpack.c.bf16 %v1113, %v1112
  %v1167 = vpack.c.bf16 %v1115, %v1114
  %v1168 = vpack.c.bf16 %v1117, %v1116
  %v1169 = vpack.c.bf16 %v1119, %v1118
  %v1170 = vpack.c.bf16 %v1121, %v1120
  %v1171 = vpack.c.bf16 %v1123, %v1122
  %v1172 = vpack.c.bf16 %v1125, %v1124
  %v1173 = vpack.c.bf16 %v1127, %v1126
  %v1174 = vpack.c.bf16 %v1129, %v1128
  %v1175 = vpack.c.bf16 %v1131, %v1130
  %v1176 = vpack.c.bf16 %v1133, %v1132
  %v1177 = vpack.c.bf16 %v1135, %v1134
  %v1178 = vpack.c.bf16 %v1137, %v1136
  %v1179 = vpack.c.bf16 %v1139, %v1138
  %v1180 = vpack.c.bf16 %v1141, %v1140
  %v1181 = vpack.c.bf16 %v1143, %v1142
  %v1182 = vpack.c.bf16 %v1145, %v1144
  %v1183 = vpack.c.bf16 %v1146, %v1146
  %v1221 = vunpack.c.l.b16 %v1147
  %v1222 = vunpack.c.h.b16 %v1147
  %v1223 = vunpack.c.l.b16 %v1148
  %v1224 = vunpack.c.h.b16 %v1148
  %v1225 = vunpack.c.l.b16 %v1149
  %v1226 = vunpack.c.h.b16 %v1149
  %v1227 = vunpack.c.l.b16 %v1150
  %v1228 = vunpack.c.h.b16 %v1150
  %v1229 = vunpack.c.l.b16 %v1151
  %v1230 = vunpack.c.h.b16 %v1151
  %v1231 = vunpack.c.l.b16 %v1152
  %v1232 = vunpack.c.h.b16 %v1152
  %v1233 = vunpack.c.l.b16 %v1153
  %v1234 = vunpack.c.h.b16 %v1153
  %v1235 = vunpack.c.l.b16 %v1154
  %v1236 = vunpack.c.h.b16 %v1154
  %v1237 = vunpack.c.l.b16 %v1155
  %v1238 = vunpack.c.h.b16 %v1155
  %v1239 = vunpack.c.l.b16 %v1156
  %v1240 = vunpack.c.h.b16 %v1156
  %v1241 = vunpack.c.l.b16 %v1157
  %v1242 = vunpack.c.h.b16 %v1157
  %v1243 = vunpack.c.l.b16 %v1158
  %v1244 = vunpack.c.h.b16 %v1158
  %v1245 = vunpack.c.l.b16 %v1159
  %v1246 = vunpack.c.h.b16 %v1159
  %v1247 = vunpack.c.l.b16 %v1160
  %v1248 = vunpack.c.h.b16 %v1160
  %v1249 = vunpack.c.l.b16 %v1161
  %v1250 = vunpack.c.h.b16 %v1161
  %v1251 = vunpack.c.l.b16 %v1162
  %v1252 = vunpack.c.h.b16 %v1162
  %v1253 = vunpack.c.l.b16 %v1163
  %v1254 = vunpack.c.h.b16 %v1163
  %v1255 = vunpack.c.l.b16 %v1164
  %v1256 = vunpack.c.h.b16 %v1164
  %v1257 = vunpack.c.l.b16 %v1165
  %v1258 = vunpack.c.h.b16 %v1165
  %v1259 = vunpack.c.l.b16 %v1166
  %v1260 = vunpack.c.h.b16 %v1166
  %v1261 = vunpack.c.l.b16 %v1167
  %v1262 = vunpack.c.h.b16 %v1167
  %v1263 = vunpack.c.l.b16 %v1168
  %v1264 = vunpack.c.h.b16 %v1168
  %v1265 = vunpack.c.l.b16 %v1169
  %v1266 = vunpack.c.h.b16 %v1169
  %v1267 = vunpack.c.l.b16 %v1170
  %v1268 = vunpack.c.h.b16 %v1170
  %v1269 = vunpack.c.l.b16 %v1171
  %v1270 = vunpack.c.h.b16 %v1171
  %v1271 = vunpack.c.l.b16 %v1172
  %v1272 = vunpack.c.h.b16 %v1172
  %v1273 = vunpack.c.l.b16 %v1173
  %v1274 = vunpack.c.h.b16 %v1173
  %v1275 = vunpack.c.l.b16 %v1174
  %v1276 = vunpack.c.h.b16 %v1174
  %v1277 = vunpack.c.l.b16 %v1175
  %v1278 = vunpack.c.h.b16 %v1175
  %v1279 = vunpack.c.l.b16 %v1176
  %v1280 = vunpack.c.h.b16 %v1176
  %v1281 = vunpack.c.l.b16 %v1177
  %v1282 = vunpack.c.h.b16 %v1177
  %v1283 = vunpack.c.l.b16 %v1178
  %v1284 = vunpack.c.h.b16 %v1178
  %v1285 = vunpack.c.l.b16 %v1179
  %v1286 = vunpack.c.h.b16 %v1179
  %v1287 = vunpack.c.l.b16 %v1180
  %v1288 = vunpack.c.h.b16 %v1180
  %v1289 = vunpack.c.l.b16 %v1181
  %v1290 = vunpack.c.h.b16 %v1181
  %v1291 = vunpack.c.l.b16 %v1182
  %v1292 = vunpack.c.h.b16 %v1182
  %v1293 = vunpack.c.l.b16 %v1183
  %v1294 = vpack.c.b16 %v1221, %v1221
  %v1295 = vpack.c.b16 %v1222, %v1222
  %v1296 = vpack.c.b16 %v1223, %v1223
  %v1297 = vpack.c.b16 %v1224, %v1224
  %v1298 = vpack.c.b16 %v1225, %v1225
  %v1299 = vpack.c.b16 %v1226, %v1226
  %v1300 = vpack.c.b16 %v1227, %v1227
  %v1301 = vpack.c.b16 %v1228, %v1228
  %v1302 = vpack.c.b16 %v1229, %v1229
  %v1303 = vpack.c.b16 %v1230, %v1230
  %v1304 = vpack.c.b16 %v1231, %v1231
  %v1305 = vpack.c.b16 %v1232, %v1232
  %v1306 = vpack.c.b16 %v1233, %v1233
  %v1307 = vpack.c.b16 %v1234, %v1234
  %v1308 = vpack.c.b16 %v1235, %v1235
  %v1309 = vpack.c.b16 %v1236, %v1236
  %v1310 = vpack.c.b16 %v1237, %v1237
  %v1311 = vpack.c.b16 %v1238, %v1238
  %v1312 = vpack.c.b16 %v1239, %v1239
  %v1313 = vpack.c.b16 %v1240, %v1240
  %v1314 = vpack.c.b16 %v1241, %v1241
  %v1315 = vpack.c.b16 %v1242, %v1242
  %v1316 = vpack.c.b16 %v1243, %v1243
  %v1317 = vpack.c.b16 %v1244, %v1244
  %v1318 = vpack.c.b16 %v1245, %v1245
  %v1319 = vpack.c.b16 %v1246, %v1246
  %v1320 = vpack.c.b16 %v1247, %v1247
  %v1321 = vpack.c.b16 %v1248, %v1248
  %v1322 = vpack.c.b16 %v1249, %v1249
  %v1323 = vpack.c.b16 %v1250, %v1250
  %v1324 = vpack.c.b16 %v1251, %v1251
  %v1325 = vpack.c.b16 %v1252, %v1252
  %v1326 = vpack.c.b16 %v1253, %v1253
  %v1327 = vpack.c.b16 %v1254, %v1254
  %v1328 = vpack.c.b16 %v1255, %v1255
  %v1329 = vpack.c.b16 %v1256, %v1256
  %v1330 = vpack.c.b16 %v1257, %v1257
  %v1331 = vpack.c.b16 %v1258, %v1258
  %v1332 = vpack.c.b16 %v1259, %v1259
  %v1333 = vpack.c.b16 %v1260, %v1260
  %v1334 = vpack.c.b16 %v1261, %v1261
  %v1335 = vpack.c.b16 %v1262, %v1262
  %v1336 = vpack.c.b16 %v1263, %v1263
  %v1337 = vpack.c.b16 %v1264, %v1264
  %v1338 = vpack.c.b16 %v1265, %v1265
  %v1339 = vpack.c.b16 %v1266, %v1266
  %v1340 = vpack.c.b16 %v1267, %v1267
  %v1341 = vpack.c.b16 %v1268, %v1268
  %v1342 = vpack.c.b16 %v1269, %v1269
  %v1343 = vpack.c.b16 %v1270, %v1270
  %v1344 = vpack.c.b16 %v1271, %v1271
  %v1345 = vpack.c.b16 %v1272, %v1272
  %v1346 = vpack.c.b16 %v1273, %v1273
  %v1347 = vpack.c.b16 %v1274, %v1274
  %v1348 = vpack.c.b16 %v1275, %v1275
  %v1349 = vpack.c.b16 %v1276, %v1276
  %v1350 = vpack.c.b16 %v1277, %v1277
  %v1351 = vpack.c.b16 %v1278, %v1278
  %v1352 = vpack.c.b16 %v1279, %v1279
  %v1353 = vpack.c.b16 %v1280, %v1280
  %v1354 = vpack.c.b16 %v1281, %v1281
  %v1355 = vpack.c.b16 %v1282, %v1282
  %v1356 = vpack.c.b16 %v1283, %v1283
  %v1357 = vpack.c.b16 %v1284, %v1284
  %v1358 = vpack.c.b16 %v1285, %v1285
  %v1359 = vpack.c.b16 %v1286, %v1286
  %v1360 = vpack.c.b16 %v1287, %v1287
  %v1361 = vpack.c.b16 %v1288, %v1288
  %v1362 = vpack.c.b16 %v1289, %v1289
  %v1363 = vpack.c.b16 %v1290, %v1290
  %v1364 = vpack.c.b16 %v1291, %v1291
  %v1365 = vpack.c.b16 %v1292, %v1292
  %v1366 = vpack.c.b16 %v1293, %v1293
  %vm1440 = vcmask 519168
  %1441 = vst.msk [vmem:[%s4] sm:$0xf] %vm1440, %v1294
  %1442 = vst.msk [vmem:[%s4 + $0x4] sm:$0xf] %vm1440, %v1295
  %1443 = vst.msk [vmem:[%s4 + $0x8] sm:$0xf] %vm1440, %v1296
  %1444 = vst.msk [vmem:[%s4 + $0xc] sm:$0xf] %vm1440, %v1297
  %1445 = vst.msk [vmem:[%s4 + $0x10] sm:$0xf] %vm1440, %v1298
  %1446 = vst.msk [vmem:[%s4 + $0x14] sm:$0xf] %vm1440, %v1299
  %1447 = vst.msk [vmem:[%s4 + $0x18] sm:$0xf] %vm1440, %v1300
  %1448 = vst.msk [vmem:[%s4 + $0x1c] sm:$0xf] %vm1440, %v1301
  %1449 = vst.msk [vmem:[%s4 + $0x20] sm:$0xf] %vm1440, %v1302
  %1450 = vst.msk [vmem:[%s4 + $0x24] sm:$0xf] %vm1440, %v1303
  %1451 = vst.msk [vmem:[%s4 + $0x28] sm:$0xf] %vm1440, %v1304
  %1452 = vst.msk [vmem:[%s4 + $0x2c] sm:$0xf] %vm1440, %v1305
  %1453 = vst.msk [vmem:[%s4 + $0x30] sm:$0xf] %vm1440, %v1306
  %1454 = vst.msk [vmem:[%s4 + $0x34] sm:$0xf] %vm1440, %v1307
  %1455 = vst.msk [vmem:[%s4 + $0x38] sm:$0xf] %vm1440, %v1308
  %1456 = vst.msk [vmem:[%s4 + $0x3c] sm:$0xf] %vm1440, %v1309
  %1457 = vst.msk [vmem:[%s4 + $0x40] sm:$0xf] %vm1440, %v1310
  %1458 = vst.msk [vmem:[%s4 + $0x44] sm:$0xf] %vm1440, %v1311
  %1459 = vst.msk [vmem:[%s4 + $0x48] sm:$0xf] %vm1440, %v1312
  %1460 = vst.msk [vmem:[%s4 + $0x4c] sm:$0xf] %vm1440, %v1313
  %1461 = vst.msk [vmem:[%s4 + $0x50] sm:$0xf] %vm1440, %v1314
  %1462 = vst.msk [vmem:[%s4 + $0x54] sm:$0xf] %vm1440, %v1315
  %1463 = vst.msk [vmem:[%s4 + $0x58] sm:$0xf] %vm1440, %v1316
  %1464 = vst.msk [vmem:[%s4 + $0x5c] sm:$0xf] %vm1440, %v1317
  %1465 = vst.msk [vmem:[%s4 + $0x60] sm:$0xf] %vm1440, %v1318
  %1466 = vst.msk [vmem:[%s4 + $0x64] sm:$0xf] %vm1440, %v1319
  %1467 = vst.msk [vmem:[%s4 + $0x68] sm:$0xf] %vm1440, %v1320
  %1468 = vst.msk [vmem:[%s4 + $0x6c] sm:$0xf] %vm1440, %v1321
  %1469 = vst.msk [vmem:[%s4 + $0x70] sm:$0xf] %vm1440, %v1322
  %1470 = vst.msk [vmem:[%s4 + $0x74] sm:$0xf] %vm1440, %v1323
  %1471 = vst.msk [vmem:[%s4 + $0x78] sm:$0xf] %vm1440, %v1324
  %1472 = vst.msk [vmem:[%s4 + $0x7c] sm:$0xf] %vm1440, %v1325
  %1473 = vst.msk [vmem:[%s4 + $0x80] sm:$0xf] %vm1440, %v1326
  %1474 = vst.msk [vmem:[%s4 + $0x84] sm:$0xf] %vm1440, %v1327
  %1475 = vst.msk [vmem:[%s4 + $0x88] sm:$0xf] %vm1440, %v1328
  %1476 = vst.msk [vmem:[%s4 + $0x8c] sm:$0xf] %vm1440, %v1329
  %1477 = vst.msk [vmem:[%s4 + $0x90] sm:$0xf] %vm1440, %v1330
  %1478 = vst.msk [vmem:[%s4 + $0x94] sm:$0xf] %vm1440, %v1331
  %1479 = vst.msk [vmem:[%s4 + $0x98] sm:$0xf] %vm1440, %v1332
  %1480 = vst.msk [vmem:[%s4 + $0x9c] sm:$0xf] %vm1440, %v1333
  %1481 = vst.msk [vmem:[%s4 + $0xa0] sm:$0xf] %vm1440, %v1334
  %1482 = vst.msk [vmem:[%s4 + $0xa4] sm:$0xf] %vm1440, %v1335
  %1483 = vst.msk [vmem:[%s4 + $0xa8] sm:$0xf] %vm1440, %v1336
  %1484 = vst.msk [vmem:[%s4 + $0xac] sm:$0xf] %vm1440, %v1337
  %1485 = vst.msk [vmem:[%s4 + $0xb0] sm:$0xf] %vm1440, %v1338
  %1486 = vst.msk [vmem:[%s4 + $0xb4] sm:$0xf] %vm1440, %v1339
  %1487 = vst.msk [vmem:[%s4 + $0xb8] sm:$0xf] %vm1440, %v1340
  %1488 = vst.msk [vmem:[%s4 + $0xbc] sm:$0xf] %vm1440, %v1341
  %1489 = vst.msk [vmem:[%s4 + $0xc0] sm:$0xf] %vm1440, %v1342
  %1490 = vst.msk [vmem:[%s4 + $0xc4] sm:$0xf] %vm1440, %v1343
  %1491 = vst.msk [vmem:[%s4 + $0xc8] sm:$0xf] %vm1440, %v1344
  %1492 = vst.msk [vmem:[%s4 + $0xcc] sm:$0xf] %vm1440, %v1345
  %1493 = vst.msk [vmem:[%s4 + $0xd0] sm:$0xf] %vm1440, %v1346
  %1494 = vst.msk [vmem:[%s4 + $0xd4] sm:$0xf] %vm1440, %v1347
  %1495 = vst.msk [vmem:[%s4 + $0xd8] sm:$0xf] %vm1440, %v1348
  %1496 = vst.msk [vmem:[%s4 + $0xdc] sm:$0xf] %vm1440, %v1349
  %1497 = vst.msk [vmem:[%s4 + $0xe0] sm:$0xf] %vm1440, %v1350
  %1498 = vst.msk [vmem:[%s4 + $0xe4] sm:$0xf] %vm1440, %v1351
  %1499 = vst.msk [vmem:[%s4 + $0xe8] sm:$0xf] %vm1440, %v1352
  %1500 = vst.msk [vmem:[%s4 + $0xec] sm:$0xf] %vm1440, %v1353
  %1501 = vst.msk [vmem:[%s4 + $0xf0] sm:$0xf] %vm1440, %v1354
  %1502 = vst.msk [vmem:[%s4 + $0xf4] sm:$0xf] %vm1440, %v1355
  %1503 = vst.msk [vmem:[%s4 + $0xf8] sm:$0xf] %vm1440, %v1356
  %1504 = vst.msk [vmem:[%s4 + $0xfc] sm:$0xf] %vm1440, %v1357
  %1505 = vst.msk [vmem:[%s4 + $0x100] sm:$0xf] %vm1440, %v1358
  %1506 = vst.msk [vmem:[%s4 + $0x104] sm:$0xf] %vm1440, %v1359
  %1507 = vst.msk [vmem:[%s4 + $0x108] sm:$0xf] %vm1440, %v1360
  %1508 = vst.msk [vmem:[%s4 + $0x10c] sm:$0xf] %vm1440, %v1361
  %1509 = vst.msk [vmem:[%s4 + $0x110] sm:$0xf] %vm1440, %v1362
  %1510 = vst.msk [vmem:[%s4 + $0x114] sm:$0xf] %vm1440, %v1363
  %1511 = vst.msk [vmem:[%s4 + $0x118] sm:$0xf] %vm1440, %v1364
  %1512 = vst.msk [vmem:[%s4 + $0x11c] sm:$0xf] %vm1440, %v1365
  %vm1513 = vcmask 516096
  %1514 = vst.msk [vmem:[%s4 + $0x120] sm:$0x1] %vm1513, %v1366
  // Predicated region
  $region18: #{decoder_forward.11} parent=0 // pred_check
    _
  $region19: #{decoder_forward.11} parent=0 // pred_check_branch
    %1516 = sbr.rel (0) target = $region21
  $region20: #{decoder_forward.11} parent=0 // pred_region
    _
  $region21: #{decoder_forward.11} parent=0 // pred_fallthru
    _
  // Predicated region
  $region22: #{decoder_forward.11} parent=0 // pred_check
    _
  $region23: #{decoder_forward.11} parent=0 // pred_check_branch
    %1518 = sbr.rel (0) target = $region25
  $region24: #{decoder_forward.11} parent=0 // pred_region
    _
  $region25: #{decoder_forward.11} parent=0 // pred_fallthru
    _

// kernel: decoder_forward.12
$region0: #{decoder_forward.12}
  #allocation0 [shape = 'u32[]', space=smem, size = 0x4, offset = 0x4, fixed_abs, tag = 'smem constant byte address 0x4 - core index']
  #allocation1 [shape = 'u32[144,128]{1,0:T(1,128)}', space=vmem, size = 0x12000, scoped, tag = 'internal scratch']
  %s0 = inlined_call_operand.vmem [shape: bf16[3072,128], index: 0, kind: input, shape index: {}]
  %s1 = inlined_call_operand.vmem [shape: bf16[128,32], index: 1, kind: input, shape index: {}]
  %s2 = inlined_call_operand.vmem [shape: f32[1,32], index: 2, kind: input, shape index: {}]
  %s3 = inlined_call_operand.vmem [shape: f32[1,32], index: 3, kind: input, shape index: {}]
  %s4 = inlined_call_operand.vmem [shape: bf16[3072,32], index: 4, kind: output, shape index: {}]
  %s5 = sld [smem:[#allocation0]]
  $region49: #{decoder_forward.12} parent=0
    _
  %s7 = ssub.s32 1, %s5
  %s8 = scalar_select 0, %s7, %s5
  loop: start=0, step=1, limit=5
  $region2: #{decoder_forward.12} parent=0 // loop_pre_header
    _
  $region3: #{decoder_forward.12} parent=0 // loop_header
    %s10 = sphi 0, %s14
    %p11 = scmp.ge.s32.totalorder %s10, 5
    %s20 = sphi 0, %s22
    %s23 = sphi 0, %s20
    %s24 = sphi 0, %s23
    %s40 = sphi 0, %s24
    %s44 = sphi 0, %s44
    %s46 = sphi 0, %s44
    %s47 = sphi 0, %s46
    %s61 = sphi 0, %s47
    %s65 = sphi 0, %s65
    %s67 = sphi 0, %s65
    %s68 = sphi 0, %s67
    %s82 = sphi 0, %s68
    %s86 = sphi 0, %s86
    %s88 = sphi 0, %s86
    %s89 = sphi 0, %s88
    %s103 = sphi 0, %s89
    %s109 = sphi 0, %s111
    %s112 = sphi 0, %s109
    %s113 = sphi 0, %s112
    %s129 = sphi 0, %s113
  $region4: #{decoder_forward.12} parent=0 // loop_header_branch
    %13 = sbr.rel (%p11) target = $region8
  $region5: #{decoder_forward.12} parent=0 // loop_body
    %s15 = ssub.s32 %s10, 1
    %s16 = ssub.s32 %s10, 2
    %s17 = sadd.s32 %s10, 1
    %s18 = ssub.s32 %s10, %s17
    %p19 = scmp.eq.s32.totalorder %s18, 0
    %s21 = sadd.s32 %s20, 1
    %s22 = scalar_select %p19, %s20, %s21
    %p25 = pneg %p19
    %p26 = scmp.eq.s32.totalorder %s10, 2
    %p27 = por %p25, %p26
    %p28 = scmp.ne.s32.totalorder %s20, %s23
    %p29 = scmp.eq.s32.totalorder %s10, 0
    %p30 = por %p28, %p29
    %p31 = scmp.ne.s32.totalorder %s20, %s23
    %p32 = scmp.eq.s32.totalorder %s15, 2
    %p33 = por %p31, %p32
    %p34 = scmp.ne.s32.totalorder %s23, %s24
    %p35 = scmp.eq.s32.totalorder %s15, 0
    %p36 = por %p34, %p35
    %p37 = scmp.ne.s32.totalorder %s23, %s24
    %p38 = scmp.eq.s32.totalorder %s16, 2
    %p39 = por %p37, %p38
    %p41 = scmp.ne.s32.totalorder %s24, %s40
    %p42 = scmp.eq.s32.totalorder %s16, 0
    %p43 = por %p41, %p42
    %s45 = sadd.s32 %s44, 1
    %p48 = scmp.eq.s32.totalorder %s10, 2
    %p49 = scmp.ne.s32.totalorder %s44, %s46
    %p50 = scmp.eq.s32.totalorder %s10, 0
    %p51 = por %p49, %p50
    %p52 = scmp.ne.s32.totalorder %s44, %s46
    %p53 = scmp.eq.s32.totalorder %s15, 2
    %p54 = por %p52, %p53
    %p55 = scmp.ne.s32.totalorder %s46, %s47
    %p56 = scmp.eq.s32.totalorder %s15, 0
    %p57 = por %p55, %p56
    %p58 = scmp.ne.s32.totalorder %s46, %s47
    %p59 = scmp.eq.s32.totalorder %s16, 2
    %p60 = por %p58, %p59
    %p62 = scmp.ne.s32.totalorder %s47, %s61
    %p63 = scmp.eq.s32.totalorder %s16, 0
    %p64 = por %p62, %p63
    %s66 = sadd.s32 %s65, 1
    %p69 = scmp.eq.s32.totalorder %s10, 2
    %p70 = scmp.ne.s32.totalorder %s65, %s67
    %p71 = scmp.eq.s32.totalorder %s10, 0
    %p72 = por %p70, %p71
    %p73 = scmp.ne.s32.totalorder %s65, %s67
    %p74 = scmp.eq.s32.totalorder %s15, 2
    %p75 = por %p73, %p74
    %p76 = scmp.ne.s32.totalorder %s67, %s68
    %p77 = scmp.eq.s32.totalorder %s15, 0
    %p78 = por %p76, %p77
    %p79 = scmp.ne.s32.totalorder %s67, %s68
    %p80 = scmp.eq.s32.totalorder %s16, 2
    %p81 = por %p79, %p80
    %p83 = scmp.ne.s32.totalorder %s68, %s82
    %p84 = scmp.eq.s32.totalorder %s16, 0
    %p85 = por %p83, %p84
    %s87 = sadd.s32 %s86, 1
    %p90 = scmp.eq.s32.totalorder %s10, 2
    %p91 = scmp.ne.s32.totalorder %s86, %s88
    %p92 = scmp.eq.s32.totalorder %s10, 0
    %p93 = por %p91, %p92
    %p94 = scmp.ne.s32.totalorder %s86, %s88
    %p95 = scmp.eq.s32.totalorder %s15, 2
    %p96 = por %p94, %p95
    %p97 = scmp.ne.s32.totalorder %s88, %s89
    %p98 = scmp.eq.s32.totalorder %s15, 0
    %p99 = por %p97, %p98
    %p100 = scmp.ne.s32.totalorder %s88, %s89
    %p101 = scmp.eq.s32.totalorder %s16, 2
    %p102 = por %p100, %p101
    %p104 = scmp.ne.s32.totalorder %s89, %s103
    %p105 = scmp.eq.s32.totalorder %s16, 0
    %p106 = por %p104, %p105
    %s107 = ssub.s32 %s10, %s17
    %p108 = scmp.eq.s32.totalorder %s107, 0
    %s110 = sadd.s32 %s109, 1
    %s111 = scalar_select %p108, %s109, %s110
    %p114 = pneg %p108
    %p115 = scmp.eq.s32.totalorder %s10, 2
    %p116 = por %p114, %p115
    %p117 = scmp.ne.s32.totalorder %s109, %s112
    %p118 = scmp.eq.s32.totalorder %s10, 0
    %p119 = por %p117, %p118
    %p120 = scmp.ne.s32.totalorder %s109, %s112
    %p121 = scmp.eq.s32.totalorder %s15, 2
    %p122 = por %p120, %p121
    %p123 = scmp.ne.s32.totalorder %s112, %s113
    %p124 = scmp.eq.s32.totalorder %s15, 0
    %p125 = por %p123, %p124
    %p126 = scmp.ne.s32.totalorder %s112, %s113
    %p127 = scmp.eq.s32.totalorder %s16, 2
    %p128 = por %p126, %p127
    %p130 = scmp.ne.s32.totalorder %s113, %s129
    %p131 = scmp.eq.s32.totalorder %s16, 0
    %p132 = por %p130, %p131
    %p133 = scmp.le.s32.totalorder 1, %s10
    %p134 = scmp.lt.s32.totalorder %s10, 4
    %p135 = pnand %p133, %p134
    %p136 = pneg %p135
    // Predicated region
    $region9: #{decoder_forward.12} parent=5 // pred_check
      _
    $region10: #{decoder_forward.12} parent=5 // pred_check_branch
      %138 = sbr.rel (%p135) target = $region12
    $region11: #{decoder_forward.12} parent=5 // pred_region
      %s139 = ssub.s32 %s10, 1
      // Predicated region
      $region13: #{decoder_forward.12} parent=11 // pred_check
        %p140 = pneg %p57
      $region14: #{decoder_forward.12} parent=11 // pred_check_branch
        %142 = sbr.rel (%p140) target = $region16
      $region15: #{decoder_forward.12} parent=11 // pred_region
        _
      $region16: #{decoder_forward.12} parent=11 // pred_fallthru
        _
      // Predicated region
      $region17: #{decoder_forward.12} parent=11 // pred_check
        %p143 = pneg %p78
      $region18: #{decoder_forward.12} parent=11 // pred_check_branch
        %145 = sbr.rel (%p143) target = $region20
      $region19: #{decoder_forward.12} parent=11 // pred_region
        _
      $region20: #{decoder_forward.12} parent=11 // pred_fallthru
        _
      // Predicated region
      $region21: #{decoder_forward.12} parent=11 // pred_check
        %p146 = pneg %p99
      $region22: #{decoder_forward.12} parent=11 // pred_check_branch
        %148 = sbr.rel (%p146) target = $region24
      $region23: #{decoder_forward.12} parent=11 // pred_region
        _
      $region24: #{decoder_forward.12} parent=11 // pred_fallthru
        _
    $region12: #{decoder_forward.12} parent=5 // pred_fallthru
      _
    %p149 = scmp.lt.s32.totalorder %s10, 3
    // Predicated region
    $region25: #{decoder_forward.12} parent=5 // pred_check
      %p150 = pneg %p149
    $region26: #{decoder_forward.12} parent=5 // pred_check_branch
      %152 = sbr.rel (%p150) target = $region28
    $region27: #{decoder_forward.12} parent=5 // pred_region
      // Predicated region
      $region29: #{decoder_forward.12} parent=27 // pred_check
        %p153 = pneg %p30
      $region30: #{decoder_forward.12} parent=27 // pred_check_branch
        %155 = sbr.rel (%p153) target = $region32
      $region31: #{decoder_forward.12} parent=27 // pred_region
        %s156 = smul.u32 128, %s10
        %p157 = scmp.lt.s32.totalorder %s156, 383
        %s158 = scalar_select %p157, %s156, 383
        %s159 = smul.addr %s158, 4
        %s160 = scalar_lea.vmem %s0, %s159
        %s161 = smul.u32 128, %s10
      $region32: #{decoder_forward.12} parent=27 // pred_fallthru
        _
    $region28: #{decoder_forward.12} parent=5 // pred_fallthru
      _
    %p162 = scmp.le.s32.totalorder 1, %s10
    %p163 = scmp.lt.s32.totalorder %s10, 4
    %p164 = pnand %p162, %p163
    %p165 = pneg %p164
    // Predicated region
    $region33: #{decoder_forward.12} parent=5 // pred_check
      _
    $region34: #{decoder_forward.12} parent=5 // pred_check_branch
      %167 = sbr.rel (%p164) target = $region36
    $region35: #{decoder_forward.12} parent=5 // pred_region
      %s168 = ssub.s32 %s10, 1
      %s169 = smul.u32 128, %s15
      %p170 = scmp.lt.s32.totalorder %s169, 383
      %s171 = scalar_select %p170, %s169, 383
      %s172 = smul.addr %s171, 4
      %s173 = scalar_lea.vmem %s0, %s172
      %p174 = pneg %p36
      %p175 = pneg %p33
      %p176 = pneg %p57
      %p177 = pneg %p54
      %p178 = pneg %p78
      %p179 = pneg %p75
      %p180 = pneg %p99
      %p181 = pneg %p96
      %p182 = pneg %p125
      %p183 = pneg %p122
      %s184 = smul.u32 128, %s15
      %p185 = scmp.lt.s32.totalorder %s184, 383
      %s186 = scalar_select %p185, %s184, 383
      %s187 = smul.addr %s186, 4
      %s188 = scalar_lea.vmem %s4, %s187
      %s189 = smul.u32 128, %s15
      %p190 = scmp.lt.s32.totalorder %s189, 383
      %s191 = scalar_select %p190, %s189, 383
      %s192 = smul.addr %s191, 4
      %s193 = scalar_lea.vmem %s0, %s192
      %s194 = smul.u32 128, %s15
      %s195 = smul.u32 128, %s15
      %p196 = scmp.lt.s32.totalorder %s195, 383
      %s197 = scalar_select %p196, %s195, 383
      %s198 = smul.addr %s197, 4
      %s199 = scalar_lea.vmem %s4, %s198
      %s200 = smul.u32 128, %s15
      %v202 = vld [vmem:[%s193] sm:$0xf]
      %v203 = vld [vmem:[%s193 + $0x4] sm:$0xf]
      %v204 = vld [vmem:[%s193 + $0x8] sm:$0xf]
      %v205 = vld [vmem:[%s193 + $0xc] sm:$0xf]
      %v206 = vld [vmem:[%s193 + $0x10] sm:$0xf]
      %v207 = vld [vmem:[%s193 + $0x14] sm:$0xf]
      %v208 = vld [vmem:[%s193 + $0x18] sm:$0xf]
      %v209 = vld [vmem:[%s193 + $0x1c] sm:$0xf]
      %v210 = vld [vmem:[%s193 + $0x20] sm:$0xf]
      %v211 = vld [vmem:[%s193 + $0x24] sm:$0xf]
      %v212 = vld [vmem:[%s193 + $0x28] sm:$0xf]
      %v213 = vld [vmem:[%s193 + $0x2c] sm:$0xf]
      %v214 = vld [vmem:[%s193 + $0x30] sm:$0xf]
      %v215 = vld [vmem:[%s193 + $0x34] sm:$0xf]
      %v216 = vld [vmem:[%s193 + $0x38] sm:$0xf]
      %v217 = vld [vmem:[%s193 + $0x3c] sm:$0xf]
      %v218 = vld [vmem:[%s193 + $0x40] sm:$0xf]
      %v219 = vld [vmem:[%s193 + $0x44] sm:$0xf]
      %v220 = vld [vmem:[%s193 + $0x48] sm:$0xf]
      %v221 = vld [vmem:[%s193 + $0x4c] sm:$0xf]
      %v222 = vld [vmem:[%s193 + $0x50] sm:$0xf]
      %v223 = vld [vmem:[%s193 + $0x54] sm:$0xf]
      %v224 = vld [vmem:[%s193 + $0x58] sm:$0xf]
      %v225 = vld [vmem:[%s193 + $0x5c] sm:$0xf]
      %v226 = vld [vmem:[%s193 + $0x60] sm:$0xf]
      %v227 = vld [vmem:[%s193 + $0x64] sm:$0xf]
      %v228 = vld [vmem:[%s193 + $0x68] sm:$0xf]
      %v229 = vld [vmem:[%s193 + $0x6c] sm:$0xf]
      %v230 = vld [vmem:[%s193 + $0x70] sm:$0xf]
      %v231 = vld [vmem:[%s193 + $0x74] sm:$0xf]
      %v232 = vld [vmem:[%s193 + $0x78] sm:$0xf]
      %v233 = vld [vmem:[%s193 + $0x7c] sm:$0xf]
      %v234 = vld [vmem:[%s193 + $0x80] sm:$0xf]
      %v235 = vld [vmem:[%s193 + $0x84] sm:$0xf]
      %v236 = vld [vmem:[%s193 + $0x88] sm:$0xf]
      %v237 = vld [vmem:[%s193 + $0x8c] sm:$0xf]
      %v238 = vld [vmem:[%s193 + $0x90] sm:$0xf]
      %v239 = vld [vmem:[%s193 + $0x94] sm:$0xf]
      %v240 = vld [vmem:[%s193 + $0x98] sm:$0xf]
      %v241 = vld [vmem:[%s193 + $0x9c] sm:$0xf]
      %v242 = vld [vmem:[%s193 + $0xa0] sm:$0xf]
      %v243 = vld [vmem:[%s193 + $0xa4] sm:$0xf]
      %v244 = vld [vmem:[%s193 + $0xa8] sm:$0xf]
      %v245 = vld [vmem:[%s193 + $0xac] sm:$0xf]
      %v246 = vld [vmem:[%s193 + $0xb0] sm:$0xf]
      %v247 = vld [vmem:[%s193 + $0xb4] sm:$0xf]
      %v248 = vld [vmem:[%s193 + $0xb8] sm:$0xf]
      %v249 = vld [vmem:[%s193 + $0xbc] sm:$0xf]
      %v250 = vld [vmem:[%s193 + $0xc0] sm:$0xf]
      %v251 = vld [vmem:[%s193 + $0xc4] sm:$0xf]
      %v252 = vld [vmem:[%s193 + $0xc8] sm:$0xf]
      %v253 = vld [vmem:[%s193 + $0xcc] sm:$0xf]
      %v254 = vld [vmem:[%s193 + $0xd0] sm:$0xf]
      %v255 = vld [vmem:[%s193 + $0xd4] sm:$0xf]
      %v256 = vld [vmem:[%s193 + $0xd8] sm:$0xf]
      %v257 = vld [vmem:[%s193 + $0xdc] sm:$0xf]
      %v258 = vld [vmem:[%s193 + $0xe0] sm:$0xf]
      %v259 = vld [vmem:[%s193 + $0xe4] sm:$0xf]
      %v260 = vld [vmem:[%s193 + $0xe8] sm:$0xf]
      %v261 = vld [vmem:[%s193 + $0xec] sm:$0xf]
      %v262 = vld [vmem:[%s193 + $0xf0] sm:$0xf]
      %v263 = vld [vmem:[%s193 + $0xf4] sm:$0xf]
      %v264 = vld [vmem:[%s193 + $0xf8] sm:$0xf]
      %v265 = vld [vmem:[%s193 + $0xfc] sm:$0xf]
      %v266 = vld [vmem:[%s193 + $0x100] sm:$0xf]
      %v267 = vld [vmem:[%s193 + $0x104] sm:$0xf]
      %v268 = vld [vmem:[%s193 + $0x108] sm:$0xf]
      %v269 = vld [vmem:[%s193 + $0x10c] sm:$0xf]
      %v270 = vld [vmem:[%s193 + $0x110] sm:$0xf]
      %v271 = vld [vmem:[%s193 + $0x114] sm:$0xf]
      %v272 = vld [vmem:[%s193 + $0x118] sm:$0xf]
      %v273 = vld [vmem:[%s193 + $0x11c] sm:$0xf]
      %v274 = vld [vmem:[%s193 + $0x120] sm:$0xf]
      %v275 = vld [vmem:[%s193 + $0x124] sm:$0xf]
      %v276 = vld [vmem:[%s193 + $0x128] sm:$0xf]
      %v277 = vld [vmem:[%s193 + $0x12c] sm:$0xf]
      %v278 = vld [vmem:[%s193 + $0x130] sm:$0xf]
      %v279 = vld [vmem:[%s193 + $0x134] sm:$0xf]
      %v280 = vld [vmem:[%s193 + $0x138] sm:$0xf]
      %v281 = vld [vmem:[%s193 + $0x13c] sm:$0xf]
      %v282 = vld [vmem:[%s193 + $0x140] sm:$0xf]
      %v283 = vld [vmem:[%s193 + $0x144] sm:$0xf]
      %v284 = vld [vmem:[%s193 + $0x148] sm:$0xf]
      %v285 = vld [vmem:[%s193 + $0x14c] sm:$0xf]
      %v286 = vld [vmem:[%s193 + $0x150] sm:$0xf]
      %v287 = vld [vmem:[%s193 + $0x154] sm:$0xf]
      %v288 = vld [vmem:[%s193 + $0x158] sm:$0xf]
      %v289 = vld [vmem:[%s193 + $0x15c] sm:$0xf]
      %v290 = vld [vmem:[%s193 + $0x160] sm:$0xf]
      %v291 = vld [vmem:[%s193 + $0x164] sm:$0xf]
      %v292 = vld [vmem:[%s193 + $0x168] sm:$0xf]
      %v293 = vld [vmem:[%s193 + $0x16c] sm:$0xf]
      %v294 = vld [vmem:[%s193 + $0x170] sm:$0xf]
      %v295 = vld [vmem:[%s193 + $0x174] sm:$0xf]
      %v296 = vld [vmem:[%s193 + $0x178] sm:$0xf]
      %v297 = vld [vmem:[%s193 + $0x17c] sm:$0xf]
      %v298 = vld [vmem:[%s193 + $0x180] sm:$0xf]
      %v299 = vld [vmem:[%s193 + $0x184] sm:$0xf]
      %v300 = vld [vmem:[%s193 + $0x188] sm:$0xf]
      %v301 = vld [vmem:[%s193 + $0x18c] sm:$0xf]
      %v302 = vld [vmem:[%s193 + $0x190] sm:$0xf]
      %v303 = vld [vmem:[%s193 + $0x194] sm:$0xf]
      %v304 = vld [vmem:[%s193 + $0x198] sm:$0xf]
      %v305 = vld [vmem:[%s193 + $0x19c] sm:$0xf]
      %v306 = vld [vmem:[%s193 + $0x1a0] sm:$0xf]
      %v307 = vld [vmem:[%s193 + $0x1a4] sm:$0xf]
      %v308 = vld [vmem:[%s193 + $0x1a8] sm:$0xf]
      %v309 = vld [vmem:[%s193 + $0x1ac] sm:$0xf]
      %v310 = vld [vmem:[%s193 + $0x1b0] sm:$0xf]
      %v311 = vld [vmem:[%s193 + $0x1b4] sm:$0xf]
      %v312 = vld [vmem:[%s193 + $0x1b8] sm:$0xf]
      %v313 = vld [vmem:[%s193 + $0x1bc] sm:$0xf]
      %v314 = vld [vmem:[%s193 + $0x1c0] sm:$0xf]
      %v315 = vld [vmem:[%s193 + $0x1c4] sm:$0xf]
      %v316 = vld [vmem:[%s193 + $0x1c8] sm:$0xf]
      %v317 = vld [vmem:[%s193 + $0x1cc] sm:$0xf]
      %v318 = vld [vmem:[%s193 + $0x1d0] sm:$0xf]
      %v319 = vld [vmem:[%s193 + $0x1d4] sm:$0xf]
      %v320 = vld [vmem:[%s193 + $0x1d8] sm:$0xf]
      %v321 = vld [vmem:[%s193 + $0x1dc] sm:$0xf]
      %v322 = vld [vmem:[%s193 + $0x1e0] sm:$0xf]
      %v323 = vld [vmem:[%s193 + $0x1e4] sm:$0xf]
      %v324 = vld [vmem:[%s193 + $0x1e8] sm:$0xf]
      %v325 = vld [vmem:[%s193 + $0x1ec] sm:$0xf]
      %v326 = vld [vmem:[%s193 + $0x1f0] sm:$0xf]
      %v327 = vld [vmem:[%s193 + $0x1f4] sm:$0xf]
      %v328 = vld [vmem:[%s193 + $0x1f8] sm:$0xf]
      %v329 = vld [vmem:[%s193 + $0x1fc] sm:$0xf]
      %v330 = vmax.bf16 %v202, 0
      %v331 = vmax.bf16 %v203, 0
      %v332 = vmax.bf16 %v204, 0
      %v333 = vmax.bf16 %v205, 0
      %v334 = vmax.bf16 %v206, 0
      %v335 = vmax.bf16 %v207, 0
      %v336 = vmax.bf16 %v208, 0
      %v337 = vmax.bf16 %v209, 0
      %v338 = vmax.bf16 %v210, 0
      %v339 = vmax.bf16 %v211, 0
      %v340 = vmax.bf16 %v212, 0
      %v341 = vmax.bf16 %v213, 0
      %v342 = vmax.bf16 %v214, 0
      %v343 = vmax.bf16 %v215, 0
      %v344 = vmax.bf16 %v216, 0
      %v345 = vmax.bf16 %v217, 0
      %v346 = vmax.bf16 %v218, 0
      %v347 = vmax.bf16 %v219, 0
      %v348 = vmax.bf16 %v220, 0
      %v349 = vmax.bf16 %v221, 0
      %v350 = vmax.bf16 %v222, 0
      %v351 = vmax.bf16 %v223, 0
      %v352 = vmax.bf16 %v224, 0
      %v353 = vmax.bf16 %v225, 0
      %v354 = vmax.bf16 %v226, 0
      %v355 = vmax.bf16 %v227, 0
      %v356 = vmax.bf16 %v228, 0
      %v357 = vmax.bf16 %v229, 0
      %v358 = vmax.bf16 %v230, 0
      %v359 = vmax.bf16 %v231, 0
      %v360 = vmax.bf16 %v232, 0
      %v361 = vmax.bf16 %v233, 0
      %v362 = vmax.bf16 %v234, 0
      %v363 = vmax.bf16 %v235, 0
      %v364 = vmax.bf16 %v236, 0
      %v365 = vmax.bf16 %v237, 0
      %v366 = vmax.bf16 %v238, 0
      %v367 = vmax.bf16 %v239, 0
      %v368 = vmax.bf16 %v240, 0
      %v369 = vmax.bf16 %v241, 0
      %v370 = vmax.bf16 %v242, 0
      %v371 = vmax.bf16 %v243, 0
      %v372 = vmax.bf16 %v244, 0
      %v373 = vmax.bf16 %v245, 0
      %v374 = vmax.bf16 %v246, 0
      %v375 = vmax.bf16 %v247, 0
      %v376 = vmax.bf16 %v248, 0
      %v377 = vmax.bf16 %v249, 0
      %v378 = vmax.bf16 %v250, 0
      %v379 = vmax.bf16 %v251, 0
      %v380 = vmax.bf16 %v252, 0
      %v381 = vmax.bf16 %v253, 0
      %v382 = vmax.bf16 %v254, 0
      %v383 = vmax.bf16 %v255, 0
      %v384 = vmax.bf16 %v256, 0
      %v385 = vmax.bf16 %v257, 0
      %v386 = vmax.bf16 %v258, 0
      %v387 = vmax.bf16 %v259, 0
      %v388 = vmax.bf16 %v260, 0
      %v389 = vmax.bf16 %v261, 0
      %v390 = vmax.bf16 %v262, 0
      %v391 = vmax.bf16 %v263, 0
      %v392 = vmax.bf16 %v264, 0
      %v393 = vmax.bf16 %v265, 0
      %v394 = vmax.bf16 %v266, 0
      %v395 = vmax.bf16 %v267, 0
      %v396 = vmax.bf16 %v268, 0
      %v397 = vmax.bf16 %v269, 0
      %v398 = vmax.bf16 %v270, 0
      %v399 = vmax.bf16 %v271, 0
      %v400 = vmax.bf16 %v272, 0
      %v401 = vmax.bf16 %v273, 0
      %v402 = vmax.bf16 %v274, 0
      %v403 = vmax.bf16 %v275, 0
      %v404 = vmax.bf16 %v276, 0
      %v405 = vmax.bf16 %v277, 0
      %v406 = vmax.bf16 %v278, 0
      %v407 = vmax.bf16 %v279, 0
      %v408 = vmax.bf16 %v280, 0
      %v409 = vmax.bf16 %v281, 0
      %v410 = vmax.bf16 %v282, 0
      %v411 = vmax.bf16 %v283, 0
      %v412 = vmax.bf16 %v284, 0
      %v413 = vmax.bf16 %v285, 0
      %v414 = vmax.bf16 %v286, 0
      %v415 = vmax.bf16 %v287, 0
      %v416 = vmax.bf16 %v288, 0
      %v417 = vmax.bf16 %v289, 0
      %v418 = vmax.bf16 %v290, 0
      %v419 = vmax.bf16 %v291, 0
      %v420 = vmax.bf16 %v292, 0
      %v421 = vmax.bf16 %v293, 0
      %v422 = vmax.bf16 %v294, 0
      %v423 = vmax.bf16 %v295, 0
      %v424 = vmax.bf16 %v296, 0
      %v425 = vmax.bf16 %v297, 0
      %v426 = vmax.bf16 %v298, 0
      %v427 = vmax.bf16 %v299, 0
      %v428 = vmax.bf16 %v300, 0
      %v429 = vmax.bf16 %v301, 0
      %v430 = vmax.bf16 %v302, 0
      %v431 = vmax.bf16 %v303, 0
      %v432 = vmax.bf16 %v304, 0
      %v433 = vmax.bf16 %v305, 0
      %v434 = vmax.bf16 %v306, 0
      %v435 = vmax.bf16 %v307, 0
      %v436 = vmax.bf16 %v308, 0
      %v437 = vmax.bf16 %v309, 0
      %v438 = vmax.bf16 %v310, 0
      %v439 = vmax.bf16 %v311, 0
      %v440 = vmax.bf16 %v312, 0
      %v441 = vmax.bf16 %v313, 0
      %v442 = vmax.bf16 %v314, 0
      %v443 = vmax.bf16 %v315, 0
      %v444 = vmax.bf16 %v316, 0
      %v445 = vmax.bf16 %v317, 0
      %v446 = vmax.bf16 %v318, 0
      %v447 = vmax.bf16 %v319, 0
      %v448 = vmax.bf16 %v320, 0
      %v449 = vmax.bf16 %v321, 0
      %v450 = vmax.bf16 %v322, 0
      %v451 = vmax.bf16 %v323, 0
      %v452 = vmax.bf16 %v324, 0
      %v453 = vmax.bf16 %v325, 0
      %v454 = vmax.bf16 %v326, 0
      %v455 = vmax.bf16 %v327, 0
      %v456 = vmax.bf16 %v328, 0
      %v457 = vmax.bf16 %v329, 0
      %v458 = vld [vmem:[%s1] sm:$0xf]
      %v459 = vld [vmem:[%s1 + $0x4] sm:$0xf]
      %v460 = vld [vmem:[%s1 + $0x8] sm:$0xf]
      %v461 = vld [vmem:[%s1 + $0xc] sm:$0xf]
      %v462 = vld [vmem:[%s1 + $0x10] sm:$0xf]
      %v463 = vld [vmem:[%s1 + $0x14] sm:$0xf]
      %v464 = vld [vmem:[%s1 + $0x18] sm:$0xf]
      %v465 = vld [vmem:[%s1 + $0x1c] sm:$0xf]
      %v466 = vld [vmem:[%s1 + $0x20] sm:$0xf]
      %v467 = vld [vmem:[%s1 + $0x24] sm:$0xf]
      %v468 = vld [vmem:[%s1 + $0x28] sm:$0xf]
      %v469 = vld [vmem:[%s1 + $0x2c] sm:$0xf]
      %v470 = vld [vmem:[%s1 + $0x30] sm:$0xf]
      %v471 = vld [vmem:[%s1 + $0x34] sm:$0xf]
      %v472 = vld [vmem:[%s1 + $0x38] sm:$0xf]
      %v473 = vld [vmem:[%s1 + $0x3c] sm:$0xf]
      %v602 = vunpack.c.l.b16 %v330
      %v603 = vunpack.c.l.b16 %v331
      %v604 = vunpack.c.l.b16 %v332
      %v605 = vunpack.c.l.b16 %v333
      %v606 = vunpack.c.l.b16 %v334
      %v607 = vunpack.c.l.b16 %v335
      %v608 = vunpack.c.l.b16 %v336
      %v609 = vunpack.c.l.b16 %v337
      %v610 = vunpack.c.l.b16 %v338
      %v611 = vunpack.c.l.b16 %v339
      %v612 = vunpack.c.l.b16 %v340
      %v613 = vunpack.c.l.b16 %v341
      %v614 = vunpack.c.l.b16 %v342
      %v615 = vunpack.c.l.b16 %v343
      %v616 = vunpack.c.l.b16 %v344
      %v617 = vunpack.c.l.b16 %v345
      %v618 = vunpack.c.l.b16 %v346
      %v619 = vunpack.c.l.b16 %v347
      %v620 = vunpack.c.l.b16 %v348
      %v621 = vunpack.c.l.b16 %v349
      %v622 = vunpack.c.l.b16 %v350
      %v623 = vunpack.c.l.b16 %v351
      %v624 = vunpack.c.l.b16 %v352
      %v625 = vunpack.c.l.b16 %v353
      %v626 = vunpack.c.l.b16 %v354
      %v627 = vunpack.c.l.b16 %v355
      %v628 = vunpack.c.l.b16 %v356
      %v629 = vunpack.c.l.b16 %v357
      %v630 = vunpack.c.l.b16 %v358
      %v631 = vunpack.c.l.b16 %v359
      %v632 = vunpack.c.l.b16 %v360
      %v633 = vunpack.c.l.b16 %v361
      %v634 = vunpack.c.l.b16 %v362
      %v635 = vunpack.c.l.b16 %v363
      %v636 = vunpack.c.l.b16 %v364
      %v637 = vunpack.c.l.b16 %v365
      %v638 = vunpack.c.l.b16 %v366
      %v639 = vunpack.c.l.b16 %v367
      %v640 = vunpack.c.l.b16 %v368
      %v641 = vunpack.c.l.b16 %v369
      %v642 = vunpack.c.l.b16 %v370
      %v643 = vunpack.c.l.b16 %v371
      %v644 = vunpack.c.l.b16 %v372
      %v645 = vunpack.c.l.b16 %v373
      %v646 = vunpack.c.l.b16 %v374
      %v647 = vunpack.c.l.b16 %v375
      %v648 = vunpack.c.l.b16 %v376
      %v649 = vunpack.c.l.b16 %v377
      %v650 = vunpack.c.l.b16 %v378
      %v651 = vunpack.c.l.b16 %v379
      %v652 = vunpack.c.l.b16 %v380
      %v653 = vunpack.c.l.b16 %v381
      %v654 = vunpack.c.l.b16 %v382
      %v655 = vunpack.c.l.b16 %v383
      %v656 = vunpack.c.l.b16 %v384
      %v657 = vunpack.c.l.b16 %v385
      %v658 = vunpack.c.l.b16 %v386
      %v659 = vunpack.c.l.b16 %v387
      %v660 = vunpack.c.l.b16 %v388
      %v661 = vunpack.c.l.b16 %v389
      %v662 = vunpack.c.l.b16 %v390
      %v663 = vunpack.c.l.b16 %v391
      %v664 = vunpack.c.l.b16 %v392
      %v665 = vunpack.c.l.b16 %v393
      %v666 = vunpack.c.l.b16 %v394
      %v667 = vunpack.c.l.b16 %v395
      %v668 = vunpack.c.l.b16 %v396
      %v669 = vunpack.c.l.b16 %v397
      %v670 = vunpack.c.l.b16 %v398
      %v671 = vunpack.c.l.b16 %v399
      %v672 = vunpack.c.l.b16 %v400
      %v673 = vunpack.c.l.b16 %v401
      %v674 = vunpack.c.l.b16 %v402
      %v675 = vunpack.c.l.b16 %v403
      %v676 = vunpack.c.l.b16 %v404
      %v677 = vunpack.c.l.b16 %v405
      %v678 = vunpack.c.l.b16 %v406
      %v679 = vunpack.c.l.b16 %v407
      %v680 = vunpack.c.l.b16 %v408
      %v681 = vunpack.c.l.b16 %v409
      %v682 = vunpack.c.l.b16 %v410
      %v683 = vunpack.c.l.b16 %v411
      %v684 = vunpack.c.l.b16 %v412
      %v685 = vunpack.c.l.b16 %v413
      %v686 = vunpack.c.l.b16 %v414
      %v687 = vunpack.c.l.b16 %v415
      %v688 = vunpack.c.l.b16 %v416
      %v689 = vunpack.c.l.b16 %v417
      %v690 = vunpack.c.l.b16 %v418
      %v691 = vunpack.c.l.b16 %v419
      %v692 = vunpack.c.l.b16 %v420
      %v693 = vunpack.c.l.b16 %v421
      %v694 = vunpack.c.l.b16 %v422
      %v695 = vunpack.c.l.b16 %v423
      %v696 = vunpack.c.l.b16 %v424
      %v697 = vunpack.c.l.b16 %v425
      %v698 = vunpack.c.l.b16 %v426
      %v699 = vunpack.c.l.b16 %v427
      %v700 = vunpack.c.l.b16 %v428
      %v701 = vunpack.c.l.b16 %v429
      %v702 = vunpack.c.l.b16 %v430
      %v703 = vunpack.c.l.b16 %v431
      %v704 = vunpack.c.l.b16 %v432
      %v705 = vunpack.c.l.b16 %v433
      %v706 = vunpack.c.l.b16 %v434
      %v707 = vunpack.c.l.b16 %v435
      %v708 = vunpack.c.l.b16 %v436
      %v709 = vunpack.c.l.b16 %v437
      %v710 = vunpack.c.l.b16 %v438
      %v711 = vunpack.c.l.b16 %v439
      %v712 = vunpack.c.l.b16 %v440
      %v713 = vunpack.c.l.b16 %v441
      %v714 = vunpack.c.l.b16 %v442
      %v715 = vunpack.c.l.b16 %v443
      %v716 = vunpack.c.l.b16 %v444
      %v717 = vunpack.c.l.b16 %v445
      %v718 = vunpack.c.l.b16 %v446
      %v719 = vunpack.c.l.b16 %v447
      %v720 = vunpack.c.l.b16 %v448
      %v721 = vunpack.c.l.b16 %v449
      %v722 = vunpack.c.l.b16 %v450
      %v723 = vunpack.c.l.b16 %v451
      %v724 = vunpack.c.l.b16 %v452
      %v725 = vunpack.c.l.b16 %v453
      %v726 = vunpack.c.l.b16 %v454
      %v727 = vunpack.c.l.b16 %v455
      %v728 = vunpack.c.l.b16 %v456
      %v729 = vunpack.c.l.b16 %v457
      %v730 = vpack.c.b16 %v603, %v602
      %v731 = vpack.c.b16 %v605, %v604
      %v732 = vpack.c.b16 %v607, %v606
      %v733 = vpack.c.b16 %v609, %v608
      %v734 = vpack.c.b16 %v611, %v610
      %v735 = vpack.c.b16 %v613, %v612
      %v736 = vpack.c.b16 %v615, %v614
      %v737 = vpack.c.b16 %v617, %v616
      %v738 = vpack.c.b16 %v619, %v618
      %v739 = vpack.c.b16 %v621, %v620
      %v740 = vpack.c.b16 %v623, %v622
      %v741 = vpack.c.b16 %v625, %v624
      %v742 = vpack.c.b16 %v627, %v626
      %v743 = vpack.c.b16 %v629, %v628
      %v744 = vpack.c.b16 %v631, %v630
      %v745 = vpack.c.b16 %v633, %v632
      %v746 = vpack.c.b16 %v635, %v634
      %v747 = vpack.c.b16 %v637, %v636
      %v748 = vpack.c.b16 %v639, %v638
      %v749 = vpack.c.b16 %v641, %v640
      %v750 = vpack.c.b16 %v643, %v642
      %v751 = vpack.c.b16 %v645, %v644
      %v752 = vpack.c.b16 %v647, %v646
      %v753 = vpack.c.b16 %v649, %v648
      %v754 = vpack.c.b16 %v651, %v650
      %v755 = vpack.c.b16 %v653, %v652
      %v756 = vpack.c.b16 %v655, %v654
      %v757 = vpack.c.b16 %v657, %v656
      %v758 = vpack.c.b16 %v659, %v658
      %v759 = vpack.c.b16 %v661, %v660
      %v760 = vpack.c.b16 %v663, %v662
      %v761 = vpack.c.b16 %v665, %v664
      %v762 = vpack.c.b16 %v667, %v666
      %v763 = vpack.c.b16 %v669, %v668
      %v764 = vpack.c.b16 %v671, %v670
      %v765 = vpack.c.b16 %v673, %v672
      %v766 = vpack.c.b16 %v675, %v674
      %v767 = vpack.c.b16 %v677, %v676
      %v768 = vpack.c.b16 %v679, %v678
      %v769 = vpack.c.b16 %v681, %v680
      %v770 = vpack.c.b16 %v683, %v682
      %v771 = vpack.c.b16 %v685, %v684
      %v772 = vpack.c.b16 %v687, %v686
      %v773 = vpack.c.b16 %v689, %v688
      %v774 = vpack.c.b16 %v691, %v690
      %v775 = vpack.c.b16 %v693, %v692
      %v776 = vpack.c.b16 %v695, %v694
      %v777 = vpack.c.b16 %v697, %v696
      %v778 = vpack.c.b16 %v699, %v698
      %v779 = vpack.c.b16 %v701, %v700
      %v780 = vpack.c.b16 %v703, %v702
      %v781 = vpack.c.b16 %v705, %v704
      %v782 = vpack.c.b16 %v707, %v706
      %v783 = vpack.c.b16 %v709, %v708
      %v784 = vpack.c.b16 %v711, %v710
      %v785 = vpack.c.b16 %v713, %v712
      %v786 = vpack.c.b16 %v715, %v714
      %v787 = vpack.c.b16 %v717, %v716
      %v788 = vpack.c.b16 %v719, %v718
      %v789 = vpack.c.b16 %v721, %v720
      %v790 = vpack.c.b16 %v723, %v722
      %v791 = vpack.c.b16 %v725, %v724
      %v792 = vpack.c.b16 %v727, %v726
      %v793 = vpack.c.b16 %v729, %v728
      %v874 = vunpack.c.l.b16 %v458
      %v875 = vunpack.c.l.b16 %v459
      %v876 = vunpack.c.l.b16 %v460
      %v877 = vunpack.c.l.b16 %v461
      %v878 = vunpack.c.l.b16 %v462
      %v879 = vunpack.c.l.b16 %v463
      %v880 = vunpack.c.l.b16 %v464
      %v881 = vunpack.c.l.b16 %v465
      %v882 = vunpack.c.l.b16 %v466
      %v883 = vunpack.c.l.b16 %v467
      %v884 = vunpack.c.l.b16 %v468
      %v885 = vunpack.c.l.b16 %v469
      %v886 = vunpack.c.l.b16 %v470
      %v887 = vunpack.c.l.b16 %v471
      %v888 = vunpack.c.l.b16 %v472
      %v889 = vunpack.c.l.b16 %v473
      %v890 = vpack.c.b16 %v875, %v874
      %v891 = vpack.c.b16 %v877, %v876
      %v892 = vpack.c.b16 %v879, %v878
      %v893 = vpack.c.b16 %v881, %v880
      %v894 = vpack.c.b16 %v883, %v882
      %v895 = vpack.c.b16 %v885, %v884
      %v896 = vpack.c.b16 %v887, %v886
      %v897 = vpack.c.b16 %v889, %v888
      %906 = vmatprep.subr.bf16.mxu0 0
      %907 = vmatpush1.bf16.msra.mxu0 %v890
      %908 = vmatprep.subr.bf16.mxu0 0
      %909 = vmatpush1.bf16.msra.mxu0 %v891
      %910 = vmatprep.subr.bf16.mxu0 0
      %911 = vmatpush1.bf16.msra.mxu0 %v892
      %912 = vmatprep.subr.bf16.mxu0 0
      %913 = vmatpush1.bf16.msra.mxu0 %v893
      %914 = vmatprep.subr.bf16.mxu0 0
      %915 = vmatpush1.bf16.msra.mxu0 %v894
      %916 = vmatprep.subr.bf16.mxu0 0
      %917 = vmatpush1.bf16.msra.mxu0 %v895
      %918 = vmatprep.subr.bf16.mxu0 0
      %919 = vmatpush1.bf16.msra.mxu0 %v896
      %920 = vmatprep.subr.bf16.mxu0 0
      %921 = vmatpush1.bf16.msra.mxu0 %v897
      %922 = vmatprep.subr.bf16.mxu0 0
      %923 = vmatpush1.bf16.msra.mxu0 0
      %924 = vmatprep.subr.bf16.mxu0 0
      %925 = vmatpush1.bf16.msra.mxu0 0
      %926 = vmatprep.subr.bf16.mxu0 0
      %927 = vmatpush1.bf16.msra.mxu0 0
      %928 = vmatprep.subr.bf16.mxu0 0
      %929 = vmatpush1.bf16.msra.mxu0 0
      %930 = vmatprep.subr.bf16.mxu0 0
      %931 = vmatpush1.bf16.msra.mxu0 0
      %932 = vmatprep.subr.bf16.mxu0 0
      %933 = vmatpush1.bf16.msra.mxu0 0
      %934 = vmatprep.subr.bf16.mxu0 0
      %935 = vmatpush1.bf16.msra.mxu0 0
      %936 = vmatprep.subr.bf16.mxu0 0
      %937 = vmatpush1.bf16.msra.mxu0 0
      %938 = vmatprep.mubr.bf16.mxu0 0
      %939 = vmatmul.mubr.bf16.gmra.mrb[0].mxu0 %v730
      %v940 = vpop.f32.mrb[0].mxu0
      %v941 = vadd.f32 0.0, %v940
      %v942 = vpop.f32.mrb[0].mxu0
      %v943 = vpop.f32.mrb[0].mxu0
      %v944 = vadd.f32 0.0, %v943
      %v945 = vpop.f32.mrb[0].mxu0
      %946 = vmatprep.mubr.bf16.mxu0 0
      %947 = vmatmul.mubr.bf16.gmra.mrb[0].mxu0 %v731
      %v948 = vpop.f32.mrb[0].mxu0
      %v949 = vadd.f32 0.0, %v948
      %v950 = vpop.f32.mrb[0].mxu0
      %v951 = vpop.f32.mrb[0].mxu0
      %v952 = vadd.f32 0.0, %v951
      %v953 = vpop.f32.mrb[0].mxu0
      %954 = vmatprep.mubr.bf16.mxu0 0
      %955 = vmatmul.mubr.bf16.gmra.mrb[0].mxu0 %v732
      %v956 = vpop.f32.mrb[0].mxu0
      %v957 = vadd.f32 0.0, %v956
      %v958 = vpop.f32.mrb[0].mxu0
      %v959 = vpop.f32.mrb[0].mxu0
      %v960 = vadd.f32 0.0, %v959
      %v961 = vpop.f32.mrb[0].mxu0
      %962 = vmatprep.mubr.bf16.mxu0 0
      %963 = vmatmul.mubr.bf16.gmra.mrb[0].mxu0 %v733
      %v964 = vpop.f32.mrb[0].mxu0
      %v965 = vadd.f32 0.0, %v964
      %v966 = vpop.f32.mrb[0].mxu0
      %v967 = vpop.f32.mrb[0].mxu0
      %v968 = vadd.f32 0.0, %v967
      %v969 = vpop.f32.mrb[0].mxu0
      %970 = vmatprep.mubr.bf16.mxu0 0
      %971 = vmatmul.mubr.bf16.gmra.mrb[0].mxu0 %v734
      %v972 = vpop.f32.mrb[0].mxu0
      %v973 = vadd.f32 0.0, %v972
      %v974 = vpop.f32.mrb[0].mxu0
      %v975 = vpop.f32.mrb[0].mxu0
      %v976 = vadd.f32 0.0, %v975
      %v977 = vpop.f32.mrb[0].mxu0
      %978 = vmatprep.mubr.bf16.mxu0 0
      %979 = vmatmul.mubr.bf16.gmra.mrb[0].mxu0 %v735
      %v980 = vpop.f32.mrb[0].mxu0
      %v981 = vadd.f32 0.0, %v980
      %v982 = vpop.f32.mrb[0].mxu0
      %v983 = vpop.f32.mrb[0].mxu0
      %v984 = vadd.f32 0.0, %v983
      %v985 = vpop.f32.mrb[0].mxu0
      %986 = vmatprep.mubr.bf16.mxu0 0
      %987 = vmatmul.mubr.bf16.gmra.mrb[0].mxu0 %v736
      %v988 = vpop.f32.mrb[0].mxu0
      %v989 = vadd.f32 0.0, %v988
      %v990 = vpop.f32.mrb[0].mxu0
      %v991 = vpop.f32.mrb[0].mxu0
      %v992 = vadd.f32 0.0, %v991
      %v993 = vpop.f32.mrb[0].mxu0
      %994 = vmatprep.mubr.bf16.mxu0 0
      %995 = vmatmul.mubr.bf16.gmra.mrb[0].mxu0 %v737
      %v996 = vpop.f32.mrb[0].mxu0
      %v997 = vadd.f32 0.0, %v996
      %v998 = vpop.f32.mrb[0].mxu0
      %v999 = vpop.f32.mrb[0].mxu0
      %v1000 = vadd.f32 0.0, %v999
      %v1001 = vpop.f32.mrb[0].mxu0
      %1002 = vmatprep.mubr.bf16.mxu0 0
      %1003 = vmatmul.mubr.bf16.gmra.mrb[0].mxu0 %v738
      %v1004 = vpop.f32.mrb[0].mxu0
      %v1005 = vadd.f32 0.0, %v1004
      %v1006 = vpop.f32.mrb[0].mxu0
      %v1007 = vpop.f32.mrb[0].mxu0
      %v1008 = vadd.f32 0.0, %v1007
      %v1009 = vpop.f32.mrb[0].mxu0
      %1010 = vmatprep.mubr.bf16.mxu0 0
      %1011 = vmatmul.mubr.bf16.gmra.mrb[0].mxu0 %v739
      %v1012 = vpop.f32.mrb[0].mxu0
      %v1013 = vadd.f32 0.0, %v1012
      %v1014 = vpop.f32.mrb[0].mxu0
      %v1015 = vpop.f32.mrb[0].mxu0
      %v1016 = vadd.f32 0.0, %v1015
      %v1017 = vpop.f32.mrb[0].mxu0
      %1018 = vmatprep.mubr.bf16.mxu0 0
      %1019 = vmatmul.mubr.bf16.gmra.mrb[0].mxu0 %v740
      %v1020 = vpop.f32.mrb[0].mxu0
      %v1021 = vadd.f32 0.0, %v1020
      %v1022 = vpop.f32.mrb[0].mxu0
      %v1023 = vpop.f32.mrb[0].mxu0
      %v1024 = vadd.f32 0.0, %v1023
      %v1025 = vpop.f32.mrb[0].mxu0
      %1026 = vmatprep.mubr.bf16.mxu0 0
      %1027 = vmatmul.mubr.bf16.gmra.mrb[0].mxu0 %v741
      %v1028 = vpop.f32.mrb[0].mxu0
      %v1029 = vadd.f32 0.0, %v1028
      %v1030 = vpop.f32.mrb[0].mxu0
      %v1031 = vpop.f32.mrb[0].mxu0
      %v1032 = vadd.f32 0.0, %v1031
      %v1033 = vpop.f32.mrb[0].mxu0
      %1034 = vmatprep.mubr.bf16.mxu0 0
      %1035 = vmatmul.mubr.bf16.gmra.mrb[0].mxu0 %v742
      %v1036 = vpop.f32.mrb[0].mxu0
      %v1037 = vadd.f32 0.0, %v1036
      %v1038 = vpop.f32.mrb[0].mxu0
      %v1039 = vpop.f32.mrb[0].mxu0
      %v1040 = vadd.f32 0.0, %v1039
      %v1041 = vpop.f32.mrb[0].mxu0
      %1042 = vmatprep.mubr.bf16.mxu0 0
      %1043 = vmatmul.mubr.bf16.gmra.mrb[0].mxu0 %v743
      %v1044 = vpop.f32.mrb[0].mxu0
      %v1045 = vadd.f32 0.0, %v1044
      %v1046 = vpop.f32.mrb[0].mxu0
      %v1047 = vpop.f32.mrb[0].mxu0
      %v1048 = vadd.f32 0.0, %v1047
      %v1049 = vpop.f32.mrb[0].mxu0
      %1050 = vmatprep.mubr.bf16.mxu0 0
      %1051 = vmatmul.mubr.bf16.gmra.mrb[0].mxu0 %v744
      %v1052 = vpop.f32.mrb[0].mxu0
      %v1053 = vadd.f32 0.0, %v1052
      %v1054 = vpop.f32.mrb[0].mxu0
      %v1055 = vpop.f32.mrb[0].mxu0
      %v1056 = vadd.f32 0.0, %v1055
      %v1057 = vpop.f32.mrb[0].mxu0
      %1058 = vmatprep.mubr.bf16.mxu0 0
      %1059 = vmatmul.mubr.bf16.gmra.mrb[0].mxu0 %v745
      %v1060 = vpop.f32.mrb[0].mxu0
      %v1061 = vadd.f32 0.0, %v1060
      %v1062 = vpop.f32.mrb[0].mxu0
      %v1063 = vpop.f32.mrb[0].mxu0
      %v1064 = vadd.f32 0.0, %v1063
      %v1065 = vpop.f32.mrb[0].mxu0
      %1066 = vmatprep.mubr.bf16.mxu0 0
      %1067 = vmatmul.mubr.bf16.gmra.mrb[0].mxu0 %v746
      %v1068 = vpop.f32.mrb[0].mxu0
      %v1069 = vadd.f32 0.0, %v1068
      %v1070 = vpop.f32.mrb[0].mxu0
      %v1071 = vpop.f32.mrb[0].mxu0
      %v1072 = vadd.f32 0.0, %v1071
      %v1073 = vpop.f32.mrb[0].mxu0
      %1074 = vmatprep.mubr.bf16.mxu0 0
      %1075 = vmatmul.mubr.bf16.gmra.mrb[0].mxu0 %v747
      %v1076 = vpop.f32.mrb[0].mxu0
      %v1077 = vadd.f32 0.0, %v1076
      %v1078 = vpop.f32.mrb[0].mxu0
      %v1079 = vpop.f32.mrb[0].mxu0
      %v1080 = vadd.f32 0.0, %v1079
      %v1081 = vpop.f32.mrb[0].mxu0
      %1082 = vmatprep.mubr.bf16.mxu0 0
      %1083 = vmatmul.mubr.bf16.gmra.mrb[0].mxu0 %v748
      %v1084 = vpop.f32.mrb[0].mxu0
      %v1085 = vadd.f32 0.0, %v1084
      %v1086 = vpop.f32.mrb[0].mxu0
      %v1087 = vpop.f32.mrb[0].mxu0
      %v1088 = vadd.f32 0.0, %v1087
      %v1089 = vpop.f32.mrb[0].mxu0
      %1090 = vmatprep.mubr.bf16.mxu0 0
      %1091 = vmatmul.mubr.bf16.gmra.mrb[0].mxu0 %v749
      %v1092 = vpop.f32.mrb[0].mxu0
      %v1093 = vadd.f32 0.0, %v1092
      %v1094 = vpop.f32.mrb[0].mxu0
      %v1095 = vpop.f32.mrb[0].mxu0
      %v1096 = vadd.f32 0.0, %v1095
      %v1097 = vpop.f32.mrb[0].mxu0
      %1098 = vmatprep.mubr.bf16.mxu0 0
      %1099 = vmatmul.mubr.bf16.gmra.mrb[0].mxu0 %v750
      %v1100 = vpop.f32.mrb[0].mxu0
      %v1101 = vadd.f32 0.0, %v1100
      %v1102 = vpop.f32.mrb[0].mxu0
      %v1103 = vpop.f32.mrb[0].mxu0
      %v1104 = vadd.f32 0.0, %v1103
      %v1105 = vpop.f32.mrb[0].mxu0
      %1106 = vmatprep.mubr.bf16.mxu0 0
      %1107 = vmatmul.mubr.bf16.gmra.mrb[0].mxu0 %v751
      %v1108 = vpop.f32.mrb[0].mxu0
      %v1109 = vadd.f32 0.0, %v1108
      %v1110 = vpop.f32.mrb[0].mxu0
      %v1111 = vpop.f32.mrb[0].mxu0
      %v1112 = vadd.f32 0.0, %v1111
      %v1113 = vpop.f32.mrb[0].mxu0
      %1114 = vmatprep.mubr.bf16.mxu0 0
      %1115 = vmatmul.mubr.bf16.gmra.mrb[0].mxu0 %v752
      %v1116 = vpop.f32.mrb[0].mxu0
      %v1117 = vadd.f32 0.0, %v1116
      %v1118 = vpop.f32.mrb[0].mxu0
      %v1119 = vpop.f32.mrb[0].mxu0
      %v1120 = vadd.f32 0.0, %v1119
      %v1121 = vpop.f32.mrb[0].mxu0
      %1122 = vmatprep.mubr.bf16.mxu0 0
      %1123 = vmatmul.mubr.bf16.gmra.mrb[0].mxu0 %v753
      %v1124 = vpop.f32.mrb[0].mxu0
      %v1125 = vadd.f32 0.0, %v1124
      %v1126 = vpop.f32.mrb[0].mxu0
      %v1127 = vpop.f32.mrb[0].mxu0
      %v1128 = vadd.f32 0.0, %v1127
      %v1129 = vpop.f32.mrb[0].mxu0
      %1130 = vmatprep.mubr.bf16.mxu0 0
      %1131 = vmatmul.mubr.bf16.gmra.mrb[0].mxu0 %v754
      %v1132 = vpop.f32.mrb[0].mxu0
      %v1133 = vadd.f32 0.0, %v1132
      %v1134 = vpop.f32.mrb[0].mxu0
      %v1135 = vpop.f32.mrb[0].mxu0
      %v1136 = vadd.f32 0.0, %v1135
      %v1137 = vpop.f32.mrb[0].mxu0
      %1138 = vmatprep.mubr.bf16.mxu0 0
      %1139 = vmatmul.mubr.bf16.gmra.mrb[0].mxu0 %v755
      %v1140 = vpop.f32.mrb[0].mxu0
      %v1141 = vadd.f32 0.0, %v1140
      %v1142 = vpop.f32.mrb[0].mxu0
      %v1143 = vpop.f32.mrb[0].mxu0
      %v1144 = vadd.f32 0.0, %v1143
      %v1145 = vpop.f32.mrb[0].mxu0
      %1146 = vmatprep.mubr.bf16.mxu0 0
      %1147 = vmatmul.mubr.bf16.gmra.mrb[0].mxu0 %v756
      %v1148 = vpop.f32.mrb[0].mxu0
      %v1149 = vadd.f32 0.0, %v1148
      %v1150 = vpop.f32.mrb[0].mxu0
      %v1151 = vpop.f32.mrb[0].mxu0
      %v1152 = vadd.f32 0.0, %v1151
      %v1153 = vpop.f32.mrb[0].mxu0
      %1154 = vmatprep.mubr.bf16.mxu0 0
      %1155 = vmatmul.mubr.bf16.gmra.mrb[0].mxu0 %v757
      %v1156 = vpop.f32.mrb[0].mxu0
      %v1157 = vadd.f32 0.0, %v1156
      %v1158 = vpop.f32.mrb[0].mxu0
      %v1159 = vpop.f32.mrb[0].mxu0
      %v1160 = vadd.f32 0.0, %v1159
      %v1161 = vpop.f32.mrb[0].mxu0
      %1162 = vmatprep.mubr.bf16.mxu0 0
      %1163 = vmatmul.mubr.bf16.gmra.mrb[0].mxu0 %v758
      %v1164 = vpop.f32.mrb[0].mxu0
      %v1165 = vadd.f32 0.0, %v1164
      %v1166 = vpop.f32.mrb[0].mxu0
      %v1167 = vpop.f32.mrb[0].mxu0
      %v1168 = vadd.f32 0.0, %v1167
      %v1169 = vpop.f32.mrb[0].mxu0
      %1170 = vmatprep.mubr.bf16.mxu0 0
      %1171 = vmatmul.mubr.bf16.gmra.mrb[0].mxu0 %v759
      %v1172 = vpop.f32.mrb[0].mxu0
      %v1173 = vadd.f32 0.0, %v1172
      %v1174 = vpop.f32.mrb[0].mxu0
      %v1175 = vpop.f32.mrb[0].mxu0
      %v1176 = vadd.f32 0.0, %v1175
      %v1177 = vpop.f32.mrb[0].mxu0
      %1178 = vmatprep.mubr.bf16.mxu0 0
      %1179 = vmatmul.mubr.bf16.gmra.mrb[0].mxu0 %v760
      %v1180 = vpop.f32.mrb[0].mxu0
      %v1181 = vadd.f32 0.0, %v1180
      %v1182 = vpop.f32.mrb[0].mxu0
      %v1183 = vpop.f32.mrb[0].mxu0
      %v1184 = vadd.f32 0.0, %v1183
      %v1185 = vpop.f32.mrb[0].mxu0
      %1186 = vmatprep.mubr.bf16.mxu0 0
      %1187 = vmatmul.mubr.bf16.gmra.mrb[0].mxu0 %v761
      %v1188 = vpop.f32.mrb[0].mxu0
      %v1189 = vadd.f32 0.0, %v1188
      %v1190 = vpop.f32.mrb[0].mxu0
      %v1191 = vpop.f32.mrb[0].mxu0
      %v1192 = vadd.f32 0.0, %v1191
      %v1193 = vpop.f32.mrb[0].mxu0
      %1194 = vmatprep.mubr.bf16.mxu0 0
      %1195 = vmatmul.mubr.bf16.gmra.mrb[0].mxu0 %v762
      %v1196 = vpop.f32.mrb[0].mxu0
      %v1197 = vadd.f32 0.0, %v1196
      %v1198 = vpop.f32.mrb[0].mxu0
      %v1199 = vpop.f32.mrb[0].mxu0
      %v1200 = vadd.f32 0.0, %v1199
      %v1201 = vpop.f32.mrb[0].mxu0
      %1202 = vmatprep.mubr.bf16.mxu0 0
      %1203 = vmatmul.mubr.bf16.gmra.mrb[0].mxu0 %v763
      %v1204 = vpop.f32.mrb[0].mxu0
      %v1205 = vadd.f32 0.0, %v1204
      %v1206 = vpop.f32.mrb[0].mxu0
      %v1207 = vpop.f32.mrb[0].mxu0
      %v1208 = vadd.f32 0.0, %v1207
      %v1209 = vpop.f32.mrb[0].mxu0
      %1210 = vmatprep.mubr.bf16.mxu0 0
      %1211 = vmatmul.mubr.bf16.gmra.mrb[0].mxu0 %v764
      %v1212 = vpop.f32.mrb[0].mxu0
      %v1213 = vadd.f32 0.0, %v1212
      %v1214 = vpop.f32.mrb[0].mxu0
      %v1215 = vpop.f32.mrb[0].mxu0
      %v1216 = vadd.f32 0.0, %v1215
      %v1217 = vpop.f32.mrb[0].mxu0
      %1218 = vmatprep.mubr.bf16.mxu0 0
      %1219 = vmatmul.mubr.bf16.gmra.mrb[0].mxu0 %v765
      %v1220 = vpop.f32.mrb[0].mxu0
      %v1221 = vadd.f32 0.0, %v1220
      %v1222 = vpop.f32.mrb[0].mxu0
      %v1223 = vpop.f32.mrb[0].mxu0
      %v1224 = vadd.f32 0.0, %v1223
      %v1225 = vpop.f32.mrb[0].mxu0
      %1226 = vmatprep.mubr.bf16.mxu0 0
      %1227 = vmatmul.mubr.bf16.gmra.mrb[0].mxu0 %v766
      %v1228 = vpop.f32.mrb[0].mxu0
      %v1229 = vadd.f32 0.0, %v1228
      %v1230 = vpop.f32.mrb[0].mxu0
      %v1231 = vpop.f32.mrb[0].mxu0
      %v1232 = vadd.f32 0.0, %v1231
      %v1233 = vpop.f32.mrb[0].mxu0
      %1234 = vmatprep.mubr.bf16.mxu0 0
      %1235 = vmatmul.mubr.bf16.gmra.mrb[0].mxu0 %v767
      %v1236 = vpop.f32.mrb[0].mxu0
      %v1237 = vadd.f32 0.0, %v1236
      %v1238 = vpop.f32.mrb[0].mxu0
      %v1239 = vpop.f32.mrb[0].mxu0
      %v1240 = vadd.f32 0.0, %v1239
      %v1241 = vpop.f32.mrb[0].mxu0
      %1242 = vmatprep.mubr.bf16.mxu0 0
      %1243 = vmatmul.mubr.bf16.gmra.mrb[0].mxu0 %v768
      %v1244 = vpop.f32.mrb[0].mxu0
      %v1245 = vadd.f32 0.0, %v1244
      %v1246 = vpop.f32.mrb[0].mxu0
      %v1247 = vpop.f32.mrb[0].mxu0
      %v1248 = vadd.f32 0.0, %v1247
      %v1249 = vpop.f32.mrb[0].mxu0
      %1250 = vmatprep.mubr.bf16.mxu0 0
      %1251 = vmatmul.mubr.bf16.gmra.mrb[0].mxu0 %v769
      %v1252 = vpop.f32.mrb[0].mxu0
      %v1253 = vadd.f32 0.0, %v1252
      %v1254 = vpop.f32.mrb[0].mxu0
      %v1255 = vpop.f32.mrb[0].mxu0
      %v1256 = vadd.f32 0.0, %v1255
      %v1257 = vpop.f32.mrb[0].mxu0
      %1258 = vmatprep.mubr.bf16.mxu0 0
      %1259 = vmatmul.mubr.bf16.gmra.mrb[0].mxu0 %v770
      %v1260 = vpop.f32.mrb[0].mxu0
      %v1261 = vadd.f32 0.0, %v1260
      %v1262 = vpop.f32.mrb[0].mxu0
      %v1263 = vpop.f32.mrb[0].mxu0
      %v1264 = vadd.f32 0.0, %v1263
      %v1265 = vpop.f32.mrb[0].mxu0
      %1266 = vmatprep.mubr.bf16.mxu0 0
      %1267 = vmatmul.mubr.bf16.gmra.mrb[0].mxu0 %v771
      %v1268 = vpop.f32.mrb[0].mxu0
      %v1269 = vadd.f32 0.0, %v1268
      %v1270 = vpop.f32.mrb[0].mxu0
      %v1271 = vpop.f32.mrb[0].mxu0
      %v1272 = vadd.f32 0.0, %v1271
      %v1273 = vpop.f32.mrb[0].mxu0
      %1274 = vmatprep.mubr.bf16.mxu0 0
      %1275 = vmatmul.mubr.bf16.gmra.mrb[0].mxu0 %v772
      %v1276 = vpop.f32.mrb[0].mxu0
      %v1277 = vadd.f32 0.0, %v1276
      %v1278 = vpop.f32.mrb[0].mxu0
      %v1279 = vpop.f32.mrb[0].mxu0
      %v1280 = vadd.f32 0.0, %v1279
      %v1281 = vpop.f32.mrb[0].mxu0
      %1282 = vmatprep.mubr.bf16.mxu0 0
      %1283 = vmatmul.mubr.bf16.gmra.mrb[0].mxu0 %v773
      %v1284 = vpop.f32.mrb[0].mxu0
      %v1285 = vadd.f32 0.0, %v1284
      %v1286 = vpop.f32.mrb[0].mxu0
      %v1287 = vpop.f32.mrb[0].mxu0
      %v1288 = vadd.f32 0.0, %v1287
      %v1289 = vpop.f32.mrb[0].mxu0
      %1290 = vmatprep.mubr.bf16.mxu0 0
      %1291 = vmatmul.mubr.bf16.gmra.mrb[0].mxu0 %v774
      %v1292 = vpop.f32.mrb[0].mxu0
      %v1293 = vadd.f32 0.0, %v1292
      %v1294 = vpop.f32.mrb[0].mxu0
      %v1295 = vpop.f32.mrb[0].mxu0
      %v1296 = vadd.f32 0.0, %v1295
      %v1297 = vpop.f32.mrb[0].mxu0
      %1298 = vmatprep.mubr.bf16.mxu0 0
      %1299 = vmatmul.mubr.bf16.gmra.mrb[0].mxu0 %v775
      %v1300 = vpop.f32.mrb[0].mxu0
      %v1301 = vadd.f32 0.0, %v1300
      %v1302 = vpop.f32.mrb[0].mxu0
      %v1303 = vpop.f32.mrb[0].mxu0
      %v1304 = vadd.f32 0.0, %v1303
      %v1305 = vpop.f32.mrb[0].mxu0
      %1306 = vmatprep.mubr.bf16.mxu0 0
      %1307 = vmatmul.mubr.bf16.gmra.mrb[0].mxu0 %v776
      %v1308 = vpop.f32.mrb[0].mxu0
      %v1309 = vadd.f32 0.0, %v1308
      %v1310 = vpop.f32.mrb[0].mxu0
      %v1311 = vpop.f32.mrb[0].mxu0
      %v1312 = vadd.f32 0.0, %v1311
      %v1313 = vpop.f32.mrb[0].mxu0
      %1314 = vmatprep.mubr.bf16.mxu0 0
      %1315 = vmatmul.mubr.bf16.gmra.mrb[0].mxu0 %v777
      %v1316 = vpop.f32.mrb[0].mxu0
      %v1317 = vadd.f32 0.0, %v1316
      %v1318 = vpop.f32.mrb[0].mxu0
      %v1319 = vpop.f32.mrb[0].mxu0
      %v1320 = vadd.f32 0.0, %v1319
      %v1321 = vpop.f32.mrb[0].mxu0
      %1322 = vmatprep.mubr.bf16.mxu0 0
      %1323 = vmatmul.mubr.bf16.gmra.mrb[0].mxu0 %v778
      %v1324 = vpop.f32.mrb[0].mxu0
      %v1325 = vadd.f32 0.0, %v1324
      %v1326 = vpop.f32.mrb[0].mxu0
      %v1327 = vpop.f32.mrb[0].mxu0
      %v1328 = vadd.f32 0.0, %v1327
      %v1329 = vpop.f32.mrb[0].mxu0
      %1330 = vmatprep.mubr.bf16.mxu0 0
      %1331 = vmatmul.mubr.bf16.gmra.mrb[0].mxu0 %v779
      %v1332 = vpop.f32.mrb[0].mxu0
      %v1333 = vadd.f32 0.0, %v1332
      %v1334 = vpop.f32.mrb[0].mxu0
      %v1335 = vpop.f32.mrb[0].mxu0
      %v1336 = vadd.f32 0.0, %v1335
      %v1337 = vpop.f32.mrb[0].mxu0
      %1338 = vmatprep.mubr.bf16.mxu0 0
      %1339 = vmatmul.mubr.bf16.gmra.mrb[0].mxu0 %v780
      %v1340 = vpop.f32.mrb[0].mxu0
      %v1341 = vadd.f32 0.0, %v1340
      %v1342 = vpop.f32.mrb[0].mxu0
      %v1343 = vpop.f32.mrb[0].mxu0
      %v1344 = vadd.f32 0.0, %v1343
      %v1345 = vpop.f32.mrb[0].mxu0
      %1346 = vmatprep.mubr.bf16.mxu0 0
      %1347 = vmatmul.mubr.bf16.gmra.mrb[0].mxu0 %v781
      %v1348 = vpop.f32.mrb[0].mxu0
      %v1349 = vadd.f32 0.0, %v1348
      %v1350 = vpop.f32.mrb[0].mxu0
      %v1351 = vpop.f32.mrb[0].mxu0
      %v1352 = vadd.f32 0.0, %v1351
      %v1353 = vpop.f32.mrb[0].mxu0
      %1354 = vmatprep.mubr.bf16.mxu0 0
      %1355 = vmatmul.mubr.bf16.gmra.mrb[0].mxu0 %v782
      %v1356 = vpop.f32.mrb[0].mxu0
      %v1357 = vadd.f32 0.0, %v1356
      %v1358 = vpop.f32.mrb[0].mxu0
      %v1359 = vpop.f32.mrb[0].mxu0
      %v1360 = vadd.f32 0.0, %v1359
      %v1361 = vpop.f32.mrb[0].mxu0
      %1362 = vmatprep.mubr.bf16.mxu0 0
      %1363 = vmatmul.mubr.bf16.gmra.mrb[0].mxu0 %v783
      %v1364 = vpop.f32.mrb[0].mxu0
      %v1365 = vadd.f32 0.0, %v1364
      %v1366 = vpop.f32.mrb[0].mxu0
      %v1367 = vpop.f32.mrb[0].mxu0
      %v1368 = vadd.f32 0.0, %v1367
      %v1369 = vpop.f32.mrb[0].mxu0
      %1370 = vmatprep.mubr.bf16.mxu0 0
      %1371 = vmatmul.mubr.bf16.gmra.mrb[0].mxu0 %v784
      %v1372 = vpop.f32.mrb[0].mxu0
      %v1373 = vadd.f32 0.0, %v1372
      %v1374 = vpop.f32.mrb[0].mxu0
      %v1375 = vpop.f32.mrb[0].mxu0
      %v1376 = vadd.f32 0.0, %v1375
      %v1377 = vpop.f32.mrb[0].mxu0
      %1378 = vmatprep.mubr.bf16.mxu0 0
      %1379 = vmatmul.mubr.bf16.gmra.mrb[0].mxu0 %v785
      %v1380 = vpop.f32.mrb[0].mxu0
      %v1381 = vadd.f32 0.0, %v1380
      %v1382 = vpop.f32.mrb[0].mxu0
      %v1383 = vpop.f32.mrb[0].mxu0
      %v1384 = vadd.f32 0.0, %v1383
      %v1385 = vpop.f32.mrb[0].mxu0
      %1386 = vmatprep.mubr.bf16.mxu0 0
      %1387 = vmatmul.mubr.bf16.gmra.mrb[0].mxu0 %v786
      %v1388 = vpop.f32.mrb[0].mxu0
      %v1389 = vadd.f32 0.0, %v1388
      %v1390 = vpop.f32.mrb[0].mxu0
      %v1391 = vpop.f32.mrb[0].mxu0
      %v1392 = vadd.f32 0.0, %v1391
      %v1393 = vpop.f32.mrb[0].mxu0
      %1394 = vmatprep.mubr.bf16.mxu0 0
      %1395 = vmatmul.mubr.bf16.gmra.mrb[0].mxu0 %v787
      %v1396 = vpop.f32.mrb[0].mxu0
      %v1397 = vadd.f32 0.0, %v1396
      %v1398 = vpop.f32.mrb[0].mxu0
      %v1399 = vpop.f32.mrb[0].mxu0
      %v1400 = vadd.f32 0.0, %v1399
      %v1401 = vpop.f32.mrb[0].mxu0
      %1402 = vmatprep.mubr.bf16.mxu0 0
      %1403 = vmatmul.mubr.bf16.gmra.mrb[0].mxu0 %v788
      %v1404 = vpop.f32.mrb[0].mxu0
      %v1405 = vadd.f32 0.0, %v1404
      %v1406 = vpop.f32.mrb[0].mxu0
      %v1407 = vpop.f32.mrb[0].mxu0
      %v1408 = vadd.f32 0.0, %v1407
      %v1409 = vpop.f32.mrb[0].mxu0
      %1410 = vmatprep.mubr.bf16.mxu0 0
      %1411 = vmatmul.mubr.bf16.gmra.mrb[0].mxu0 %v789
      %v1412 = vpop.f32.mrb[0].mxu0
      %v1413 = vadd.f32 0.0, %v1412
      %v1414 = vpop.f32.mrb[0].mxu0
      %v1415 = vpop.f32.mrb[0].mxu0
      %v1416 = vadd.f32 0.0, %v1415
      %v1417 = vpop.f32.mrb[0].mxu0
      %1418 = vmatprep.mubr.bf16.mxu0 0
      %1419 = vmatmul.mubr.bf16.gmra.mrb[0].mxu0 %v790
      %v1420 = vpop.f32.mrb[0].mxu0
      %v1421 = vadd.f32 0.0, %v1420
      %v1422 = vpop.f32.mrb[0].mxu0
      %v1423 = vpop.f32.mrb[0].mxu0
      %v1424 = vadd.f32 0.0, %v1423
      %v1425 = vpop.f32.mrb[0].mxu0
      %1426 = vmatprep.mubr.bf16.mxu0 0
      %1427 = vmatmul.mubr.bf16.gmra.mrb[0].mxu0 %v791
      %v1428 = vpop.f32.mrb[0].mxu0
      %v1429 = vadd.f32 0.0, %v1428
      %v1430 = vpop.f32.mrb[0].mxu0
      %v1431 = vpop.f32.mrb[0].mxu0
      %v1432 = vadd.f32 0.0, %v1431
      %v1433 = vpop.f32.mrb[0].mxu0
      %1434 = vmatprep.mubr.bf16.mxu0 0
      %1435 = vmatmul.mubr.bf16.gmra.mrb[0].mxu0 %v792
      %v1436 = vpop.f32.mrb[0].mxu0
      %v1437 = vadd.f32 0.0, %v1436
      %v1438 = vpop.f32.mrb[0].mxu0
      %v1439 = vpop.f32.mrb[0].mxu0
      %v1440 = vadd.f32 0.0, %v1439
      %v1441 = vpop.f32.mrb[0].mxu0
      %1442 = vmatprep.mubr.bf16.mxu0 0
      %1443 = vmatmul.mubr.bf16.gmra.mrb[0].mxu0 %v793
      %v1444 = vpop.f32.mrb[0].mxu0
      %v1445 = vadd.f32 0.0, %v1444
      %v1446 = vpop.f32.mrb[0].mxu0
      %v1447 = vpop.f32.mrb[0].mxu0
      %v1448 = vadd.f32 0.0, %v1447
      %v1449 = vpop.f32.mrb[0].mxu0
      %1450 = vdwg.mxu0
      %v1451 = vld [vmem:[%s2] sm:$0x1]
      %v1453 = vlaneseq
      %v1454 = vshrl.u32 %v1453, 7
      %v1455 = vsub.s32 0, %v1454
      %v1456 = vrot.slane %v1451, %v1455
      %v1458 = vmul.f32 %v941, %v1456
      %v1459 = vmul.f32 %v944, %v1456
      %v1460 = vmul.f32 %v949, %v1456
      %v1461 = vmul.f32 %v952, %v1456
      %v1462 = vmul.f32 %v957, %v1456
      %v1463 = vmul.f32 %v960, %v1456
      %v1464 = vmul.f32 %v965, %v1456
      %v1465 = vmul.f32 %v968, %v1456
      %v1466 = vmul.f32 %v973, %v1456
      %v1467 = vmul.f32 %v976, %v1456
      %v1468 = vmul.f32 %v981, %v1456
      %v1469 = vmul.f32 %v984, %v1456
      %v1470 = vmul.f32 %v989, %v1456
      %v1471 = vmul.f32 %v992, %v1456
      %v1472 = vmul.f32 %v997, %v1456
      %v1473 = vmul.f32 %v1000, %v1456
      %v1474 = vmul.f32 %v1005, %v1456
      %v1475 = vmul.f32 %v1008, %v1456
      %v1476 = vmul.f32 %v1013, %v1456
      %v1477 = vmul.f32 %v1016, %v1456
      %v1478 = vmul.f32 %v1021, %v1456
      %v1479 = vmul.f32 %v1024, %v1456
      %v1480 = vmul.f32 %v1029, %v1456
      %v1481 = vmul.f32 %v1032, %v1456
      %v1482 = vmul.f32 %v1037, %v1456
      %v1483 = vmul.f32 %v1040, %v1456
      %v1484 = vmul.f32 %v1045, %v1456
      %v1485 = vmul.f32 %v1048, %v1456
      %v1486 = vmul.f32 %v1053, %v1456
      %v1487 = vmul.f32 %v1056, %v1456
      %v1488 = vmul.f32 %v1061, %v1456
      %v1489 = vmul.f32 %v1064, %v1456
      %v1490 = vmul.f32 %v1069, %v1456
      %v1491 = vmul.f32 %v1072, %v1456
      %v1492 = vmul.f32 %v1077, %v1456
      %v1493 = vmul.f32 %v1080, %v1456
      %v1494 = vmul.f32 %v1085, %v1456
      %v1495 = vmul.f32 %v1088, %v1456
      %v1496 = vmul.f32 %v1093, %v1456
      %v1497 = vmul.f32 %v1096, %v1456
      %v1498 = vmul.f32 %v1101, %v1456
      %v1499 = vmul.f32 %v1104, %v1456
      %v1500 = vmul.f32 %v1109, %v1456
      %v1501 = vmul.f32 %v1112, %v1456
      %v1502 = vmul.f32 %v1117, %v1456
      %v1503 = vmul.f32 %v1120, %v1456
      %v1504 = vmul.f32 %v1125, %v1456
      %v1505 = vmul.f32 %v1128, %v1456
      %v1506 = vmul.f32 %v1133, %v1456
      %v1507 = vmul.f32 %v1136, %v1456
      %v1508 = vmul.f32 %v1141, %v1456
      %v1509 = vmul.f32 %v1144, %v1456
      %v1510 = vmul.f32 %v1149, %v1456
      %v1511 = vmul.f32 %v1152, %v1456
      %v1512 = vmul.f32 %v1157, %v1456
      %v1513 = vmul.f32 %v1160, %v1456
      %v1514 = vmul.f32 %v1165, %v1456
      %v1515 = vmul.f32 %v1168, %v1456
      %v1516 = vmul.f32 %v1173, %v1456
      %v1517 = vmul.f32 %v1176, %v1456
      %v1518 = vmul.f32 %v1181, %v1456
      %v1519 = vmul.f32 %v1184, %v1456
      %v1520 = vmul.f32 %v1189, %v1456
      %v1521 = vmul.f32 %v1192, %v1456
      %v1522 = vmul.f32 %v1197, %v1456
      %v1523 = vmul.f32 %v1200, %v1456
      %v1524 = vmul.f32 %v1205, %v1456
      %v1525 = vmul.f32 %v1208, %v1456
      %v1526 = vmul.f32 %v1213, %v1456
      %v1527 = vmul.f32 %v1216, %v1456
      %v1528 = vmul.f32 %v1221, %v1456
      %v1529 = vmul.f32 %v1224, %v1456
      %v1530 = vmul.f32 %v1229, %v1456
      %v1531 = vmul.f32 %v1232, %v1456
      %v1532 = vmul.f32 %v1237, %v1456
      %v1533 = vmul.f32 %v1240, %v1456
      %v1534 = vmul.f32 %v1245, %v1456
      %v1535 = vmul.f32 %v1248, %v1456
      %v1536 = vmul.f32 %v1253, %v1456
      %v1537 = vmul.f32 %v1256, %v1456
      %v1538 = vmul.f32 %v1261, %v1456
      %v1539 = vmul.f32 %v1264, %v1456
      %v1540 = vmul.f32 %v1269, %v1456
      %v1541 = vmul.f32 %v1272, %v1456
      %v1542 = vmul.f32 %v1277, %v1456
      %v1543 = vmul.f32 %v1280, %v1456
      %v1544 = vmul.f32 %v1285, %v1456
      %v1545 = vmul.f32 %v1288, %v1456
      %v1546 = vmul.f32 %v1293, %v1456
      %v1547 = vmul.f32 %v1296, %v1456
      %v1548 = vmul.f32 %v1301, %v1456
      %v1549 = vmul.f32 %v1304, %v1456
      %v1550 = vmul.f32 %v1309, %v1456
      %v1551 = vmul.f32 %v1312, %v1456
      %v1552 = vmul.f32 %v1317, %v1456
      %v1553 = vmul.f32 %v1320, %v1456
      %v1554 = vmul.f32 %v1325, %v1456
      %v1555 = vmul.f32 %v1328, %v1456
      %v1556 = vmul.f32 %v1333, %v1456
      %v1557 = vmul.f32 %v1336, %v1456
      %v1558 = vmul.f32 %v1341, %v1456
      %v1559 = vmul.f32 %v1344, %v1456
      %v1560 = vmul.f32 %v1349, %v1456
      %v1561 = vmul.f32 %v1352, %v1456
      %v1562 = vmul.f32 %v1357, %v1456
      %v1563 = vmul.f32 %v1360, %v1456
      %v1564 = vmul.f32 %v1365, %v1456
      %v1565 = vmul.f32 %v1368, %v1456
      %v1566 = vmul.f32 %v1373, %v1456
      %v1567 = vmul.f32 %v1376, %v1456
      %v1568 = vmul.f32 %v1381, %v1456
      %v1569 = vmul.f32 %v1384, %v1456
      %v1570 = vmul.f32 %v1389, %v1456
      %v1571 = vmul.f32 %v1392, %v1456
      %v1572 = vmul.f32 %v1397, %v1456
      %v1573 = vmul.f32 %v1400, %v1456
      %v1574 = vmul.f32 %v1405, %v1456
      %v1575 = vmul.f32 %v1408, %v1456
      %v1576 = vmul.f32 %v1413, %v1456
      %v1577 = vmul.f32 %v1416, %v1456
      %v1578 = vmul.f32 %v1421, %v1456
      %v1579 = vmul.f32 %v1424, %v1456
      %v1580 = vmul.f32 %v1429, %v1456
      %v1581 = vmul.f32 %v1432, %v1456
      %v1582 = vmul.f32 %v1437, %v1456
      %v1583 = vmul.f32 %v1440, %v1456
      %v1584 = vmul.f32 %v1445, %v1456
      %v1585 = vmul.f32 %v1448, %v1456
      %v1586 = vld [vmem:[%s3] sm:$0x1]
      %v1588 = vlaneseq
      %v1589 = vshrl.u32 %v1588, 7
      %v1590 = vsub.s32 0, %v1589
      %v1591 = vrot.slane %v1586, %v1590
      %v1593 = vadd.f32 %v1458, %v1591
      %v1594 = vadd.f32 %v1459, %v1591
      %v1595 = vadd.f32 %v1460, %v1591
      %v1596 = vadd.f32 %v1461, %v1591
      %v1597 = vadd.f32 %v1462, %v1591
      %v1598 = vadd.f32 %v1463, %v1591
      %v1599 = vadd.f32 %v1464, %v1591
      %v1600 = vadd.f32 %v1465, %v1591
      %v1601 = vadd.f32 %v1466, %v1591
      %v1602 = vadd.f32 %v1467, %v1591
      %v1603 = vadd.f32 %v1468, %v1591
      %v1604 = vadd.f32 %v1469, %v1591
      %v1605 = vadd.f32 %v1470, %v1591
      %v1606 = vadd.f32 %v1471, %v1591
      %v1607 = vadd.f32 %v1472, %v1591
      %v1608 = vadd.f32 %v1473, %v1591
      %v1609 = vadd.f32 %v1474, %v1591
      %v1610 = vadd.f32 %v1475, %v1591
      %v1611 = vadd.f32 %v1476, %v1591
      %v1612 = vadd.f32 %v1477, %v1591
      %v1613 = vadd.f32 %v1478, %v1591
      %v1614 = vadd.f32 %v1479, %v1591
      %v1615 = vadd.f32 %v1480, %v1591
      %v1616 = vadd.f32 %v1481, %v1591
      %v1617 = vadd.f32 %v1482, %v1591
      %v1618 = vadd.f32 %v1483, %v1591
      %v1619 = vadd.f32 %v1484, %v1591
      %v1620 = vadd.f32 %v1485, %v1591
      %v1621 = vadd.f32 %v1486, %v1591
      %v1622 = vadd.f32 %v1487, %v1591
      %v1623 = vadd.f32 %v1488, %v1591
      %v1624 = vadd.f32 %v1489, %v1591
      %v1625 = vadd.f32 %v1490, %v1591
      %v1626 = vadd.f32 %v1491, %v1591
      %v1627 = vadd.f32 %v1492, %v1591
      %v1628 = vadd.f32 %v1493, %v1591
      %v1629 = vadd.f32 %v1494, %v1591
      %v1630 = vadd.f32 %v1495, %v1591
      %v1631 = vadd.f32 %v1496, %v1591
      %v1632 = vadd.f32 %v1497, %v1591
      %v1633 = vadd.f32 %v1498, %v1591
      %v1634 = vadd.f32 %v1499, %v1591
      %v1635 = vadd.f32 %v1500, %v1591
      %v1636 = vadd.f32 %v1501, %v1591
      %v1637 = vadd.f32 %v1502, %v1591
      %v1638 = vadd.f32 %v1503, %v1591
      %v1639 = vadd.f32 %v1504, %v1591
      %v1640 = vadd.f32 %v1505, %v1591
      %v1641 = vadd.f32 %v1506, %v1591
      %v1642 = vadd.f32 %v1507, %v1591
      %v1643 = vadd.f32 %v1508, %v1591
      %v1644 = vadd.f32 %v1509, %v1591
      %v1645 = vadd.f32 %v1510, %v1591
      %v1646 = vadd.f32 %v1511, %v1591
      %v1647 = vadd.f32 %v1512, %v1591
      %v1648 = vadd.f32 %v1513, %v1591
      %v1649 = vadd.f32 %v1514, %v1591
      %v1650 = vadd.f32 %v1515, %v1591
      %v1651 = vadd.f32 %v1516, %v1591
      %v1652 = vadd.f32 %v1517, %v1591
      %v1653 = vadd.f32 %v1518, %v1591
      %v1654 = vadd.f32 %v1519, %v1591
      %v1655 = vadd.f32 %v1520, %v1591
      %v1656 = vadd.f32 %v1521, %v1591
      %v1657 = vadd.f32 %v1522, %v1591
      %v1658 = vadd.f32 %v1523, %v1591
      %v1659 = vadd.f32 %v1524, %v1591
      %v1660 = vadd.f32 %v1525, %v1591
      %v1661 = vadd.f32 %v1526, %v1591
      %v1662 = vadd.f32 %v1527, %v1591
      %v1663 = vadd.f32 %v1528, %v1591
      %v1664 = vadd.f32 %v1529, %v1591
      %v1665 = vadd.f32 %v1530, %v1591
      %v1666 = vadd.f32 %v1531, %v1591
      %v1667 = vadd.f32 %v1532, %v1591
      %v1668 = vadd.f32 %v1533, %v1591
      %v1669 = vadd.f32 %v1534, %v1591
      %v1670 = vadd.f32 %v1535, %v1591
      %v1671 = vadd.f32 %v1536, %v1591
      %v1672 = vadd.f32 %v1537, %v1591
      %v1673 = vadd.f32 %v1538, %v1591
      %v1674 = vadd.f32 %v1539, %v1591
      %v1675 = vadd.f32 %v1540, %v1591
      %v1676 = vadd.f32 %v1541, %v1591
      %v1677 = vadd.f32 %v1542, %v1591
      %v1678 = vadd.f32 %v1543, %v1591
      %v1679 = vadd.f32 %v1544, %v1591
      %v1680 = vadd.f32 %v1545, %v1591
      %v1681 = vadd.f32 %v1546, %v1591
      %v1682 = vadd.f32 %v1547, %v1591
      %v1683 = vadd.f32 %v1548, %v1591
      %v1684 = vadd.f32 %v1549, %v1591
      %v1685 = vadd.f32 %v1550, %v1591
      %v1686 = vadd.f32 %v1551, %v1591
      %v1687 = vadd.f32 %v1552, %v1591
      %v1688 = vadd.f32 %v1553, %v1591
      %v1689 = vadd.f32 %v1554, %v1591
      %v1690 = vadd.f32 %v1555, %v1591
      %v1691 = vadd.f32 %v1556, %v1591
      %v1692 = vadd.f32 %v1557, %v1591
      %v1693 = vadd.f32 %v1558, %v1591
      %v1694 = vadd.f32 %v1559, %v1591
      %v1695 = vadd.f32 %v1560, %v1591
      %v1696 = vadd.f32 %v1561, %v1591
      %v1697 = vadd.f32 %v1562, %v1591
      %v1698 = vadd.f32 %v1563, %v1591
      %v1699 = vadd.f32 %v1564, %v1591
      %v1700 = vadd.f32 %v1565, %v1591
      %v1701 = vadd.f32 %v1566, %v1591
      %v1702 = vadd.f32 %v1567, %v1591
      %v1703 = vadd.f32 %v1568, %v1591
      %v1704 = vadd.f32 %v1569, %v1591
      %v1705 = vadd.f32 %v1570, %v1591
      %v1706 = vadd.f32 %v1571, %v1591
      %v1707 = vadd.f32 %v1572, %v1591
      %v1708 = vadd.f32 %v1573, %v1591
      %v1709 = vadd.f32 %v1574, %v1591
      %v1710 = vadd.f32 %v1575, %v1591
      %v1711 = vadd.f32 %v1576, %v1591
      %v1712 = vadd.f32 %v1577, %v1591
      %v1713 = vadd.f32 %v1578, %v1591
      %v1714 = vadd.f32 %v1579, %v1591
      %v1715 = vadd.f32 %v1580, %v1591
      %v1716 = vadd.f32 %v1581, %v1591
      %v1717 = vadd.f32 %v1582, %v1591
      %v1718 = vadd.f32 %v1583, %v1591
      %v1719 = vadd.f32 %v1584, %v1591
      %v1720 = vadd.f32 %v1585, %v1591
      %v1721 = vpack.c.bf16 %v1594, %v1593
      %v1722 = vpack.c.bf16 %v1596, %v1595
      %v1723 = vpack.c.bf16 %v1598, %v1597
      %v1724 = vpack.c.bf16 %v1600, %v1599
      %v1725 = vpack.c.bf16 %v1602, %v1601
      %v1726 = vpack.c.bf16 %v1604, %v1603
      %v1727 = vpack.c.bf16 %v1606, %v1605
      %v1728 = vpack.c.bf16 %v1608, %v1607
      %v1729 = vpack.c.bf16 %v1610, %v1609
      %v1730 = vpack.c.bf16 %v1612, %v1611
      %v1731 = vpack.c.bf16 %v1614, %v1613
      %v1732 = vpack.c.bf16 %v1616, %v1615
      %v1733 = vpack.c.bf16 %v1618, %v1617
      %v1734 = vpack.c.bf16 %v1620, %v1619
      %v1735 = vpack.c.bf16 %v1622, %v1621
      %v1736 = vpack.c.bf16 %v1624, %v1623
      %v1737 = vpack.c.bf16 %v1626, %v1625
      %v1738 = vpack.c.bf16 %v1628, %v1627
      %v1739 = vpack.c.bf16 %v1630, %v1629
      %v1740 = vpack.c.bf16 %v1632, %v1631
      %v1741 = vpack.c.bf16 %v1634, %v1633
      %v1742 = vpack.c.bf16 %v1636, %v1635
      %v1743 = vpack.c.bf16 %v1638, %v1637
      %v1744 = vpack.c.bf16 %v1640, %v1639
      %v1745 = vpack.c.bf16 %v1642, %v1641
      %v1746 = vpack.c.bf16 %v1644, %v1643
      %v1747 = vpack.c.bf16 %v1646, %v1645
      %v1748 = vpack.c.bf16 %v1648, %v1647
      %v1749 = vpack.c.bf16 %v1650, %v1649
      %v1750 = vpack.c.bf16 %v1652, %v1651
      %v1751 = vpack.c.bf16 %v1654, %v1653
      %v1752 = vpack.c.bf16 %v1656, %v1655
      %v1753 = vpack.c.bf16 %v1658, %v1657
      %v1754 = vpack.c.bf16 %v1660, %v1659
      %v1755 = vpack.c.bf16 %v1662, %v1661
      %v1756 = vpack.c.bf16 %v1664, %v1663
      %v1757 = vpack.c.bf16 %v1666, %v1665
      %v1758 = vpack.c.bf16 %v1668, %v1667
      %v1759 = vpack.c.bf16 %v1670, %v1669
      %v1760 = vpack.c.bf16 %v1672, %v1671
      %v1761 = vpack.c.bf16 %v1674, %v1673
      %v1762 = vpack.c.bf16 %v1676, %v1675
      %v1763 = vpack.c.bf16 %v1678, %v1677
      %v1764 = vpack.c.bf16 %v1680, %v1679
      %v1765 = vpack.c.bf16 %v1682, %v1681
      %v1766 = vpack.c.bf16 %v1684, %v1683
      %v1767 = vpack.c.bf16 %v1686, %v1685
      %v1768 = vpack.c.bf16 %v1688, %v1687
      %v1769 = vpack.c.bf16 %v1690, %v1689
      %v1770 = vpack.c.bf16 %v1692, %v1691
      %v1771 = vpack.c.bf16 %v1694, %v1693
      %v1772 = vpack.c.bf16 %v1696, %v1695
      %v1773 = vpack.c.bf16 %v1698, %v1697
      %v1774 = vpack.c.bf16 %v1700, %v1699
      %v1775 = vpack.c.bf16 %v1702, %v1701
      %v1776 = vpack.c.bf16 %v1704, %v1703
      %v1777 = vpack.c.bf16 %v1706, %v1705
      %v1778 = vpack.c.bf16 %v1708, %v1707
      %v1779 = vpack.c.bf16 %v1710, %v1709
      %v1780 = vpack.c.bf16 %v1712, %v1711
      %v1781 = vpack.c.bf16 %v1714, %v1713
      %v1782 = vpack.c.bf16 %v1716, %v1715
      %v1783 = vpack.c.bf16 %v1718, %v1717
      %v1784 = vpack.c.bf16 %v1720, %v1719
      %v1849 = vunpack.c.l.b16 %v1721
      %v1850 = vunpack.c.h.b16 %v1721
      %v1851 = vunpack.c.l.b16 %v1722
      %v1852 = vunpack.c.h.b16 %v1722
      %v1853 = vunpack.c.l.b16 %v1723
      %v1854 = vunpack.c.h.b16 %v1723
      %v1855 = vunpack.c.l.b16 %v1724
      %v1856 = vunpack.c.h.b16 %v1724
      %v1857 = vunpack.c.l.b16 %v1725
      %v1858 = vunpack.c.h.b16 %v1725
      %v1859 = vunpack.c.l.b16 %v1726
      %v1860 = vunpack.c.h.b16 %v1726
      %v1861 = vunpack.c.l.b16 %v1727
      %v1862 = vunpack.c.h.b16 %v1727
      %v1863 = vunpack.c.l.b16 %v1728
      %v1864 = vunpack.c.h.b16 %v1728
      %v1865 = vunpack.c.l.b16 %v1729
      %v1866 = vunpack.c.h.b16 %v1729
      %v1867 = vunpack.c.l.b16 %v1730
      %v1868 = vunpack.c.h.b16 %v1730
      %v1869 = vunpack.c.l.b16 %v1731
      %v1870 = vunpack.c.h.b16 %v1731
      %v1871 = vunpack.c.l.b16 %v1732
      %v1872 = vunpack.c.h.b16 %v1732
      %v1873 = vunpack.c.l.b16 %v1733
      %v1874 = vunpack.c.h.b16 %v1733
      %v1875 = vunpack.c.l.b16 %v1734
      %v1876 = vunpack.c.h.b16 %v1734
      %v1877 = vunpack.c.l.b16 %v1735
      %v1878 = vunpack.c.h.b16 %v1735
      %v1879 = vunpack.c.l.b16 %v1736
      %v1880 = vunpack.c.h.b16 %v1736
      %v1881 = vunpack.c.l.b16 %v1737
      %v1882 = vunpack.c.h.b16 %v1737
      %v1883 = vunpack.c.l.b16 %v1738
      %v1884 = vunpack.c.h.b16 %v1738
      %v1885 = vunpack.c.l.b16 %v1739
      %v1886 = vunpack.c.h.b16 %v1739
      %v1887 = vunpack.c.l.b16 %v1740
      %v1888 = vunpack.c.h.b16 %v1740
      %v1889 = vunpack.c.l.b16 %v1741
      %v1890 = vunpack.c.h.b16 %v1741
      %v1891 = vunpack.c.l.b16 %v1742
      %v1892 = vunpack.c.h.b16 %v1742
      %v1893 = vunpack.c.l.b16 %v1743
      %v1894 = vunpack.c.h.b16 %v1743
      %v1895 = vunpack.c.l.b16 %v1744
      %v1896 = vunpack.c.h.b16 %v1744
      %v1897 = vunpack.c.l.b16 %v1745
      %v1898 = vunpack.c.h.b16 %v1745
      %v1899 = vunpack.c.l.b16 %v1746
      %v1900 = vunpack.c.h.b16 %v1746
      %v1901 = vunpack.c.l.b16 %v1747
      %v1902 = vunpack.c.h.b16 %v1747
      %v1903 = vunpack.c.l.b16 %v1748
      %v1904 = vunpack.c.h.b16 %v1748
      %v1905 = vunpack.c.l.b16 %v1749
      %v1906 = vunpack.c.h.b16 %v1749
      %v1907 = vunpack.c.l.b16 %v1750
      %v1908 = vunpack.c.h.b16 %v1750
      %v1909 = vunpack.c.l.b16 %v1751
      %v1910 = vunpack.c.h.b16 %v1751
      %v1911 = vunpack.c.l.b16 %v1752
      %v1912 = vunpack.c.h.b16 %v1752
      %v1913 = vunpack.c.l.b16 %v1753
      %v1914 = vunpack.c.h.b16 %v1753
      %v1915 = vunpack.c.l.b16 %v1754
      %v1916 = vunpack.c.h.b16 %v1754
      %v1917 = vunpack.c.l.b16 %v1755
      %v1918 = vunpack.c.h.b16 %v1755
      %v1919 = vunpack.c.l.b16 %v1756
      %v1920 = vunpack.c.h.b16 %v1756
      %v1921 = vunpack.c.l.b16 %v1757
      %v1922 = vunpack.c.h.b16 %v1757
      %v1923 = vunpack.c.l.b16 %v1758
      %v1924 = vunpack.c.h.b16 %v1758
      %v1925 = vunpack.c.l.b16 %v1759
      %v1926 = vunpack.c.h.b16 %v1759
      %v1927 = vunpack.c.l.b16 %v1760
      %v1928 = vunpack.c.h.b16 %v1760
      %v1929 = vunpack.c.l.b16 %v1761
      %v1930 = vunpack.c.h.b16 %v1761
      %v1931 = vunpack.c.l.b16 %v1762
      %v1932 = vunpack.c.h.b16 %v1762
      %v1933 = vunpack.c.l.b16 %v1763
      %v1934 = vunpack.c.h.b16 %v1763
      %v1935 = vunpack.c.l.b16 %v1764
      %v1936 = vunpack.c.h.b16 %v1764
      %v1937 = vunpack.c.l.b16 %v1765
      %v1938 = vunpack.c.h.b16 %v1765
      %v1939 = vunpack.c.l.b16 %v1766
      %v1940 = vunpack.c.h.b16 %v1766
      %v1941 = vunpack.c.l.b16 %v1767
      %v1942 = vunpack.c.h.b16 %v1767
      %v1943 = vunpack.c.l.b16 %v1768
      %v1944 = vunpack.c.h.b16 %v1768
      %v1945 = vunpack.c.l.b16 %v1769
      %v1946 = vunpack.c.h.b16 %v1769
      %v1947 = vunpack.c.l.b16 %v1770
      %v1948 = vunpack.c.h.b16 %v1770
      %v1949 = vunpack.c.l.b16 %v1771
      %v1950 = vunpack.c.h.b16 %v1771
      %v1951 = vunpack.c.l.b16 %v1772
      %v1952 = vunpack.c.h.b16 %v1772
      %v1953 = vunpack.c.l.b16 %v1773
      %v1954 = vunpack.c.h.b16 %v1773
      %v1955 = vunpack.c.l.b16 %v1774
      %v1956 = vunpack.c.h.b16 %v1774
      %v1957 = vunpack.c.l.b16 %v1775
      %v1958 = vunpack.c.h.b16 %v1775
      %v1959 = vunpack.c.l.b16 %v1776
      %v1960 = vunpack.c.h.b16 %v1776
      %v1961 = vunpack.c.l.b16 %v1777
      %v1962 = vunpack.c.h.b16 %v1777
      %v1963 = vunpack.c.l.b16 %v1778
      %v1964 = vunpack.c.h.b16 %v1778
      %v1965 = vunpack.c.l.b16 %v1779
      %v1966 = vunpack.c.h.b16 %v1779
      %v1967 = vunpack.c.l.b16 %v1780
      %v1968 = vunpack.c.h.b16 %v1780
      %v1969 = vunpack.c.l.b16 %v1781
      %v1970 = vunpack.c.h.b16 %v1781
      %v1971 = vunpack.c.l.b16 %v1782
      %v1972 = vunpack.c.h.b16 %v1782
      %v1973 = vunpack.c.l.b16 %v1783
      %v1974 = vunpack.c.h.b16 %v1783
      %v1975 = vunpack.c.l.b16 %v1784
      %v1976 = vunpack.c.h.b16 %v1784
      %v1977 = vpack.c.b16 %v1849, %v1849
      %v1978 = vpack.c.b16 %v1850, %v1850
      %v1979 = vpack.c.b16 %v1851, %v1851
      %v1980 = vpack.c.b16 %v1852, %v1852
      %v1981 = vpack.c.b16 %v1853, %v1853
      %v1982 = vpack.c.b16 %v1854, %v1854
      %v1983 = vpack.c.b16 %v1855, %v1855
      %v1984 = vpack.c.b16 %v1856, %v1856
      %v1985 = vpack.c.b16 %v1857, %v1857
      %v1986 = vpack.c.b16 %v1858, %v1858
      %v1987 = vpack.c.b16 %v1859, %v1859
      %v1988 = vpack.c.b16 %v1860, %v1860
      %v1989 = vpack.c.b16 %v1861, %v1861
      %v1990 = vpack.c.b16 %v1862, %v1862
      %v1991 = vpack.c.b16 %v1863, %v1863
      %v1992 = vpack.c.b16 %v1864, %v1864
      %v1993 = vpack.c.b16 %v1865, %v1865
      %v1994 = vpack.c.b16 %v1866, %v1866
      %v1995 = vpack.c.b16 %v1867, %v1867
      %v1996 = vpack.c.b16 %v1868, %v1868
      %v1997 = vpack.c.b16 %v1869, %v1869
      %v1998 = vpack.c.b16 %v1870, %v1870
      %v1999 = vpack.c.b16 %v1871, %v1871
      %v2000 = vpack.c.b16 %v1872, %v1872
      %v2001 = vpack.c.b16 %v1873, %v1873
      %v2002 = vpack.c.b16 %v1874, %v1874
      %v2003 = vpack.c.b16 %v1875, %v1875
      %v2004 = vpack.c.b16 %v1876, %v1876
      %v2005 = vpack.c.b16 %v1877, %v1877
      %v2006 = vpack.c.b16 %v1878, %v1878
      %v2007 = vpack.c.b16 %v1879, %v1879
      %v2008 = vpack.c.b16 %v1880, %v1880
      %v2009 = vpack.c.b16 %v1881, %v1881
      %v2010 = vpack.c.b16 %v1882, %v1882
      %v2011 = vpack.c.b16 %v1883, %v1883
      %v2012 = vpack.c.b16 %v1884, %v1884
      %v2013 = vpack.c.b16 %v1885, %v1885
      %v2014 = vpack.c.b16 %v1886, %v1886
      %v2015 = vpack.c.b16 %v1887, %v1887
      %v2016 = vpack.c.b16 %v1888, %v1888
      %v2017 = vpack.c.b16 %v1889, %v1889
      %v2018 = vpack.c.b16 %v1890, %v1890
      %v2019 = vpack.c.b16 %v1891, %v1891
      %v2020 = vpack.c.b16 %v1892, %v1892
      %v2021 = vpack.c.b16 %v1893, %v1893
      %v2022 = vpack.c.b16 %v1894, %v1894
      %v2023 = vpack.c.b16 %v1895, %v1895
      %v2024 = vpack.c.b16 %v1896, %v1896
      %v2025 = vpack.c.b16 %v1897, %v1897
      %v2026 = vpack.c.b16 %v1898, %v1898
      %v2027 = vpack.c.b16 %v1899, %v1899
      %v2028 = vpack.c.b16 %v1900, %v1900
      %v2029 = vpack.c.b16 %v1901, %v1901
      %v2030 = vpack.c.b16 %v1902, %v1902
      %v2031 = vpack.c.b16 %v1903, %v1903
      %v2032 = vpack.c.b16 %v1904, %v1904
      %v2033 = vpack.c.b16 %v1905, %v1905
      %v2034 = vpack.c.b16 %v1906, %v1906
      %v2035 = vpack.c.b16 %v1907, %v1907
      %v2036 = vpack.c.b16 %v1908, %v1908
      %v2037 = vpack.c.b16 %v1909, %v1909
      %v2038 = vpack.c.b16 %v1910, %v1910
      %v2039 = vpack.c.b16 %v1911, %v1911
      %v2040 = vpack.c.b16 %v1912, %v1912
      %v2041 = vpack.c.b16 %v1913, %v1913
      %v2042 = vpack.c.b16 %v1914, %v1914
      %v2043 = vpack.c.b16 %v1915, %v1915
      %v2044 = vpack.c.b16 %v1916, %v1916
      %v2045 = vpack.c.b16 %v1917, %v1917
      %v2046 = vpack.c.b16 %v1918, %v1918
      %v2047 = vpack.c.b16 %v1919, %v1919
      %v2048 = vpack.c.b16 %v1920, %v1920
      %v2049 = vpack.c.b16 %v1921, %v1921
      %v2050 = vpack.c.b16 %v1922, %v1922
      %v2051 = vpack.c.b16 %v1923, %v1923
      %v2052 = vpack.c.b16 %v1924, %v1924
      %v2053 = vpack.c.b16 %v1925, %v1925
      %v2054 = vpack.c.b16 %v1926, %v1926
      %v2055 = vpack.c.b16 %v1927, %v1927
      %v2056 = vpack.c.b16 %v1928, %v1928
      %v2057 = vpack.c.b16 %v1929, %v1929
      %v2058 = vpack.c.b16 %v1930, %v1930
      %v2059 = vpack.c.b16 %v1931, %v1931
      %v2060 = vpack.c.b16 %v1932, %v1932
      %v2061 = vpack.c.b16 %v1933, %v1933
      %v2062 = vpack.c.b16 %v1934, %v1934
      %v2063 = vpack.c.b16 %v1935, %v1935
      %v2064 = vpack.c.b16 %v1936, %v1936
      %v2065 = vpack.c.b16 %v1937, %v1937
      %v2066 = vpack.c.b16 %v1938, %v1938
      %v2067 = vpack.c.b16 %v1939, %v1939
      %v2068 = vpack.c.b16 %v1940, %v1940
      %v2069 = vpack.c.b16 %v1941, %v1941
      %v2070 = vpack.c.b16 %v1942, %v1942
      %v2071 = vpack.c.b16 %v1943, %v1943
      %v2072 = vpack.c.b16 %v1944, %v1944
      %v2073 = vpack.c.b16 %v1945, %v1945
      %v2074 = vpack.c.b16 %v1946, %v1946
      %v2075 = vpack.c.b16 %v1947, %v1947
      %v2076 = vpack.c.b16 %v1948, %v1948
      %v2077 = vpack.c.b16 %v1949, %v1949
      %v2078 = vpack.c.b16 %v1950, %v1950
      %v2079 = vpack.c.b16 %v1951, %v1951
      %v2080 = vpack.c.b16 %v1952, %v1952
      %v2081 = vpack.c.b16 %v1953, %v1953
      %v2082 = vpack.c.b16 %v1954, %v1954
      %v2083 = vpack.c.b16 %v1955, %v1955
      %v2084 = vpack.c.b16 %v1956, %v1956
      %v2085 = vpack.c.b16 %v1957, %v1957
      %v2086 = vpack.c.b16 %v1958, %v1958
      %v2087 = vpack.c.b16 %v1959, %v1959
      %v2088 = vpack.c.b16 %v1960, %v1960
      %v2089 = vpack.c.b16 %v1961, %v1961
      %v2090 = vpack.c.b16 %v1962, %v1962
      %v2091 = vpack.c.b16 %v1963, %v1963
      %v2092 = vpack.c.b16 %v1964, %v1964
      %v2093 = vpack.c.b16 %v1965, %v1965
      %v2094 = vpack.c.b16 %v1966, %v1966
      %v2095 = vpack.c.b16 %v1967, %v1967
      %v2096 = vpack.c.b16 %v1968, %v1968
      %v2097 = vpack.c.b16 %v1969, %v1969
      %v2098 = vpack.c.b16 %v1970, %v1970
      %v2099 = vpack.c.b16 %v1971, %v1971
      %v2100 = vpack.c.b16 %v1972, %v1972
      %v2101 = vpack.c.b16 %v1973, %v1973
      %v2102 = vpack.c.b16 %v1974, %v1974
      %v2103 = vpack.c.b16 %v1975, %v1975
      %v2104 = vpack.c.b16 %v1976, %v1976
      %vm2233 = vcmask 257024
      %2234 = vst.msk [vmem:[%s199] sm:$0xf] %vm2233, %v1977
      %2235 = vst.msk [vmem:[%s199 + $0x4] sm:$0xf] %vm2233, %v1978
      %2236 = vst.msk [vmem:[%s199 + $0x8] sm:$0xf] %vm2233, %v1979
      %2237 = vst.msk [vmem:[%s199 + $0xc] sm:$0xf] %vm2233, %v1980
      %2238 = vst.msk [vmem:[%s199 + $0x10] sm:$0xf] %vm2233, %v1981
      %2239 = vst.msk [vmem:[%s199 + $0x14] sm:$0xf] %vm2233, %v1982
      %2240 = vst.msk [vmem:[%s199 + $0x18] sm:$0xf] %vm2233, %v1983
      %2241 = vst.msk [vmem:[%s199 + $0x1c] sm:$0xf] %vm2233, %v1984
      %2242 = vst.msk [vmem:[%s199 + $0x20] sm:$0xf] %vm2233, %v1985
      %2243 = vst.msk [vmem:[%s199 + $0x24] sm:$0xf] %vm2233, %v1986
      %2244 = vst.msk [vmem:[%s199 + $0x28] sm:$0xf] %vm2233, %v1987
      %2245 = vst.msk [vmem:[%s199 + $0x2c] sm:$0xf] %vm2233, %v1988
      %2246 = vst.msk [vmem:[%s199 + $0x30] sm:$0xf] %vm2233, %v1989
      %2247 = vst.msk [vmem:[%s199 + $0x34] sm:$0xf] %vm2233, %v1990
      %2248 = vst.msk [vmem:[%s199 + $0x38] sm:$0xf] %vm2233, %v1991
      %2249 = vst.msk [vmem:[%s199 + $0x3c] sm:$0xf] %vm2233, %v1992
      %2250 = vst.msk [vmem:[%s199 + $0x40] sm:$0xf] %vm2233, %v1993
      %2251 = vst.msk [vmem:[%s199 + $0x44] sm:$0xf] %vm2233, %v1994
      %2252 = vst.msk [vmem:[%s199 + $0x48] sm:$0xf] %vm2233, %v1995
      %2253 = vst.msk [vmem:[%s199 + $0x4c] sm:$0xf] %vm2233, %v1996
      %2254 = vst.msk [vmem:[%s199 + $0x50] sm:$0xf] %vm2233, %v1997
      %2255 = vst.msk [vmem:[%s199 + $0x54] sm:$0xf] %vm2233, %v1998
      %2256 = vst.msk [vmem:[%s199 + $0x58] sm:$0xf] %vm2233, %v1999
      %2257 = vst.msk [vmem:[%s199 + $0x5c] sm:$0xf] %vm2233, %v2000
      %2258 = vst.msk [vmem:[%s199 + $0x60] sm:$0xf] %vm2233, %v2001
      %2259 = vst.msk [vmem:[%s199 + $0x64] sm:$0xf] %vm2233, %v2002
      %2260 = vst.msk [vmem:[%s199 + $0x68] sm:$0xf] %vm2233, %v2003
      %2261 = vst.msk [vmem:[%s199 + $0x6c] sm:$0xf] %vm2233, %v2004
      %2262 = vst.msk [vmem:[%s199 + $0x70] sm:$0xf] %vm2233, %v2005
      %2263 = vst.msk [vmem:[%s199 + $0x74] sm:$0xf] %vm2233, %v2006
      %2264 = vst.msk [vmem:[%s199 + $0x78] sm:$0xf] %vm2233, %v2007
      %2265 = vst.msk [vmem:[%s199 + $0x7c] sm:$0xf] %vm2233, %v2008
      %2266 = vst.msk [vmem:[%s199 + $0x80] sm:$0xf] %vm2233, %v2009
      %2267 = vst.msk [vmem:[%s199 + $0x84] sm:$0xf] %vm2233, %v2010
      %2268 = vst.msk [vmem:[%s199 + $0x88] sm:$0xf] %vm2233, %v2011
      %2269 = vst.msk [vmem:[%s199 + $0x8c] sm:$0xf] %vm2233, %v2012
      %2270 = vst.msk [vmem:[%s199 + $0x90] sm:$0xf] %vm2233, %v2013
      %2271 = vst.msk [vmem:[%s199 + $0x94] sm:$0xf] %vm2233, %v2014
      %2272 = vst.msk [vmem:[%s199 + $0x98] sm:$0xf] %vm2233, %v2015
      %2273 = vst.msk [vmem:[%s199 + $0x9c] sm:$0xf] %vm2233, %v2016
      %2274 = vst.msk [vmem:[%s199 + $0xa0] sm:$0xf] %vm2233, %v2017
      %2275 = vst.msk [vmem:[%s199 + $0xa4] sm:$0xf] %vm2233, %v2018
      %2276 = vst.msk [vmem:[%s199 + $0xa8] sm:$0xf] %vm2233, %v2019
      %2277 = vst.msk [vmem:[%s199 + $0xac] sm:$0xf] %vm2233, %v2020
      %2278 = vst.msk [vmem:[%s199 + $0xb0] sm:$0xf] %vm2233, %v2021
      %2279 = vst.msk [vmem:[%s199 + $0xb4] sm:$0xf] %vm2233, %v2022
      %2280 = vst.msk [vmem:[%s199 + $0xb8] sm:$0xf] %vm2233, %v2023
      %2281 = vst.msk [vmem:[%s199 + $0xbc] sm:$0xf] %vm2233, %v2024
      %2282 = vst.msk [vmem:[%s199 + $0xc0] sm:$0xf] %vm2233, %v2025
      %2283 = vst.msk [vmem:[%s199 + $0xc4] sm:$0xf] %vm2233, %v2026
      %2284 = vst.msk [vmem:[%s199 + $0xc8] sm:$0xf] %vm2233, %v2027
      %2285 = vst.msk [vmem:[%s199 + $0xcc] sm:$0xf] %vm2233, %v2028
      %2286 = vst.msk [vmem:[%s199 + $0xd0] sm:$0xf] %vm2233, %v2029
      %2287 = vst.msk [vmem:[%s199 + $0xd4] sm:$0xf] %vm2233, %v2030
      %2288 = vst.msk [vmem:[%s199 + $0xd8] sm:$0xf] %vm2233, %v2031
      %2289 = vst.msk [vmem:[%s199 + $0xdc] sm:$0xf] %vm2233, %v2032
      %2290 = vst.msk [vmem:[%s199 + $0xe0] sm:$0xf] %vm2233, %v2033
      %2291 = vst.msk [vmem:[%s199 + $0xe4] sm:$0xf] %vm2233, %v2034
      %2292 = vst.msk [vmem:[%s199 + $0xe8] sm:$0xf] %vm2233, %v2035
      %2293 = vst.msk [vmem:[%s199 + $0xec] sm:$0xf] %vm2233, %v2036
      %2294 = vst.msk [vmem:[%s199 + $0xf0] sm:$0xf] %vm2233, %v2037
      %2295 = vst.msk [vmem:[%s199 + $0xf4] sm:$0xf] %vm2233, %v2038
      %2296 = vst.msk [vmem:[%s199 + $0xf8] sm:$0xf] %vm2233, %v2039
      %2297 = vst.msk [vmem:[%s199 + $0xfc] sm:$0xf] %vm2233, %v2040
      %2298 = vst.msk [vmem:[%s199 + $0x100] sm:$0xf] %vm2233, %v2041
      %2299 = vst.msk [vmem:[%s199 + $0x104] sm:$0xf] %vm2233, %v2042
      %2300 = vst.msk [vmem:[%s199 + $0x108] sm:$0xf] %vm2233, %v2043
      %2301 = vst.msk [vmem:[%s199 + $0x10c] sm:$0xf] %vm2233, %v2044
      %2302 = vst.msk [vmem:[%s199 + $0x110] sm:$0xf] %vm2233, %v2045
      %2303 = vst.msk [vmem:[%s199 + $0x114] sm:$0xf] %vm2233, %v2046
      %2304 = vst.msk [vmem:[%s199 + $0x118] sm:$0xf] %vm2233, %v2047
      %2305 = vst.msk [vmem:[%s199 + $0x11c] sm:$0xf] %vm2233, %v2048
      %2306 = vst.msk [vmem:[%s199 + $0x120] sm:$0xf] %vm2233, %v2049
      %2307 = vst.msk [vmem:[%s199 + $0x124] sm:$0xf] %vm2233, %v2050
      %2308 = vst.msk [vmem:[%s199 + $0x128] sm:$0xf] %vm2233, %v2051
      %2309 = vst.msk [vmem:[%s199 + $0x12c] sm:$0xf] %vm2233, %v2052
      %2310 = vst.msk [vmem:[%s199 + $0x130] sm:$0xf] %vm2233, %v2053
      %2311 = vst.msk [vmem:[%s199 + $0x134] sm:$0xf] %vm2233, %v2054
      %2312 = vst.msk [vmem:[%s199 + $0x138] sm:$0xf] %vm2233, %v2055
      %2313 = vst.msk [vmem:[%s199 + $0x13c] sm:$0xf] %vm2233, %v2056
      %2314 = vst.msk [vmem:[%s199 + $0x140] sm:$0xf] %vm2233, %v2057
      %2315 = vst.msk [vmem:[%s199 + $0x144] sm:$0xf] %vm2233, %v2058
      %2316 = vst.msk [vmem:[%s199 + $0x148] sm:$0xf] %vm2233, %v2059
      %2317 = vst.msk [vmem:[%s199 + $0x14c] sm:$0xf] %vm2233, %v2060
      %2318 = vst.msk [vmem:[%s199 + $0x150] sm:$0xf] %vm2233, %v2061
      %2319 = vst.msk [vmem:[%s199 + $0x154] sm:$0xf] %vm2233, %v2062
      %2320 = vst.msk [vmem:[%s199 + $0x158] sm:$0xf] %vm2233, %v2063
      %2321 = vst.msk [vmem:[%s199 + $0x15c] sm:$0xf] %vm2233, %v2064
      %2322 = vst.msk [vmem:[%s199 + $0x160] sm:$0xf] %vm2233, %v2065
      %2323 = vst.msk [vmem:[%s199 + $0x164] sm:$0xf] %vm2233, %v2066
      %2324 = vst.msk [vmem:[%s199 + $0x168] sm:$0xf] %vm2233, %v2067
      %2325 = vst.msk [vmem:[%s199 + $0x16c] sm:$0xf] %vm2233, %v2068
      %2326 = vst.msk [vmem:[%s199 + $0x170] sm:$0xf] %vm2233, %v2069
      %2327 = vst.msk [vmem:[%s199 + $0x174] sm:$0xf] %vm2233, %v2070
      %2328 = vst.msk [vmem:[%s199 + $0x178] sm:$0xf] %vm2233, %v2071
      %2329 = vst.msk [vmem:[%s199 + $0x17c] sm:$0xf] %vm2233, %v2072
      %2330 = vst.msk [vmem:[%s199 + $0x180] sm:$0xf] %vm2233, %v2073
      %2331 = vst.msk [vmem:[%s199 + $0x184] sm:$0xf] %vm2233, %v2074
      %2332 = vst.msk [vmem:[%s199 + $0x188] sm:$0xf] %vm2233, %v2075
      %2333 = vst.msk [vmem:[%s199 + $0x18c] sm:$0xf] %vm2233, %v2076
      %2334 = vst.msk [vmem:[%s199 + $0x190] sm:$0xf] %vm2233, %v2077
      %2335 = vst.msk [vmem:[%s199 + $0x194] sm:$0xf] %vm2233, %v2078
      %2336 = vst.msk [vmem:[%s199 + $0x198] sm:$0xf] %vm2233, %v2079
      %2337 = vst.msk [vmem:[%s199 + $0x19c] sm:$0xf] %vm2233, %v2080
      %2338 = vst.msk [vmem:[%s199 + $0x1a0] sm:$0xf] %vm2233, %v2081
      %2339 = vst.msk [vmem:[%s199 + $0x1a4] sm:$0xf] %vm2233, %v2082
      %2340 = vst.msk [vmem:[%s199 + $0x1a8] sm:$0xf] %vm2233, %v2083
      %2341 = vst.msk [vmem:[%s199 + $0x1ac] sm:$0xf] %vm2233, %v2084
      %2342 = vst.msk [vmem:[%s199 + $0x1b0] sm:$0xf] %vm2233, %v2085
      %2343 = vst.msk [vmem:[%s199 + $0x1b4] sm:$0xf] %vm2233, %v2086
      %2344 = vst.msk [vmem:[%s199 + $0x1b8] sm:$0xf] %vm2233, %v2087
      %2345 = vst.msk [vmem:[%s199 + $0x1bc] sm:$0xf] %vm2233, %v2088
      %2346 = vst.msk [vmem:[%s199 + $0x1c0] sm:$0xf] %vm2233, %v2089
      %2347 = vst.msk [vmem:[%s199 + $0x1c4] sm:$0xf] %vm2233, %v2090
      %2348 = vst.msk [vmem:[%s199 + $0x1c8] sm:$0xf] %vm2233, %v2091
      %2349 = vst.msk [vmem:[%s199 + $0x1cc] sm:$0xf] %vm2233, %v2092
      %2350 = vst.msk [vmem:[%s199 + $0x1d0] sm:$0xf] %vm2233, %v2093
      %2351 = vst.msk [vmem:[%s199 + $0x1d4] sm:$0xf] %vm2233, %v2094
      %2352 = vst.msk [vmem:[%s199 + $0x1d8] sm:$0xf] %vm2233, %v2095
      %2353 = vst.msk [vmem:[%s199 + $0x1dc] sm:$0xf] %vm2233, %v2096
      %2354 = vst.msk [vmem:[%s199 + $0x1e0] sm:$0xf] %vm2233, %v2097
      %2355 = vst.msk [vmem:[%s199 + $0x1e4] sm:$0xf] %vm2233, %v2098
      %2356 = vst.msk [vmem:[%s199 + $0x1e8] sm:$0xf] %vm2233, %v2099
      %2357 = vst.msk [vmem:[%s199 + $0x1ec] sm:$0xf] %vm2233, %v2100
      %2358 = vst.msk [vmem:[%s199 + $0x1f0] sm:$0xf] %vm2233, %v2101
      %2359 = vst.msk [vmem:[%s199 + $0x1f4] sm:$0xf] %vm2233, %v2102
      %2360 = vst.msk [vmem:[%s199 + $0x1f8] sm:$0xf] %vm2233, %v2103
      %2361 = vst.msk [vmem:[%s199 + $0x1fc] sm:$0xf] %vm2233, %v2104
      %s2362 = smul.u32 128, %s15
      %p2363 = scmp.lt.s32.totalorder %s2362, 383
      %s2364 = scalar_select %p2363, %s2362, 383
      %s2365 = smul.addr %s2364, 4
      %s2366 = scalar_lea.vmem %s4, %s2365
      // Predicated region
      $region37: #{decoder_forward.12} parent=35 // pred_check
        %p2367 = pneg %p122
      $region38: #{decoder_forward.12} parent=35 // pred_check_branch
        %2369 = sbr.rel (%p2367) target = $region40
      $region39: #{decoder_forward.12} parent=35 // pred_region
        %s2370 = smul.u32 128, %s15
      $region40: #{decoder_forward.12} parent=35 // pred_fallthru
        _
    $region36: #{decoder_forward.12} parent=5 // pred_fallthru
      _
    %p2371 = scmp.le.s32.totalorder 2, %s10
    // Predicated region
    $region41: #{decoder_forward.12} parent=5 // pred_check
      %p2372 = pneg %p2371
    $region42: #{decoder_forward.12} parent=5 // pred_check_branch
      %2374 = sbr.rel (%p2372) target = $region44
    $region43: #{decoder_forward.12} parent=5 // pred_region
      %s2375 = ssub.s32 %s10, 2
      // Predicated region
      $region45: #{decoder_forward.12} parent=43 // pred_check
        %p2376 = pneg %p128
      $region46: #{decoder_forward.12} parent=43 // pred_check_branch
        %2378 = sbr.rel (%p2376) target = $region48
      $region47: #{decoder_forward.12} parent=43 // pred_region
        %s2379 = smul.u32 128, %s16
        %p2380 = scmp.lt.s32.totalorder %s2379, 383
        %s2381 = scalar_select %p2380, %s2379, 383
        %s2382 = smul.addr %s2381, 4
        %s2383 = scalar_lea.vmem %s4, %s2382
      $region48: #{decoder_forward.12} parent=43 // pred_fallthru
        _
    $region44: #{decoder_forward.12} parent=5 // pred_fallthru
      _
  $region6: #{decoder_forward.12} parent=0 // loop_footer
    %s14 = sadd.s32 1, %s10
  $region7: #{decoder_forward.12} parent=0 // loop_footer_branch
    %9 = sbr.rel target = $region3
  $region8: #{decoder_forward.12} parent=0 // loop_exit
    _

// kernel: decoder_forward.13
$region0: #{decoder_forward.13}
  #allocation0 [shape = 'u32[]', space=smem, size = 0x4, offset = 0x4, fixed_abs, tag = 'smem constant byte address 0x4 - core index']
  #allocation1 [shape = 'u32[144,128]{1,0:T(1,128)}', space=vmem, size = 0x12000, scoped, tag = 'internal scratch']
  %s0 = inlined_call_operand.vmem [shape: bf16[9216,64], index: 0, kind: input, shape index: {}]
  %s1 = inlined_call_operand.vmem [shape: bf16[64,12], index: 1, kind: input, shape index: {}]
  %s2 = inlined_call_operand.vmem [shape: f32[1,12], index: 2, kind: input, shape index: {}]
  %s3 = inlined_call_operand.vmem [shape: f32[1,12], index: 3, kind: input, shape index: {}]
  %s4 = inlined_call_operand.vmem [shape: f32[9216,12], index: 4, kind: output, shape index: {}]
  %s5 = sld [smem:[#allocation0]]
  $region49: #{decoder_forward.13} parent=0
    _
  %s7 = ssub.s32 1, %s5
  %s8 = scalar_select 0, %s7, %s5
  loop: start=0, step=1, limit=11
  $region2: #{decoder_forward.13} parent=0 // loop_pre_header
    _
  $region3: #{decoder_forward.13} parent=0 // loop_header
    %s10 = sphi 0, %s14
    %p11 = scmp.ge.s32.totalorder %s10, 11
    %s20 = sphi 0, %s22
    %s23 = sphi 0, %s20
    %s24 = sphi 0, %s23
    %s40 = sphi 0, %s24
    %s44 = sphi 0, %s44
    %s46 = sphi 0, %s44
    %s47 = sphi 0, %s46
    %s61 = sphi 0, %s47
    %s65 = sphi 0, %s65
    %s67 = sphi 0, %s65
    %s68 = sphi 0, %s67
    %s82 = sphi 0, %s68
    %s86 = sphi 0, %s86
    %s88 = sphi 0, %s86
    %s89 = sphi 0, %s88
    %s103 = sphi 0, %s89
    %s109 = sphi 0, %s111
    %s112 = sphi 0, %s109
    %s113 = sphi 0, %s112
    %s129 = sphi 0, %s113
  $region4: #{decoder_forward.13} parent=0 // loop_header_branch
    %13 = sbr.rel (%p11) target = $region8
  $region5: #{decoder_forward.13} parent=0 // loop_body
    %s15 = ssub.s32 %s10, 1
    %s16 = ssub.s32 %s10, 2
    %s17 = sadd.s32 %s10, 1
    %s18 = ssub.s32 %s10, %s17
    %p19 = scmp.eq.s32.totalorder %s18, 0
    %s21 = sadd.s32 %s20, 1
    %s22 = scalar_select %p19, %s20, %s21
    %p25 = pneg %p19
    %p26 = scmp.eq.s32.totalorder %s10, 8
    %p27 = por %p25, %p26
    %p28 = scmp.ne.s32.totalorder %s20, %s23
    %p29 = scmp.eq.s32.totalorder %s10, 0
    %p30 = por %p28, %p29
    %p31 = scmp.ne.s32.totalorder %s20, %s23
    %p32 = scmp.eq.s32.totalorder %s15, 8
    %p33 = por %p31, %p32
    %p34 = scmp.ne.s32.totalorder %s23, %s24
    %p35 = scmp.eq.s32.totalorder %s15, 0
    %p36 = por %p34, %p35
    %p37 = scmp.ne.s32.totalorder %s23, %s24
    %p38 = scmp.eq.s32.totalorder %s16, 8
    %p39 = por %p37, %p38
    %p41 = scmp.ne.s32.totalorder %s24, %s40
    %p42 = scmp.eq.s32.totalorder %s16, 0
    %p43 = por %p41, %p42
    %s45 = sadd.s32 %s44, 1
    %p48 = scmp.eq.s32.totalorder %s10, 8
    %p49 = scmp.ne.s32.totalorder %s44, %s46
    %p50 = scmp.eq.s32.totalorder %s10, 0
    %p51 = por %p49, %p50
    %p52 = scmp.ne.s32.totalorder %s44, %s46
    %p53 = scmp.eq.s32.totalorder %s15, 8
    %p54 = por %p52, %p53
    %p55 = scmp.ne.s32.totalorder %s46, %s47
    %p56 = scmp.eq.s32.totalorder %s15, 0
    %p57 = por %p55, %p56
    %p58 = scmp.ne.s32.totalorder %s46, %s47
    %p59 = scmp.eq.s32.totalorder %s16, 8
    %p60 = por %p58, %p59
    %p62 = scmp.ne.s32.totalorder %s47, %s61
    %p63 = scmp.eq.s32.totalorder %s16, 0
    %p64 = por %p62, %p63
    %s66 = sadd.s32 %s65, 1
    %p69 = scmp.eq.s32.totalorder %s10, 8
    %p70 = scmp.ne.s32.totalorder %s65, %s67
    %p71 = scmp.eq.s32.totalorder %s10, 0
    %p72 = por %p70, %p71
    %p73 = scmp.ne.s32.totalorder %s65, %s67
    %p74 = scmp.eq.s32.totalorder %s15, 8
    %p75 = por %p73, %p74
    %p76 = scmp.ne.s32.totalorder %s67, %s68
    %p77 = scmp.eq.s32.totalorder %s15, 0
    %p78 = por %p76, %p77
    %p79 = scmp.ne.s32.totalorder %s67, %s68
    %p80 = scmp.eq.s32.totalorder %s16, 8
    %p81 = por %p79, %p80
    %p83 = scmp.ne.s32.totalorder %s68, %s82
    %p84 = scmp.eq.s32.totalorder %s16, 0
    %p85 = por %p83, %p84
    %s87 = sadd.s32 %s86, 1
    %p90 = scmp.eq.s32.totalorder %s10, 8
    %p91 = scmp.ne.s32.totalorder %s86, %s88
    %p92 = scmp.eq.s32.totalorder %s10, 0
    %p93 = por %p91, %p92
    %p94 = scmp.ne.s32.totalorder %s86, %s88
    %p95 = scmp.eq.s32.totalorder %s15, 8
    %p96 = por %p94, %p95
    %p97 = scmp.ne.s32.totalorder %s88, %s89
    %p98 = scmp.eq.s32.totalorder %s15, 0
    %p99 = por %p97, %p98
    %p100 = scmp.ne.s32.totalorder %s88, %s89
    %p101 = scmp.eq.s32.totalorder %s16, 8
    %p102 = por %p100, %p101
    %p104 = scmp.ne.s32.totalorder %s89, %s103
    %p105 = scmp.eq.s32.totalorder %s16, 0
    %p106 = por %p104, %p105
    %s107 = ssub.s32 %s10, %s17
    %p108 = scmp.eq.s32.totalorder %s107, 0
    %s110 = sadd.s32 %s109, 1
    %s111 = scalar_select %p108, %s109, %s110
    %p114 = pneg %p108
    %p115 = scmp.eq.s32.totalorder %s10, 8
    %p116 = por %p114, %p115
    %p117 = scmp.ne.s32.totalorder %s109, %s112
    %p118 = scmp.eq.s32.totalorder %s10, 0
    %p119 = por %p117, %p118
    %p120 = scmp.ne.s32.totalorder %s109, %s112
    %p121 = scmp.eq.s32.totalorder %s15, 8
    %p122 = por %p120, %p121
    %p123 = scmp.ne.s32.totalorder %s112, %s113
    %p124 = scmp.eq.s32.totalorder %s15, 0
    %p125 = por %p123, %p124
    %p126 = scmp.ne.s32.totalorder %s112, %s113
    %p127 = scmp.eq.s32.totalorder %s16, 8
    %p128 = por %p126, %p127
    %p130 = scmp.ne.s32.totalorder %s113, %s129
    %p131 = scmp.eq.s32.totalorder %s16, 0
    %p132 = por %p130, %p131
    %p133 = scmp.le.s32.totalorder 1, %s10
    %p134 = scmp.lt.s32.totalorder %s10, 10
    %p135 = pnand %p133, %p134
    %p136 = pneg %p135
    // Predicated region
    $region9: #{decoder_forward.13} parent=5 // pred_check
      _
    $region10: #{decoder_forward.13} parent=5 // pred_check_branch
      %138 = sbr.rel (%p135) target = $region12
    $region11: #{decoder_forward.13} parent=5 // pred_region
      %s139 = ssub.s32 %s10, 1
      // Predicated region
      $region13: #{decoder_forward.13} parent=11 // pred_check
        %p140 = pneg %p57
      $region14: #{decoder_forward.13} parent=11 // pred_check_branch
        %142 = sbr.rel (%p140) target = $region16
      $region15: #{decoder_forward.13} parent=11 // pred_region
        _
      $region16: #{decoder_forward.13} parent=11 // pred_fallthru
        _
      // Predicated region
      $region17: #{decoder_forward.13} parent=11 // pred_check
        %p143 = pneg %p78
      $region18: #{decoder_forward.13} parent=11 // pred_check_branch
        %145 = sbr.rel (%p143) target = $region20
      $region19: #{decoder_forward.13} parent=11 // pred_region
        _
      $region20: #{decoder_forward.13} parent=11 // pred_fallthru
        _
      // Predicated region
      $region21: #{decoder_forward.13} parent=11 // pred_check
        %p146 = pneg %p99
      $region22: #{decoder_forward.13} parent=11 // pred_check_branch
        %148 = sbr.rel (%p146) target = $region24
      $region23: #{decoder_forward.13} parent=11 // pred_region
        _
      $region24: #{decoder_forward.13} parent=11 // pred_fallthru
        _
    $region12: #{decoder_forward.13} parent=5 // pred_fallthru
      _
    %p149 = scmp.lt.s32.totalorder %s10, 9
    // Predicated region
    $region25: #{decoder_forward.13} parent=5 // pred_check
      %p150 = pneg %p149
    $region26: #{decoder_forward.13} parent=5 // pred_check_branch
      %152 = sbr.rel (%p150) target = $region28
    $region27: #{decoder_forward.13} parent=5 // pred_region
      // Predicated region
      $region29: #{decoder_forward.13} parent=27 // pred_check
        %p153 = pneg %p30
      $region30: #{decoder_forward.13} parent=27 // pred_check_branch
        %155 = sbr.rel (%p153) target = $region32
      $region31: #{decoder_forward.13} parent=27 // pred_region
        %s156 = smul.u32 128, %s10
        %p157 = scmp.lt.s32.totalorder %s156, 1151
        %s158 = scalar_select %p157, %s156, 1151
        %s159 = smul.addr %s158, 4
        %s160 = scalar_lea.vmem %s0, %s159
        %s161 = smul.u32 128, %s10
      $region32: #{decoder_forward.13} parent=27 // pred_fallthru
        _
    $region28: #{decoder_forward.13} parent=5 // pred_fallthru
      _
    %p162 = scmp.le.s32.totalorder 1, %s10
    %p163 = scmp.lt.s32.totalorder %s10, 10
    %p164 = pnand %p162, %p163
    %p165 = pneg %p164
    // Predicated region
    $region33: #{decoder_forward.13} parent=5 // pred_check
      _
    $region34: #{decoder_forward.13} parent=5 // pred_check_branch
      %167 = sbr.rel (%p164) target = $region36
    $region35: #{decoder_forward.13} parent=5 // pred_region
      %s168 = ssub.s32 %s10, 1
      %s169 = smul.u32 128, %s15
      %p170 = scmp.lt.s32.totalorder %s169, 1151
      %s171 = scalar_select %p170, %s169, 1151
      %s172 = smul.addr %s171, 4
      %s173 = scalar_lea.vmem %s0, %s172
      %p174 = pneg %p36
      %p175 = pneg %p33
      %p176 = pneg %p57
      %p177 = pneg %p54
      %p178 = pneg %p78
      %p179 = pneg %p75
      %p180 = pneg %p99
      %p181 = pneg %p96
      %p182 = pneg %p125
      %p183 = pneg %p122
      %s184 = smul.u32 128, %s15
      %p185 = scmp.lt.s32.totalorder %s184, 1151
      %s186 = scalar_select %p185, %s184, 1151
      %s187 = smul.addr %s186, 8
      %s188 = scalar_lea.vmem %s4, %s187
      %s189 = smul.u32 128, %s15
      %p190 = scmp.lt.s32.totalorder %s189, 1151
      %s191 = scalar_select %p190, %s189, 1151
      %s192 = smul.addr %s191, 4
      %s193 = scalar_lea.vmem %s0, %s192
      %s194 = smul.u32 128, %s15
      %s195 = smul.u32 128, %s15
      %p196 = scmp.lt.s32.totalorder %s195, 1151
      %s197 = scalar_select %p196, %s195, 1151
      %s198 = smul.addr %s197, 8
      %s199 = scalar_lea.vmem %s4, %s198
      %s200 = smul.u32 128, %s15
      %v202 = vld [vmem:[%s193] sm:$0xf]
      %v203 = vld [vmem:[%s193 + $0x4] sm:$0xf]
      %v204 = vld [vmem:[%s193 + $0x8] sm:$0xf]
      %v205 = vld [vmem:[%s193 + $0xc] sm:$0xf]
      %v206 = vld [vmem:[%s193 + $0x10] sm:$0xf]
      %v207 = vld [vmem:[%s193 + $0x14] sm:$0xf]
      %v208 = vld [vmem:[%s193 + $0x18] sm:$0xf]
      %v209 = vld [vmem:[%s193 + $0x1c] sm:$0xf]
      %v210 = vld [vmem:[%s193 + $0x20] sm:$0xf]
      %v211 = vld [vmem:[%s193 + $0x24] sm:$0xf]
      %v212 = vld [vmem:[%s193 + $0x28] sm:$0xf]
      %v213 = vld [vmem:[%s193 + $0x2c] sm:$0xf]
      %v214 = vld [vmem:[%s193 + $0x30] sm:$0xf]
      %v215 = vld [vmem:[%s193 + $0x34] sm:$0xf]
      %v216 = vld [vmem:[%s193 + $0x38] sm:$0xf]
      %v217 = vld [vmem:[%s193 + $0x3c] sm:$0xf]
      %v218 = vld [vmem:[%s193 + $0x40] sm:$0xf]
      %v219 = vld [vmem:[%s193 + $0x44] sm:$0xf]
      %v220 = vld [vmem:[%s193 + $0x48] sm:$0xf]
      %v221 = vld [vmem:[%s193 + $0x4c] sm:$0xf]
      %v222 = vld [vmem:[%s193 + $0x50] sm:$0xf]
      %v223 = vld [vmem:[%s193 + $0x54] sm:$0xf]
      %v224 = vld [vmem:[%s193 + $0x58] sm:$0xf]
      %v225 = vld [vmem:[%s193 + $0x5c] sm:$0xf]
      %v226 = vld [vmem:[%s193 + $0x60] sm:$0xf]
      %v227 = vld [vmem:[%s193 + $0x64] sm:$0xf]
      %v228 = vld [vmem:[%s193 + $0x68] sm:$0xf]
      %v229 = vld [vmem:[%s193 + $0x6c] sm:$0xf]
      %v230 = vld [vmem:[%s193 + $0x70] sm:$0xf]
      %v231 = vld [vmem:[%s193 + $0x74] sm:$0xf]
      %v232 = vld [vmem:[%s193 + $0x78] sm:$0xf]
      %v233 = vld [vmem:[%s193 + $0x7c] sm:$0xf]
      %v234 = vld [vmem:[%s193 + $0x80] sm:$0xf]
      %v235 = vld [vmem:[%s193 + $0x84] sm:$0xf]
      %v236 = vld [vmem:[%s193 + $0x88] sm:$0xf]
      %v237 = vld [vmem:[%s193 + $0x8c] sm:$0xf]
      %v238 = vld [vmem:[%s193 + $0x90] sm:$0xf]
      %v239 = vld [vmem:[%s193 + $0x94] sm:$0xf]
      %v240 = vld [vmem:[%s193 + $0x98] sm:$0xf]
      %v241 = vld [vmem:[%s193 + $0x9c] sm:$0xf]
      %v242 = vld [vmem:[%s193 + $0xa0] sm:$0xf]
      %v243 = vld [vmem:[%s193 + $0xa4] sm:$0xf]
      %v244 = vld [vmem:[%s193 + $0xa8] sm:$0xf]
      %v245 = vld [vmem:[%s193 + $0xac] sm:$0xf]
      %v246 = vld [vmem:[%s193 + $0xb0] sm:$0xf]
      %v247 = vld [vmem:[%s193 + $0xb4] sm:$0xf]
      %v248 = vld [vmem:[%s193 + $0xb8] sm:$0xf]
      %v249 = vld [vmem:[%s193 + $0xbc] sm:$0xf]
      %v250 = vld [vmem:[%s193 + $0xc0] sm:$0xf]
      %v251 = vld [vmem:[%s193 + $0xc4] sm:$0xf]
      %v252 = vld [vmem:[%s193 + $0xc8] sm:$0xf]
      %v253 = vld [vmem:[%s193 + $0xcc] sm:$0xf]
      %v254 = vld [vmem:[%s193 + $0xd0] sm:$0xf]
      %v255 = vld [vmem:[%s193 + $0xd4] sm:$0xf]
      %v256 = vld [vmem:[%s193 + $0xd8] sm:$0xf]
      %v257 = vld [vmem:[%s193 + $0xdc] sm:$0xf]
      %v258 = vld [vmem:[%s193 + $0xe0] sm:$0xf]
      %v259 = vld [vmem:[%s193 + $0xe4] sm:$0xf]
      %v260 = vld [vmem:[%s193 + $0xe8] sm:$0xf]
      %v261 = vld [vmem:[%s193 + $0xec] sm:$0xf]
      %v262 = vld [vmem:[%s193 + $0xf0] sm:$0xf]
      %v263 = vld [vmem:[%s193 + $0xf4] sm:$0xf]
      %v264 = vld [vmem:[%s193 + $0xf8] sm:$0xf]
      %v265 = vld [vmem:[%s193 + $0xfc] sm:$0xf]
      %v266 = vld [vmem:[%s193 + $0x100] sm:$0xf]
      %v267 = vld [vmem:[%s193 + $0x104] sm:$0xf]
      %v268 = vld [vmem:[%s193 + $0x108] sm:$0xf]
      %v269 = vld [vmem:[%s193 + $0x10c] sm:$0xf]
      %v270 = vld [vmem:[%s193 + $0x110] sm:$0xf]
      %v271 = vld [vmem:[%s193 + $0x114] sm:$0xf]
      %v272 = vld [vmem:[%s193 + $0x118] sm:$0xf]
      %v273 = vld [vmem:[%s193 + $0x11c] sm:$0xf]
      %v274 = vld [vmem:[%s193 + $0x120] sm:$0xf]
      %v275 = vld [vmem:[%s193 + $0x124] sm:$0xf]
      %v276 = vld [vmem:[%s193 + $0x128] sm:$0xf]
      %v277 = vld [vmem:[%s193 + $0x12c] sm:$0xf]
      %v278 = vld [vmem:[%s193 + $0x130] sm:$0xf]
      %v279 = vld [vmem:[%s193 + $0x134] sm:$0xf]
      %v280 = vld [vmem:[%s193 + $0x138] sm:$0xf]
      %v281 = vld [vmem:[%s193 + $0x13c] sm:$0xf]
      %v282 = vld [vmem:[%s193 + $0x140] sm:$0xf]
      %v283 = vld [vmem:[%s193 + $0x144] sm:$0xf]
      %v284 = vld [vmem:[%s193 + $0x148] sm:$0xf]
      %v285 = vld [vmem:[%s193 + $0x14c] sm:$0xf]
      %v286 = vld [vmem:[%s193 + $0x150] sm:$0xf]
      %v287 = vld [vmem:[%s193 + $0x154] sm:$0xf]
      %v288 = vld [vmem:[%s193 + $0x158] sm:$0xf]
      %v289 = vld [vmem:[%s193 + $0x15c] sm:$0xf]
      %v290 = vld [vmem:[%s193 + $0x160] sm:$0xf]
      %v291 = vld [vmem:[%s193 + $0x164] sm:$0xf]
      %v292 = vld [vmem:[%s193 + $0x168] sm:$0xf]
      %v293 = vld [vmem:[%s193 + $0x16c] sm:$0xf]
      %v294 = vld [vmem:[%s193 + $0x170] sm:$0xf]
      %v295 = vld [vmem:[%s193 + $0x174] sm:$0xf]
      %v296 = vld [vmem:[%s193 + $0x178] sm:$0xf]
      %v297 = vld [vmem:[%s193 + $0x17c] sm:$0xf]
      %v298 = vld [vmem:[%s193 + $0x180] sm:$0xf]
      %v299 = vld [vmem:[%s193 + $0x184] sm:$0xf]
      %v300 = vld [vmem:[%s193 + $0x188] sm:$0xf]
      %v301 = vld [vmem:[%s193 + $0x18c] sm:$0xf]
      %v302 = vld [vmem:[%s193 + $0x190] sm:$0xf]
      %v303 = vld [vmem:[%s193 + $0x194] sm:$0xf]
      %v304 = vld [vmem:[%s193 + $0x198] sm:$0xf]
      %v305 = vld [vmem:[%s193 + $0x19c] sm:$0xf]
      %v306 = vld [vmem:[%s193 + $0x1a0] sm:$0xf]
      %v307 = vld [vmem:[%s193 + $0x1a4] sm:$0xf]
      %v308 = vld [vmem:[%s193 + $0x1a8] sm:$0xf]
      %v309 = vld [vmem:[%s193 + $0x1ac] sm:$0xf]
      %v310 = vld [vmem:[%s193 + $0x1b0] sm:$0xf]
      %v311 = vld [vmem:[%s193 + $0x1b4] sm:$0xf]
      %v312 = vld [vmem:[%s193 + $0x1b8] sm:$0xf]
      %v313 = vld [vmem:[%s193 + $0x1bc] sm:$0xf]
      %v314 = vld [vmem:[%s193 + $0x1c0] sm:$0xf]
      %v315 = vld [vmem:[%s193 + $0x1c4] sm:$0xf]
      %v316 = vld [vmem:[%s193 + $0x1c8] sm:$0xf]
      %v317 = vld [vmem:[%s193 + $0x1cc] sm:$0xf]
      %v318 = vld [vmem:[%s193 + $0x1d0] sm:$0xf]
      %v319 = vld [vmem:[%s193 + $0x1d4] sm:$0xf]
      %v320 = vld [vmem:[%s193 + $0x1d8] sm:$0xf]
      %v321 = vld [vmem:[%s193 + $0x1dc] sm:$0xf]
      %v322 = vld [vmem:[%s193 + $0x1e0] sm:$0xf]
      %v323 = vld [vmem:[%s193 + $0x1e4] sm:$0xf]
      %v324 = vld [vmem:[%s193 + $0x1e8] sm:$0xf]
      %v325 = vld [vmem:[%s193 + $0x1ec] sm:$0xf]
      %v326 = vld [vmem:[%s193 + $0x1f0] sm:$0xf]
      %v327 = vld [vmem:[%s193 + $0x1f4] sm:$0xf]
      %v328 = vld [vmem:[%s193 + $0x1f8] sm:$0xf]
      %v329 = vld [vmem:[%s193 + $0x1fc] sm:$0xf]
      %v330 = vmax.bf16 %v202, 0
      %v331 = vmax.bf16 %v203, 0
      %v332 = vmax.bf16 %v204, 0
      %v333 = vmax.bf16 %v205, 0
      %v334 = vmax.bf16 %v206, 0
      %v335 = vmax.bf16 %v207, 0
      %v336 = vmax.bf16 %v208, 0
      %v337 = vmax.bf16 %v209, 0
      %v338 = vmax.bf16 %v210, 0
      %v339 = vmax.bf16 %v211, 0
      %v340 = vmax.bf16 %v212, 0
      %v341 = vmax.bf16 %v213, 0
      %v342 = vmax.bf16 %v214, 0
      %v343 = vmax.bf16 %v215, 0
      %v344 = vmax.bf16 %v216, 0
      %v345 = vmax.bf16 %v217, 0
      %v346 = vmax.bf16 %v218, 0
      %v347 = vmax.bf16 %v219, 0
      %v348 = vmax.bf16 %v220, 0
      %v349 = vmax.bf16 %v221, 0
      %v350 = vmax.bf16 %v222, 0
      %v351 = vmax.bf16 %v223, 0
      %v352 = vmax.bf16 %v224, 0
      %v353 = vmax.bf16 %v225, 0
      %v354 = vmax.bf16 %v226, 0
      %v355 = vmax.bf16 %v227, 0
      %v356 = vmax.bf16 %v228, 0
      %v357 = vmax.bf16 %v229, 0
      %v358 = vmax.bf16 %v230, 0
      %v359 = vmax.bf16 %v231, 0
      %v360 = vmax.bf16 %v232, 0
      %v361 = vmax.bf16 %v233, 0
      %v362 = vmax.bf16 %v234, 0
      %v363 = vmax.bf16 %v235, 0
      %v364 = vmax.bf16 %v236, 0
      %v365 = vmax.bf16 %v237, 0
      %v366 = vmax.bf16 %v238, 0
      %v367 = vmax.bf16 %v239, 0
      %v368 = vmax.bf16 %v240, 0
      %v369 = vmax.bf16 %v241, 0
      %v370 = vmax.bf16 %v242, 0
      %v371 = vmax.bf16 %v243, 0
      %v372 = vmax.bf16 %v244, 0
      %v373 = vmax.bf16 %v245, 0
      %v374 = vmax.bf16 %v246, 0
      %v375 = vmax.bf16 %v247, 0
      %v376 = vmax.bf16 %v248, 0
      %v377 = vmax.bf16 %v249, 0
      %v378 = vmax.bf16 %v250, 0
      %v379 = vmax.bf16 %v251, 0
      %v380 = vmax.bf16 %v252, 0
      %v381 = vmax.bf16 %v253, 0
      %v382 = vmax.bf16 %v254, 0
      %v383 = vmax.bf16 %v255, 0
      %v384 = vmax.bf16 %v256, 0
      %v385 = vmax.bf16 %v257, 0
      %v386 = vmax.bf16 %v258, 0
      %v387 = vmax.bf16 %v259, 0
      %v388 = vmax.bf16 %v260, 0
      %v389 = vmax.bf16 %v261, 0
      %v390 = vmax.bf16 %v262, 0
      %v391 = vmax.bf16 %v263, 0
      %v392 = vmax.bf16 %v264, 0
      %v393 = vmax.bf16 %v265, 0
      %v394 = vmax.bf16 %v266, 0
      %v395 = vmax.bf16 %v267, 0
      %v396 = vmax.bf16 %v268, 0
      %v397 = vmax.bf16 %v269, 0
      %v398 = vmax.bf16 %v270, 0
      %v399 = vmax.bf16 %v271, 0
      %v400 = vmax.bf16 %v272, 0
      %v401 = vmax.bf16 %v273, 0
      %v402 = vmax.bf16 %v274, 0
      %v403 = vmax.bf16 %v275, 0
      %v404 = vmax.bf16 %v276, 0
      %v405 = vmax.bf16 %v277, 0
      %v406 = vmax.bf16 %v278, 0
      %v407 = vmax.bf16 %v279, 0
      %v408 = vmax.bf16 %v280, 0
      %v409 = vmax.bf16 %v281, 0
      %v410 = vmax.bf16 %v282, 0
      %v411 = vmax.bf16 %v283, 0
      %v412 = vmax.bf16 %v284, 0
      %v413 = vmax.bf16 %v285, 0
      %v414 = vmax.bf16 %v286, 0
      %v415 = vmax.bf16 %v287, 0
      %v416 = vmax.bf16 %v288, 0
      %v417 = vmax.bf16 %v289, 0
      %v418 = vmax.bf16 %v290, 0
      %v419 = vmax.bf16 %v291, 0
      %v420 = vmax.bf16 %v292, 0
      %v421 = vmax.bf16 %v293, 0
      %v422 = vmax.bf16 %v294, 0
      %v423 = vmax.bf16 %v295, 0
      %v424 = vmax.bf16 %v296, 0
      %v425 = vmax.bf16 %v297, 0
      %v426 = vmax.bf16 %v298, 0
      %v427 = vmax.bf16 %v299, 0
      %v428 = vmax.bf16 %v300, 0
      %v429 = vmax.bf16 %v301, 0
      %v430 = vmax.bf16 %v302, 0
      %v431 = vmax.bf16 %v303, 0
      %v432 = vmax.bf16 %v304, 0
      %v433 = vmax.bf16 %v305, 0
      %v434 = vmax.bf16 %v306, 0
      %v435 = vmax.bf16 %v307, 0
      %v436 = vmax.bf16 %v308, 0
      %v437 = vmax.bf16 %v309, 0
      %v438 = vmax.bf16 %v310, 0
      %v439 = vmax.bf16 %v311, 0
      %v440 = vmax.bf16 %v312, 0
      %v441 = vmax.bf16 %v313, 0
      %v442 = vmax.bf16 %v314, 0
      %v443 = vmax.bf16 %v315, 0
      %v444 = vmax.bf16 %v316, 0
      %v445 = vmax.bf16 %v317, 0
      %v446 = vmax.bf16 %v318, 0
      %v447 = vmax.bf16 %v319, 0
      %v448 = vmax.bf16 %v320, 0
      %v449 = vmax.bf16 %v321, 0
      %v450 = vmax.bf16 %v322, 0
      %v451 = vmax.bf16 %v323, 0
      %v452 = vmax.bf16 %v324, 0
      %v453 = vmax.bf16 %v325, 0
      %v454 = vmax.bf16 %v326, 0
      %v455 = vmax.bf16 %v327, 0
      %v456 = vmax.bf16 %v328, 0
      %v457 = vmax.bf16 %v329, 0
      %v458 = vld [vmem:[%s1] sm:$0xf]
      %v459 = vld [vmem:[%s1 + $0x4] sm:$0xf]
      %v460 = vld [vmem:[%s1 + $0x8] sm:$0xf]
      %v461 = vld [vmem:[%s1 + $0xc] sm:$0xf]
      %v462 = vld [vmem:[%s1 + $0x10] sm:$0xf]
      %v463 = vld [vmem:[%s1 + $0x14] sm:$0xf]
      %v464 = vld [vmem:[%s1 + $0x18] sm:$0xf]
      %v465 = vld [vmem:[%s1 + $0x1c] sm:$0xf]
      %v594 = vunpack.c.l.b16 %v330
      %v595 = vunpack.c.l.b16 %v331
      %v596 = vunpack.c.l.b16 %v332
      %v597 = vunpack.c.l.b16 %v333
      %v598 = vunpack.c.l.b16 %v334
      %v599 = vunpack.c.l.b16 %v335
      %v600 = vunpack.c.l.b16 %v336
      %v601 = vunpack.c.l.b16 %v337
      %v602 = vunpack.c.l.b16 %v338
      %v603 = vunpack.c.l.b16 %v339
      %v604 = vunpack.c.l.b16 %v340
      %v605 = vunpack.c.l.b16 %v341
      %v606 = vunpack.c.l.b16 %v342
      %v607 = vunpack.c.l.b16 %v343
      %v608 = vunpack.c.l.b16 %v344
      %v609 = vunpack.c.l.b16 %v345
      %v610 = vunpack.c.l.b16 %v346
      %v611 = vunpack.c.l.b16 %v347
      %v612 = vunpack.c.l.b16 %v348
      %v613 = vunpack.c.l.b16 %v349
      %v614 = vunpack.c.l.b16 %v350
      %v615 = vunpack.c.l.b16 %v351
      %v616 = vunpack.c.l.b16 %v352
      %v617 = vunpack.c.l.b16 %v353
      %v618 = vunpack.c.l.b16 %v354
      %v619 = vunpack.c.l.b16 %v355
      %v620 = vunpack.c.l.b16 %v356
      %v621 = vunpack.c.l.b16 %v357
      %v622 = vunpack.c.l.b16 %v358
      %v623 = vunpack.c.l.b16 %v359
      %v624 = vunpack.c.l.b16 %v360
      %v625 = vunpack.c.l.b16 %v361
      %v626 = vunpack.c.l.b16 %v362
      %v627 = vunpack.c.l.b16 %v363
      %v628 = vunpack.c.l.b16 %v364
      %v629 = vunpack.c.l.b16 %v365
      %v630 = vunpack.c.l.b16 %v366
      %v631 = vunpack.c.l.b16 %v367
      %v632 = vunpack.c.l.b16 %v368
      %v633 = vunpack.c.l.b16 %v369
      %v634 = vunpack.c.l.b16 %v370
      %v635 = vunpack.c.l.b16 %v371
      %v636 = vunpack.c.l.b16 %v372
      %v637 = vunpack.c.l.b16 %v373
      %v638 = vunpack.c.l.b16 %v374
      %v639 = vunpack.c.l.b16 %v375
      %v640 = vunpack.c.l.b16 %v376
      %v641 = vunpack.c.l.b16 %v377
      %v642 = vunpack.c.l.b16 %v378
      %v643 = vunpack.c.l.b16 %v379
      %v644 = vunpack.c.l.b16 %v380
      %v645 = vunpack.c.l.b16 %v381
      %v646 = vunpack.c.l.b16 %v382
      %v647 = vunpack.c.l.b16 %v383
      %v648 = vunpack.c.l.b16 %v384
      %v649 = vunpack.c.l.b16 %v385
      %v650 = vunpack.c.l.b16 %v386
      %v651 = vunpack.c.l.b16 %v387
      %v652 = vunpack.c.l.b16 %v388
      %v653 = vunpack.c.l.b16 %v389
      %v654 = vunpack.c.l.b16 %v390
      %v655 = vunpack.c.l.b16 %v391
      %v656 = vunpack.c.l.b16 %v392
      %v657 = vunpack.c.l.b16 %v393
      %v658 = vunpack.c.l.b16 %v394
      %v659 = vunpack.c.l.b16 %v395
      %v660 = vunpack.c.l.b16 %v396
      %v661 = vunpack.c.l.b16 %v397
      %v662 = vunpack.c.l.b16 %v398
      %v663 = vunpack.c.l.b16 %v399
      %v664 = vunpack.c.l.b16 %v400
      %v665 = vunpack.c.l.b16 %v401
      %v666 = vunpack.c.l.b16 %v402
      %v667 = vunpack.c.l.b16 %v403
      %v668 = vunpack.c.l.b16 %v404
      %v669 = vunpack.c.l.b16 %v405
      %v670 = vunpack.c.l.b16 %v406
      %v671 = vunpack.c.l.b16 %v407
      %v672 = vunpack.c.l.b16 %v408
      %v673 = vunpack.c.l.b16 %v409
      %v674 = vunpack.c.l.b16 %v410
      %v675 = vunpack.c.l.b16 %v411
      %v676 = vunpack.c.l.b16 %v412
      %v677 = vunpack.c.l.b16 %v413
      %v678 = vunpack.c.l.b16 %v414
      %v679 = vunpack.c.l.b16 %v415
      %v680 = vunpack.c.l.b16 %v416
      %v681 = vunpack.c.l.b16 %v417
      %v682 = vunpack.c.l.b16 %v418
      %v683 = vunpack.c.l.b16 %v419
      %v684 = vunpack.c.l.b16 %v420
      %v685 = vunpack.c.l.b16 %v421
      %v686 = vunpack.c.l.b16 %v422
      %v687 = vunpack.c.l.b16 %v423
      %v688 = vunpack.c.l.b16 %v424
      %v689 = vunpack.c.l.b16 %v425
      %v690 = vunpack.c.l.b16 %v426
      %v691 = vunpack.c.l.b16 %v427
      %v692 = vunpack.c.l.b16 %v428
      %v693 = vunpack.c.l.b16 %v429
      %v694 = vunpack.c.l.b16 %v430
      %v695 = vunpack.c.l.b16 %v431
      %v696 = vunpack.c.l.b16 %v432
      %v697 = vunpack.c.l.b16 %v433
      %v698 = vunpack.c.l.b16 %v434
      %v699 = vunpack.c.l.b16 %v435
      %v700 = vunpack.c.l.b16 %v436
      %v701 = vunpack.c.l.b16 %v437
      %v702 = vunpack.c.l.b16 %v438
      %v703 = vunpack.c.l.b16 %v439
      %v704 = vunpack.c.l.b16 %v440
      %v705 = vunpack.c.l.b16 %v441
      %v706 = vunpack.c.l.b16 %v442
      %v707 = vunpack.c.l.b16 %v443
      %v708 = vunpack.c.l.b16 %v444
      %v709 = vunpack.c.l.b16 %v445
      %v710 = vunpack.c.l.b16 %v446
      %v711 = vunpack.c.l.b16 %v447
      %v712 = vunpack.c.l.b16 %v448
      %v713 = vunpack.c.l.b16 %v449
      %v714 = vunpack.c.l.b16 %v450
      %v715 = vunpack.c.l.b16 %v451
      %v716 = vunpack.c.l.b16 %v452
      %v717 = vunpack.c.l.b16 %v453
      %v718 = vunpack.c.l.b16 %v454
      %v719 = vunpack.c.l.b16 %v455
      %v720 = vunpack.c.l.b16 %v456
      %v721 = vunpack.c.l.b16 %v457
      %v722 = vpack.c.b16 %v595, %v594
      %v723 = vpack.c.b16 %v597, %v596
      %v724 = vpack.c.b16 %v599, %v598
      %v725 = vpack.c.b16 %v601, %v600
      %v726 = vpack.c.b16 %v603, %v602
      %v727 = vpack.c.b16 %v605, %v604
      %v728 = vpack.c.b16 %v607, %v606
      %v729 = vpack.c.b16 %v609, %v608
      %v730 = vpack.c.b16 %v611, %v610
      %v731 = vpack.c.b16 %v613, %v612
      %v732 = vpack.c.b16 %v615, %v614
      %v733 = vpack.c.b16 %v617, %v616
      %v734 = vpack.c.b16 %v619, %v618
      %v735 = vpack.c.b16 %v621, %v620
      %v736 = vpack.c.b16 %v623, %v622
      %v737 = vpack.c.b16 %v625, %v624
      %v738 = vpack.c.b16 %v627, %v626
      %v739 = vpack.c.b16 %v629, %v628
      %v740 = vpack.c.b16 %v631, %v630
      %v741 = vpack.c.b16 %v633, %v632
      %v742 = vpack.c.b16 %v635, %v634
      %v743 = vpack.c.b16 %v637, %v636
      %v744 = vpack.c.b16 %v639, %v638
      %v745 = vpack.c.b16 %v641, %v640
      %v746 = vpack.c.b16 %v643, %v642
      %v747 = vpack.c.b16 %v645, %v644
      %v748 = vpack.c.b16 %v647, %v646
      %v749 = vpack.c.b16 %v649, %v648
      %v750 = vpack.c.b16 %v651, %v650
      %v751 = vpack.c.b16 %v653, %v652
      %v752 = vpack.c.b16 %v655, %v654
      %v753 = vpack.c.b16 %v657, %v656
      %v754 = vpack.c.b16 %v659, %v658
      %v755 = vpack.c.b16 %v661, %v660
      %v756 = vpack.c.b16 %v663, %v662
      %v757 = vpack.c.b16 %v665, %v664
      %v758 = vpack.c.b16 %v667, %v666
      %v759 = vpack.c.b16 %v669, %v668
      %v760 = vpack.c.b16 %v671, %v670
      %v761 = vpack.c.b16 %v673, %v672
      %v762 = vpack.c.b16 %v675, %v674
      %v763 = vpack.c.b16 %v677, %v676
      %v764 = vpack.c.b16 %v679, %v678
      %v765 = vpack.c.b16 %v681, %v680
      %v766 = vpack.c.b16 %v683, %v682
      %v767 = vpack.c.b16 %v685, %v684
      %v768 = vpack.c.b16 %v687, %v686
      %v769 = vpack.c.b16 %v689, %v688
      %v770 = vpack.c.b16 %v691, %v690
      %v771 = vpack.c.b16 %v693, %v692
      %v772 = vpack.c.b16 %v695, %v694
      %v773 = vpack.c.b16 %v697, %v696
      %v774 = vpack.c.b16 %v699, %v698
      %v775 = vpack.c.b16 %v701, %v700
      %v776 = vpack.c.b16 %v703, %v702
      %v777 = vpack.c.b16 %v705, %v704
      %v778 = vpack.c.b16 %v707, %v706
      %v779 = vpack.c.b16 %v709, %v708
      %v780 = vpack.c.b16 %v711, %v710
      %v781 = vpack.c.b16 %v713, %v712
      %v782 = vpack.c.b16 %v715, %v714
      %v783 = vpack.c.b16 %v717, %v716
      %v784 = vpack.c.b16 %v719, %v718
      %v785 = vpack.c.b16 %v721, %v720
      %v794 = vunpack.c.l.b16 %v458
      %v795 = vunpack.c.l.b16 %v459
      %v796 = vunpack.c.l.b16 %v460
      %v797 = vunpack.c.l.b16 %v461
      %v798 = vunpack.c.l.b16 %v462
      %v799 = vunpack.c.l.b16 %v463
      %v800 = vunpack.c.l.b16 %v464
      %v801 = vunpack.c.l.b16 %v465
      %v802 = vpack.c.b16 %v795, %v794
      %v803 = vpack.c.b16 %v797, %v796
      %v804 = vpack.c.b16 %v799, %v798
      %v805 = vpack.c.b16 %v801, %v800
      %vm810 = vcmask 523264
      %v812 = vsel %vm810, %v722, 0
      %v815 = vsel %vm810, %v723, 0
      %v818 = vsel %vm810, %v724, 0
      %v821 = vsel %vm810, %v725, 0
      %v824 = vsel %vm810, %v726, 0
      %v827 = vsel %vm810, %v727, 0
      %v830 = vsel %vm810, %v728, 0
      %v833 = vsel %vm810, %v729, 0
      %v836 = vsel %vm810, %v730, 0
      %v839 = vsel %vm810, %v731, 0
      %v842 = vsel %vm810, %v732, 0
      %v845 = vsel %vm810, %v733, 0
      %v848 = vsel %vm810, %v734, 0
      %v851 = vsel %vm810, %v735, 0
      %v854 = vsel %vm810, %v736, 0
      %v857 = vsel %vm810, %v737, 0
      %v860 = vsel %vm810, %v738, 0
      %v863 = vsel %vm810, %v739, 0
      %v866 = vsel %vm810, %v740, 0
      %v869 = vsel %vm810, %v741, 0
      %v872 = vsel %vm810, %v742, 0
      %v875 = vsel %vm810, %v743, 0
      %v878 = vsel %vm810, %v744, 0
      %v881 = vsel %vm810, %v745, 0
      %v884 = vsel %vm810, %v746, 0
      %v887 = vsel %vm810, %v747, 0
      %v890 = vsel %vm810, %v748, 0
      %v893 = vsel %vm810, %v749, 0
      %v896 = vsel %vm810, %v750, 0
      %v899 = vsel %vm810, %v751, 0
      %v902 = vsel %vm810, %v752, 0
      %v905 = vsel %vm810, %v753, 0
      %v908 = vsel %vm810, %v754, 0
      %v911 = vsel %vm810, %v755, 0
      %v914 = vsel %vm810, %v756, 0
      %v917 = vsel %vm810, %v757, 0
      %v920 = vsel %vm810, %v758, 0
      %v923 = vsel %vm810, %v759, 0
      %v926 = vsel %vm810, %v760, 0
      %v929 = vsel %vm810, %v761, 0
      %v932 = vsel %vm810, %v762, 0
      %v935 = vsel %vm810, %v763, 0
      %v938 = vsel %vm810, %v764, 0
      %v941 = vsel %vm810, %v765, 0
      %v944 = vsel %vm810, %v766, 0
      %v947 = vsel %vm810, %v767, 0
      %v950 = vsel %vm810, %v768, 0
      %v953 = vsel %vm810, %v769, 0
      %v956 = vsel %vm810, %v770, 0
      %v959 = vsel %vm810, %v771, 0
      %v962 = vsel %vm810, %v772, 0
      %v965 = vsel %vm810, %v773, 0
      %v968 = vsel %vm810, %v774, 0
      %v971 = vsel %vm810, %v775, 0
      %v974 = vsel %vm810, %v776, 0
      %v977 = vsel %vm810, %v777, 0
      %v980 = vsel %vm810, %v778, 0
      %v983 = vsel %vm810, %v779, 0
      %v986 = vsel %vm810, %v780, 0
      %v989 = vsel %vm810, %v781, 0
      %v992 = vsel %vm810, %v782, 0
      %v995 = vsel %vm810, %v783, 0
      %v998 = vsel %vm810, %v784, 0
      %v1001 = vsel %vm810, %v785, 0
      %1003 = vmatprep.subr.bf16.mxu0 0
      %1004 = vmatpush1.bf16.msra.mxu0 %v802
      %1005 = vmatprep.subr.bf16.mxu0 0
      %1006 = vmatpush1.bf16.msra.mxu0 %v803
      %1007 = vmatprep.subr.bf16.mxu0 0
      %1008 = vmatpush1.bf16.msra.mxu0 %v804
      %1009 = vmatprep.subr.bf16.mxu0 0
      %1010 = vmatpush1.bf16.msra.mxu0 %v805
      %1011 = vmatprep.subr.bf16.mxu0 0
      %1012 = vmatpush1.bf16.msra.mxu0 0
      %1013 = vmatprep.subr.bf16.mxu0 0
      %1014 = vmatpush1.bf16.msra.mxu0 0
      %1015 = vmatprep.subr.bf16.mxu0 0
      %1016 = vmatpush1.bf16.msra.mxu0 0
      %1017 = vmatprep.subr.bf16.mxu0 0
      %1018 = vmatpush1.bf16.msra.mxu0 0
      %1019 = vmatprep.subr.bf16.mxu0 0
      %1020 = vmatpush1.bf16.msra.mxu0 0
      %1021 = vmatprep.subr.bf16.mxu0 0
      %1022 = vmatpush1.bf16.msra.mxu0 0
      %1023 = vmatprep.subr.bf16.mxu0 0
      %1024 = vmatpush1.bf16.msra.mxu0 0
      %1025 = vmatprep.subr.bf16.mxu0 0
      %1026 = vmatpush1.bf16.msra.mxu0 0
      %1027 = vmatprep.subr.bf16.mxu0 0
      %1028 = vmatpush1.bf16.msra.mxu0 0
      %1029 = vmatprep.subr.bf16.mxu0 0
      %1030 = vmatpush1.bf16.msra.mxu0 0
      %1031 = vmatprep.subr.bf16.mxu0 0
      %1032 = vmatpush1.bf16.msra.mxu0 0
      %1033 = vmatprep.subr.bf16.mxu0 0
      %1034 = vmatpush1.bf16.msra.mxu0 0
      %1035 = vmatprep.mubr.bf16.mxu0 0
      %1036 = vmatmul.mubr.bf16.gmra.mrb[0].mxu0 %v812
      %v1037 = vpop.f32.mrb[0].mxu0
      %v1038 = vadd.f32 0.0, %v1037
      %v1039 = vpop.f32.mrb[0].mxu0
      %v1040 = vpop.f32.mrb[0].mxu0
      %v1041 = vadd.f32 0.0, %v1040
      %v1042 = vpop.f32.mrb[0].mxu0
      %1043 = vmatprep.mubr.bf16.mxu0 0
      %1044 = vmatmul.mubr.bf16.gmra.mrb[0].mxu0 %v815
      %v1045 = vpop.f32.mrb[0].mxu0
      %v1046 = vadd.f32 0.0, %v1045
      %v1047 = vpop.f32.mrb[0].mxu0
      %v1048 = vpop.f32.mrb[0].mxu0
      %v1049 = vadd.f32 0.0, %v1048
      %v1050 = vpop.f32.mrb[0].mxu0
      %1051 = vmatprep.mubr.bf16.mxu0 0
      %1052 = vmatmul.mubr.bf16.gmra.mrb[0].mxu0 %v818
      %v1053 = vpop.f32.mrb[0].mxu0
      %v1054 = vadd.f32 0.0, %v1053
      %v1055 = vpop.f32.mrb[0].mxu0
      %v1056 = vpop.f32.mrb[0].mxu0
      %v1057 = vadd.f32 0.0, %v1056
      %v1058 = vpop.f32.mrb[0].mxu0
      %1059 = vmatprep.mubr.bf16.mxu0 0
      %1060 = vmatmul.mubr.bf16.gmra.mrb[0].mxu0 %v821
      %v1061 = vpop.f32.mrb[0].mxu0
      %v1062 = vadd.f32 0.0, %v1061
      %v1063 = vpop.f32.mrb[0].mxu0
      %v1064 = vpop.f32.mrb[0].mxu0
      %v1065 = vadd.f32 0.0, %v1064
      %v1066 = vpop.f32.mrb[0].mxu0
      %1067 = vmatprep.mubr.bf16.mxu0 0
      %1068 = vmatmul.mubr.bf16.gmra.mrb[0].mxu0 %v824
      %v1069 = vpop.f32.mrb[0].mxu0
      %v1070 = vadd.f32 0.0, %v1069
      %v1071 = vpop.f32.mrb[0].mxu0
      %v1072 = vpop.f32.mrb[0].mxu0
      %v1073 = vadd.f32 0.0, %v1072
      %v1074 = vpop.f32.mrb[0].mxu0
      %1075 = vmatprep.mubr.bf16.mxu0 0
      %1076 = vmatmul.mubr.bf16.gmra.mrb[0].mxu0 %v827
      %v1077 = vpop.f32.mrb[0].mxu0
      %v1078 = vadd.f32 0.0, %v1077
      %v1079 = vpop.f32.mrb[0].mxu0
      %v1080 = vpop.f32.mrb[0].mxu0
      %v1081 = vadd.f32 0.0, %v1080
      %v1082 = vpop.f32.mrb[0].mxu0
      %1083 = vmatprep.mubr.bf16.mxu0 0
      %1084 = vmatmul.mubr.bf16.gmra.mrb[0].mxu0 %v830
      %v1085 = vpop.f32.mrb[0].mxu0
      %v1086 = vadd.f32 0.0, %v1085
      %v1087 = vpop.f32.mrb[0].mxu0
      %v1088 = vpop.f32.mrb[0].mxu0
      %v1089 = vadd.f32 0.0, %v1088
      %v1090 = vpop.f32.mrb[0].mxu0
      %1091 = vmatprep.mubr.bf16.mxu0 0
      %1092 = vmatmul.mubr.bf16.gmra.mrb[0].mxu0 %v833
      %v1093 = vpop.f32.mrb[0].mxu0
      %v1094 = vadd.f32 0.0, %v1093
      %v1095 = vpop.f32.mrb[0].mxu0
      %v1096 = vpop.f32.mrb[0].mxu0
      %v1097 = vadd.f32 0.0, %v1096
      %v1098 = vpop.f32.mrb[0].mxu0
      %1099 = vmatprep.mubr.bf16.mxu0 0
      %1100 = vmatmul.mubr.bf16.gmra.mrb[0].mxu0 %v836
      %v1101 = vpop.f32.mrb[0].mxu0
      %v1102 = vadd.f32 0.0, %v1101
      %v1103 = vpop.f32.mrb[0].mxu0
      %v1104 = vpop.f32.mrb[0].mxu0
      %v1105 = vadd.f32 0.0, %v1104
      %v1106 = vpop.f32.mrb[0].mxu0
      %1107 = vmatprep.mubr.bf16.mxu0 0
      %1108 = vmatmul.mubr.bf16.gmra.mrb[0].mxu0 %v839
      %v1109 = vpop.f32.mrb[0].mxu0
      %v1110 = vadd.f32 0.0, %v1109
      %v1111 = vpop.f32.mrb[0].mxu0
      %v1112 = vpop.f32.mrb[0].mxu0
      %v1113 = vadd.f32 0.0, %v1112
      %v1114 = vpop.f32.mrb[0].mxu0
      %1115 = vmatprep.mubr.bf16.mxu0 0
      %1116 = vmatmul.mubr.bf16.gmra.mrb[0].mxu0 %v842
      %v1117 = vpop.f32.mrb[0].mxu0
      %v1118 = vadd.f32 0.0, %v1117
      %v1119 = vpop.f32.mrb[0].mxu0
      %v1120 = vpop.f32.mrb[0].mxu0
      %v1121 = vadd.f32 0.0, %v1120
      %v1122 = vpop.f32.mrb[0].mxu0
      %1123 = vmatprep.mubr.bf16.mxu0 0
      %1124 = vmatmul.mubr.bf16.gmra.mrb[0].mxu0 %v845
      %v1125 = vpop.f32.mrb[0].mxu0
      %v1126 = vadd.f32 0.0, %v1125
      %v1127 = vpop.f32.mrb[0].mxu0
      %v1128 = vpop.f32.mrb[0].mxu0
      %v1129 = vadd.f32 0.0, %v1128
      %v1130 = vpop.f32.mrb[0].mxu0
      %1131 = vmatprep.mubr.bf16.mxu0 0
      %1132 = vmatmul.mubr.bf16.gmra.mrb[0].mxu0 %v848
      %v1133 = vpop.f32.mrb[0].mxu0
      %v1134 = vadd.f32 0.0, %v1133
      %v1135 = vpop.f32.mrb[0].mxu0
      %v1136 = vpop.f32.mrb[0].mxu0
      %v1137 = vadd.f32 0.0, %v1136
      %v1138 = vpop.f32.mrb[0].mxu0
      %1139 = vmatprep.mubr.bf16.mxu0 0
      %1140 = vmatmul.mubr.bf16.gmra.mrb[0].mxu0 %v851
      %v1141 = vpop.f32.mrb[0].mxu0
      %v1142 = vadd.f32 0.0, %v1141
      %v1143 = vpop.f32.mrb[0].mxu0
      %v1144 = vpop.f32.mrb[0].mxu0
      %v1145 = vadd.f32 0.0, %v1144
      %v1146 = vpop.f32.mrb[0].mxu0
      %1147 = vmatprep.mubr.bf16.mxu0 0
      %1148 = vmatmul.mubr.bf16.gmra.mrb[0].mxu0 %v854
      %v1149 = vpop.f32.mrb[0].mxu0
      %v1150 = vadd.f32 0.0, %v1149
      %v1151 = vpop.f32.mrb[0].mxu0
      %v1152 = vpop.f32.mrb[0].mxu0
      %v1153 = vadd.f32 0.0, %v1152
      %v1154 = vpop.f32.mrb[0].mxu0
      %1155 = vmatprep.mubr.bf16.mxu0 0
      %1156 = vmatmul.mubr.bf16.gmra.mrb[0].mxu0 %v857
      %v1157 = vpop.f32.mrb[0].mxu0
      %v1158 = vadd.f32 0.0, %v1157
      %v1159 = vpop.f32.mrb[0].mxu0
      %v1160 = vpop.f32.mrb[0].mxu0
      %v1161 = vadd.f32 0.0, %v1160
      %v1162 = vpop.f32.mrb[0].mxu0
      %1163 = vmatprep.mubr.bf16.mxu0 0
      %1164 = vmatmul.mubr.bf16.gmra.mrb[0].mxu0 %v860
      %v1165 = vpop.f32.mrb[0].mxu0
      %v1166 = vadd.f32 0.0, %v1165
      %v1167 = vpop.f32.mrb[0].mxu0
      %v1168 = vpop.f32.mrb[0].mxu0
      %v1169 = vadd.f32 0.0, %v1168
      %v1170 = vpop.f32.mrb[0].mxu0
      %1171 = vmatprep.mubr.bf16.mxu0 0
      %1172 = vmatmul.mubr.bf16.gmra.mrb[0].mxu0 %v863
      %v1173 = vpop.f32.mrb[0].mxu0
      %v1174 = vadd.f32 0.0, %v1173
      %v1175 = vpop.f32.mrb[0].mxu0
      %v1176 = vpop.f32.mrb[0].mxu0
      %v1177 = vadd.f32 0.0, %v1176
      %v1178 = vpop.f32.mrb[0].mxu0
      %1179 = vmatprep.mubr.bf16.mxu0 0
      %1180 = vmatmul.mubr.bf16.gmra.mrb[0].mxu0 %v866
      %v1181 = vpop.f32.mrb[0].mxu0
      %v1182 = vadd.f32 0.0, %v1181
      %v1183 = vpop.f32.mrb[0].mxu0
      %v1184 = vpop.f32.mrb[0].mxu0
      %v1185 = vadd.f32 0.0, %v1184
      %v1186 = vpop.f32.mrb[0].mxu0
      %1187 = vmatprep.mubr.bf16.mxu0 0
      %1188 = vmatmul.mubr.bf16.gmra.mrb[0].mxu0 %v869
      %v1189 = vpop.f32.mrb[0].mxu0
      %v1190 = vadd.f32 0.0, %v1189
      %v1191 = vpop.f32.mrb[0].mxu0
      %v1192 = vpop.f32.mrb[0].mxu0
      %v1193 = vadd.f32 0.0, %v1192
      %v1194 = vpop.f32.mrb[0].mxu0
      %1195 = vmatprep.mubr.bf16.mxu0 0
      %1196 = vmatmul.mubr.bf16.gmra.mrb[0].mxu0 %v872
      %v1197 = vpop.f32.mrb[0].mxu0
      %v1198 = vadd.f32 0.0, %v1197
      %v1199 = vpop.f32.mrb[0].mxu0
      %v1200 = vpop.f32.mrb[0].mxu0
      %v1201 = vadd.f32 0.0, %v1200
      %v1202 = vpop.f32.mrb[0].mxu0
      %1203 = vmatprep.mubr.bf16.mxu0 0
      %1204 = vmatmul.mubr.bf16.gmra.mrb[0].mxu0 %v875
      %v1205 = vpop.f32.mrb[0].mxu0
      %v1206 = vadd.f32 0.0, %v1205
      %v1207 = vpop.f32.mrb[0].mxu0
      %v1208 = vpop.f32.mrb[0].mxu0
      %v1209 = vadd.f32 0.0, %v1208
      %v1210 = vpop.f32.mrb[0].mxu0
      %1211 = vmatprep.mubr.bf16.mxu0 0
      %1212 = vmatmul.mubr.bf16.gmra.mrb[0].mxu0 %v878
      %v1213 = vpop.f32.mrb[0].mxu0
      %v1214 = vadd.f32 0.0, %v1213
      %v1215 = vpop.f32.mrb[0].mxu0
      %v1216 = vpop.f32.mrb[0].mxu0
      %v1217 = vadd.f32 0.0, %v1216
      %v1218 = vpop.f32.mrb[0].mxu0
      %1219 = vmatprep.mubr.bf16.mxu0 0
      %1220 = vmatmul.mubr.bf16.gmra.mrb[0].mxu0 %v881
      %v1221 = vpop.f32.mrb[0].mxu0
      %v1222 = vadd.f32 0.0, %v1221
      %v1223 = vpop.f32.mrb[0].mxu0
      %v1224 = vpop.f32.mrb[0].mxu0
      %v1225 = vadd.f32 0.0, %v1224
      %v1226 = vpop.f32.mrb[0].mxu0
      %1227 = vmatprep.mubr.bf16.mxu0 0
      %1228 = vmatmul.mubr.bf16.gmra.mrb[0].mxu0 %v884
      %v1229 = vpop.f32.mrb[0].mxu0
      %v1230 = vadd.f32 0.0, %v1229
      %v1231 = vpop.f32.mrb[0].mxu0
      %v1232 = vpop.f32.mrb[0].mxu0
      %v1233 = vadd.f32 0.0, %v1232
      %v1234 = vpop.f32.mrb[0].mxu0
      %1235 = vmatprep.mubr.bf16.mxu0 0
      %1236 = vmatmul.mubr.bf16.gmra.mrb[0].mxu0 %v887
      %v1237 = vpop.f32.mrb[0].mxu0
      %v1238 = vadd.f32 0.0, %v1237
      %v1239 = vpop.f32.mrb[0].mxu0
      %v1240 = vpop.f32.mrb[0].mxu0
      %v1241 = vadd.f32 0.0, %v1240
      %v1242 = vpop.f32.mrb[0].mxu0
      %1243 = vmatprep.mubr.bf16.mxu0 0
      %1244 = vmatmul.mubr.bf16.gmra.mrb[0].mxu0 %v890
      %v1245 = vpop.f32.mrb[0].mxu0
      %v1246 = vadd.f32 0.0, %v1245
      %v1247 = vpop.f32.mrb[0].mxu0
      %v1248 = vpop.f32.mrb[0].mxu0
      %v1249 = vadd.f32 0.0, %v1248
      %v1250 = vpop.f32.mrb[0].mxu0
      %1251 = vmatprep.mubr.bf16.mxu0 0
      %1252 = vmatmul.mubr.bf16.gmra.mrb[0].mxu0 %v893
      %v1253 = vpop.f32.mrb[0].mxu0
      %v1254 = vadd.f32 0.0, %v1253
      %v1255 = vpop.f32.mrb[0].mxu0
      %v1256 = vpop.f32.mrb[0].mxu0
      %v1257 = vadd.f32 0.0, %v1256
      %v1258 = vpop.f32.mrb[0].mxu0
      %1259 = vmatprep.mubr.bf16.mxu0 0
      %1260 = vmatmul.mubr.bf16.gmra.mrb[0].mxu0 %v896
      %v1261 = vpop.f32.mrb[0].mxu0
      %v1262 = vadd.f32 0.0, %v1261
      %v1263 = vpop.f32.mrb[0].mxu0
      %v1264 = vpop.f32.mrb[0].mxu0
      %v1265 = vadd.f32 0.0, %v1264
      %v1266 = vpop.f32.mrb[0].mxu0
      %1267 = vmatprep.mubr.bf16.mxu0 0
      %1268 = vmatmul.mubr.bf16.gmra.mrb[0].mxu0 %v899
      %v1269 = vpop.f32.mrb[0].mxu0
      %v1270 = vadd.f32 0.0, %v1269
      %v1271 = vpop.f32.mrb[0].mxu0
      %v1272 = vpop.f32.mrb[0].mxu0
      %v1273 = vadd.f32 0.0, %v1272
      %v1274 = vpop.f32.mrb[0].mxu0
      %1275 = vmatprep.mubr.bf16.mxu0 0
      %1276 = vmatmul.mubr.bf16.gmra.mrb[0].mxu0 %v902
      %v1277 = vpop.f32.mrb[0].mxu0
      %v1278 = vadd.f32 0.0, %v1277
      %v1279 = vpop.f32.mrb[0].mxu0
      %v1280 = vpop.f32.mrb[0].mxu0
      %v1281 = vadd.f32 0.0, %v1280
      %v1282 = vpop.f32.mrb[0].mxu0
      %1283 = vmatprep.mubr.bf16.mxu0 0
      %1284 = vmatmul.mubr.bf16.gmra.mrb[0].mxu0 %v905
      %v1285 = vpop.f32.mrb[0].mxu0
      %v1286 = vadd.f32 0.0, %v1285
      %v1287 = vpop.f32.mrb[0].mxu0
      %v1288 = vpop.f32.mrb[0].mxu0
      %v1289 = vadd.f32 0.0, %v1288
      %v1290 = vpop.f32.mrb[0].mxu0
      %1291 = vmatprep.mubr.bf16.mxu0 0
      %1292 = vmatmul.mubr.bf16.gmra.mrb[0].mxu0 %v908
      %v1293 = vpop.f32.mrb[0].mxu0
      %v1294 = vadd.f32 0.0, %v1293
      %v1295 = vpop.f32.mrb[0].mxu0
      %v1296 = vpop.f32.mrb[0].mxu0
      %v1297 = vadd.f32 0.0, %v1296
      %v1298 = vpop.f32.mrb[0].mxu0
      %1299 = vmatprep.mubr.bf16.mxu0 0
      %1300 = vmatmul.mubr.bf16.gmra.mrb[0].mxu0 %v911
      %v1301 = vpop.f32.mrb[0].mxu0
      %v1302 = vadd.f32 0.0, %v1301
      %v1303 = vpop.f32.mrb[0].mxu0
      %v1304 = vpop.f32.mrb[0].mxu0
      %v1305 = vadd.f32 0.0, %v1304
      %v1306 = vpop.f32.mrb[0].mxu0
      %1307 = vmatprep.mubr.bf16.mxu0 0
      %1308 = vmatmul.mubr.bf16.gmra.mrb[0].mxu0 %v914
      %v1309 = vpop.f32.mrb[0].mxu0
      %v1310 = vadd.f32 0.0, %v1309
      %v1311 = vpop.f32.mrb[0].mxu0
      %v1312 = vpop.f32.mrb[0].mxu0
      %v1313 = vadd.f32 0.0, %v1312
      %v1314 = vpop.f32.mrb[0].mxu0
      %1315 = vmatprep.mubr.bf16.mxu0 0
      %1316 = vmatmul.mubr.bf16.gmra.mrb[0].mxu0 %v917
      %v1317 = vpop.f32.mrb[0].mxu0
      %v1318 = vadd.f32 0.0, %v1317
      %v1319 = vpop.f32.mrb[0].mxu0
      %v1320 = vpop.f32.mrb[0].mxu0
      %v1321 = vadd.f32 0.0, %v1320
      %v1322 = vpop.f32.mrb[0].mxu0
      %1323 = vmatprep.mubr.bf16.mxu0 0
      %1324 = vmatmul.mubr.bf16.gmra.mrb[0].mxu0 %v920
      %v1325 = vpop.f32.mrb[0].mxu0
      %v1326 = vadd.f32 0.0, %v1325
      %v1327 = vpop.f32.mrb[0].mxu0
      %v1328 = vpop.f32.mrb[0].mxu0
      %v1329 = vadd.f32 0.0, %v1328
      %v1330 = vpop.f32.mrb[0].mxu0
      %1331 = vmatprep.mubr.bf16.mxu0 0
      %1332 = vmatmul.mubr.bf16.gmra.mrb[0].mxu0 %v923
      %v1333 = vpop.f32.mrb[0].mxu0
      %v1334 = vadd.f32 0.0, %v1333
      %v1335 = vpop.f32.mrb[0].mxu0
      %v1336 = vpop.f32.mrb[0].mxu0
      %v1337 = vadd.f32 0.0, %v1336
      %v1338 = vpop.f32.mrb[0].mxu0
      %1339 = vmatprep.mubr.bf16.mxu0 0
      %1340 = vmatmul.mubr.bf16.gmra.mrb[0].mxu0 %v926
      %v1341 = vpop.f32.mrb[0].mxu0
      %v1342 = vadd.f32 0.0, %v1341
      %v1343 = vpop.f32.mrb[0].mxu0
      %v1344 = vpop.f32.mrb[0].mxu0
      %v1345 = vadd.f32 0.0, %v1344
      %v1346 = vpop.f32.mrb[0].mxu0
      %1347 = vmatprep.mubr.bf16.mxu0 0
      %1348 = vmatmul.mubr.bf16.gmra.mrb[0].mxu0 %v929
      %v1349 = vpop.f32.mrb[0].mxu0
      %v1350 = vadd.f32 0.0, %v1349
      %v1351 = vpop.f32.mrb[0].mxu0
      %v1352 = vpop.f32.mrb[0].mxu0
      %v1353 = vadd.f32 0.0, %v1352
      %v1354 = vpop.f32.mrb[0].mxu0
      %1355 = vmatprep.mubr.bf16.mxu0 0
      %1356 = vmatmul.mubr.bf16.gmra.mrb[0].mxu0 %v932
      %v1357 = vpop.f32.mrb[0].mxu0
      %v1358 = vadd.f32 0.0, %v1357
      %v1359 = vpop.f32.mrb[0].mxu0
      %v1360 = vpop.f32.mrb[0].mxu0
      %v1361 = vadd.f32 0.0, %v1360
      %v1362 = vpop.f32.mrb[0].mxu0
      %1363 = vmatprep.mubr.bf16.mxu0 0
      %1364 = vmatmul.mubr.bf16.gmra.mrb[0].mxu0 %v935
      %v1365 = vpop.f32.mrb[0].mxu0
      %v1366 = vadd.f32 0.0, %v1365
      %v1367 = vpop.f32.mrb[0].mxu0
      %v1368 = vpop.f32.mrb[0].mxu0
      %v1369 = vadd.f32 0.0, %v1368
      %v1370 = vpop.f32.mrb[0].mxu0
      %1371 = vmatprep.mubr.bf16.mxu0 0
      %1372 = vmatmul.mubr.bf16.gmra.mrb[0].mxu0 %v938
      %v1373 = vpop.f32.mrb[0].mxu0
      %v1374 = vadd.f32 0.0, %v1373
      %v1375 = vpop.f32.mrb[0].mxu0
      %v1376 = vpop.f32.mrb[0].mxu0
      %v1377 = vadd.f32 0.0, %v1376
      %v1378 = vpop.f32.mrb[0].mxu0
      %1379 = vmatprep.mubr.bf16.mxu0 0
      %1380 = vmatmul.mubr.bf16.gmra.mrb[0].mxu0 %v941
      %v1381 = vpop.f32.mrb[0].mxu0
      %v1382 = vadd.f32 0.0, %v1381
      %v1383 = vpop.f32.mrb[0].mxu0
      %v1384 = vpop.f32.mrb[0].mxu0
      %v1385 = vadd.f32 0.0, %v1384
      %v1386 = vpop.f32.mrb[0].mxu0
      %1387 = vmatprep.mubr.bf16.mxu0 0
      %1388 = vmatmul.mubr.bf16.gmra.mrb[0].mxu0 %v944
      %v1389 = vpop.f32.mrb[0].mxu0
      %v1390 = vadd.f32 0.0, %v1389
      %v1391 = vpop.f32.mrb[0].mxu0
      %v1392 = vpop.f32.mrb[0].mxu0
      %v1393 = vadd.f32 0.0, %v1392
      %v1394 = vpop.f32.mrb[0].mxu0
      %1395 = vmatprep.mubr.bf16.mxu0 0
      %1396 = vmatmul.mubr.bf16.gmra.mrb[0].mxu0 %v947
      %v1397 = vpop.f32.mrb[0].mxu0
      %v1398 = vadd.f32 0.0, %v1397
      %v1399 = vpop.f32.mrb[0].mxu0
      %v1400 = vpop.f32.mrb[0].mxu0
      %v1401 = vadd.f32 0.0, %v1400
      %v1402 = vpop.f32.mrb[0].mxu0
      %1403 = vmatprep.mubr.bf16.mxu0 0
      %1404 = vmatmul.mubr.bf16.gmra.mrb[0].mxu0 %v950
      %v1405 = vpop.f32.mrb[0].mxu0
      %v1406 = vadd.f32 0.0, %v1405
      %v1407 = vpop.f32.mrb[0].mxu0
      %v1408 = vpop.f32.mrb[0].mxu0
      %v1409 = vadd.f32 0.0, %v1408
      %v1410 = vpop.f32.mrb[0].mxu0
      %1411 = vmatprep.mubr.bf16.mxu0 0
      %1412 = vmatmul.mubr.bf16.gmra.mrb[0].mxu0 %v953
      %v1413 = vpop.f32.mrb[0].mxu0
      %v1414 = vadd.f32 0.0, %v1413
      %v1415 = vpop.f32.mrb[0].mxu0
      %v1416 = vpop.f32.mrb[0].mxu0
      %v1417 = vadd.f32 0.0, %v1416
      %v1418 = vpop.f32.mrb[0].mxu0
      %1419 = vmatprep.mubr.bf16.mxu0 0
      %1420 = vmatmul.mubr.bf16.gmra.mrb[0].mxu0 %v956
      %v1421 = vpop.f32.mrb[0].mxu0
      %v1422 = vadd.f32 0.0, %v1421
      %v1423 = vpop.f32.mrb[0].mxu0
      %v1424 = vpop.f32.mrb[0].mxu0
      %v1425 = vadd.f32 0.0, %v1424
      %v1426 = vpop.f32.mrb[0].mxu0
      %1427 = vmatprep.mubr.bf16.mxu0 0
      %1428 = vmatmul.mubr.bf16.gmra.mrb[0].mxu0 %v959
      %v1429 = vpop.f32.mrb[0].mxu0
      %v1430 = vadd.f32 0.0, %v1429
      %v1431 = vpop.f32.mrb[0].mxu0
      %v1432 = vpop.f32.mrb[0].mxu0
      %v1433 = vadd.f32 0.0, %v1432
      %v1434 = vpop.f32.mrb[0].mxu0
      %1435 = vmatprep.mubr.bf16.mxu0 0
      %1436 = vmatmul.mubr.bf16.gmra.mrb[0].mxu0 %v962
      %v1437 = vpop.f32.mrb[0].mxu0
      %v1438 = vadd.f32 0.0, %v1437
      %v1439 = vpop.f32.mrb[0].mxu0
      %v1440 = vpop.f32.mrb[0].mxu0
      %v1441 = vadd.f32 0.0, %v1440
      %v1442 = vpop.f32.mrb[0].mxu0
      %1443 = vmatprep.mubr.bf16.mxu0 0
      %1444 = vmatmul.mubr.bf16.gmra.mrb[0].mxu0 %v965
      %v1445 = vpop.f32.mrb[0].mxu0
      %v1446 = vadd.f32 0.0, %v1445
      %v1447 = vpop.f32.mrb[0].mxu0
      %v1448 = vpop.f32.mrb[0].mxu0
      %v1449 = vadd.f32 0.0, %v1448
      %v1450 = vpop.f32.mrb[0].mxu0
      %1451 = vmatprep.mubr.bf16.mxu0 0
      %1452 = vmatmul.mubr.bf16.gmra.mrb[0].mxu0 %v968
      %v1453 = vpop.f32.mrb[0].mxu0
      %v1454 = vadd.f32 0.0, %v1453
      %v1455 = vpop.f32.mrb[0].mxu0
      %v1456 = vpop.f32.mrb[0].mxu0
      %v1457 = vadd.f32 0.0, %v1456
      %v1458 = vpop.f32.mrb[0].mxu0
      %1459 = vmatprep.mubr.bf16.mxu0 0
      %1460 = vmatmul.mubr.bf16.gmra.mrb[0].mxu0 %v971
      %v1461 = vpop.f32.mrb[0].mxu0
      %v1462 = vadd.f32 0.0, %v1461
      %v1463 = vpop.f32.mrb[0].mxu0
      %v1464 = vpop.f32.mrb[0].mxu0
      %v1465 = vadd.f32 0.0, %v1464
      %v1466 = vpop.f32.mrb[0].mxu0
      %1467 = vmatprep.mubr.bf16.mxu0 0
      %1468 = vmatmul.mubr.bf16.gmra.mrb[0].mxu0 %v974
      %v1469 = vpop.f32.mrb[0].mxu0
      %v1470 = vadd.f32 0.0, %v1469
      %v1471 = vpop.f32.mrb[0].mxu0
      %v1472 = vpop.f32.mrb[0].mxu0
      %v1473 = vadd.f32 0.0, %v1472
      %v1474 = vpop.f32.mrb[0].mxu0
      %1475 = vmatprep.mubr.bf16.mxu0 0
      %1476 = vmatmul.mubr.bf16.gmra.mrb[0].mxu0 %v977
      %v1477 = vpop.f32.mrb[0].mxu0
      %v1478 = vadd.f32 0.0, %v1477
      %v1479 = vpop.f32.mrb[0].mxu0
      %v1480 = vpop.f32.mrb[0].mxu0
      %v1481 = vadd.f32 0.0, %v1480
      %v1482 = vpop.f32.mrb[0].mxu0
      %1483 = vmatprep.mubr.bf16.mxu0 0
      %1484 = vmatmul.mubr.bf16.gmra.mrb[0].mxu0 %v980
      %v1485 = vpop.f32.mrb[0].mxu0
      %v1486 = vadd.f32 0.0, %v1485
      %v1487 = vpop.f32.mrb[0].mxu0
      %v1488 = vpop.f32.mrb[0].mxu0
      %v1489 = vadd.f32 0.0, %v1488
      %v1490 = vpop.f32.mrb[0].mxu0
      %1491 = vmatprep.mubr.bf16.mxu0 0
      %1492 = vmatmul.mubr.bf16.gmra.mrb[0].mxu0 %v983
      %v1493 = vpop.f32.mrb[0].mxu0
      %v1494 = vadd.f32 0.0, %v1493
      %v1495 = vpop.f32.mrb[0].mxu0
      %v1496 = vpop.f32.mrb[0].mxu0
      %v1497 = vadd.f32 0.0, %v1496
      %v1498 = vpop.f32.mrb[0].mxu0
      %1499 = vmatprep.mubr.bf16.mxu0 0
      %1500 = vmatmul.mubr.bf16.gmra.mrb[0].mxu0 %v986
      %v1501 = vpop.f32.mrb[0].mxu0
      %v1502 = vadd.f32 0.0, %v1501
      %v1503 = vpop.f32.mrb[0].mxu0
      %v1504 = vpop.f32.mrb[0].mxu0
      %v1505 = vadd.f32 0.0, %v1504
      %v1506 = vpop.f32.mrb[0].mxu0
      %1507 = vmatprep.mubr.bf16.mxu0 0
      %1508 = vmatmul.mubr.bf16.gmra.mrb[0].mxu0 %v989
      %v1509 = vpop.f32.mrb[0].mxu0
      %v1510 = vadd.f32 0.0, %v1509
      %v1511 = vpop.f32.mrb[0].mxu0
      %v1512 = vpop.f32.mrb[0].mxu0
      %v1513 = vadd.f32 0.0, %v1512
      %v1514 = vpop.f32.mrb[0].mxu0
      %1515 = vmatprep.mubr.bf16.mxu0 0
      %1516 = vmatmul.mubr.bf16.gmra.mrb[0].mxu0 %v992
      %v1517 = vpop.f32.mrb[0].mxu0
      %v1518 = vadd.f32 0.0, %v1517
      %v1519 = vpop.f32.mrb[0].mxu0
      %v1520 = vpop.f32.mrb[0].mxu0
      %v1521 = vadd.f32 0.0, %v1520
      %v1522 = vpop.f32.mrb[0].mxu0
      %1523 = vmatprep.mubr.bf16.mxu0 0
      %1524 = vmatmul.mubr.bf16.gmra.mrb[0].mxu0 %v995
      %v1525 = vpop.f32.mrb[0].mxu0
      %v1526 = vadd.f32 0.0, %v1525
      %v1527 = vpop.f32.mrb[0].mxu0
      %v1528 = vpop.f32.mrb[0].mxu0
      %v1529 = vadd.f32 0.0, %v1528
      %v1530 = vpop.f32.mrb[0].mxu0
      %1531 = vmatprep.mubr.bf16.mxu0 0
      %1532 = vmatmul.mubr.bf16.gmra.mrb[0].mxu0 %v998
      %v1533 = vpop.f32.mrb[0].mxu0
      %v1534 = vadd.f32 0.0, %v1533
      %v1535 = vpop.f32.mrb[0].mxu0
      %v1536 = vpop.f32.mrb[0].mxu0
      %v1537 = vadd.f32 0.0, %v1536
      %v1538 = vpop.f32.mrb[0].mxu0
      %1539 = vmatprep.mubr.bf16.mxu0 0
      %1540 = vmatmul.mubr.bf16.gmra.mrb[0].mxu0 %v1001
      %v1541 = vpop.f32.mrb[0].mxu0
      %v1542 = vadd.f32 0.0, %v1541
      %v1543 = vpop.f32.mrb[0].mxu0
      %v1544 = vpop.f32.mrb[0].mxu0
      %v1545 = vadd.f32 0.0, %v1544
      %v1546 = vpop.f32.mrb[0].mxu0
      %1547 = vdwg.mxu0
      %v1548 = vld [vmem:[%s2] sm:$0x1]
      %v1550 = vlaneseq
      %v1551 = vshrl.u32 %v1550, 7
      %v1552 = vsub.s32 0, %v1551
      %v1553 = vrot.slane %v1548, %v1552
      %v1555 = vmul.f32 %v1038, %v1553
      %v1556 = vmul.f32 %v1041, %v1553
      %v1557 = vmul.f32 %v1046, %v1553
      %v1558 = vmul.f32 %v1049, %v1553
      %v1559 = vmul.f32 %v1054, %v1553
      %v1560 = vmul.f32 %v1057, %v1553
      %v1561 = vmul.f32 %v1062, %v1553
      %v1562 = vmul.f32 %v1065, %v1553
      %v1563 = vmul.f32 %v1070, %v1553
      %v1564 = vmul.f32 %v1073, %v1553
      %v1565 = vmul.f32 %v1078, %v1553
      %v1566 = vmul.f32 %v1081, %v1553
      %v1567 = vmul.f32 %v1086, %v1553
      %v1568 = vmul.f32 %v1089, %v1553
      %v1569 = vmul.f32 %v1094, %v1553
      %v1570 = vmul.f32 %v1097, %v1553
      %v1571 = vmul.f32 %v1102, %v1553
      %v1572 = vmul.f32 %v1105, %v1553
      %v1573 = vmul.f32 %v1110, %v1553
      %v1574 = vmul.f32 %v1113, %v1553
      %v1575 = vmul.f32 %v1118, %v1553
      %v1576 = vmul.f32 %v1121, %v1553
      %v1577 = vmul.f32 %v1126, %v1553
      %v1578 = vmul.f32 %v1129, %v1553
      %v1579 = vmul.f32 %v1134, %v1553
      %v1580 = vmul.f32 %v1137, %v1553
      %v1581 = vmul.f32 %v1142, %v1553
      %v1582 = vmul.f32 %v1145, %v1553
      %v1583 = vmul.f32 %v1150, %v1553
      %v1584 = vmul.f32 %v1153, %v1553
      %v1585 = vmul.f32 %v1158, %v1553
      %v1586 = vmul.f32 %v1161, %v1553
      %v1587 = vmul.f32 %v1166, %v1553
      %v1588 = vmul.f32 %v1169, %v1553
      %v1589 = vmul.f32 %v1174, %v1553
      %v1590 = vmul.f32 %v1177, %v1553
      %v1591 = vmul.f32 %v1182, %v1553
      %v1592 = vmul.f32 %v1185, %v1553
      %v1593 = vmul.f32 %v1190, %v1553
      %v1594 = vmul.f32 %v1193, %v1553
      %v1595 = vmul.f32 %v1198, %v1553
      %v1596 = vmul.f32 %v1201, %v1553
      %v1597 = vmul.f32 %v1206, %v1553
      %v1598 = vmul.f32 %v1209, %v1553
      %v1599 = vmul.f32 %v1214, %v1553
      %v1600 = vmul.f32 %v1217, %v1553
      %v1601 = vmul.f32 %v1222, %v1553
      %v1602 = vmul.f32 %v1225, %v1553
      %v1603 = vmul.f32 %v1230, %v1553
      %v1604 = vmul.f32 %v1233, %v1553
      %v1605 = vmul.f32 %v1238, %v1553
      %v1606 = vmul.f32 %v1241, %v1553
      %v1607 = vmul.f32 %v1246, %v1553
      %v1608 = vmul.f32 %v1249, %v1553
      %v1609 = vmul.f32 %v1254, %v1553
      %v1610 = vmul.f32 %v1257, %v1553
      %v1611 = vmul.f32 %v1262, %v1553
      %v1612 = vmul.f32 %v1265, %v1553
      %v1613 = vmul.f32 %v1270, %v1553
      %v1614 = vmul.f32 %v1273, %v1553
      %v1615 = vmul.f32 %v1278, %v1553
      %v1616 = vmul.f32 %v1281, %v1553
      %v1617 = vmul.f32 %v1286, %v1553
      %v1618 = vmul.f32 %v1289, %v1553
      %v1619 = vmul.f32 %v1294, %v1553
      %v1620 = vmul.f32 %v1297, %v1553
      %v1621 = vmul.f32 %v1302, %v1553
      %v1622 = vmul.f32 %v1305, %v1553
      %v1623 = vmul.f32 %v1310, %v1553
      %v1624 = vmul.f32 %v1313, %v1553
      %v1625 = vmul.f32 %v1318, %v1553
      %v1626 = vmul.f32 %v1321, %v1553
      %v1627 = vmul.f32 %v1326, %v1553
      %v1628 = vmul.f32 %v1329, %v1553
      %v1629 = vmul.f32 %v1334, %v1553
      %v1630 = vmul.f32 %v1337, %v1553
      %v1631 = vmul.f32 %v1342, %v1553
      %v1632 = vmul.f32 %v1345, %v1553
      %v1633 = vmul.f32 %v1350, %v1553
      %v1634 = vmul.f32 %v1353, %v1553
      %v1635 = vmul.f32 %v1358, %v1553
      %v1636 = vmul.f32 %v1361, %v1553
      %v1637 = vmul.f32 %v1366, %v1553
      %v1638 = vmul.f32 %v1369, %v1553
      %v1639 = vmul.f32 %v1374, %v1553
      %v1640 = vmul.f32 %v1377, %v1553
      %v1641 = vmul.f32 %v1382, %v1553
      %v1642 = vmul.f32 %v1385, %v1553
      %v1643 = vmul.f32 %v1390, %v1553
      %v1644 = vmul.f32 %v1393, %v1553
      %v1645 = vmul.f32 %v1398, %v1553
      %v1646 = vmul.f32 %v1401, %v1553
      %v1647 = vmul.f32 %v1406, %v1553
      %v1648 = vmul.f32 %v1409, %v1553
      %v1649 = vmul.f32 %v1414, %v1553
      %v1650 = vmul.f32 %v1417, %v1553
      %v1651 = vmul.f32 %v1422, %v1553
      %v1652 = vmul.f32 %v1425, %v1553
      %v1653 = vmul.f32 %v1430, %v1553
      %v1654 = vmul.f32 %v1433, %v1553
      %v1655 = vmul.f32 %v1438, %v1553
      %v1656 = vmul.f32 %v1441, %v1553
      %v1657 = vmul.f32 %v1446, %v1553
      %v1658 = vmul.f32 %v1449, %v1553
      %v1659 = vmul.f32 %v1454, %v1553
      %v1660 = vmul.f32 %v1457, %v1553
      %v1661 = vmul.f32 %v1462, %v1553
      %v1662 = vmul.f32 %v1465, %v1553
      %v1663 = vmul.f32 %v1470, %v1553
      %v1664 = vmul.f32 %v1473, %v1553
      %v1665 = vmul.f32 %v1478, %v1553
      %v1666 = vmul.f32 %v1481, %v1553
      %v1667 = vmul.f32 %v1486, %v1553
      %v1668 = vmul.f32 %v1489, %v1553
      %v1669 = vmul.f32 %v1494, %v1553
      %v1670 = vmul.f32 %v1497, %v1553
      %v1671 = vmul.f32 %v1502, %v1553
      %v1672 = vmul.f32 %v1505, %v1553
      %v1673 = vmul.f32 %v1510, %v1553
      %v1674 = vmul.f32 %v1513, %v1553
      %v1675 = vmul.f32 %v1518, %v1553
      %v1676 = vmul.f32 %v1521, %v1553
      %v1677 = vmul.f32 %v1526, %v1553
      %v1678 = vmul.f32 %v1529, %v1553
      %v1679 = vmul.f32 %v1534, %v1553
      %v1680 = vmul.f32 %v1537, %v1553
      %v1681 = vmul.f32 %v1542, %v1553
      %v1682 = vmul.f32 %v1545, %v1553
      %v1683 = vld [vmem:[%s3] sm:$0x1]
      %v1685 = vlaneseq
      %v1686 = vshrl.u32 %v1685, 7
      %v1687 = vsub.s32 0, %v1686
      %v1688 = vrot.slane %v1683, %v1687
      %v1690 = vadd.f32 %v1555, %v1688
      %v1691 = vadd.f32 %v1556, %v1688
      %v1692 = vadd.f32 %v1557, %v1688
      %v1693 = vadd.f32 %v1558, %v1688
      %v1694 = vadd.f32 %v1559, %v1688
      %v1695 = vadd.f32 %v1560, %v1688
      %v1696 = vadd.f32 %v1561, %v1688
      %v1697 = vadd.f32 %v1562, %v1688
      %v1698 = vadd.f32 %v1563, %v1688
      %v1699 = vadd.f32 %v1564, %v1688
      %v1700 = vadd.f32 %v1565, %v1688
      %v1701 = vadd.f32 %v1566, %v1688
      %v1702 = vadd.f32 %v1567, %v1688
      %v1703 = vadd.f32 %v1568, %v1688
      %v1704 = vadd.f32 %v1569, %v1688
      %v1705 = vadd.f32 %v1570, %v1688
      %v1706 = vadd.f32 %v1571, %v1688
      %v1707 = vadd.f32 %v1572, %v1688
      %v1708 = vadd.f32 %v1573, %v1688
      %v1709 = vadd.f32 %v1574, %v1688
      %v1710 = vadd.f32 %v1575, %v1688
      %v1711 = vadd.f32 %v1576, %v1688
      %v1712 = vadd.f32 %v1577, %v1688
      %v1713 = vadd.f32 %v1578, %v1688
      %v1714 = vadd.f32 %v1579, %v1688
      %v1715 = vadd.f32 %v1580, %v1688
      %v1716 = vadd.f32 %v1581, %v1688
      %v1717 = vadd.f32 %v1582, %v1688
      %v1718 = vadd.f32 %v1583, %v1688
      %v1719 = vadd.f32 %v1584, %v1688
      %v1720 = vadd.f32 %v1585, %v1688
      %v1721 = vadd.f32 %v1586, %v1688
      %v1722 = vadd.f32 %v1587, %v1688
      %v1723 = vadd.f32 %v1588, %v1688
      %v1724 = vadd.f32 %v1589, %v1688
      %v1725 = vadd.f32 %v1590, %v1688
      %v1726 = vadd.f32 %v1591, %v1688
      %v1727 = vadd.f32 %v1592, %v1688
      %v1728 = vadd.f32 %v1593, %v1688
      %v1729 = vadd.f32 %v1594, %v1688
      %v1730 = vadd.f32 %v1595, %v1688
      %v1731 = vadd.f32 %v1596, %v1688
      %v1732 = vadd.f32 %v1597, %v1688
      %v1733 = vadd.f32 %v1598, %v1688
      %v1734 = vadd.f32 %v1599, %v1688
      %v1735 = vadd.f32 %v1600, %v1688
      %v1736 = vadd.f32 %v1601, %v1688
      %v1737 = vadd.f32 %v1602, %v1688
      %v1738 = vadd.f32 %v1603, %v1688
      %v1739 = vadd.f32 %v1604, %v1688
      %v1740 = vadd.f32 %v1605, %v1688
      %v1741 = vadd.f32 %v1606, %v1688
      %v1742 = vadd.f32 %v1607, %v1688
      %v1743 = vadd.f32 %v1608, %v1688
      %v1744 = vadd.f32 %v1609, %v1688
      %v1745 = vadd.f32 %v1610, %v1688
      %v1746 = vadd.f32 %v1611, %v1688
      %v1747 = vadd.f32 %v1612, %v1688
      %v1748 = vadd.f32 %v1613, %v1688
      %v1749 = vadd.f32 %v1614, %v1688
      %v1750 = vadd.f32 %v1615, %v1688
      %v1751 = vadd.f32 %v1616, %v1688
      %v1752 = vadd.f32 %v1617, %v1688
      %v1753 = vadd.f32 %v1618, %v1688
      %v1754 = vadd.f32 %v1619, %v1688
      %v1755 = vadd.f32 %v1620, %v1688
      %v1756 = vadd.f32 %v1621, %v1688
      %v1757 = vadd.f32 %v1622, %v1688
      %v1758 = vadd.f32 %v1623, %v1688
      %v1759 = vadd.f32 %v1624, %v1688
      %v1760 = vadd.f32 %v1625, %v1688
      %v1761 = vadd.f32 %v1626, %v1688
      %v1762 = vadd.f32 %v1627, %v1688
      %v1763 = vadd.f32 %v1628, %v1688
      %v1764 = vadd.f32 %v1629, %v1688
      %v1765 = vadd.f32 %v1630, %v1688
      %v1766 = vadd.f32 %v1631, %v1688
      %v1767 = vadd.f32 %v1632, %v1688
      %v1768 = vadd.f32 %v1633, %v1688
      %v1769 = vadd.f32 %v1634, %v1688
      %v1770 = vadd.f32 %v1635, %v1688
      %v1771 = vadd.f32 %v1636, %v1688
      %v1772 = vadd.f32 %v1637, %v1688
      %v1773 = vadd.f32 %v1638, %v1688
      %v1774 = vadd.f32 %v1639, %v1688
      %v1775 = vadd.f32 %v1640, %v1688
      %v1776 = vadd.f32 %v1641, %v1688
      %v1777 = vadd.f32 %v1642, %v1688
      %v1778 = vadd.f32 %v1643, %v1688
      %v1779 = vadd.f32 %v1644, %v1688
      %v1780 = vadd.f32 %v1645, %v1688
      %v1781 = vadd.f32 %v1646, %v1688
      %v1782 = vadd.f32 %v1647, %v1688
      %v1783 = vadd.f32 %v1648, %v1688
      %v1784 = vadd.f32 %v1649, %v1688
      %v1785 = vadd.f32 %v1650, %v1688
      %v1786 = vadd.f32 %v1651, %v1688
      %v1787 = vadd.f32 %v1652, %v1688
      %v1788 = vadd.f32 %v1653, %v1688
      %v1789 = vadd.f32 %v1654, %v1688
      %v1790 = vadd.f32 %v1655, %v1688
      %v1791 = vadd.f32 %v1656, %v1688
      %v1792 = vadd.f32 %v1657, %v1688
      %v1793 = vadd.f32 %v1658, %v1688
      %v1794 = vadd.f32 %v1659, %v1688
      %v1795 = vadd.f32 %v1660, %v1688
      %v1796 = vadd.f32 %v1661, %v1688
      %v1797 = vadd.f32 %v1662, %v1688
      %v1798 = vadd.f32 %v1663, %v1688
      %v1799 = vadd.f32 %v1664, %v1688
      %v1800 = vadd.f32 %v1665, %v1688
      %v1801 = vadd.f32 %v1666, %v1688
      %v1802 = vadd.f32 %v1667, %v1688
      %v1803 = vadd.f32 %v1668, %v1688
      %v1804 = vadd.f32 %v1669, %v1688
      %v1805 = vadd.f32 %v1670, %v1688
      %v1806 = vadd.f32 %v1671, %v1688
      %v1807 = vadd.f32 %v1672, %v1688
      %v1808 = vadd.f32 %v1673, %v1688
      %v1809 = vadd.f32 %v1674, %v1688
      %v1810 = vadd.f32 %v1675, %v1688
      %v1811 = vadd.f32 %v1676, %v1688
      %v1812 = vadd.f32 %v1677, %v1688
      %v1813 = vadd.f32 %v1678, %v1688
      %v1814 = vadd.f32 %v1679, %v1688
      %v1815 = vadd.f32 %v1680, %v1688
      %v1816 = vadd.f32 %v1681, %v1688
      %v1817 = vadd.f32 %v1682, %v1688
      %v1818 = vtanh.pop %v1690
      %v1819 = vtanh.pop %v1691
      %v1820 = vtanh.pop %v1692
      %v1821 = vtanh.pop %v1693
      %v1822 = vtanh.pop %v1694
      %v1823 = vtanh.pop %v1695
      %v1824 = vtanh.pop %v1696
      %v1825 = vtanh.pop %v1697
      %v1826 = vtanh.pop %v1698
      %v1827 = vtanh.pop %v1699
      %v1828 = vtanh.pop %v1700
      %v1829 = vtanh.pop %v1701
      %v1830 = vtanh.pop %v1702
      %v1831 = vtanh.pop %v1703
      %v1832 = vtanh.pop %v1704
      %v1833 = vtanh.pop %v1705
      %v1834 = vtanh.pop %v1706
      %v1835 = vtanh.pop %v1707
      %v1836 = vtanh.pop %v1708
      %v1837 = vtanh.pop %v1709
      %v1838 = vtanh.pop %v1710
      %v1839 = vtanh.pop %v1711
      %v1840 = vtanh.pop %v1712
      %v1841 = vtanh.pop %v1713
      %v1842 = vtanh.pop %v1714
      %v1843 = vtanh.pop %v1715
      %v1844 = vtanh.pop %v1716
      %v1845 = vtanh.pop %v1717
      %v1846 = vtanh.pop %v1718
      %v1847 = vtanh.pop %v1719
      %v1848 = vtanh.pop %v1720
      %v1849 = vtanh.pop %v1721
      %v1850 = vtanh.pop %v1722
      %v1851 = vtanh.pop %v1723
      %v1852 = vtanh.pop %v1724
      %v1853 = vtanh.pop %v1725
      %v1854 = vtanh.pop %v1726
      %v1855 = vtanh.pop %v1727
      %v1856 = vtanh.pop %v1728
      %v1857 = vtanh.pop %v1729
      %v1858 = vtanh.pop %v1730
      %v1859 = vtanh.pop %v1731
      %v1860 = vtanh.pop %v1732
      %v1861 = vtanh.pop %v1733
      %v1862 = vtanh.pop %v1734
      %v1863 = vtanh.pop %v1735
      %v1864 = vtanh.pop %v1736
      %v1865 = vtanh.pop %v1737
      %v1866 = vtanh.pop %v1738
      %v1867 = vtanh.pop %v1739
      %v1868 = vtanh.pop %v1740
      %v1869 = vtanh.pop %v1741
      %v1870 = vtanh.pop %v1742
      %v1871 = vtanh.pop %v1743
      %v1872 = vtanh.pop %v1744
      %v1873 = vtanh.pop %v1745
      %v1874 = vtanh.pop %v1746
      %v1875 = vtanh.pop %v1747
      %v1876 = vtanh.pop %v1748
      %v1877 = vtanh.pop %v1749
      %v1878 = vtanh.pop %v1750
      %v1879 = vtanh.pop %v1751
      %v1880 = vtanh.pop %v1752
      %v1881 = vtanh.pop %v1753
      %v1882 = vtanh.pop %v1754
      %v1883 = vtanh.pop %v1755
      %v1884 = vtanh.pop %v1756
      %v1885 = vtanh.pop %v1757
      %v1886 = vtanh.pop %v1758
      %v1887 = vtanh.pop %v1759
      %v1888 = vtanh.pop %v1760
      %v1889 = vtanh.pop %v1761
      %v1890 = vtanh.pop %v1762
      %v1891 = vtanh.pop %v1763
      %v1892 = vtanh.pop %v1764
      %v1893 = vtanh.pop %v1765
      %v1894 = vtanh.pop %v1766
      %v1895 = vtanh.pop %v1767
      %v1896 = vtanh.pop %v1768
      %v1897 = vtanh.pop %v1769
      %v1898 = vtanh.pop %v1770
      %v1899 = vtanh.pop %v1771
      %v1900 = vtanh.pop %v1772
      %v1901 = vtanh.pop %v1773
      %v1902 = vtanh.pop %v1774
      %v1903 = vtanh.pop %v1775
      %v1904 = vtanh.pop %v1776
      %v1905 = vtanh.pop %v1777
      %v1906 = vtanh.pop %v1778
      %v1907 = vtanh.pop %v1779
      %v1908 = vtanh.pop %v1780
      %v1909 = vtanh.pop %v1781
      %v1910 = vtanh.pop %v1782
      %v1911 = vtanh.pop %v1783
      %v1912 = vtanh.pop %v1784
      %v1913 = vtanh.pop %v1785
      %v1914 = vtanh.pop %v1786
      %v1915 = vtanh.pop %v1787
      %v1916 = vtanh.pop %v1788
      %v1917 = vtanh.pop %v1789
      %v1918 = vtanh.pop %v1790
      %v1919 = vtanh.pop %v1791
      %v1920 = vtanh.pop %v1792
      %v1921 = vtanh.pop %v1793
      %v1922 = vtanh.pop %v1794
      %v1923 = vtanh.pop %v1795
      %v1924 = vtanh.pop %v1796
      %v1925 = vtanh.pop %v1797
      %v1926 = vtanh.pop %v1798
      %v1927 = vtanh.pop %v1799
      %v1928 = vtanh.pop %v1800
      %v1929 = vtanh.pop %v1801
      %v1930 = vtanh.pop %v1802
      %v1931 = vtanh.pop %v1803
      %v1932 = vtanh.pop %v1804
      %v1933 = vtanh.pop %v1805
      %v1934 = vtanh.pop %v1806
      %v1935 = vtanh.pop %v1807
      %v1936 = vtanh.pop %v1808
      %v1937 = vtanh.pop %v1809
      %v1938 = vtanh.pop %v1810
      %v1939 = vtanh.pop %v1811
      %v1940 = vtanh.pop %v1812
      %v1941 = vtanh.pop %v1813
      %v1942 = vtanh.pop %v1814
      %v1943 = vtanh.pop %v1815
      %v1944 = vtanh.pop %v1816
      %v1945 = vtanh.pop %v1817
      %vm1946 = vcmask 97280
      %1947 = vst.msk [vmem:[%s199] sm:$0xff] %vm1946, %v1818
      %1948 = vst.msk [vmem:[%s199 + $0x8] sm:$0xff] %vm1946, %v1819
      %1949 = vst.msk [vmem:[%s199 + $0x10] sm:$0xff] %vm1946, %v1820
      %1950 = vst.msk [vmem:[%s199 + $0x18] sm:$0xff] %vm1946, %v1821
      %1951 = vst.msk [vmem:[%s199 + $0x20] sm:$0xff] %vm1946, %v1822
      %1952 = vst.msk [vmem:[%s199 + $0x28] sm:$0xff] %vm1946, %v1823
      %1953 = vst.msk [vmem:[%s199 + $0x30] sm:$0xff] %vm1946, %v1824
      %1954 = vst.msk [vmem:[%s199 + $0x38] sm:$0xff] %vm1946, %v1825
      %1955 = vst.msk [vmem:[%s199 + $0x40] sm:$0xff] %vm1946, %v1826
      %1956 = vst.msk [vmem:[%s199 + $0x48] sm:$0xff] %vm1946, %v1827
      %1957 = vst.msk [vmem:[%s199 + $0x50] sm:$0xff] %vm1946, %v1828
      %1958 = vst.msk [vmem:[%s199 + $0x58] sm:$0xff] %vm1946, %v1829
      %1959 = vst.msk [vmem:[%s199 + $0x60] sm:$0xff] %vm1946, %v1830
      %1960 = vst.msk [vmem:[%s199 + $0x68] sm:$0xff] %vm1946, %v1831
      %1961 = vst.msk [vmem:[%s199 + $0x70] sm:$0xff] %vm1946, %v1832
      %1962 = vst.msk [vmem:[%s199 + $0x78] sm:$0xff] %vm1946, %v1833
      %1963 = vst.msk [vmem:[%s199 + $0x80] sm:$0xff] %vm1946, %v1834
      %1964 = vst.msk [vmem:[%s199 + $0x88] sm:$0xff] %vm1946, %v1835
      %1965 = vst.msk [vmem:[%s199 + $0x90] sm:$0xff] %vm1946, %v1836
      %1966 = vst.msk [vmem:[%s199 + $0x98] sm:$0xff] %vm1946, %v1837
      %1967 = vst.msk [vmem:[%s199 + $0xa0] sm:$0xff] %vm1946, %v1838
      %1968 = vst.msk [vmem:[%s199 + $0xa8] sm:$0xff] %vm1946, %v1839
      %1969 = vst.msk [vmem:[%s199 + $0xb0] sm:$0xff] %vm1946, %v1840
      %1970 = vst.msk [vmem:[%s199 + $0xb8] sm:$0xff] %vm1946, %v1841
      %1971 = vst.msk [vmem:[%s199 + $0xc0] sm:$0xff] %vm1946, %v1842
      %1972 = vst.msk [vmem:[%s199 + $0xc8] sm:$0xff] %vm1946, %v1843
      %1973 = vst.msk [vmem:[%s199 + $0xd0] sm:$0xff] %vm1946, %v1844
      %1974 = vst.msk [vmem:[%s199 + $0xd8] sm:$0xff] %vm1946, %v1845
      %1975 = vst.msk [vmem:[%s199 + $0xe0] sm:$0xff] %vm1946, %v1846
      %1976 = vst.msk [vmem:[%s199 + $0xe8] sm:$0xff] %vm1946, %v1847
      %1977 = vst.msk [vmem:[%s199 + $0xf0] sm:$0xff] %vm1946, %v1848
      %1978 = vst.msk [vmem:[%s199 + $0xf8] sm:$0xff] %vm1946, %v1849
      %1979 = vst.msk [vmem:[%s199 + $0x100] sm:$0xff] %vm1946, %v1850
      %1980 = vst.msk [vmem:[%s199 + $0x108] sm:$0xff] %vm1946, %v1851
      %1981 = vst.msk [vmem:[%s199 + $0x110] sm:$0xff] %vm1946, %v1852
      %1982 = vst.msk [vmem:[%s199 + $0x118] sm:$0xff] %vm1946, %v1853
      %1983 = vst.msk [vmem:[%s199 + $0x120] sm:$0xff] %vm1946, %v1854
      %1984 = vst.msk [vmem:[%s199 + $0x128] sm:$0xff] %vm1946, %v1855
      %1985 = vst.msk [vmem:[%s199 + $0x130] sm:$0xff] %vm1946, %v1856
      %1986 = vst.msk [vmem:[%s199 + $0x138] sm:$0xff] %vm1946, %v1857
      %1987 = vst.msk [vmem:[%s199 + $0x140] sm:$0xff] %vm1946, %v1858
      %1988 = vst.msk [vmem:[%s199 + $0x148] sm:$0xff] %vm1946, %v1859
      %1989 = vst.msk [vmem:[%s199 + $0x150] sm:$0xff] %vm1946, %v1860
      %1990 = vst.msk [vmem:[%s199 + $0x158] sm:$0xff] %vm1946, %v1861
      %1991 = vst.msk [vmem:[%s199 + $0x160] sm:$0xff] %vm1946, %v1862
      %1992 = vst.msk [vmem:[%s199 + $0x168] sm:$0xff] %vm1946, %v1863
      %1993 = vst.msk [vmem:[%s199 + $0x170] sm:$0xff] %vm1946, %v1864
      %1994 = vst.msk [vmem:[%s199 + $0x178] sm:$0xff] %vm1946, %v1865
      %1995 = vst.msk [vmem:[%s199 + $0x180] sm:$0xff] %vm1946, %v1866
      %1996 = vst.msk [vmem:[%s199 + $0x188] sm:$0xff] %vm1946, %v1867
      %1997 = vst.msk [vmem:[%s199 + $0x190] sm:$0xff] %vm1946, %v1868
      %1998 = vst.msk [vmem:[%s199 + $0x198] sm:$0xff] %vm1946, %v1869
      %1999 = vst.msk [vmem:[%s199 + $0x1a0] sm:$0xff] %vm1946, %v1870
      %2000 = vst.msk [vmem:[%s199 + $0x1a8] sm:$0xff] %vm1946, %v1871
      %2001 = vst.msk [vmem:[%s199 + $0x1b0] sm:$0xff] %vm1946, %v1872
      %2002 = vst.msk [vmem:[%s199 + $0x1b8] sm:$0xff] %vm1946, %v1873
      %2003 = vst.msk [vmem:[%s199 + $0x1c0] sm:$0xff] %vm1946, %v1874
      %2004 = vst.msk [vmem:[%s199 + $0x1c8] sm:$0xff] %vm1946, %v1875
      %2005 = vst.msk [vmem:[%s199 + $0x1d0] sm:$0xff] %vm1946, %v1876
      %2006 = vst.msk [vmem:[%s199 + $0x1d8] sm:$0xff] %vm1946, %v1877
      %2007 = vst.msk [vmem:[%s199 + $0x1e0] sm:$0xff] %vm1946, %v1878
      %2008 = vst.msk [vmem:[%s199 + $0x1e8] sm:$0xff] %vm1946, %v1879
      %2009 = vst.msk [vmem:[%s199 + $0x1f0] sm:$0xff] %vm1946, %v1880
      %2010 = vst.msk [vmem:[%s199 + $0x1f8] sm:$0xff] %vm1946, %v1881
      %2011 = vst.msk [vmem:[%s199 + $0x200] sm:$0xff] %vm1946, %v1882
      %2012 = vst.msk [vmem:[%s199 + $0x208] sm:$0xff] %vm1946, %v1883
      %2013 = vst.msk [vmem:[%s199 + $0x210] sm:$0xff] %vm1946, %v1884
      %2014 = vst.msk [vmem:[%s199 + $0x218] sm:$0xff] %vm1946, %v1885
      %2015 = vst.msk [vmem:[%s199 + $0x220] sm:$0xff] %vm1946, %v1886
      %2016 = vst.msk [vmem:[%s199 + $0x228] sm:$0xff] %vm1946, %v1887
      %2017 = vst.msk [vmem:[%s199 + $0x230] sm:$0xff] %vm1946, %v1888
      %2018 = vst.msk [vmem:[%s199 + $0x238] sm:$0xff] %vm1946, %v1889
      %2019 = vst.msk [vmem:[%s199 + $0x240] sm:$0xff] %vm1946, %v1890
      %2020 = vst.msk [vmem:[%s199 + $0x248] sm:$0xff] %vm1946, %v1891
      %2021 = vst.msk [vmem:[%s199 + $0x250] sm:$0xff] %vm1946, %v1892
      %2022 = vst.msk [vmem:[%s199 + $0x258] sm:$0xff] %vm1946, %v1893
      %2023 = vst.msk [vmem:[%s199 + $0x260] sm:$0xff] %vm1946, %v1894
      %2024 = vst.msk [vmem:[%s199 + $0x268] sm:$0xff] %vm1946, %v1895
      %2025 = vst.msk [vmem:[%s199 + $0x270] sm:$0xff] %vm1946, %v1896
      %2026 = vst.msk [vmem:[%s199 + $0x278] sm:$0xff] %vm1946, %v1897
      %2027 = vst.msk [vmem:[%s199 + $0x280] sm:$0xff] %vm1946, %v1898
      %2028 = vst.msk [vmem:[%s199 + $0x288] sm:$0xff] %vm1946, %v1899
      %2029 = vst.msk [vmem:[%s199 + $0x290] sm:$0xff] %vm1946, %v1900
      %2030 = vst.msk [vmem:[%s199 + $0x298] sm:$0xff] %vm1946, %v1901
      %2031 = vst.msk [vmem:[%s199 + $0x2a0] sm:$0xff] %vm1946, %v1902
      %2032 = vst.msk [vmem:[%s199 + $0x2a8] sm:$0xff] %vm1946, %v1903
      %2033 = vst.msk [vmem:[%s199 + $0x2b0] sm:$0xff] %vm1946, %v1904
      %2034 = vst.msk [vmem:[%s199 + $0x2b8] sm:$0xff] %vm1946, %v1905
      %2035 = vst.msk [vmem:[%s199 + $0x2c0] sm:$0xff] %vm1946, %v1906
      %2036 = vst.msk [vmem:[%s199 + $0x2c8] sm:$0xff] %vm1946, %v1907
      %2037 = vst.msk [vmem:[%s199 + $0x2d0] sm:$0xff] %vm1946, %v1908
      %2038 = vst.msk [vmem:[%s199 + $0x2d8] sm:$0xff] %vm1946, %v1909
      %2039 = vst.msk [vmem:[%s199 + $0x2e0] sm:$0xff] %vm1946, %v1910
      %2040 = vst.msk [vmem:[%s199 + $0x2e8] sm:$0xff] %vm1946, %v1911
      %2041 = vst.msk [vmem:[%s199 + $0x2f0] sm:$0xff] %vm1946, %v1912
      %2042 = vst.msk [vmem:[%s199 + $0x2f8] sm:$0xff] %vm1946, %v1913
      %2043 = vst.msk [vmem:[%s199 + $0x300] sm:$0xff] %vm1946, %v1914
      %2044 = vst.msk [vmem:[%s199 + $0x308] sm:$0xff] %vm1946, %v1915
      %2045 = vst.msk [vmem:[%s199 + $0x310] sm:$0xff] %vm1946, %v1916
      %2046 = vst.msk [vmem:[%s199 + $0x318] sm:$0xff] %vm1946, %v1917
      %2047 = vst.msk [vmem:[%s199 + $0x320] sm:$0xff] %vm1946, %v1918
      %2048 = vst.msk [vmem:[%s199 + $0x328] sm:$0xff] %vm1946, %v1919
      %2049 = vst.msk [vmem:[%s199 + $0x330] sm:$0xff] %vm1946, %v1920
      %2050 = vst.msk [vmem:[%s199 + $0x338] sm:$0xff] %vm1946, %v1921
      %2051 = vst.msk [vmem:[%s199 + $0x340] sm:$0xff] %vm1946, %v1922
      %2052 = vst.msk [vmem:[%s199 + $0x348] sm:$0xff] %vm1946, %v1923
      %2053 = vst.msk [vmem:[%s199 + $0x350] sm:$0xff] %vm1946, %v1924
      %2054 = vst.msk [vmem:[%s199 + $0x358] sm:$0xff] %vm1946, %v1925
      %2055 = vst.msk [vmem:[%s199 + $0x360] sm:$0xff] %vm1946, %v1926
      %2056 = vst.msk [vmem:[%s199 + $0x368] sm:$0xff] %vm1946, %v1927
      %2057 = vst.msk [vmem:[%s199 + $0x370] sm:$0xff] %vm1946, %v1928
      %2058 = vst.msk [vmem:[%s199 + $0x378] sm:$0xff] %vm1946, %v1929
      %2059 = vst.msk [vmem:[%s199 + $0x380] sm:$0xff] %vm1946, %v1930
      %2060 = vst.msk [vmem:[%s199 + $0x388] sm:$0xff] %vm1946, %v1931
      %2061 = vst.msk [vmem:[%s199 + $0x390] sm:$0xff] %vm1946, %v1932
      %2062 = vst.msk [vmem:[%s199 + $0x398] sm:$0xff] %vm1946, %v1933
      %2063 = vst.msk [vmem:[%s199 + $0x3a0] sm:$0xff] %vm1946, %v1934
      %2064 = vst.msk [vmem:[%s199 + $0x3a8] sm:$0xff] %vm1946, %v1935
      %2065 = vst.msk [vmem:[%s199 + $0x3b0] sm:$0xff] %vm1946, %v1936
      %2066 = vst.msk [vmem:[%s199 + $0x3b8] sm:$0xff] %vm1946, %v1937
      %2067 = vst.msk [vmem:[%s199 + $0x3c0] sm:$0xff] %vm1946, %v1938
      %2068 = vst.msk [vmem:[%s199 + $0x3c8] sm:$0xff] %vm1946, %v1939
      %2069 = vst.msk [vmem:[%s199 + $0x3d0] sm:$0xff] %vm1946, %v1940
      %2070 = vst.msk [vmem:[%s199 + $0x3d8] sm:$0xff] %vm1946, %v1941
      %2071 = vst.msk [vmem:[%s199 + $0x3e0] sm:$0xff] %vm1946, %v1942
      %2072 = vst.msk [vmem:[%s199 + $0x3e8] sm:$0xff] %vm1946, %v1943
      %2073 = vst.msk [vmem:[%s199 + $0x3f0] sm:$0xff] %vm1946, %v1944
      %2074 = vst.msk [vmem:[%s199 + $0x3f8] sm:$0xff] %vm1946, %v1945
      %s2075 = smul.u32 128, %s15
      %p2076 = scmp.lt.s32.totalorder %s2075, 1151
      %s2077 = scalar_select %p2076, %s2075, 1151
      %s2078 = smul.addr %s2077, 8
      %s2079 = scalar_lea.vmem %s4, %s2078
      // Predicated region
      $region37: #{decoder_forward.13} parent=35 // pred_check
        %p2080 = pneg %p122
      $region38: #{decoder_forward.13} parent=35 // pred_check_branch
        %2082 = sbr.rel (%p2080) target = $region40
      $region39: #{decoder_forward.13} parent=35 // pred_region
        %s2083 = smul.u32 128, %s15
      $region40: #{decoder_forward.13} parent=35 // pred_fallthru
        _
    $region36: #{decoder_forward.13} parent=5 // pred_fallthru
      _
    %p2084 = scmp.le.s32.totalorder 2, %s10
    // Predicated region
    $region41: #{decoder_forward.13} parent=5 // pred_check
      %p2085 = pneg %p2084
    $region42: #{decoder_forward.13} parent=5 // pred_check_branch
      %2087 = sbr.rel (%p2085) target = $region44
    $region43: #{decoder_forward.13} parent=5 // pred_region
      %s2088 = ssub.s32 %s10, 2
      // Predicated region
      $region45: #{decoder_forward.13} parent=43 // pred_check
        %p2089 = pneg %p128
      $region46: #{decoder_forward.13} parent=43 // pred_check_branch
        %2091 = sbr.rel (%p2089) target = $region48
      $region47: #{decoder_forward.13} parent=43 // pred_region
        %s2092 = smul.u32 128, %s16
        %p2093 = scmp.lt.s32.totalorder %s2092, 1151
        %s2094 = scalar_select %p2093, %s2092, 1151
        %s2095 = smul.addr %s2094, 8
        %s2096 = scalar_lea.vmem %s4, %s2095
      $region48: #{decoder_forward.13} parent=43 // pred_fallthru
        _
    $region44: #{decoder_forward.13} parent=5 // pred_fallthru
      _
  $region6: #{decoder_forward.13} parent=0 // loop_footer
    %s14 = sadd.s32 1, %s10
  $region7: #{decoder_forward.13} parent=0 // loop_footer_branch
    %9 = sbr.rel target = $region3
  $region8: #{decoder_forward.13} parent=0 // loop_exit
    _

</llo_original>
